<compile_context>
chip_gen: v7x
topology: tpu7x:2x2x1
jax: 0.10.0
libtpu: 0.0.40
codegen_flags: <defaults>
</compile_context>

<pallas_src>
import math

import numpy as np
import jax
import jax.numpy as jnp
from jax import lax
from jax.experimental import pallas as pl
from jax.experimental.pallas import tpu as pltpu

# ----------------- small config (ModelArgs scaled down) -----------------
DIM = 32
N_HEADS = 4
HEAD_DIM = DIM // N_HEADS          # 8
N_LAYERS = 2
VOCAB = 64
MULTIPLE_OF = 16
NORM_EPS = 1e-5
MAX_SEQ_LEN = 64
SEQ = 48
BATCH = 2
NUM_IMG = 1                        # images per sequence
QFORMER_HIDDEN = 16                # stand-in for Blip2 Q-Former hidden size
LEARNED_QUERIES = 32               # hard-coded "32" in replace_image_embeds
NQ = NUM_IMG * LEARNED_QUERIES
_h = int(8 * DIM / 3)
HIDDEN_DIM = MULTIPLE_OF * ((_h + MULTIPLE_OF - 1) // MULTIPLE_OF)   # 96
ROPE_THETA = 10000.0

# ----------------- packed / padded layout constants -----------------
LANE = 128
HPAD = N_HEADS * LANE              # 512: each head owns one 128-lane tile
OFF_Q, OFF_K, OFF_V, OFF_G = 0, HPAD, 2 * HPAD, 3 * HPAD
OFF_FFN = 4 * HPAD                 # 2048: start of fused [w1 | w3] block
W_IN_COLS = OFF_FFN + 2 * LANE     # 2304
W_OUT_ROWS = HPAD + LANE           # 640: [wo_pad rows | w2_pad rows]

assert HEAD_DIM <= LANE and HIDDEN_DIM <= LANE and SEQ % 8 == 0


# ----------------------------- fused kernel -----------------------------
def _fused_forward_kernel(h0_ref, meta_ref, rope_ref,
                          w_in_ref, w_out_ref, norm_ref, w_final_ref,
                          o_ref):
    f32 = jnp.float32
    bf16 = jnp.bfloat16
    s = SEQ

    h = h0_ref[0]                                   # (S, D) f32 residual stream
    meta = meta_ref[0]                              # (S, 2) int32
    lbl = meta[:, 0:1]                              # shifted labels (S, 1)
    img = meta[:, 1:2] > 0                          # image-position mask (S, 1)

    # masks generated in-kernel (no HBM inputs); finite -1e30 instead of -inf.
    row = lax.broadcasted_iota(jnp.int32, (s, s), 0)
    col = lax.broadcasted_iota(jnp.int32, (s, s), 1)
    mask = jnp.where(col <= row, 0.0, -1e30).astype(f32)
    is_even = (lax.broadcasted_iota(jnp.int32, (s, HPAD), 1) % 2) == 0

    def rmsnorm(x, w_row):                          # f32 VPU math throughout
        ms = jnp.mean(x * x, axis=-1, keepdims=True)
        return x * lax.rsqrt(ms + NORM_EPS) * w_row

    def rope(x):
        # interleaved complex rotation; tables are zero on inactive padded
        # lanes, so the +/-1 lane rolls never leak data across head tiles.
        cosf = rope_ref[0]                          # loaded at point of use to
        sinf = rope_ref[1]                          # keep live ranges short
        swapped = jnp.where(is_even,
                            pltpu.roll(x, HPAD - 1, axis=1),   # x[i+1] at even
                            pltpu.roll(x, 1, axis=1))          # x[i-1] at odd
        return x * cosf + swapped * sinf

    for l in range(N_LAYERS):                       # static unroll, weights in VMEM
        # ---------------- attention ----------------
        xn = rmsnorm(h, norm_ref[2 * l:2 * l + 1, :]).astype(bf16)
        # head-per-lane-tile padded projections (1/sqrt(hd) folded into Wq).
        q = rope(jnp.dot(xn, w_in_ref[l, :, OFF_Q:OFF_K], preferred_element_type=f32))
        k = rope(jnp.dot(xn, w_in_ref[l, :, OFF_K:OFF_V], preferred_element_type=f32))
        v = jnp.dot(xn, w_in_ref[l, :, OFF_V:OFF_G], preferred_element_type=f32)
        g = jnp.tanh(jnp.dot(xn, w_in_ref[l, :, OFF_G:OFF_FFN],
                             preferred_element_type=f32))
        # visual-adapter gating for all heads in one fused where(); the gate is
        # already replicated across each head's lanes by the packed weight.
        v = jnp.where(img, v * g, v)
        qb, kb, vb = q.astype(bf16), k.astype(bf16), v.astype(bf16)

        head_out = []
        for hh in range(N_HEADS):                   # all slices 128-lane aligned
            lo = hh * LANE
            sc = lax.dot_general(qb[:, lo:lo + LANE], kb[:, lo:lo + LANE],
                                 (((1,), (1,)), ((), ())),
                                 preferred_element_type=f32) + mask
            m = jnp.max(sc, axis=-1, keepdims=True)
            p = jnp.exp(sc - m)
            p = p / jnp.sum(p, axis=-1, keepdims=True)        # exact softmax
            head_out.append(jnp.dot(p.astype(bf16), vb[:, lo:lo + LANE],
                                    preferred_element_type=f32).astype(bf16))
        out_pad = jnp.concatenate(head_out, axis=1)           # (S, 512) tile-aligned
        h = h + jnp.dot(out_pad, w_out_ref[l, 0:HPAD, :],
                        preferred_element_type=f32)           # x + wo(attn)

        # ---------------- FFN (fused w1 || w3, 128-aligned halves) ----------------
        hn = rmsnorm(h, norm_ref[2 * l + 1:2 * l + 2, :]).astype(bf16)
        h13 = jnp.dot(hn, w_in_ref[l, :, OFF_FFN:W_IN_COLS],
                      preferred_element_type=f32)             # (S, 256)
        h1 = h13[:, 0:LANE]
        h3 = h13[:, LANE:2 * LANE]
        gact = h1 * (1.0 / (1.0 + jnp.exp(-h1))) * h3         # SiLU(w1 x) * (w3 x)
        h = h + jnp.dot(gact.astype(bf16), w_out_ref[l, HPAD:W_OUT_ROWS, :],
                        preferred_element_type=f32)

    # ---- final norm + output projection + shifted cross-entropy partials ----
    hn = rmsnorm(h, norm_ref[2 * N_LAYERS:2 * N_LAYERS + 1, :]).astype(bf16)
    logits = jnp.dot(hn, w_final_ref[...], preferred_element_type=f32)   # (S, V)
    m = jnp.max(logits, axis=-1, keepdims=True)
    lse = m + jnp.log(jnp.sum(jnp.exp(logits - m), axis=-1, keepdims=True))
    onehot = (lax.broadcasted_iota(jnp.int32, (s, VOCAB), 1) == lbl).astype(f32)
    picked = jnp.sum(logits * onehot, axis=-1, keepdims=True)
    valid = (lbl != 0).astype(f32)          # ignore_index=0 (also drops last row)
    num = jnp.sum((lse - picked) * valid, keepdims=True)                 # (1, 1)
    den = jnp.sum(valid, keepdims=True)                                  # (1, 1)

    lane = lax.broadcasted_iota(jnp.int32, (1, 128), 1)
    o_ref[0] = jnp.where(lane == 0, num, 0.0) + jnp.where(lane == 1, den, 0.0)


# ----------------------------- parameters -----------------------------
def init_params(key):
    keys = iter(jax.random.split(key, 64))

    def nrm(shape, scale):
        return jax.random.normal(next(keys), shape, jnp.float32) * scale

    p = {
        'tok_embeddings': nrm((VOCAB, DIM), 0.02),               # Embedding(vocab, dim)
        'vis_adapter_proj_t': nrm((QFORMER_HIDDEN, DIM), 0.02),  # Linear(qf_hidden, dim), W^T
        'output_t': nrm((DIM, VOCAB), 1.0 / math.sqrt(DIM)),     # Linear(dim, vocab), W^T
        'norm_w': jnp.ones((DIM,), jnp.float32),
    }
    layers = []
    s = 1.0 / math.sqrt(DIM)
    for _ in range(N_LAYERS):
        layers.append(dict(
            wq_t=nrm((DIM, DIM), s),
            wk_t=nrm((DIM, DIM), s),
            wv_t=nrm((DIM, DIM), s),
            wg_t=jnp.zeros((DIM, N_HEADS), jnp.float32),         # vis_adapter_gate zero-init
            wo_t=nrm((DIM, DIM), s),
            w1_t=nrm((DIM, HIDDEN_DIM), s),
            w3_t=nrm((DIM, HIDDEN_DIM), s),
            w2_t=nrm((HIDDEN_DIM, DIM), 1.0 / math.sqrt(HIDDEN_DIM)),
            attn_norm_w=jnp.ones((DIM,), jnp.float32),
            ffn_norm_w=jnp.ones((DIM,), jnp.float32),
        ))
    p['layers'] = layers
    return p


def pack_weights(p):
    """Build the lane-aligned bf16 weight slabs consumed by the kernel."""
    f32 = np.float32

    def head_pad_cols(w):        # (D, H*hd) -> (D, H*128), head h at lanes [h*128, +hd)
        out = np.zeros((DIM, HPAD), f32)
        for hh in range(N_HEADS):
            out[:, hh * LANE:hh * LANE + HEAD_DIM] = w[:, hh * HEAD_DIM:(hh + 1) * HEAD_DIM]
        return out

    def head_pad_rows(w):        # (H*hd, D) -> (H*128, D)
        out = np.zeros((HPAD, DIM), f32)
        for hh in range(N_HEADS):
            out[hh * LANE:hh * LANE + HEAD_DIM, :] = w[hh * HEAD_DIM:(hh + 1) * HEAD_DIM, :]
        return out

    def gate_expand(wg):         # (D, H) -> (D, H*128), gate replicated over head lanes
        out = np.zeros((DIM, HPAD), f32)
        for hh in range(N_HEADS):
            out[:, hh * LANE:hh * LANE + HEAD_DIM] = np.repeat(
                wg[:, hh:hh + 1], HEAD_DIM, axis=1)
        return out

    scale = 1.0 / math.sqrt(HEAD_DIM)                 # folded into Wq
    w_in, w_out, norm_rows = [], [], []
    for lw in p['layers']:
        w13 = np.zeros((DIM, 2 * LANE), f32)
        w13[:, 0:HIDDEN_DIM] = np.asarray(lw['w1_t'])
        w13[:, LANE:LANE + HIDDEN_DIM] = np.asarray(lw['w3_t'])
        w2p = np.zeros((LANE, DIM), f32)
        w2p[0:HIDDEN_DIM, :] = np.asarray(lw['w2_t'])
        w_in.append(np.concatenate([
            head_pad_cols(np.asarray(lw['wq_t']) * scale),
            head_pad_cols(np.asarray(lw['wk_t'])),
            head_pad_cols(np.asarray(lw['wv_t'])),
            gate_expand(np.asarray(lw['wg_t'])),
            w13], axis=1))                                         # (D, 2304)
        w_out.append(np.concatenate([head_pad_rows(np.asarray(lw['wo_t'])), w2p],
                                    axis=0))                       # (640, D)
        norm_rows.append(np.asarray(lw['attn_norm_w']))
        norm_rows.append(np.asarray(lw['ffn_norm_w']))
    norm_rows.append(np.asarray(p['norm_w']))

    return (jnp.asarray(np.stack(w_in), jnp.bfloat16),             # (L, D, 2304)
            jnp.asarray(np.stack(w_out), jnp.bfloat16),            # (L, 640, D)
            jnp.asarray(np.stack(norm_rows), jnp.float32),         # (2L+1, D)
            jnp.asarray(np.asarray(p['output_t']), jnp.bfloat16))  # (D, V)


def precompute_rope_tables_padded(seqlen):
    """cos / sign-folded sin tables in the head-per-lane-tile padded layout."""
    half = HEAD_DIM // 2
    freqs = 1.0 / (ROPE_THETA ** (np.arange(0, HEAD_DIM, 2)[:half].astype(np.float64)
                                  / HEAD_DIM))
    t = np.arange(seqlen, dtype=np.float64)
    ang = np.outer(t, freqs)                         # (S, hd/2)
    cos8 = np.repeat(np.cos(ang), 2, axis=1)         # duplicate onto interleaved pairs
    sin8 = np.repeat(np.sin(ang), 2, axis=1)
    sin8 = sin8 * np.tile(np.array([-1.0, 1.0]), half)[None, :]   # (-sin, +sin) per pair
    cos_pad = np.zeros((seqlen, HPAD), np.float32)
    sin_pad = np.zeros((seqlen, HPAD), np.float32)
    for hh in range(N_HEADS):
        cos_pad[:, hh * LANE:hh * LANE + HEAD_DIM] = cos8
        sin_pad[:, hh * LANE:hh * LANE + HEAD_DIM] = sin8
    return jnp.asarray(np.stack([cos_pad, sin_pad]), jnp.float32)  # (2, S, 512)


def causal_dummy():  # kept only so older call sites don't break (mask is in-kernel now)
    return None


def build_scatter(image_positions_np):
    """Static (B, S, NQ) 0/1 matrix mirroring the torch replace_image_embeds loop."""
    b, s = image_positions_np.shape
    scat = np.zeros((b, s, NQ), np.float32)
    for bi in range(b):
        indices = np.where(image_positions_np[bi])[0].tolist()
        for image_id, indice in enumerate(indices[::LEARNED_QUERIES]):
            if indice + LEARNED_QUERIES > MAX_SEQ_LEN:
                break
            for q in range(LEARNED_QUERIES):
                scat[bi, indice + q, image_id * LEARNED_QUERIES + q] = 1.0
    return jnp.asarray(scat)


# ----------------------------- model forward -----------------------------
def transformer_forward(params, packed, examples, labels, image_embeds_q,
                        image_positions_np, rope_tables):
    b, s = examples.shape
    assert s == SEQ
    w_in, w_out, norm_w, w_final = packed
    img_pos = jnp.asarray(image_positions_np)                     # (B, S) bool

    # --- replace_image_embeds equivalent (tiny XLA prologue; collapses 5 kernel
    # inputs into one (B,S,D) buffer): token gather (image positions -> token 0),
    # Q-Former feature projection, static scatter of the 32 learned queries.
    ids_z = jnp.where(img_pos, 0, examples)
    emb = jnp.take(params['tok_embeddings'], ids_z, axis=0)       # (B, S, D)
    ie = jnp.einsum('bqf,fd->bqd',
                    image_embeds_q.reshape(b, NQ, QFORMER_HIDDEN),
                    params['vis_adapter_proj_t'])                 # (B, NQ, D)
    scat = build_scatter(image_positions_np)                      # (B, S, NQ)
    ie_scat = jnp.einsum('bsq,bqd->bsd', scat, ie)
    covered = jnp.sum(scat, axis=-1, keepdims=True) > 0.0
    h0 = jnp.where(covered, ie_scat, emb).astype(jnp.float32)

    # labels shifted in the wrapper (full-tile CE in kernel); pad with ignore_index=0.
    lbl_shift = jnp.concatenate([labels[:, 1:], jnp.zeros((b, 1), labels.dtype)], axis=1)
    meta = jnp.stack([lbl_shift.astype(jnp.int32), img_pos.astype(jnp.int32)],
                     axis=-1)                                     # (B, S, 2)

    def batch_spec(shape):
        rank = len(shape)
        return pl.BlockSpec((1,) + tuple(shape[1:]),
                            lambda i, _r=rank: (i,) + (0,) * (_r - 1))

    def shared_spec(shape):
        rank = len(shape)
        return pl.BlockSpec(tuple(shape), lambda i, _r=rank: (0,) * _r)

    in_arrays = (h0, meta, rope_tables, w_in, w_out, norm_w, w_final)
    in_specs = ([batch_spec(a.shape) for a in in_arrays[:2]]
                + [shared_spec(a.shape) for a in in_arrays[2:]])

    partials = pl.pallas_call(
        _fused_forward_kernel,
        out_shape=jax.ShapeDtypeStruct((b, 1, 128), jnp.float32),
        grid=(b,),
        in_specs=in_specs,
        out_specs=pl.BlockSpec((1, 1, 128), lambda i: (i, 0, 0)),
        compiler_params=pltpu.CompilerParams(
            dimension_semantics=("parallel",)),       # one sequence per v7x TensorCore
    )(*in_arrays)

    # scalar loss reduction in plain JAX (second pallas_call removed).
    tot = jnp.sum(partials.reshape(b, 128), axis=0)
    return tot[0] / jnp.maximum(tot[1], 1.0)          # guard all-ignored labels


# ----------------------------- main -----------------------------
if __name__ == "__main__":
    key = jax.random.PRNGKey(0)
    kp, ke, kl, ki, kq = jax.random.split(key, 5)
    params = init_params(kp)
    packed = pack_weights(params)

    examples = jax.random.randint(ke, (BATCH, SEQ), 0, VOCAB, dtype=jnp.int32)
    labels = jax.random.randint(kl, (BATCH, SEQ), 1, VOCAB, dtype=jnp.int32)
    labels = labels.at[:, :2].set(0)          # exercise ignore_index=0 positions

    image_positions = np.zeros((BATCH, SEQ), dtype=bool)
    image_positions[:, 4:4 + LEARNED_QUERIES] = True   # one 32-token image block / sequence

    # kept for interface parity with the torch module (B, num_imgs, C, H, W); unused.
    # TODO(synk): Blip2Qformer (visual_feature_extractor.forward_image) has no clean
    # Pallas equivalent; its (B, num_imgs, 32, hidden) output is supplied as
    # `image_embeds_q`, and the per-layer CSV gate dump is a host side-effect we skip.
    images = jax.random.normal(ki, (BATCH, NUM_IMG, 3, 8, 8), jnp.float32)
    image_embeds_q = jax.random.normal(
        kq, (BATCH, NUM_IMG, LEARNED_QUERIES, QFORMER_HIDDEN), jnp.float32) * 0.02

    rope_tables = precompute_rope_tables_padded(SEQ)   # trace-time constants

    loss = transformer_forward(params, packed, examples, labels, image_embeds_q,
                               image_positions, rope_tables)
    jax.block_until_ready(loss)
    print("KERNEL_OK")
</pallas_src>

<mosaic_0001>
module attributes {stable_mosaic.version = 11 : i64} {
  func.func @_fused_forward_kernel(%arg0: i32, %arg1: memref<1x48x32xf32, #tpu.memory_space<vmem>>, %arg2: memref<1x48x2xi32, #tpu.memory_space<vmem>>, %arg3: memref<2x48x512xf32, #tpu.memory_space<vmem>>, %arg4: memref<2x32x2304xbf16, #tpu.memory_space<vmem>>, %arg5: memref<2x640x32xbf16, #tpu.memory_space<vmem>>, %arg6: memref<5x32xf32, #tpu.memory_space<vmem>>, %arg7: memref<32x64xbf16, #tpu.memory_space<vmem>>, %arg8: memref<1x1x128xf32, #tpu.memory_space<vmem>>) attributes {dimension_semantics = [#tpu.dimension_semantics<parallel>], iteration_bounds = array<i64: 2>, scalar_prefetch = 0 : i64, scratch_operands = 0 : i64, tpu.core_type = #tpu.core_type<tc>, window_params = [{transform_indices = @transform_0, window_bounds = array<i64: 1, 48, 32>}, {transform_indices = @transform_1, window_bounds = array<i64: 1, 48, 2>}, {pipeline_mode = #tpu.pipeline_mode<synchronous>, transform_indices = @transform_2, window_bounds = array<i64: 2, 48, 512>}, {pipeline_mode = #tpu.pipeline_mode<synchronous>, transform_indices = @transform_3, window_bounds = array<i64: 2, 32, 2304>}, {pipeline_mode = #tpu.pipeline_mode<synchronous>, transform_indices = @transform_4, window_bounds = array<i64: 2, 640, 32>}, {pipeline_mode = #tpu.pipeline_mode<synchronous>, transform_indices = @transform_5, window_bounds = array<i64: 5, 32>}, {pipeline_mode = #tpu.pipeline_mode<synchronous>, transform_indices = @transform_6, window_bounds = array<i64: 32, 64>}, {transform_indices = @transform_7, window_bounds = array<i64: 1, 1, 128>}]} {
    %c0 = arith.constant 0 : index
    %c0_0 = arith.constant 0 : index
    %c0_1 = arith.constant 0 : index
    %0 = vector.load %arg1[%c0, %c0_0, %c0_1] : memref<1x48x32xf32, #tpu.memory_space<vmem>>, vector<1x48x32xf32>
    %1 = vector.shape_cast %0 : vector<1x48x32xf32> to vector<48x32xf32>
    %c0_2 = arith.constant 0 : index
    %c0_3 = arith.constant 0 : index
    %c0_4 = arith.constant 0 : index
    %2 = vector.load %arg2[%c0_2, %c0_3, %c0_4] : memref<1x48x2xi32, #tpu.memory_space<vmem>>, vector<1x48x2xi32>
    %3 = vector.shape_cast %2 : vector<1x48x2xi32> to vector<48x2xi32>
    %4 = vector.extract_strided_slice %3 {offsets = [0, 0], sizes = [48, 1], strides = [1, 1]} : vector<48x2xi32> to vector<48x1xi32>
    %5 = vector.extract_strided_slice %3 {offsets = [0, 1], sizes = [48, 1], strides = [1, 1]} : vector<48x2xi32> to vector<48x1xi32>
    %c0_i32 = arith.constant 0 : i32
    %6 = vector.broadcast %c0_i32 : i32 to vector<48x1xi32>
    %7 = arith.cmpi sgt, %5, %6 : vector<48x1xi32>
    %8 = tpu.iota {dimensions = array<i32: 0>} : vector<48x48xi32>
    %9 = tpu.iota {dimensions = array<i32: 1>} : vector<48x48xi32>
    %10 = arith.cmpi sle, %9, %8 : vector<48x48xi32>
    %cst = arith.constant 0.000000e+00 : f32
    %cst_5 = arith.constant -1.000000e+30 : f32
    %11 = vector.broadcast %cst : f32 to vector<48x48xf32>
    %12 = vector.broadcast %cst_5 : f32 to vector<48x48xf32>
    %13 = arith.select %10, %11, %12 : vector<48x48xi1>, vector<48x48xf32>
    %14 = tpu.iota {dimensions = array<i32: 1>} : vector<48x512xi32>
    %c2_i32 = arith.constant 2 : i32
    %c0_i32_6 = arith.constant 0 : i32
    %15 = arith.cmpi eq, %c2_i32, %c0_i32_6 : i32
    %c1_i32 = arith.constant 1 : i32
    %16 = arith.select %15, %c1_i32, %c2_i32 : i32
    %17 = vector.broadcast %16 : i32 to vector<48x512xi32>
    %18 = arith.remsi %14, %17 : vector<48x512xi32>
    %c0_i32_7 = arith.constant 0 : i32
    %19 = vector.broadcast %c0_i32_7 : i32 to vector<48x512xi32>
    %20 = arith.cmpi ne, %18, %19 : vector<48x512xi32>
    %c0_i32_8 = arith.constant 0 : i32
    %21 = vector.broadcast %c0_i32_8 : i32 to vector<48x512xi32>
    %22 = arith.cmpi slt, %18, %21 : vector<48x512xi32>
    %c0_i32_9 = arith.constant 0 : i32
    %23 = arith.cmpi slt, %16, %c0_i32_9 : i32
    %24 = vector.broadcast %23 : i1 to vector<48x512xi1>
    %25 = vector.broadcast %24 : vector<48x512xi1> to vector<48x512xi1>
    %26 = arith.xori %22, %25 : vector<48x512xi1>
    %27 = arith.andi %26, %20 : vector<48x512xi1>
    %28 = vector.broadcast %16 : i32 to vector<48x512xi32>
    %29 = arith.addi %18, %28 : vector<48x512xi32>
    %30 = arith.select %27, %29, %18 : vector<48x512xi1>, vector<48x512xi32>
    %c0_i32_10 = arith.constant 0 : i32
    %31 = vector.broadcast %c0_i32_10 : i32 to vector<48x512xi32>
    %32 = arith.cmpi eq, %30, %31 : vector<48x512xi32>
    %c0_11 = arith.constant 0 : index
    %c0_12 = arith.constant 0 : index
    %33 = vector.load %arg6[%c0_11, %c0_12] : memref<5x32xf32, #tpu.memory_space<vmem>>, vector<1x32xf32>
    %34 = arith.mulf %1, %1 : vector<48x32xf32>
    %cst_13 = arith.constant dense<0.000000e+00> : vector<48xf32>
    %35 = vector.multi_reduction <add>, %34, %cst_13 [1] : vector<48x32xf32> to vector<48xf32>
    %36 = vector.shape_cast %35 : vector<48xf32> to vector<48x1xf32>
    %cst_14 = arith.constant 3.200000e+01 : f32
    %37 = vector.broadcast %cst_14 : f32 to vector<48x1xf32>
    %38 = arith.divf %36, %37 : vector<48x1xf32>
    %cst_15 = arith.constant 9.99999974E-6 : f32
    %39 = vector.broadcast %cst_15 : f32 to vector<48x1xf32>
    %40 = arith.addf %38, %39 : vector<48x1xf32>
    %41 = math.rsqrt %40 : vector<48x1xf32>
    %42 = vector.broadcast %41 : vector<48x1xf32> to vector<48x32xf32>
    %43 = arith.mulf %1, %42 : vector<48x32xf32>
    %44 = vector.broadcast %33 : vector<1x32xf32> to vector<48x32xf32>
    %45 = arith.mulf %43, %44 : vector<48x32xf32>
    %46 = arith.truncf %45 : vector<48x32xf32> to vector<48x32xbf16>
    %c0_16 = arith.constant 0 : index
    %c0_17 = arith.constant 0 : index
    %c0_18 = arith.constant 0 : index
    %47 = vector.load %arg4[%c0_16, %c0_17, %c0_18] : memref<2x32x2304xbf16, #tpu.memory_space<vmem>>, vector<1x32x512xbf16>
    %48 = vector.shape_cast %47 : vector<1x32x512xbf16> to vector<32x512xbf16>
    %cst_19 = arith.constant dense<0.000000e+00> : vector<48x512xf32>
    %49 = tpu.matmul %46, %48, %cst_19 {dimension_numbers = #tpu.dot_dimension_numbers<[1], [0], [0], [1], [0, 0, 1, 1], [], []>} : vector<48x32xbf16>, vector<32x512xbf16>, vector<48x512xf32> -> vector<48x512xf32>
    %c0_20 = arith.constant 0 : index
    %c0_21 = arith.constant 0 : index
    %c0_22 = arith.constant 0 : index
    %50 = vector.load %arg3[%c0_20, %c0_21, %c0_22] : memref<2x48x512xf32, #tpu.memory_space<vmem>>, vector<1x48x512xf32>
    %51 = vector.shape_cast %50 : vector<1x48x512xf32> to vector<48x512xf32>
    %c1 = arith.constant 1 : index
    %c0_23 = arith.constant 0 : index
    %c0_24 = arith.constant 0 : index
    %52 = vector.load %arg3[%c1, %c0_23, %c0_24] : memref<2x48x512xf32, #tpu.memory_space<vmem>>, vector<1x48x512xf32>
    %53 = vector.shape_cast %52 : vector<1x48x512xf32> to vector<48x512xf32>
    %c511_i32 = arith.constant 511 : i32
    %54 = tpu.dynamic_rotate %49 by %c511_i32 dim 1 : vector<48x512xf32>, i32 -> vector<48x512xf32>
    %c1_i32_25 = arith.constant 1 : i32
    %55 = tpu.dynamic_rotate %49 by %c1_i32_25 dim 1 : vector<48x512xf32>, i32 -> vector<48x512xf32>
    %56 = arith.select %32, %54, %55 : vector<48x512xi1>, vector<48x512xf32>
    %57 = arith.mulf %49, %51 : vector<48x512xf32>
    %58 = arith.mulf %56, %53 : vector<48x512xf32>
    %59 = arith.addf %57, %58 : vector<48x512xf32>
    %c0_26 = arith.constant 0 : index
    %c0_27 = arith.constant 0 : index
    %c512 = arith.constant 512 : index
    %60 = vector.load %arg4[%c0_26, %c0_27, %c512] : memref<2x32x2304xbf16, #tpu.memory_space<vmem>>, vector<1x32x512xbf16>
    %61 = vector.shape_cast %60 : vector<1x32x512xbf16> to vector<32x512xbf16>
    %cst_28 = arith.constant dense<0.000000e+00> : vector<48x512xf32>
    %62 = tpu.matmul %46, %61, %cst_28 {dimension_numbers = #tpu.dot_dimension_numbers<[1], [0], [0], [1], [0, 0, 1, 1], [], []>} : vector<48x32xbf16>, vector<32x512xbf16>, vector<48x512xf32> -> vector<48x512xf32>
    %c0_29 = arith.constant 0 : index
    %c0_30 = arith.constant 0 : index
    %c0_31 = arith.constant 0 : index
    %63 = vector.load %arg3[%c0_29, %c0_30, %c0_31] : memref<2x48x512xf32, #tpu.memory_space<vmem>>, vector<1x48x512xf32>
    %64 = vector.shape_cast %63 : vector<1x48x512xf32> to vector<48x512xf32>
    %c1_32 = arith.constant 1 : index
    %c0_33 = arith.constant 0 : index
    %c0_34 = arith.constant 0 : index
    %65 = vector.load %arg3[%c1_32, %c0_33, %c0_34] : memref<2x48x512xf32, #tpu.memory_space<vmem>>, vector<1x48x512xf32>
    %66 = vector.shape_cast %65 : vector<1x48x512xf32> to vector<48x512xf32>
    %c511_i32_35 = arith.constant 511 : i32
    %67 = tpu.dynamic_rotate %62 by %c511_i32_35 dim 1 : vector<48x512xf32>, i32 -> vector<48x512xf32>
    %c1_i32_36 = arith.constant 1 : i32
    %68 = tpu.dynamic_rotate %62 by %c1_i32_36 dim 1 : vector<48x512xf32>, i32 -> vector<48x512xf32>
    %69 = arith.select %32, %67, %68 : vector<48x512xi1>, vector<48x512xf32>
    %70 = arith.mulf %62, %64 : vector<48x512xf32>
    %71 = arith.mulf %69, %66 : vector<48x512xf32>
    %72 = arith.addf %70, %71 : vector<48x512xf32>
    %c0_37 = arith.constant 0 : index
    %c0_38 = arith.constant 0 : index
    %c1024 = arith.constant 1024 : index
    %73 = vector.load %arg4[%c0_37, %c0_38, %c1024] : memref<2x32x2304xbf16, #tpu.memory_space<vmem>>, vector<1x32x512xbf16>
    %74 = vector.shape_cast %73 : vector<1x32x512xbf16> to vector<32x512xbf16>
    %cst_39 = arith.constant dense<0.000000e+00> : vector<48x512xf32>
    %75 = tpu.matmul %46, %74, %cst_39 {dimension_numbers = #tpu.dot_dimension_numbers<[1], [0], [0], [1], [0, 0, 1, 1], [], []>} : vector<48x32xbf16>, vector<32x512xbf16>, vector<48x512xf32> -> vector<48x512xf32>
    %c0_40 = arith.constant 0 : index
    %c0_41 = arith.constant 0 : index
    %c1536 = arith.constant 1536 : index
    %76 = vector.load %arg4[%c0_40, %c0_41, %c1536] : memref<2x32x2304xbf16, #tpu.memory_space<vmem>>, vector<1x32x512xbf16>
    %77 = vector.shape_cast %76 : vector<1x32x512xbf16> to vector<32x512xbf16>
    %cst_42 = arith.constant dense<0.000000e+00> : vector<48x512xf32>
    %78 = tpu.matmul %46, %77, %cst_42 {dimension_numbers = #tpu.dot_dimension_numbers<[1], [0], [0], [1], [0, 0, 1, 1], [], []>} : vector<48x32xbf16>, vector<32x512xbf16>, vector<48x512xf32> -> vector<48x512xf32>
    %79 = math.tanh %78 : vector<48x512xf32>
    %80 = arith.mulf %75, %79 : vector<48x512xf32>
    %81 = vector.shape_cast %7 : vector<48x1xi1> to vector<48x1xi1>
    %82 = vector.broadcast %81 : vector<48x1xi1> to vector<48x512xi1>
    %83 = arith.select %82, %80, %75 : vector<48x512xi1>, vector<48x512xf32>
    %84 = arith.truncf %59 : vector<48x512xf32> to vector<48x512xbf16>
    %85 = arith.truncf %72 : vector<48x512xf32> to vector<48x512xbf16>
    %86 = arith.truncf %83 : vector<48x512xf32> to vector<48x512xbf16>
    %87 = vector.extract_strided_slice %84 {offsets = [0, 0], sizes = [48, 128], strides = [1, 1]} : vector<48x512xbf16> to vector<48x128xbf16>
    %88 = vector.extract_strided_slice %85 {offsets = [0, 0], sizes = [48, 128], strides = [1, 1]} : vector<48x512xbf16> to vector<48x128xbf16>
    %cst_43 = arith.constant dense<0.000000e+00> : vector<48x48xf32>
    %89 = tpu.matmul %87, %88, %cst_43 {dimension_numbers = #tpu.dot_dimension_numbers<[1], [1], [0], [0], [0, 0, 1, 0], [], []>} : vector<48x128xbf16>, vector<48x128xbf16>, vector<48x48xf32> -> vector<48x48xf32>
    %90 = arith.addf %89, %13 : vector<48x48xf32>
    %cst_44 = arith.constant dense<0xFF800000> : vector<48xf32>
    %91 = vector.multi_reduction <maximumf>, %90, %cst_44 [1] : vector<48x48xf32> to vector<48xf32>
    %92 = vector.shape_cast %91 : vector<48xf32> to vector<48x1xf32>
    %93 = vector.broadcast %92 : vector<48x1xf32> to vector<48x48xf32>
    %94 = arith.subf %90, %93 : vector<48x48xf32>
    %95 = math.exp %94 : vector<48x48xf32>
    %cst_45 = arith.constant dense<0.000000e+00> : vector<48xf32>
    %96 = vector.multi_reduction <add>, %95, %cst_45 [1] : vector<48x48xf32> to vector<48xf32>
    %97 = vector.shape_cast %96 : vector<48xf32> to vector<48x1xf32>
    %98 = vector.broadcast %97 : vector<48x1xf32> to vector<48x48xf32>
    %99 = arith.divf %95, %98 : vector<48x48xf32>
    %100 = arith.truncf %99 : vector<48x48xf32> to vector<48x48xbf16>
    %101 = vector.extract_strided_slice %86 {offsets = [0, 0], sizes = [48, 128], strides = [1, 1]} : vector<48x512xbf16> to vector<48x128xbf16>
    %cst_46 = arith.constant dense<0.000000e+00> : vector<48x128xf32>
    %102 = tpu.matmul %100, %101, %cst_46 {dimension_numbers = #tpu.dot_dimension_numbers<[1], [0], [0], [1], [0, 0, 1, 1], [], []>} : vector<48x48xbf16>, vector<48x128xbf16>, vector<48x128xf32> -> vector<48x128xf32>
    %103 = arith.truncf %102 : vector<48x128xf32> to vector<48x128xbf16>
    %104 = vector.extract_strided_slice %84 {offsets = [0, 128], sizes = [48, 128], strides = [1, 1]} : vector<48x512xbf16> to vector<48x128xbf16>
    %105 = vector.extract_strided_slice %85 {offsets = [0, 128], sizes = [48, 128], strides = [1, 1]} : vector<48x512xbf16> to vector<48x128xbf16>
    %cst_47 = arith.constant dense<0.000000e+00> : vector<48x48xf32>
    %106 = tpu.matmul %104, %105, %cst_47 {dimension_numbers = #tpu.dot_dimension_numbers<[1], [1], [0], [0], [0, 0, 1, 0], [], []>} : vector<48x128xbf16>, vector<48x128xbf16>, vector<48x48xf32> -> vector<48x48xf32>
    %107 = arith.addf %106, %13 : vector<48x48xf32>
    %cst_48 = arith.constant dense<0xFF800000> : vector<48xf32>
    %108 = vector.multi_reduction <maximumf>, %107, %cst_48 [1] : vector<48x48xf32> to vector<48xf32>
    %109 = vector.shape_cast %108 : vector<48xf32> to vector<48x1xf32>
    %110 = vector.broadcast %109 : vector<48x1xf32> to vector<48x48xf32>
    %111 = arith.subf %107, %110 : vector<48x48xf32>
    %112 = math.exp %111 : vector<48x48xf32>
    %cst_49 = arith.constant dense<0.000000e+00> : vector<48xf32>
    %113 = vector.multi_reduction <add>, %112, %cst_49 [1] : vector<48x48xf32> to vector<48xf32>
    %114 = vector.shape_cast %113 : vector<48xf32> to vector<48x1xf32>
    %115 = vector.broadcast %114 : vector<48x1xf32> to vector<48x48xf32>
    %116 = arith.divf %112, %115 : vector<48x48xf32>
    %117 = arith.truncf %116 : vector<48x48xf32> to vector<48x48xbf16>
    %118 = vector.extract_strided_slice %86 {offsets = [0, 128], sizes = [48, 128], strides = [1, 1]} : vector<48x512xbf16> to vector<48x128xbf16>
    %cst_50 = arith.constant dense<0.000000e+00> : vector<48x128xf32>
    %119 = tpu.matmul %117, %118, %cst_50 {dimension_numbers = #tpu.dot_dimension_numbers<[1], [0], [0], [1], [0, 0, 1, 1], [], []>} : vector<48x48xbf16>, vector<48x128xbf16>, vector<48x128xf32> -> vector<48x128xf32>
    %120 = arith.truncf %119 : vector<48x128xf32> to vector<48x128xbf16>
    %121 = vector.extract_strided_slice %84 {offsets = [0, 256], sizes = [48, 128], strides = [1, 1]} : vector<48x512xbf16> to vector<48x128xbf16>
    %122 = vector.extract_strided_slice %85 {offsets = [0, 256], sizes = [48, 128], strides = [1, 1]} : vector<48x512xbf16> to vector<48x128xbf16>
    %cst_51 = arith.constant dense<0.000000e+00> : vector<48x48xf32>
    %123 = tpu.matmul %121, %122, %cst_51 {dimension_numbers = #tpu.dot_dimension_numbers<[1], [1], [0], [0], [0, 0, 1, 0], [], []>} : vector<48x128xbf16>, vector<48x128xbf16>, vector<48x48xf32> -> vector<48x48xf32>
    %124 = arith.addf %123, %13 : vector<48x48xf32>
    %cst_52 = arith.constant dense<0xFF800000> : vector<48xf32>
    %125 = vector.multi_reduction <maximumf>, %124, %cst_52 [1] : vector<48x48xf32> to vector<48xf32>
    %126 = vector.shape_cast %125 : vector<48xf32> to vector<48x1xf32>
    %127 = vector.broadcast %126 : vector<48x1xf32> to vector<48x48xf32>
    %128 = arith.subf %124, %127 : vector<48x48xf32>
    %129 = math.exp %128 : vector<48x48xf32>
    %cst_53 = arith.constant dense<0.000000e+00> : vector<48xf32>
    %130 = vector.multi_reduction <add>, %129, %cst_53 [1] : vector<48x48xf32> to vector<48xf32>
    %131 = vector.shape_cast %130 : vector<48xf32> to vector<48x1xf32>
    %132 = vector.broadcast %131 : vector<48x1xf32> to vector<48x48xf32>
    %133 = arith.divf %129, %132 : vector<48x48xf32>
    %134 = arith.truncf %133 : vector<48x48xf32> to vector<48x48xbf16>
    %135 = vector.extract_strided_slice %86 {offsets = [0, 256], sizes = [48, 128], strides = [1, 1]} : vector<48x512xbf16> to vector<48x128xbf16>
    %cst_54 = arith.constant dense<0.000000e+00> : vector<48x128xf32>
    %136 = tpu.matmul %134, %135, %cst_54 {dimension_numbers = #tpu.dot_dimension_numbers<[1], [0], [0], [1], [0, 0, 1, 1], [], []>} : vector<48x48xbf16>, vector<48x128xbf16>, vector<48x128xf32> -> vector<48x128xf32>
    %137 = arith.truncf %136 : vector<48x128xf32> to vector<48x128xbf16>
    %138 = vector.extract_strided_slice %84 {offsets = [0, 384], sizes = [48, 128], strides = [1, 1]} : vector<48x512xbf16> to vector<48x128xbf16>
    %139 = vector.extract_strided_slice %85 {offsets = [0, 384], sizes = [48, 128], strides = [1, 1]} : vector<48x512xbf16> to vector<48x128xbf16>
    %cst_55 = arith.constant dense<0.000000e+00> : vector<48x48xf32>
    %140 = tpu.matmul %138, %139, %cst_55 {dimension_numbers = #tpu.dot_dimension_numbers<[1], [1], [0], [0], [0, 0, 1, 0], [], []>} : vector<48x128xbf16>, vector<48x128xbf16>, vector<48x48xf32> -> vector<48x48xf32>
    %141 = arith.addf %140, %13 : vector<48x48xf32>
    %cst_56 = arith.constant dense<0xFF800000> : vector<48xf32>
    %142 = vector.multi_reduction <maximumf>, %141, %cst_56 [1] : vector<48x48xf32> to vector<48xf32>
    %143 = vector.shape_cast %142 : vector<48xf32> to vector<48x1xf32>
    %144 = vector.broadcast %143 : vector<48x1xf32> to vector<48x48xf32>
    %145 = arith.subf %141, %144 : vector<48x48xf32>
    %146 = math.exp %145 : vector<48x48xf32>
    %cst_57 = arith.constant dense<0.000000e+00> : vector<48xf32>
    %147 = vector.multi_reduction <add>, %146, %cst_57 [1] : vector<48x48xf32> to vector<48xf32>
    %148 = vector.shape_cast %147 : vector<48xf32> to vector<48x1xf32>
    %149 = vector.broadcast %148 : vector<48x1xf32> to vector<48x48xf32>
    %150 = arith.divf %146, %149 : vector<48x48xf32>
    %151 = arith.truncf %150 : vector<48x48xf32> to vector<48x48xbf16>
    %152 = vector.extract_strided_slice %86 {offsets = [0, 384], sizes = [48, 128], strides = [1, 1]} : vector<48x512xbf16> to vector<48x128xbf16>
    %cst_58 = arith.constant dense<0.000000e+00> : vector<48x128xf32>
    %153 = tpu.matmul %151, %152, %cst_58 {dimension_numbers = #tpu.dot_dimension_numbers<[1], [0], [0], [1], [0, 0, 1, 1], [], []>} : vector<48x48xbf16>, vector<48x128xbf16>, vector<48x128xf32> -> vector<48x128xf32>
    %154 = arith.truncf %153 : vector<48x128xf32> to vector<48x128xbf16>
    %155 = tpu.concatenate %103, %120, %137, %154 in 1 : vector<48x128xbf16>, vector<48x128xbf16>, vector<48x128xbf16>, vector<48x128xbf16> -> vector<48x512xbf16>
    %c0_59 = arith.constant 0 : index
    %c0_60 = arith.constant 0 : index
    %c0_61 = arith.constant 0 : index
    %156 = vector.load %arg5[%c0_59, %c0_60, %c0_61] : memref<2x640x32xbf16, #tpu.memory_space<vmem>>, vector<1x512x32xbf16>
    %157 = vector.shape_cast %156 : vector<1x512x32xbf16> to vector<512x32xbf16>
    %cst_62 = arith.constant dense<0.000000e+00> : vector<48x32xf32>
    %158 = tpu.matmul %155, %157, %cst_62 {dimension_numbers = #tpu.dot_dimension_numbers<[1], [0], [0], [1], [0, 0, 1, 1], [], []>} : vector<48x512xbf16>, vector<512x32xbf16>, vector<48x32xf32> -> vector<48x32xf32>
    %159 = arith.addf %1, %158 : vector<48x32xf32>
    %c1_63 = arith.constant 1 : index
    %c0_64 = arith.constant 0 : index
    %160 = vector.load %arg6[%c1_63, %c0_64] : memref<5x32xf32, #tpu.memory_space<vmem>>, vector<1x32xf32>
    %161 = arith.mulf %159, %159 : vector<48x32xf32>
    %cst_65 = arith.constant dense<0.000000e+00> : vector<48xf32>
    %162 = vector.multi_reduction <add>, %161, %cst_65 [1] : vector<48x32xf32> to vector<48xf32>
    %163 = vector.shape_cast %162 : vector<48xf32> to vector<48x1xf32>
    %cst_66 = arith.constant 3.200000e+01 : f32
    %164 = vector.broadcast %cst_66 : f32 to vector<48x1xf32>
    %165 = arith.divf %163, %164 : vector<48x1xf32>
    %cst_67 = arith.constant 9.99999974E-6 : f32
    %166 = vector.broadcast %cst_67 : f32 to vector<48x1xf32>
    %167 = arith.addf %165, %166 : vector<48x1xf32>
    %168 = math.rsqrt %167 : vector<48x1xf32>
    %169 = vector.broadcast %168 : vector<48x1xf32> to vector<48x32xf32>
    %170 = arith.mulf %159, %169 : vector<48x32xf32>
    %171 = vector.broadcast %160 : vector<1x32xf32> to vector<48x32xf32>
    %172 = arith.mulf %170, %171 : vector<48x32xf32>
    %173 = arith.truncf %172 : vector<48x32xf32> to vector<48x32xbf16>
    %c0_68 = arith.constant 0 : index
    %c0_69 = arith.constant 0 : index
    %c2048 = arith.constant 2048 : index
    %174 = vector.load %arg4[%c0_68, %c0_69, %c2048] : memref<2x32x2304xbf16, #tpu.memory_space<vmem>>, vector<1x32x256xbf16>
    %175 = vector.shape_cast %174 : vector<1x32x256xbf16> to vector<32x256xbf16>
    %cst_70 = arith.constant dense<0.000000e+00> : vector<48x256xf32>
    %176 = tpu.matmul %173, %175, %cst_70 {dimension_numbers = #tpu.dot_dimension_numbers<[1], [0], [0], [1], [0, 0, 1, 1], [], []>} : vector<48x32xbf16>, vector<32x256xbf16>, vector<48x256xf32> -> vector<48x256xf32>
    %177 = vector.extract_strided_slice %176 {offsets = [0, 0], sizes = [48, 128], strides = [1, 1]} : vector<48x256xf32> to vector<48x128xf32>
    %178 = vector.extract_strided_slice %176 {offsets = [0, 128], sizes = [48, 128], strides = [1, 1]} : vector<48x256xf32> to vector<48x128xf32>
    %cst_71 = arith.constant 0.000000e+00 : f32
    %179 = vector.broadcast %cst_71 : f32 to vector<48x128xf32>
    %180 = arith.subf %179, %177 : vector<48x128xf32>
    %181 = math.exp %180 : vector<48x128xf32>
    %cst_72 = arith.constant 1.000000e+00 : f32
    %182 = vector.broadcast %cst_72 : f32 to vector<48x128xf32>
    %183 = arith.addf %182, %181 : vector<48x128xf32>
    %cst_73 = arith.constant 1.000000e+00 : f32
    %184 = vector.broadcast %cst_73 : f32 to vector<48x128xf32>
    %185 = arith.divf %184, %183 : vector<48x128xf32>
    %186 = arith.mulf %177, %185 : vector<48x128xf32>
    %187 = arith.mulf %186, %178 : vector<48x128xf32>
    %188 = arith.truncf %187 : vector<48x128xf32> to vector<48x128xbf16>
    %c0_74 = arith.constant 0 : index
    %c512_75 = arith.constant 512 : index
    %c0_76 = arith.constant 0 : index
    %189 = vector.load %arg5[%c0_74, %c512_75, %c0_76] : memref<2x640x32xbf16, #tpu.memory_space<vmem>>, vector<1x128x32xbf16>
    %190 = vector.shape_cast %189 : vector<1x128x32xbf16> to vector<128x32xbf16>
    %cst_77 = arith.constant dense<0.000000e+00> : vector<48x32xf32>
    %191 = tpu.matmul %188, %190, %cst_77 {dimension_numbers = #tpu.dot_dimension_numbers<[1], [0], [0], [1], [0, 0, 1, 1], [], []>} : vector<48x128xbf16>, vector<128x32xbf16>, vector<48x32xf32> -> vector<48x32xf32>
    %192 = arith.addf %159, %191 : vector<48x32xf32>
    %c2 = arith.constant 2 : index
    %c0_78 = arith.constant 0 : index
    %193 = vector.load %arg6[%c2, %c0_78] : memref<5x32xf32, #tpu.memory_space<vmem>>, vector<1x32xf32>
    %194 = arith.mulf %192, %192 : vector<48x32xf32>
    %cst_79 = arith.constant dense<0.000000e+00> : vector<48xf32>
    %195 = vector.multi_reduction <add>, %194, %cst_79 [1] : vector<48x32xf32> to vector<48xf32>
    %196 = vector.shape_cast %195 : vector<48xf32> to vector<48x1xf32>
    %cst_80 = arith.constant 3.200000e+01 : f32
    %197 = vector.broadcast %cst_80 : f32 to vector<48x1xf32>
    %198 = arith.divf %196, %197 : vector<48x1xf32>
    %cst_81 = arith.constant 9.99999974E-6 : f32
    %199 = vector.broadcast %cst_81 : f32 to vector<48x1xf32>
    %200 = arith.addf %198, %199 : vector<48x1xf32>
    %201 = math.rsqrt %200 : vector<48x1xf32>
    %202 = vector.broadcast %201 : vector<48x1xf32> to vector<48x32xf32>
    %203 = arith.mulf %192, %202 : vector<48x32xf32>
    %204 = vector.broadcast %193 : vector<1x32xf32> to vector<48x32xf32>
    %205 = arith.mulf %203, %204 : vector<48x32xf32>
    %206 = arith.truncf %205 : vector<48x32xf32> to vector<48x32xbf16>
    %c1_82 = arith.constant 1 : index
    %c0_83 = arith.constant 0 : index
    %c0_84 = arith.constant 0 : index
    %207 = vector.load %arg4[%c1_82, %c0_83, %c0_84] : memref<2x32x2304xbf16, #tpu.memory_space<vmem>>, vector<1x32x512xbf16>
    %208 = vector.shape_cast %207 : vector<1x32x512xbf16> to vector<32x512xbf16>
    %cst_85 = arith.constant dense<0.000000e+00> : vector<48x512xf32>
    %209 = tpu.matmul %206, %208, %cst_85 {dimension_numbers = #tpu.dot_dimension_numbers<[1], [0], [0], [1], [0, 0, 1, 1], [], []>} : vector<48x32xbf16>, vector<32x512xbf16>, vector<48x512xf32> -> vector<48x512xf32>
    %c0_86 = arith.constant 0 : index
    %c0_87 = arith.constant 0 : index
    %c0_88 = arith.constant 0 : index
    %210 = vector.load %arg3[%c0_86, %c0_87, %c0_88] : memref<2x48x512xf32, #tpu.memory_space<vmem>>, vector<1x48x512xf32>
    %211 = vector.shape_cast %210 : vector<1x48x512xf32> to vector<48x512xf32>
    %c1_89 = arith.constant 1 : index
    %c0_90 = arith.constant 0 : index
    %c0_91 = arith.constant 0 : index
    %212 = vector.load %arg3[%c1_89, %c0_90, %c0_91] : memref<2x48x512xf32, #tpu.memory_space<vmem>>, vector<1x48x512xf32>
    %213 = vector.shape_cast %212 : vector<1x48x512xf32> to vector<48x512xf32>
    %c511_i32_92 = arith.constant 511 : i32
    %214 = tpu.dynamic_rotate %209 by %c511_i32_92 dim 1 : vector<48x512xf32>, i32 -> vector<48x512xf32>
    %c1_i32_93 = arith.constant 1 : i32
    %215 = tpu.dynamic_rotate %209 by %c1_i32_93 dim 1 : vector<48x512xf32>, i32 -> vector<48x512xf32>
    %216 = arith.select %32, %214, %215 : vector<48x512xi1>, vector<48x512xf32>
    %217 = arith.mulf %209, %211 : vector<48x512xf32>
    %218 = arith.mulf %216, %213 : vector<48x512xf32>
    %219 = arith.addf %217, %218 : vector<48x512xf32>
    %c1_94 = arith.constant 1 : index
    %c0_95 = arith.constant 0 : index
    %c512_96 = arith.constant 512 : index
    %220 = vector.load %arg4[%c1_94, %c0_95, %c512_96] : memref<2x32x2304xbf16, #tpu.memory_space<vmem>>, vector<1x32x512xbf16>
    %221 = vector.shape_cast %220 : vector<1x32x512xbf16> to vector<32x512xbf16>
    %cst_97 = arith.constant dense<0.000000e+00> : vector<48x512xf32>
    %222 = tpu.matmul %206, %221, %cst_97 {dimension_numbers = #tpu.dot_dimension_numbers<[1], [0], [0], [1], [0, 0, 1, 1], [], []>} : vector<48x32xbf16>, vector<32x512xbf16>, vector<48x512xf32> -> vector<48x512xf32>
    %c0_98 = arith.constant 0 : index
    %c0_99 = arith.constant 0 : index
    %c0_100 = arith.constant 0 : index
    %223 = vector.load %arg3[%c0_98, %c0_99, %c0_100] : memref<2x48x512xf32, #tpu.memory_space<vmem>>, vector<1x48x512xf32>
    %224 = vector.shape_cast %223 : vector<1x48x512xf32> to vector<48x512xf32>
    %c1_101 = arith.constant 1 : index
    %c0_102 = arith.constant 0 : index
    %c0_103 = arith.constant 0 : index
    %225 = vector.load %arg3[%c1_101, %c0_102, %c0_103] : memref<2x48x512xf32, #tpu.memory_space<vmem>>, vector<1x48x512xf32>
    %226 = vector.shape_cast %225 : vector<1x48x512xf32> to vector<48x512xf32>
    %c511_i32_104 = arith.constant 511 : i32
    %227 = tpu.dynamic_rotate %222 by %c511_i32_104 dim 1 : vector<48x512xf32>, i32 -> vector<48x512xf32>
    %c1_i32_105 = arith.constant 1 : i32
    %228 = tpu.dynamic_rotate %222 by %c1_i32_105 dim 1 : vector<48x512xf32>, i32 -> vector<48x512xf32>
    %229 = arith.select %32, %227, %228 : vector<48x512xi1>, vector<48x512xf32>
    %230 = arith.mulf %222, %224 : vector<48x512xf32>
    %231 = arith.mulf %229, %226 : vector<48x512xf32>
    %232 = arith.addf %230, %231 : vector<48x512xf32>
    %c1_106 = arith.constant 1 : index
    %c0_107 = arith.constant 0 : index
    %c1024_108 = arith.constant 1024 : index
    %233 = vector.load %arg4[%c1_106, %c0_107, %c1024_108] : memref<2x32x2304xbf16, #tpu.memory_space<vmem>>, vector<1x32x512xbf16>
    %234 = vector.shape_cast %233 : vector<1x32x512xbf16> to vector<32x512xbf16>
    %cst_109 = arith.constant dense<0.000000e+00> : vector<48x512xf32>
    %235 = tpu.matmul %206, %234, %cst_109 {dimension_numbers = #tpu.dot_dimension_numbers<[1], [0], [0], [1], [0, 0, 1, 1], [], []>} : vector<48x32xbf16>, vector<32x512xbf16>, vector<48x512xf32> -> vector<48x512xf32>
    %c1_110 = arith.constant 1 : index
    %c0_111 = arith.constant 0 : index
    %c1536_112 = arith.constant 1536 : index
    %236 = vector.load %arg4[%c1_110, %c0_111, %c1536_112] : memref<2x32x2304xbf16, #tpu.memory_space<vmem>>, vector<1x32x512xbf16>
    %237 = vector.shape_cast %236 : vector<1x32x512xbf16> to vector<32x512xbf16>
    %cst_113 = arith.constant dense<0.000000e+00> : vector<48x512xf32>
    %238 = tpu.matmul %206, %237, %cst_113 {dimension_numbers = #tpu.dot_dimension_numbers<[1], [0], [0], [1], [0, 0, 1, 1], [], []>} : vector<48x32xbf16>, vector<32x512xbf16>, vector<48x512xf32> -> vector<48x512xf32>
    %239 = math.tanh %238 : vector<48x512xf32>
    %240 = arith.mulf %235, %239 : vector<48x512xf32>
    %241 = vector.shape_cast %7 : vector<48x1xi1> to vector<48x1xi1>
    %242 = vector.broadcast %241 : vector<48x1xi1> to vector<48x512xi1>
    %243 = arith.select %242, %240, %235 : vector<48x512xi1>, vector<48x512xf32>
    %244 = arith.truncf %219 : vector<48x512xf32> to vector<48x512xbf16>
    %245 = arith.truncf %232 : vector<48x512xf32> to vector<48x512xbf16>
    %246 = arith.truncf %243 : vector<48x512xf32> to vector<48x512xbf16>
    %247 = vector.extract_strided_slice %244 {offsets = [0, 0], sizes = [48, 128], strides = [1, 1]} : vector<48x512xbf16> to vector<48x128xbf16>
    %248 = vector.extract_strided_slice %245 {offsets = [0, 0], sizes = [48, 128], strides = [1, 1]} : vector<48x512xbf16> to vector<48x128xbf16>
    %cst_114 = arith.constant dense<0.000000e+00> : vector<48x48xf32>
    %249 = tpu.matmul %247, %248, %cst_114 {dimension_numbers = #tpu.dot_dimension_numbers<[1], [1], [0], [0], [0, 0, 1, 0], [], []>} : vector<48x128xbf16>, vector<48x128xbf16>, vector<48x48xf32> -> vector<48x48xf32>
    %250 = arith.addf %249, %13 : vector<48x48xf32>
    %cst_115 = arith.constant dense<0xFF800000> : vector<48xf32>
    %251 = vector.multi_reduction <maximumf>, %250, %cst_115 [1] : vector<48x48xf32> to vector<48xf32>
    %252 = vector.shape_cast %251 : vector<48xf32> to vector<48x1xf32>
    %253 = vector.broadcast %252 : vector<48x1xf32> to vector<48x48xf32>
    %254 = arith.subf %250, %253 : vector<48x48xf32>
    %255 = math.exp %254 : vector<48x48xf32>
    %cst_116 = arith.constant dense<0.000000e+00> : vector<48xf32>
    %256 = vector.multi_reduction <add>, %255, %cst_116 [1] : vector<48x48xf32> to vector<48xf32>
    %257 = vector.shape_cast %256 : vector<48xf32> to vector<48x1xf32>
    %258 = vector.broadcast %257 : vector<48x1xf32> to vector<48x48xf32>
    %259 = arith.divf %255, %258 : vector<48x48xf32>
    %260 = arith.truncf %259 : vector<48x48xf32> to vector<48x48xbf16>
    %261 = vector.extract_strided_slice %246 {offsets = [0, 0], sizes = [48, 128], strides = [1, 1]} : vector<48x512xbf16> to vector<48x128xbf16>
    %cst_117 = arith.constant dense<0.000000e+00> : vector<48x128xf32>
    %262 = tpu.matmul %260, %261, %cst_117 {dimension_numbers = #tpu.dot_dimension_numbers<[1], [0], [0], [1], [0, 0, 1, 1], [], []>} : vector<48x48xbf16>, vector<48x128xbf16>, vector<48x128xf32> -> vector<48x128xf32>
    %263 = arith.truncf %262 : vector<48x128xf32> to vector<48x128xbf16>
    %264 = vector.extract_strided_slice %244 {offsets = [0, 128], sizes = [48, 128], strides = [1, 1]} : vector<48x512xbf16> to vector<48x128xbf16>
    %265 = vector.extract_strided_slice %245 {offsets = [0, 128], sizes = [48, 128], strides = [1, 1]} : vector<48x512xbf16> to vector<48x128xbf16>
    %cst_118 = arith.constant dense<0.000000e+00> : vector<48x48xf32>
    %266 = tpu.matmul %264, %265, %cst_118 {dimension_numbers = #tpu.dot_dimension_numbers<[1], [1], [0], [0], [0, 0, 1, 0], [], []>} : vector<48x128xbf16>, vector<48x128xbf16>, vector<48x48xf32> -> vector<48x48xf32>
    %267 = arith.addf %266, %13 : vector<48x48xf32>
    %cst_119 = arith.constant dense<0xFF800000> : vector<48xf32>
    %268 = vector.multi_reduction <maximumf>, %267, %cst_119 [1] : vector<48x48xf32> to vector<48xf32>
    %269 = vector.shape_cast %268 : vector<48xf32> to vector<48x1xf32>
    %270 = vector.broadcast %269 : vector<48x1xf32> to vector<48x48xf32>
    %271 = arith.subf %267, %270 : vector<48x48xf32>
    %272 = math.exp %271 : vector<48x48xf32>
    %cst_120 = arith.constant dense<0.000000e+00> : vector<48xf32>
    %273 = vector.multi_reduction <add>, %272, %cst_120 [1] : vector<48x48xf32> to vector<48xf32>
    %274 = vector.shape_cast %273 : vector<48xf32> to vector<48x1xf32>
    %275 = vector.broadcast %274 : vector<48x1xf32> to vector<48x48xf32>
    %276 = arith.divf %272, %275 : vector<48x48xf32>
    %277 = arith.truncf %276 : vector<48x48xf32> to vector<48x48xbf16>
    %278 = vector.extract_strided_slice %246 {offsets = [0, 128], sizes = [48, 128], strides = [1, 1]} : vector<48x512xbf16> to vector<48x128xbf16>
    %cst_121 = arith.constant dense<0.000000e+00> : vector<48x128xf32>
    %279 = tpu.matmul %277, %278, %cst_121 {dimension_numbers = #tpu.dot_dimension_numbers<[1], [0], [0], [1], [0, 0, 1, 1], [], []>} : vector<48x48xbf16>, vector<48x128xbf16>, vector<48x128xf32> -> vector<48x128xf32>
    %280 = arith.truncf %279 : vector<48x128xf32> to vector<48x128xbf16>
    %281 = vector.extract_strided_slice %244 {offsets = [0, 256], sizes = [48, 128], strides = [1, 1]} : vector<48x512xbf16> to vector<48x128xbf16>
    %282 = vector.extract_strided_slice %245 {offsets = [0, 256], sizes = [48, 128], strides = [1, 1]} : vector<48x512xbf16> to vector<48x128xbf16>
    %cst_122 = arith.constant dense<0.000000e+00> : vector<48x48xf32>
    %283 = tpu.matmul %281, %282, %cst_122 {dimension_numbers = #tpu.dot_dimension_numbers<[1], [1], [0], [0], [0, 0, 1, 0], [], []>} : vector<48x128xbf16>, vector<48x128xbf16>, vector<48x48xf32> -> vector<48x48xf32>
    %284 = arith.addf %283, %13 : vector<48x48xf32>
    %cst_123 = arith.constant dense<0xFF800000> : vector<48xf32>
    %285 = vector.multi_reduction <maximumf>, %284, %cst_123 [1] : vector<48x48xf32> to vector<48xf32>
    %286 = vector.shape_cast %285 : vector<48xf32> to vector<48x1xf32>
    %287 = vector.broadcast %286 : vector<48x1xf32> to vector<48x48xf32>
    %288 = arith.subf %284, %287 : vector<48x48xf32>
    %289 = math.exp %288 : vector<48x48xf32>
    %cst_124 = arith.constant dense<0.000000e+00> : vector<48xf32>
    %290 = vector.multi_reduction <add>, %289, %cst_124 [1] : vector<48x48xf32> to vector<48xf32>
    %291 = vector.shape_cast %290 : vector<48xf32> to vector<48x1xf32>
    %292 = vector.broadcast %291 : vector<48x1xf32> to vector<48x48xf32>
    %293 = arith.divf %289, %292 : vector<48x48xf32>
    %294 = arith.truncf %293 : vector<48x48xf32> to vector<48x48xbf16>
    %295 = vector.extract_strided_slice %246 {offsets = [0, 256], sizes = [48, 128], strides = [1, 1]} : vector<48x512xbf16> to vector<48x128xbf16>
    %cst_125 = arith.constant dense<0.000000e+00> : vector<48x128xf32>
    %296 = tpu.matmul %294, %295, %cst_125 {dimension_numbers = #tpu.dot_dimension_numbers<[1], [0], [0], [1], [0, 0, 1, 1], [], []>} : vector<48x48xbf16>, vector<48x128xbf16>, vector<48x128xf32> -> vector<48x128xf32>
    %297 = arith.truncf %296 : vector<48x128xf32> to vector<48x128xbf16>
    %298 = vector.extract_strided_slice %244 {offsets = [0, 384], sizes = [48, 128], strides = [1, 1]} : vector<48x512xbf16> to vector<48x128xbf16>
    %299 = vector.extract_strided_slice %245 {offsets = [0, 384], sizes = [48, 128], strides = [1, 1]} : vector<48x512xbf16> to vector<48x128xbf16>
    %cst_126 = arith.constant dense<0.000000e+00> : vector<48x48xf32>
    %300 = tpu.matmul %298, %299, %cst_126 {dimension_numbers = #tpu.dot_dimension_numbers<[1], [1], [0], [0], [0, 0, 1, 0], [], []>} : vector<48x128xbf16>, vector<48x128xbf16>, vector<48x48xf32> -> vector<48x48xf32>
    %301 = arith.addf %300, %13 : vector<48x48xf32>
    %cst_127 = arith.constant dense<0xFF800000> : vector<48xf32>
    %302 = vector.multi_reduction <maximumf>, %301, %cst_127 [1] : vector<48x48xf32> to vector<48xf32>
    %303 = vector.shape_cast %302 : vector<48xf32> to vector<48x1xf32>
    %304 = vector.broadcast %303 : vector<48x1xf32> to vector<48x48xf32>
    %305 = arith.subf %301, %304 : vector<48x48xf32>
    %306 = math.exp %305 : vector<48x48xf32>
    %cst_128 = arith.constant dense<0.000000e+00> : vector<48xf32>
    %307 = vector.multi_reduction <add>, %306, %cst_128 [1] : vector<48x48xf32> to vector<48xf32>
    %308 = vector.shape_cast %307 : vector<48xf32> to vector<48x1xf32>
    %309 = vector.broadcast %308 : vector<48x1xf32> to vector<48x48xf32>
    %310 = arith.divf %306, %309 : vector<48x48xf32>
    %311 = arith.truncf %310 : vector<48x48xf32> to vector<48x48xbf16>
    %312 = vector.extract_strided_slice %246 {offsets = [0, 384], sizes = [48, 128], strides = [1, 1]} : vector<48x512xbf16> to vector<48x128xbf16>
    %cst_129 = arith.constant dense<0.000000e+00> : vector<48x128xf32>
    %313 = tpu.matmul %311, %312, %cst_129 {dimension_numbers = #tpu.dot_dimension_numbers<[1], [0], [0], [1], [0, 0, 1, 1], [], []>} : vector<48x48xbf16>, vector<48x128xbf16>, vector<48x128xf32> -> vector<48x128xf32>
    %314 = arith.truncf %313 : vector<48x128xf32> to vector<48x128xbf16>
    %315 = tpu.concatenate %263, %280, %297, %314 in 1 : vector<48x128xbf16>, vector<48x128xbf16>, vector<48x128xbf16>, vector<48x128xbf16> -> vector<48x512xbf16>
    %c1_130 = arith.constant 1 : index
    %c0_131 = arith.constant 0 : index
    %c0_132 = arith.constant 0 : index
    %316 = vector.load %arg5[%c1_130, %c0_131, %c0_132] : memref<2x640x32xbf16, #tpu.memory_space<vmem>>, vector<1x512x32xbf16>
    %317 = vector.shape_cast %316 : vector<1x512x32xbf16> to vector<512x32xbf16>
    %cst_133 = arith.constant dense<0.000000e+00> : vector<48x32xf32>
    %318 = tpu.matmul %315, %317, %cst_133 {dimension_numbers = #tpu.dot_dimension_numbers<[1], [0], [0], [1], [0, 0, 1, 1], [], []>} : vector<48x512xbf16>, vector<512x32xbf16>, vector<48x32xf32> -> vector<48x32xf32>
    %319 = arith.addf %192, %318 : vector<48x32xf32>
    %c3 = arith.constant 3 : index
    %c0_134 = arith.constant 0 : index
    %320 = vector.load %arg6[%c3, %c0_134] : memref<5x32xf32, #tpu.memory_space<vmem>>, vector<1x32xf32>
    %321 = arith.mulf %319, %319 : vector<48x32xf32>
    %cst_135 = arith.constant dense<0.000000e+00> : vector<48xf32>
    %322 = vector.multi_reduction <add>, %321, %cst_135 [1] : vector<48x32xf32> to vector<48xf32>
    %323 = vector.shape_cast %322 : vector<48xf32> to vector<48x1xf32>
    %cst_136 = arith.constant 3.200000e+01 : f32
    %324 = vector.broadcast %cst_136 : f32 to vector<48x1xf32>
    %325 = arith.divf %323, %324 : vector<48x1xf32>
    %cst_137 = arith.constant 9.99999974E-6 : f32
    %326 = vector.broadcast %cst_137 : f32 to vector<48x1xf32>
    %327 = arith.addf %325, %326 : vector<48x1xf32>
    %328 = math.rsqrt %327 : vector<48x1xf32>
    %329 = vector.broadcast %328 : vector<48x1xf32> to vector<48x32xf32>
    %330 = arith.mulf %319, %329 : vector<48x32xf32>
    %331 = vector.broadcast %320 : vector<1x32xf32> to vector<48x32xf32>
    %332 = arith.mulf %330, %331 : vector<48x32xf32>
    %333 = arith.truncf %332 : vector<48x32xf32> to vector<48x32xbf16>
    %c1_138 = arith.constant 1 : index
    %c0_139 = arith.constant 0 : index
    %c2048_140 = arith.constant 2048 : index
    %334 = vector.load %arg4[%c1_138, %c0_139, %c2048_140] : memref<2x32x2304xbf16, #tpu.memory_space<vmem>>, vector<1x32x256xbf16>
    %335 = vector.shape_cast %334 : vector<1x32x256xbf16> to vector<32x256xbf16>
    %cst_141 = arith.constant dense<0.000000e+00> : vector<48x256xf32>
    %336 = tpu.matmul %333, %335, %cst_141 {dimension_numbers = #tpu.dot_dimension_numbers<[1], [0], [0], [1], [0, 0, 1, 1], [], []>} : vector<48x32xbf16>, vector<32x256xbf16>, vector<48x256xf32> -> vector<48x256xf32>
    %337 = vector.extract_strided_slice %336 {offsets = [0, 0], sizes = [48, 128], strides = [1, 1]} : vector<48x256xf32> to vector<48x128xf32>
    %338 = vector.extract_strided_slice %336 {offsets = [0, 128], sizes = [48, 128], strides = [1, 1]} : vector<48x256xf32> to vector<48x128xf32>
    %cst_142 = arith.constant 0.000000e+00 : f32
    %339 = vector.broadcast %cst_142 : f32 to vector<48x128xf32>
    %340 = arith.subf %339, %337 : vector<48x128xf32>
    %341 = math.exp %340 : vector<48x128xf32>
    %cst_143 = arith.constant 1.000000e+00 : f32
    %342 = vector.broadcast %cst_143 : f32 to vector<48x128xf32>
    %343 = arith.addf %342, %341 : vector<48x128xf32>
    %cst_144 = arith.constant 1.000000e+00 : f32
    %344 = vector.broadcast %cst_144 : f32 to vector<48x128xf32>
    %345 = arith.divf %344, %343 : vector<48x128xf32>
    %346 = arith.mulf %337, %345 : vector<48x128xf32>
    %347 = arith.mulf %346, %338 : vector<48x128xf32>
    %348 = arith.truncf %347 : vector<48x128xf32> to vector<48x128xbf16>
    %c1_145 = arith.constant 1 : index
    %c512_146 = arith.constant 512 : index
    %c0_147 = arith.constant 0 : index
    %349 = vector.load %arg5[%c1_145, %c512_146, %c0_147] : memref<2x640x32xbf16, #tpu.memory_space<vmem>>, vector<1x128x32xbf16>
    %350 = vector.shape_cast %349 : vector<1x128x32xbf16> to vector<128x32xbf16>
    %cst_148 = arith.constant dense<0.000000e+00> : vector<48x32xf32>
    %351 = tpu.matmul %348, %350, %cst_148 {dimension_numbers = #tpu.dot_dimension_numbers<[1], [0], [0], [1], [0, 0, 1, 1], [], []>} : vector<48x128xbf16>, vector<128x32xbf16>, vector<48x32xf32> -> vector<48x32xf32>
    %352 = arith.addf %319, %351 : vector<48x32xf32>
    %c4 = arith.constant 4 : index
    %c0_149 = arith.constant 0 : index
    %353 = vector.load %arg6[%c4, %c0_149] : memref<5x32xf32, #tpu.memory_space<vmem>>, vector<1x32xf32>
    %354 = arith.mulf %352, %352 : vector<48x32xf32>
    %cst_150 = arith.constant dense<0.000000e+00> : vector<48xf32>
    %355 = vector.multi_reduction <add>, %354, %cst_150 [1] : vector<48x32xf32> to vector<48xf32>
    %356 = vector.shape_cast %355 : vector<48xf32> to vector<48x1xf32>
    %cst_151 = arith.constant 3.200000e+01 : f32
    %357 = vector.broadcast %cst_151 : f32 to vector<48x1xf32>
    %358 = arith.divf %356, %357 : vector<48x1xf32>
    %cst_152 = arith.constant 9.99999974E-6 : f32
    %359 = vector.broadcast %cst_152 : f32 to vector<48x1xf32>
    %360 = arith.addf %358, %359 : vector<48x1xf32>
    %361 = math.rsqrt %360 : vector<48x1xf32>
    %362 = vector.broadcast %361 : vector<48x1xf32> to vector<48x32xf32>
    %363 = arith.mulf %352, %362 : vector<48x32xf32>
    %364 = vector.broadcast %353 : vector<1x32xf32> to vector<48x32xf32>
    %365 = arith.mulf %363, %364 : vector<48x32xf32>
    %366 = arith.truncf %365 : vector<48x32xf32> to vector<48x32xbf16>
    %c0_153 = arith.constant 0 : index
    %c0_154 = arith.constant 0 : index
    %367 = vector.load %arg7[%c0_153, %c0_154] : memref<32x64xbf16, #tpu.memory_space<vmem>>, vector<32x64xbf16>
    %cst_155 = arith.constant dense<0.000000e+00> : vector<48x64xf32>
    %368 = tpu.matmul %366, %367, %cst_155 {dimension_numbers = #tpu.dot_dimension_numbers<[1], [0], [0], [1], [0, 0, 1, 1], [], []>} : vector<48x32xbf16>, vector<32x64xbf16>, vector<48x64xf32> -> vector<48x64xf32>
    %cst_156 = arith.constant dense<0xFF800000> : vector<48xf32>
    %369 = vector.multi_reduction <maximumf>, %368, %cst_156 [1] : vector<48x64xf32> to vector<48xf32>
    %370 = vector.shape_cast %369 : vector<48xf32> to vector<48x1xf32>
    %371 = vector.broadcast %370 : vector<48x1xf32> to vector<48x64xf32>
    %372 = arith.subf %368, %371 : vector<48x64xf32>
    %373 = math.exp %372 : vector<48x64xf32>
    %cst_157 = arith.constant dense<0.000000e+00> : vector<48xf32>
    %374 = vector.multi_reduction <add>, %373, %cst_157 [1] : vector<48x64xf32> to vector<48xf32>
    %375 = vector.shape_cast %374 : vector<48xf32> to vector<48x1xf32>
    %376 = math.log %375 : vector<48x1xf32>
    %377 = arith.addf %370, %376 : vector<48x1xf32>
    %378 = tpu.iota {dimensions = array<i32: 1>} : vector<48x64xi32>
    %379 = vector.broadcast %4 : vector<48x1xi32> to vector<48x64xi32>
    %380 = arith.cmpi eq, %378, %379 : vector<48x64xi32>
    %381 = arith.extui %380 : vector<48x64xi1> to vector<48x64xi32>
    %382 = arith.sitofp %381 : vector<48x64xi32> to vector<48x64xf32>
    %383 = arith.mulf %368, %382 : vector<48x64xf32>
    %cst_158 = arith.constant dense<0.000000e+00> : vector<48xf32>
    %384 = vector.multi_reduction <add>, %383, %cst_158 [1] : vector<48x64xf32> to vector<48xf32>
    %385 = vector.shape_cast %384 : vector<48xf32> to vector<48x1xf32>
    %c0_i32_159 = arith.constant 0 : i32
    %386 = vector.broadcast %c0_i32_159 : i32 to vector<48x1xi32>
    %387 = arith.cmpi ne, %4, %386 : vector<48x1xi32>
    %388 = arith.extui %387 : vector<48x1xi1> to vector<48x1xi32>
    %389 = arith.sitofp %388 : vector<48x1xi32> to vector<48x1xf32>
    %390 = arith.subf %377, %385 : vector<48x1xf32>
    %391 = arith.mulf %390, %389 : vector<48x1xf32>
    %392 = vector.shape_cast %391 : vector<48x1xf32> to vector<1x48x1xf32>
    %cst_160 = arith.constant dense<0.000000e+00> : vector<1xf32>
    %393 = vector.multi_reduction <add>, %392, %cst_160 [1, 2] : vector<1x48x1xf32> to vector<1xf32>
    %394 = vector.shape_cast %393 : vector<1xf32> to vector<1x1x1xf32>
    %395 = vector.extract %394[0, 0, 0] : f32 from vector<1x1x1xf32>
    %396 = vector.broadcast %395 : f32 to vector<1x1xf32>
    %397 = vector.shape_cast %389 : vector<48x1xf32> to vector<1x48x1xf32>
    %cst_161 = arith.constant dense<0.000000e+00> : vector<1xf32>
    %398 = vector.multi_reduction <add>, %397, %cst_161 [1, 2] : vector<1x48x1xf32> to vector<1xf32>
    %399 = vector.shape_cast %398 : vector<1xf32> to vector<1x1x1xf32>
    %400 = vector.extract %399[0, 0, 0] : f32 from vector<1x1x1xf32>
    %401 = vector.broadcast %400 : f32 to vector<1x1xf32>
    %402 = tpu.iota {dimensions = array<i32: 1>} : vector<1x128xi32>
    %c0_i32_162 = arith.constant 0 : i32
    %403 = vector.broadcast %c0_i32_162 : i32 to vector<1x128xi32>
    %404 = arith.cmpi eq, %402, %403 : vector<1x128xi32>
    %cst_163 = arith.constant 0.000000e+00 : f32
    %405 = vector.shape_cast %396 : vector<1x1xf32> to vector<1x1xf32>
    %406 = vector.broadcast %405 : vector<1x1xf32> to vector<1x128xf32>
    %407 = vector.broadcast %cst_163 : f32 to vector<1x128xf32>
    %408 = arith.select %404, %406, %407 : vector<1x128xi1>, vector<1x128xf32>
    %c1_i32_164 = arith.constant 1 : i32
    %409 = vector.broadcast %c1_i32_164 : i32 to vector<1x128xi32>
    %410 = arith.cmpi eq, %402, %409 : vector<1x128xi32>
    %cst_165 = arith.constant 0.000000e+00 : f32
    %411 = vector.shape_cast %401 : vector<1x1xf32> to vector<1x1xf32>
    %412 = vector.broadcast %411 : vector<1x1xf32> to vector<1x128xf32>
    %413 = vector.broadcast %cst_165 : f32 to vector<1x128xf32>
    %414 = arith.select %410, %412, %413 : vector<1x128xi1>, vector<1x128xf32>
    %415 = arith.addf %408, %414 : vector<1x128xf32>
    %c0_166 = arith.constant 0 : index
    %c0_167 = arith.constant 0 : index
    %c0_168 = arith.constant 0 : index
    %416 = vector.load %arg8[%c0_166, %c0_167, %c0_168] : memref<1x1x128xf32, #tpu.memory_space<vmem>>, vector<1x1x128xf32>
    %417 = vector.shape_cast %416 : vector<1x1x128xf32> to vector<1x128xf32>
    %418 = vector.shape_cast %415 : vector<1x128xf32> to vector<1x1x128xf32>
    tpu.vector_store %arg8[%c0_166, %c0_167, %c0_168], %418 {strides = array<i32>} : memref<1x1x128xf32, #tpu.memory_space<vmem>>, vector<1x1x128xf32>,
    return
  }
  func.func @transform_0(%arg0: i32) -> (i32, i32, i32) {
    %c0_i32 = arith.constant 0 : i32
    %c0_i32_0 = arith.constant 0 : i32
    %c0_i32_1 = arith.constant 0 : i32
    return %arg0, %c0_i32, %c0_i32_0 : i32, i32, i32
  }
  func.func @transform_1(%arg0: i32) -> (i32, i32, i32) {
    %c0_i32 = arith.constant 0 : i32
    %c0_i32_0 = arith.constant 0 : i32
    %c0_i32_1 = arith.constant 0 : i32
    return %arg0, %c0_i32, %c0_i32_0 : i32, i32, i32
  }
  func.func @transform_2(%arg0: i32) -> (i32, i32, i32) {
    %c0_i32 = arith.constant 0 : i32
    %c0_i32_0 = arith.constant 0 : i32
    %c0_i32_1 = arith.constant 0 : i32
    %c0_i32_2 = arith.constant 0 : i32
    return %c0_i32, %c0_i32_0, %c0_i32_1 : i32, i32, i32
  }
  func.func @transform_3(%arg0: i32) -> (i32, i32, i32) {
    %c0_i32 = arith.constant 0 : i32
    %c0_i32_0 = arith.constant 0 : i32
    %c0_i32_1 = arith.constant 0 : i32
    %c0_i32_2 = arith.constant 0 : i32
    return %c0_i32, %c0_i32_0, %c0_i32_1 : i32, i32, i32
  }
  func.func @transform_4(%arg0: i32) -> (i32, i32, i32) {
    %c0_i32 = arith.constant 0 : i32
    %c0_i32_0 = arith.constant 0 : i32
    %c0_i32_1 = arith.constant 0 : i32
    %c0_i32_2 = arith.constant 0 : i32
    return %c0_i32, %c0_i32_0, %c0_i32_1 : i32, i32, i32
  }
  func.func @transform_5(%arg0: i32) -> (i32, i32) {
    %c0_i32 = arith.constant 0 : i32
    %c0_i32_0 = arith.constant 0 : i32
    %c0_i32_1 = arith.constant 0 : i32
    return %c0_i32, %c0_i32_0 : i32, i32
  }
  func.func @transform_6(%arg0: i32) -> (i32, i32) {
    %c0_i32 = arith.constant 0 : i32
    %c0_i32_0 = arith.constant 0 : i32
    %c0_i32_1 = arith.constant 0 : i32
    return %c0_i32, %c0_i32_0 : i32, i32
  }
  func.func @transform_7(%arg0: i32) -> (i32, i32, i32) {
    %c0_i32 = arith.constant 0 : i32
    %c0_i32_0 = arith.constant 0 : i32
    %c0_i32_1 = arith.constant 0 : i32
    return %arg0, %c0_i32, %c0_i32_0 : i32, i32, i32
  }
}

</mosaic_0001>

<llo_original>
// kernel: tpu_custom_call.1
$region0: #{tpu_custom_call.1}
  #allocation0 [shape = 'u32[]', space=smem, size = 0x4, offset = 0x4, fixed_abs, tag = 'smem constant byte address 0x4 - core index']
  #allocation1 [shape = 'u32[144,128]{1,0:T(1,128)}', space=vmem, size = 0x12000, scoped, tag = 'internal scratch']
  %s0 = inlined_call_operand.vmem [shape: f32[2,48,32], index: 0, kind: input, shape index: {}]
  %s1 = inlined_call_operand.vmem [shape: s32[2,48,2], index: 1, kind: input, shape index: {}]
  %s2 = inlined_call_operand.vmem [shape: f32[2,48,512], index: 2, kind: input, shape index: {}]
  %s3 = inlined_call_operand.vmem [shape: bf16[2,32,2304], index: 3, kind: input, shape index: {}]
  %s4 = inlined_call_operand.vmem [shape: bf16[2,640,32], index: 4, kind: input, shape index: {}]
  %s5 = inlined_call_operand.vmem [shape: f32[5,32], index: 5, kind: input, shape index: {}]
  %s6 = inlined_call_operand.vmem [shape: bf16[32,64], index: 6, kind: input, shape index: {}]
  %s7 = inlined_call_operand.hbm [shape: f32[2,1,128], index: 7, kind: output, shape index: {}]
  %s8 = sld [smem:[#allocation0]]
  $region61: #{tpu_custom_call.1} parent=0
    _
  %s10 = ssub.s32 1, %s8
  %s11 = scalar_select 0, %s10, %s8
  $region1: #{tpu_custom_call.1} parent=0
    #allocation2 [shape = 'u8[1024]{0}', space=vmem, size = 0x400, scoped, tag = 'output window, operand 0']
    #allocation3 [shape = 's32[2]{0}', space=sflag, size = 0x8, scoped, tag = 'scoped memory for tpu_custom_call.1']
    %12 = vsyncpa [#allocation3], 0
    %s13 = scalar_lea.sflag [#allocation3], 1
    %14 = vsyncpa %s13, 0
    loop: start=0, step=1, limit=4
    $region2: #{tpu_custom_call.1} parent=1 // loop_pre_header
      _
    $region3: #{tpu_custom_call.1} parent=1 // loop_header
      %s16 = sphi 0, %s20
      %p17 = scmp.ge.s32.totalorder %s16, 4
      %s26 = sphi 0, %s28
      %s29 = sphi 0, %s26
      %s30 = sphi 0, %s29
      %s46 = sphi 0, %s30
      %s52 = sphi 0, %s54
      %s55 = sphi 0, %s52
      %s56 = sphi 0, %s55
      %s72 = sphi 0, %s56
      %s76 = sphi 0, %s76
      %s78 = sphi 0, %s76
      %s79 = sphi 0, %s78
      %s93 = sphi 0, %s79
      %s97 = sphi 0, %s97
      %s99 = sphi 0, %s97
      %s100 = sphi 0, %s99
      %s114 = sphi 0, %s100
      %s118 = sphi 0, %s118
      %s120 = sphi 0, %s118
      %s121 = sphi 0, %s120
      %s135 = sphi 0, %s121
      %s139 = sphi 0, %s139
      %s141 = sphi 0, %s139
      %s142 = sphi 0, %s141
      %s156 = sphi 0, %s142
      %s160 = sphi 0, %s160
      %s162 = sphi 0, %s160
      %s163 = sphi 0, %s162
      %s177 = sphi 0, %s163
      %s183 = sphi 0, %s185
      %s186 = sphi 0, %s183
      %s187 = sphi 0, %s186
      %s203 = sphi 0, %s187
    $region4: #{tpu_custom_call.1} parent=1 // loop_header_branch
      %19 = sbr.rel (%p17) target = $region8
    $region5: #{tpu_custom_call.1} parent=1 // loop_body
      %s21 = ssub.s32 %s16, 1
      %s22 = ssub.s32 %s16, 2
      %s23 = sadd.s32 %s16, 1
      %s24 = ssub.s32 %s16, %s23
      %p25 = scmp.eq.s32.totalorder %s24, 0
      %s27 = sadd.s32 %s26, 1
      %s28 = scalar_select %p25, %s26, %s27
      %p31 = pneg %p25
      %p32 = scmp.eq.s32.totalorder %s16, 1
      %p33 = por %p31, %p32
      %p34 = scmp.ne.s32.totalorder %s26, %s29
      %p35 = scmp.eq.s32.totalorder %s16, 0
      %p36 = por %p34, %p35
      %p37 = scmp.ne.s32.totalorder %s26, %s29
      %p38 = scmp.eq.s32.totalorder %s21, 1
      %p39 = por %p37, %p38
      %p40 = scmp.ne.s32.totalorder %s29, %s30
      %p41 = scmp.eq.s32.totalorder %s21, 0
      %p42 = por %p40, %p41
      %p43 = scmp.ne.s32.totalorder %s29, %s30
      %p44 = scmp.eq.s32.totalorder %s22, 1
      %p45 = por %p43, %p44
      %p47 = scmp.ne.s32.totalorder %s30, %s46
      %p48 = scmp.eq.s32.totalorder %s22, 0
      %p49 = por %p47, %p48
      %s50 = ssub.s32 %s16, %s23
      %p51 = scmp.eq.s32.totalorder %s50, 0
      %s53 = sadd.s32 %s52, 1
      %s54 = scalar_select %p51, %s52, %s53
      %p57 = pneg %p51
      %p58 = scmp.eq.s32.totalorder %s16, 1
      %p59 = por %p57, %p58
      %p60 = scmp.ne.s32.totalorder %s52, %s55
      %p61 = scmp.eq.s32.totalorder %s16, 0
      %p62 = por %p60, %p61
      %p63 = scmp.ne.s32.totalorder %s52, %s55
      %p64 = scmp.eq.s32.totalorder %s21, 1
      %p65 = por %p63, %p64
      %p66 = scmp.ne.s32.totalorder %s55, %s56
      %p67 = scmp.eq.s32.totalorder %s21, 0
      %p68 = por %p66, %p67
      %p69 = scmp.ne.s32.totalorder %s55, %s56
      %p70 = scmp.eq.s32.totalorder %s22, 1
      %p71 = por %p69, %p70
      %p73 = scmp.ne.s32.totalorder %s56, %s72
      %p74 = scmp.eq.s32.totalorder %s22, 0
      %p75 = por %p73, %p74
      %s77 = sadd.s32 %s76, 1
      %p80 = scmp.eq.s32.totalorder %s16, 1
      %p81 = scmp.ne.s32.totalorder %s76, %s78
      %p82 = scmp.eq.s32.totalorder %s16, 0
      %p83 = por %p81, %p82
      %p84 = scmp.ne.s32.totalorder %s76, %s78
      %p85 = scmp.eq.s32.totalorder %s21, 1
      %p86 = por %p84, %p85
      %p87 = scmp.ne.s32.totalorder %s78, %s79
      %p88 = scmp.eq.s32.totalorder %s21, 0
      %p89 = por %p87, %p88
      %p90 = scmp.ne.s32.totalorder %s78, %s79
      %p91 = scmp.eq.s32.totalorder %s22, 1
      %p92 = por %p90, %p91
      %p94 = scmp.ne.s32.totalorder %s79, %s93
      %p95 = scmp.eq.s32.totalorder %s22, 0
      %p96 = por %p94, %p95
      %s98 = sadd.s32 %s97, 1
      %p101 = scmp.eq.s32.totalorder %s16, 1
      %p102 = scmp.ne.s32.totalorder %s97, %s99
      %p103 = scmp.eq.s32.totalorder %s16, 0
      %p104 = por %p102, %p103
      %p105 = scmp.ne.s32.totalorder %s97, %s99
      %p106 = scmp.eq.s32.totalorder %s21, 1
      %p107 = por %p105, %p106
      %p108 = scmp.ne.s32.totalorder %s99, %s100
      %p109 = scmp.eq.s32.totalorder %s21, 0
      %p110 = por %p108, %p109
      %p111 = scmp.ne.s32.totalorder %s99, %s100
      %p112 = scmp.eq.s32.totalorder %s22, 1
      %p113 = por %p111, %p112
      %p115 = scmp.ne.s32.totalorder %s100, %s114
      %p116 = scmp.eq.s32.totalorder %s22, 0
      %p117 = por %p115, %p116
      %s119 = sadd.s32 %s118, 1
      %p122 = scmp.eq.s32.totalorder %s16, 1
      %p123 = scmp.ne.s32.totalorder %s118, %s120
      %p124 = scmp.eq.s32.totalorder %s16, 0
      %p125 = por %p123, %p124
      %p126 = scmp.ne.s32.totalorder %s118, %s120
      %p127 = scmp.eq.s32.totalorder %s21, 1
      %p128 = por %p126, %p127
      %p129 = scmp.ne.s32.totalorder %s120, %s121
      %p130 = scmp.eq.s32.totalorder %s21, 0
      %p131 = por %p129, %p130
      %p132 = scmp.ne.s32.totalorder %s120, %s121
      %p133 = scmp.eq.s32.totalorder %s22, 1
      %p134 = por %p132, %p133
      %p136 = scmp.ne.s32.totalorder %s121, %s135
      %p137 = scmp.eq.s32.totalorder %s22, 0
      %p138 = por %p136, %p137
      %s140 = sadd.s32 %s139, 1
      %p143 = scmp.eq.s32.totalorder %s16, 1
      %p144 = scmp.ne.s32.totalorder %s139, %s141
      %p145 = scmp.eq.s32.totalorder %s16, 0
      %p146 = por %p144, %p145
      %p147 = scmp.ne.s32.totalorder %s139, %s141
      %p148 = scmp.eq.s32.totalorder %s21, 1
      %p149 = por %p147, %p148
      %p150 = scmp.ne.s32.totalorder %s141, %s142
      %p151 = scmp.eq.s32.totalorder %s21, 0
      %p152 = por %p150, %p151
      %p153 = scmp.ne.s32.totalorder %s141, %s142
      %p154 = scmp.eq.s32.totalorder %s22, 1
      %p155 = por %p153, %p154
      %p157 = scmp.ne.s32.totalorder %s142, %s156
      %p158 = scmp.eq.s32.totalorder %s22, 0
      %p159 = por %p157, %p158
      %s161 = sadd.s32 %s160, 1
      %p164 = scmp.eq.s32.totalorder %s16, 1
      %p165 = scmp.ne.s32.totalorder %s160, %s162
      %p166 = scmp.eq.s32.totalorder %s16, 0
      %p167 = por %p165, %p166
      %p168 = scmp.ne.s32.totalorder %s160, %s162
      %p169 = scmp.eq.s32.totalorder %s21, 1
      %p170 = por %p168, %p169
      %p171 = scmp.ne.s32.totalorder %s162, %s163
      %p172 = scmp.eq.s32.totalorder %s21, 0
      %p173 = por %p171, %p172
      %p174 = scmp.ne.s32.totalorder %s162, %s163
      %p175 = scmp.eq.s32.totalorder %s22, 1
      %p176 = por %p174, %p175
      %p178 = scmp.ne.s32.totalorder %s163, %s177
      %p179 = scmp.eq.s32.totalorder %s22, 0
      %p180 = por %p178, %p179
      %s181 = ssub.s32 %s16, %s23
      %p182 = scmp.eq.s32.totalorder %s181, 0
      %s184 = sadd.s32 %s183, 1
      %s185 = scalar_select %p182, %s183, %s184
      %p188 = pneg %p182
      %p189 = scmp.eq.s32.totalorder %s16, 1
      %p190 = por %p188, %p189
      %p191 = scmp.ne.s32.totalorder %s183, %s186
      %p192 = scmp.eq.s32.totalorder %s16, 0
      %p193 = por %p191, %p192
      %p194 = scmp.ne.s32.totalorder %s183, %s186
      %p195 = scmp.eq.s32.totalorder %s21, 1
      %p196 = por %p194, %p195
      %p197 = scmp.ne.s32.totalorder %s186, %s187
      %p198 = scmp.eq.s32.totalorder %s21, 0
      %p199 = por %p197, %p198
      %p200 = scmp.ne.s32.totalorder %s186, %s187
      %p201 = scmp.eq.s32.totalorder %s22, 1
      %p202 = por %p200, %p201
      %p204 = scmp.ne.s32.totalorder %s187, %s203
      %p205 = scmp.eq.s32.totalorder %s22, 0
      %p206 = por %p204, %p205
      %p207 = scmp.le.s32.totalorder 1, %s16
      %p208 = scmp.lt.s32.totalorder %s16, 3
      %p209 = pnand %p207, %p208
      %p210 = pneg %p209
      // Predicated region
      $region9: #{tpu_custom_call.1} parent=5 // pred_check
        _
      $region10: #{tpu_custom_call.1} parent=5 // pred_check_branch
        %212 = sbr.rel (%p209) target = $region12
      $region11: #{tpu_custom_call.1} parent=5 // pred_region
        %s213 = ssub.s32 %s16, 1
        // Predicated region
        $region13: #{tpu_custom_call.1} parent=11 // pred_check
          %p214 = pneg %p89
        $region14: #{tpu_custom_call.1} parent=11 // pred_check_branch
          %216 = sbr.rel (%p214) target = $region16
        $region15: #{tpu_custom_call.1} parent=11 // pred_region
          _
        $region16: #{tpu_custom_call.1} parent=11 // pred_fallthru
          _
        // Predicated region
        $region17: #{tpu_custom_call.1} parent=11 // pred_check
          %p217 = pneg %p110
        $region18: #{tpu_custom_call.1} parent=11 // pred_check_branch
          %219 = sbr.rel (%p217) target = $region20
        $region19: #{tpu_custom_call.1} parent=11 // pred_region
          _
        $region20: #{tpu_custom_call.1} parent=11 // pred_fallthru
          _
        // Predicated region
        $region21: #{tpu_custom_call.1} parent=11 // pred_check
          %p220 = pneg %p131
        $region22: #{tpu_custom_call.1} parent=11 // pred_check_branch
          %222 = sbr.rel (%p220) target = $region24
        $region23: #{tpu_custom_call.1} parent=11 // pred_region
          _
        $region24: #{tpu_custom_call.1} parent=11 // pred_fallthru
          _
        // Predicated region
        $region25: #{tpu_custom_call.1} parent=11 // pred_check
          %p223 = pneg %p152
        $region26: #{tpu_custom_call.1} parent=11 // pred_check_branch
          %225 = sbr.rel (%p223) target = $region28
        $region27: #{tpu_custom_call.1} parent=11 // pred_region
          _
        $region28: #{tpu_custom_call.1} parent=11 // pred_fallthru
          _
        // Predicated region
        $region29: #{tpu_custom_call.1} parent=11 // pred_check
          %p226 = pneg %p173
        $region30: #{tpu_custom_call.1} parent=11 // pred_check_branch
          %228 = sbr.rel (%p226) target = $region32
        $region31: #{tpu_custom_call.1} parent=11 // pred_region
          _
        $region32: #{tpu_custom_call.1} parent=11 // pred_fallthru
          _
      $region12: #{tpu_custom_call.1} parent=5 // pred_fallthru
        _
      %p229 = scmp.lt.s32.totalorder %s16, 2
      // Predicated region
      $region33: #{tpu_custom_call.1} parent=5 // pred_check
        %p230 = pneg %p229
      $region34: #{tpu_custom_call.1} parent=5 // pred_check_branch
        %232 = sbr.rel (%p230) target = $region36
      $region35: #{tpu_custom_call.1} parent=5 // pred_region
        // Predicated region
        $region37: #{tpu_custom_call.1} parent=35 // pred_check
          %p233 = pneg %p36
        $region38: #{tpu_custom_call.1} parent=35 // pred_check_branch
          %235 = sbr.rel (%p233) target = $region40
        $region39: #{tpu_custom_call.1} parent=35 // pred_region
          %p236 = scmp.lt.s32.totalorder %s16, 1
          %s237 = scalar_select %p236, %s16, 1
          %s238 = smul.addr %s237, 6
          %s239 = smul.addr %s238, 8
          %s240 = scalar_lea.vmem %s0, %s239
        $region40: #{tpu_custom_call.1} parent=35 // pred_fallthru
          _
        // Predicated region
        $region41: #{tpu_custom_call.1} parent=35 // pred_check
          %p241 = pneg %p62
        $region42: #{tpu_custom_call.1} parent=35 // pred_check_branch
          %243 = sbr.rel (%p241) target = $region44
        $region43: #{tpu_custom_call.1} parent=35 // pred_region
          %p244 = scmp.lt.s32.totalorder %s16, 1
          %s245 = scalar_select %p244, %s16, 1
          %s246 = smul.addr %s245, 6
          %s247 = smul.addr %s246, 8
          %s248 = scalar_lea.vmem %s1, %s247
        $region44: #{tpu_custom_call.1} parent=35 // pred_fallthru
          _
      $region36: #{tpu_custom_call.1} parent=5 // pred_fallthru
        _
      %p249 = scmp.le.s32.totalorder 1, %s16
      %p250 = scmp.lt.s32.totalorder %s16, 3
      %p251 = pnand %p249, %p250
      %p252 = pneg %p251
      // Predicated region
      $region45: #{tpu_custom_call.1} parent=5 // pred_check
        _
      $region46: #{tpu_custom_call.1} parent=5 // pred_check_branch
        %254 = sbr.rel (%p251) target = $region48
      $region47: #{tpu_custom_call.1} parent=5 // pred_region
        %s255 = ssub.s32 %s16, 1
        %p256 = scmp.lt.s32.totalorder %s21, 1
        %s257 = scalar_select %p256, %s21, 1
        %s258 = smul.addr %s257, 6
        %s259 = smul.addr %s258, 8
        %s260 = scalar_lea.vmem %s0, %s259
        %p261 = pneg %p42
        %p262 = pneg %p39
        %p263 = scmp.lt.s32.totalorder %s21, 1
        %s264 = scalar_select %p263, %s21, 1
        %s265 = smul.addr %s264, 6
        %s266 = smul.addr %s265, 8
        %s267 = scalar_lea.vmem %s1, %s266
        %p268 = pneg %p68
        %p269 = pneg %p65
        %p270 = pneg %p89
        %p271 = pneg %p86
        %p272 = pneg %p110
        %p273 = pneg %p107
        %p274 = pneg %p131
        %p275 = pneg %p128
        %p276 = pneg %p152
        %p277 = pneg %p149
        %p278 = pneg %p173
        %p279 = pneg %p170
        %p280 = pneg %p199
        %p281 = pneg %p196
        %s282 = sand.u32 %s186, 1
        %s283 = scalar_lea.sflag [#allocation3], %s282
        %s284 = sand.u32 %s186, 1
        %s285 = scalar_lea.vmem [#allocation2], %s284
        %p286 = scmp.lt.s32.totalorder %s21, 1
        %s287 = scalar_select %p286, %s21, 1
        %s288 = smul.addr %s287, 6
        %s289 = smul.addr %s288, 8
        %s290 = scalar_lea.vmem %s0, %s289
        %p291 = scmp.lt.s32.totalorder %s21, 1
        %s292 = scalar_select %p291, %s21, 1
        %s293 = smul.addr %s292, 6
        %s294 = smul.addr %s293, 8
        %s295 = scalar_lea.vmem %s1, %s294
        %v297 = vld [vmem:[%s290] sm:$0xff]
        %v298 = vld [vmem:[%s290 + $0x8] sm:$0xff]
        %v299 = vld [vmem:[%s290 + $0x10] sm:$0xff]
        %v300 = vld [vmem:[%s290 + $0x18] sm:$0xff]
        %v301 = vld [vmem:[%s290 + $0x20] sm:$0xff]
        %v302 = vld [vmem:[%s290 + $0x28] sm:$0xff]
        %v303 = vld [vmem:[%s295] sm:$0xff]
        %v304 = vld [vmem:[%s295 + $0x8] sm:$0xff]
        %v305 = vld [vmem:[%s295 + $0x10] sm:$0xff]
        %v306 = vld [vmem:[%s295 + $0x18] sm:$0xff]
        %v307 = vld [vmem:[%s295 + $0x20] sm:$0xff]
        %v308 = vld [vmem:[%s295 + $0x28] sm:$0xff]
        %vm309 = vcmp.gt.s32.totalorder %v303, 0
        %vm310 = vcmp.gt.s32.totalorder %v304, 0
        %vm311 = vcmp.gt.s32.totalorder %v305, 0
        %vm312 = vcmp.gt.s32.totalorder %v306, 0
        %vm313 = vcmp.gt.s32.totalorder %v307, 0
        %vm314 = vcmp.gt.s32.totalorder %v308, 0
        %v315 = vlaneseq
        %v316 = vshrl.u32 %v315, 7
        %v317 = vadd.s32 %v316, 8
        %v318 = vadd.s32 %v316, 16
        %v319 = vadd.s32 %v316, 24
        %v320 = vadd.s32 %v316, 32
        %v321 = vadd.s32 %v316, 40
        %v322 = vlaneseq
        %v323 = vand.u32 %v322, 127
        %vm324 = vcmp.le.s32.totalorder %v323, %v316
        %vm325 = vcmp.le.s32.totalorder %v323, %v317
        %vm326 = vcmp.le.s32.totalorder %v323, %v318
        %vm327 = vcmp.le.s32.totalorder %v323, %v319
        %vm328 = vcmp.le.s32.totalorder %v323, %v320
        %vm329 = vcmp.le.s32.totalorder %v323, %v321
        %v330 = vsel %vm324, 0.0, -1e+30
        %v331 = vsel %vm325, 0.0, -1e+30
        %v332 = vsel %vm326, 0.0, -1e+30
        %v333 = vsel %vm327, 0.0, -1e+30
        %v334 = vsel %vm328, 0.0, -1e+30
        %v335 = vsel %vm329, 0.0, -1e+30
        %v336 = vadd.s32 %v323, 128
        %v337 = vadd.s32 %v323, 256
        %v338 = vadd.s32 %v323, 384
        %vm339 = vcmp.lt.s32.totalorder %v323, 0
        %v340 = vsub.s32 0, %v323
        %v341 = vsel %vm339, %v340, %v323
        %v342 = vshrl.u32 %v341, 1
        %v343 = vand.u32 %v341, 1
        %v344 = vsub.s32 0, %v343
        %v345 = vsel %vm339, %v344, %v343
        %vm346 = vcmp.lt.s32.totalorder %v336, 0
        %v347 = vsub.s32 0, %v336
        %v348 = vsel %vm346, %v347, %v336
        %v349 = vshrl.u32 %v348, 1
        %v350 = vand.u32 %v348, 1
        %v351 = vsub.s32 0, %v350
        %v352 = vsel %vm346, %v351, %v350
        %vm353 = vcmp.lt.s32.totalorder %v337, 0
        %v354 = vsub.s32 0, %v337
        %v355 = vsel %vm353, %v354, %v337
        %v356 = vshrl.u32 %v355, 1
        %v357 = vand.u32 %v355, 1
        %v358 = vsub.s32 0, %v357
        %v359 = vsel %vm353, %v358, %v357
        %vm360 = vcmp.lt.s32.totalorder %v338, 0
        %v361 = vsub.s32 0, %v338
        %v362 = vsel %vm360, %v361, %v338
        %v363 = vshrl.u32 %v362, 1
        %v364 = vand.u32 %v362, 1
        %v365 = vsub.s32 0, %v364
        %v366 = vsel %vm360, %v365, %v364
        %vm367 = vcmp.ne.s32.totalorder %v345, 0
        %vm368 = vcmp.ne.s32.totalorder %v352, 0
        %vm369 = vcmp.ne.s32.totalorder %v359, 0
        %vm370 = vcmp.ne.s32.totalorder %v366, 0
        %vm371 = vcmp.lt.s32.totalorder %v345, 0
        %vm372 = vcmp.lt.s32.totalorder %v352, 0
        %vm373 = vcmp.lt.s32.totalorder %v359, 0
        %vm374 = vcmp.lt.s32.totalorder %v366, 0
        %vm375 = vmand %vm371, %vm367
        %vm376 = vmand %vm372, %vm368
        %vm377 = vmand %vm373, %vm369
        %vm378 = vmand %vm374, %vm370
        %v379 = vadd.s32 %v345, 2
        %v380 = vadd.s32 %v352, 2
        %v381 = vadd.s32 %v359, 2
        %v382 = vadd.s32 %v366, 2
        %v383 = vsel %vm375, %v379, %v345
        %v384 = vsel %vm376, %v380, %v352
        %v385 = vsel %vm377, %v381, %v359
        %v386 = vsel %vm378, %v382, %v366
        %vm387 = vcmp.eq.s32.totalorder %v383, 0
        %vm388 = vcmp.eq.s32.totalorder %v384, 0
        %vm389 = vcmp.eq.s32.totalorder %v385, 0
        %vm390 = vcmp.eq.s32.totalorder %v386, 0
        %v391 = vld [vmem:[%s5] sm:$0x1]
        %v392 = vmul.f32 %v297, %v297
        %v393 = vmul.f32 %v298, %v298
        %v394 = vmul.f32 %v299, %v299
        %v395 = vmul.f32 %v300, %v300
        %v396 = vmul.f32 %v301, %v301
        %v397 = vmul.f32 %v302, %v302
        %vm398 = vcmask 261120
        %v399 = vsel %vm398, %v392, 0.0
        %400 = vadd.xlane.f32.xlu0 %v399
        %v401 = vpop.xlane.xlu0 %400
        %v402 = vsel %vm398, %v393, 0.0
        %403 = vadd.xlane.f32.xlu0 %v402
        %v404 = vpop.xlane.xlu0 %403
        %v405 = vsel %vm398, %v394, 0.0
        %406 = vadd.xlane.f32.xlu0 %v405
        %v407 = vpop.xlane.xlu0 %406
        %v408 = vsel %vm398, %v395, 0.0
        %409 = vadd.xlane.f32.xlu0 %v408
        %v410 = vpop.xlane.xlu0 %409
        %v411 = vsel %vm398, %v396, 0.0
        %412 = vadd.xlane.f32.xlu0 %v411
        %v413 = vpop.xlane.xlu0 %412
        %v414 = vsel %vm398, %v397, 0.0
        %415 = vadd.xlane.f32.xlu0 %v414
        %v416 = vpop.xlane.xlu0 %415
        %v417 = vrcp.pop 32.0
        %v418 = vmul.f32 %v401, %v417
        %v419 = vmul.f32 %v404, %v417
        %v420 = vmul.f32 %v407, %v417
        %v421 = vmul.f32 %v410, %v417
        %v422 = vmul.f32 %v413, %v417
        %v423 = vmul.f32 %v416, %v417
        %v424 = vadd.f32 %v418, 1e-05
        %v425 = vadd.f32 %v419, 1e-05
        %v426 = vadd.f32 %v420, 1e-05
        %v427 = vadd.f32 %v421, 1e-05
        %v428 = vadd.f32 %v422, 1e-05
        %v429 = vadd.f32 %v423, 1e-05
        %v430 = vrsqrt.pop %v424
        %v431 = vrsqrt.pop %v425
        %v432 = vrsqrt.pop %v426
        %v433 = vrsqrt.pop %v427
        %v434 = vrsqrt.pop %v428
        %v435 = vrsqrt.pop %v429
        %v436 = vmul.f32 %v297, %v430
        %v437 = vmul.f32 %v298, %v431
        %v438 = vmul.f32 %v299, %v432
        %v439 = vmul.f32 %v300, %v433
        %v440 = vmul.f32 %v301, %v434
        %v441 = vmul.f32 %v302, %v435
        %v442 = vlaneseq
        %v443 = vshrl.u32 %v442, 7
        %v444 = vsub.s32 0, %v443
        %v445 = vrot.slane %v391, %v444
        %v446 = vmul.f32 %v436, %v445
        %v447 = vmul.f32 %v437, %v445
        %v448 = vmul.f32 %v438, %v445
        %v449 = vmul.f32 %v439, %v445
        %v450 = vmul.f32 %v440, %v445
        %v451 = vmul.f32 %v441, %v445
        %v452 = vpack.c.bf16 %v447, %v446
        %v453 = vpack.c.bf16 %v449, %v448
        %v454 = vpack.c.bf16 %v451, %v450
        %v455 = vld [vmem:[%s3] sm:$0xff]
        %v456 = vld [vmem:[%s3 + $0x8] sm:$0xff]
        %v457 = vld [vmem:[%s3 + $0x48] sm:$0xff]
        %v458 = vld [vmem:[%s3 + $0x50] sm:$0xff]
        %v459 = vld [vmem:[%s3 + $0x90] sm:$0xff]
        %v460 = vld [vmem:[%s3 + $0x98] sm:$0xff]
        %v461 = vld [vmem:[%s3 + $0xd8] sm:$0xff]
        %v462 = vld [vmem:[%s3 + $0xe0] sm:$0xff]
        %v471 = vunpack.c.l.b16 %v455
        %v472 = vunpack.c.h.b16 %v455
        %v473 = vunpack.c.l.b16 %v456
        %v474 = vunpack.c.h.b16 %v456
        %v475 = vunpack.c.l.b16 %v457
        %v476 = vunpack.c.h.b16 %v457
        %v477 = vunpack.c.l.b16 %v458
        %v478 = vunpack.c.h.b16 %v458
        %v479 = vunpack.c.l.b16 %v459
        %v480 = vunpack.c.h.b16 %v459
        %v481 = vunpack.c.l.b16 %v460
        %v482 = vunpack.c.h.b16 %v460
        %v483 = vunpack.c.l.b16 %v461
        %v484 = vunpack.c.h.b16 %v461
        %v485 = vunpack.c.l.b16 %v462
        %v486 = vunpack.c.h.b16 %v462
        %v487 = vpack.c.b16 %v475, %v471
        %v488 = vpack.c.b16 %v476, %v472
        %v489 = vpack.c.b16 %v477, %v473
        %v490 = vpack.c.b16 %v478, %v474
        %v491 = vpack.c.b16 %v483, %v479
        %v492 = vpack.c.b16 %v484, %v480
        %v493 = vpack.c.b16 %v485, %v481
        %v494 = vpack.c.b16 %v486, %v482
        %v504 = vsel %vm398, %v452, 0
        %v507 = vsel %vm398, %v453, 0
        %v510 = vsel %vm398, %v454, 0
        %512 = vmatprep.subr.bf16.mxu0 %v488
        %513 = vmatpush1.bf16.msra.mxu0 %v487
        %514 = vmatprep.subr.bf16.mxu0 %v492
        %515 = vmatpush1.bf16.msra.mxu0 %v491
        %516 = vmatprep.subr.bf16.mxu0 0
        %517 = vmatpush1.bf16.msra.mxu0 0
        %518 = vmatprep.subr.bf16.mxu0 0
        %519 = vmatpush1.bf16.msra.mxu0 0
        %520 = vmatprep.subr.bf16.mxu0 0
        %521 = vmatpush1.bf16.msra.mxu0 0
        %522 = vmatprep.subr.bf16.mxu0 0
        %523 = vmatpush1.bf16.msra.mxu0 0
        %524 = vmatprep.subr.bf16.mxu0 0
        %525 = vmatpush1.bf16.msra.mxu0 0
        %526 = vmatprep.subr.bf16.mxu0 0
        %527 = vmatpush1.bf16.msra.mxu0 0
        %528 = vmatprep.subr.bf16.mxu0 0
        %529 = vmatpush1.bf16.msra.mxu0 0
        %530 = vmatprep.subr.bf16.mxu0 0
        %531 = vmatpush1.bf16.msra.mxu0 0
        %532 = vmatprep.subr.bf16.mxu0 0
        %533 = vmatpush1.bf16.msra.mxu0 0
        %534 = vmatprep.subr.bf16.mxu0 0
        %535 = vmatpush1.bf16.msra.mxu0 0
        %536 = vmatprep.subr.bf16.mxu0 0
        %537 = vmatpush1.bf16.msra.mxu0 0
        %538 = vmatprep.subr.bf16.mxu0 0
        %539 = vmatpush1.bf16.msra.mxu0 0
        %540 = vmatprep.subr.bf16.mxu0 0
        %541 = vmatpush1.bf16.msra.mxu0 0
        %542 = vmatprep.subr.bf16.mxu0 0
        %543 = vmatpush1.bf16.msra.mxu0 0
        %544 = vmatprep.mubr.bf16.mxu0 0
        %545 = vmatmul.mubr.bf16.gmra.mrb[0].mxu0 %v504
        %v546 = vpop.f32.mrb[0].mxu0
        %v547 = vadd.f32 0.0, %v546
        %v548 = vpop.f32.mrb[0].mxu0
        %v549 = vadd.f32 0.0, %v548
        %v550 = vpop.f32.mrb[0].mxu0
        %v551 = vadd.f32 0.0, %v550
        %v552 = vpop.f32.mrb[0].mxu0
        %v553 = vadd.f32 0.0, %v552
        %554 = vmatprep.mubr.bf16.mxu0 0
        %555 = vmatmul.mubr.bf16.gmra.mrb[0].mxu0 %v507
        %v556 = vpop.f32.mrb[0].mxu0
        %v557 = vadd.f32 0.0, %v556
        %v558 = vpop.f32.mrb[0].mxu0
        %v559 = vadd.f32 0.0, %v558
        %v560 = vpop.f32.mrb[0].mxu0
        %v561 = vadd.f32 0.0, %v560
        %v562 = vpop.f32.mrb[0].mxu0
        %v563 = vadd.f32 0.0, %v562
        %564 = vmatprep.mubr.bf16.mxu0 0
        %565 = vmatmul.mubr.bf16.gmra.mrb[0].mxu0 %v510
        %v566 = vpop.f32.mrb[0].mxu0
        %v567 = vadd.f32 0.0, %v566
        %v568 = vpop.f32.mrb[0].mxu0
        %v569 = vadd.f32 0.0, %v568
        %v570 = vpop.f32.mrb[0].mxu0
        %v571 = vadd.f32 0.0, %v570
        %v572 = vpop.f32.mrb[0].mxu0
        %v573 = vadd.f32 0.0, %v572
        %574 = vdwg.mxu0
        %575 = vmatprep.subr.bf16.mxu0 %v490
        %576 = vmatpush1.bf16.msra.mxu0 %v489
        %577 = vmatprep.subr.bf16.mxu0 %v494
        %578 = vmatpush1.bf16.msra.mxu0 %v493
        %579 = vmatprep.subr.bf16.mxu0 0
        %580 = vmatpush1.bf16.msra.mxu0 0
        %581 = vmatprep.subr.bf16.mxu0 0
        %582 = vmatpush1.bf16.msra.mxu0 0
        %583 = vmatprep.subr.bf16.mxu0 0
        %584 = vmatpush1.bf16.msra.mxu0 0
        %585 = vmatprep.subr.bf16.mxu0 0
        %586 = vmatpush1.bf16.msra.mxu0 0
        %587 = vmatprep.subr.bf16.mxu0 0
        %588 = vmatpush1.bf16.msra.mxu0 0
        %589 = vmatprep.subr.bf16.mxu0 0
        %590 = vmatpush1.bf16.msra.mxu0 0
        %591 = vmatprep.subr.bf16.mxu0 0
        %592 = vmatpush1.bf16.msra.mxu0 0
        %593 = vmatprep.subr.bf16.mxu0 0
        %594 = vmatpush1.bf16.msra.mxu0 0
        %595 = vmatprep.subr.bf16.mxu0 0
        %596 = vmatpush1.bf16.msra.mxu0 0
        %597 = vmatprep.subr.bf16.mxu0 0
        %598 = vmatpush1.bf16.msra.mxu0 0
        %599 = vmatprep.subr.bf16.mxu0 0
        %600 = vmatpush1.bf16.msra.mxu0 0
        %601 = vmatprep.subr.bf16.mxu0 0
        %602 = vmatpush1.bf16.msra.mxu0 0
        %603 = vmatprep.subr.bf16.mxu0 0
        %604 = vmatpush1.bf16.msra.mxu0 0
        %605 = vmatprep.subr.bf16.mxu0 0
        %606 = vmatpush1.bf16.msra.mxu0 0
        %607 = vmatprep.mubr.bf16.mxu0 0
        %608 = vmatmul.mubr.bf16.gmra.mrb[0].mxu0 %v504
        %v609 = vpop.f32.mrb[0].mxu0
        %v610 = vadd.f32 0.0, %v609
        %v611 = vpop.f32.mrb[0].mxu0
        %v612 = vadd.f32 0.0, %v611
        %v613 = vpop.f32.mrb[0].mxu0
        %v614 = vadd.f32 0.0, %v613
        %v615 = vpop.f32.mrb[0].mxu0
        %v616 = vadd.f32 0.0, %v615
        %617 = vmatprep.mubr.bf16.mxu0 0
        %618 = vmatmul.mubr.bf16.gmra.mrb[0].mxu0 %v507
        %v619 = vpop.f32.mrb[0].mxu0
        %v620 = vadd.f32 0.0, %v619
        %v621 = vpop.f32.mrb[0].mxu0
        %v622 = vadd.f32 0.0, %v621
        %v623 = vpop.f32.mrb[0].mxu0
        %v624 = vadd.f32 0.0, %v623
        %v625 = vpop.f32.mrb[0].mxu0
        %v626 = vadd.f32 0.0, %v625
        %627 = vmatprep.mubr.bf16.mxu0 0
        %628 = vmatmul.mubr.bf16.gmra.mrb[0].mxu0 %v510
        %v629 = vpop.f32.mrb[0].mxu0
        %v630 = vadd.f32 0.0, %v629
        %v631 = vpop.f32.mrb[0].mxu0
        %v632 = vadd.f32 0.0, %v631
        %v633 = vpop.f32.mrb[0].mxu0
        %v634 = vadd.f32 0.0, %v633
        %v635 = vpop.f32.mrb[0].mxu0
        %v636 = vadd.f32 0.0, %v635
        %637 = vdwg.mxu0
        %v638 = vld [vmem:[%s2] sm:$0xff]
        %v639 = vld [vmem:[%s2 + $0x8] sm:$0xff]
        %v640 = vld [vmem:[%s2 + $0x10] sm:$0xff]
        %v641 = vld [vmem:[%s2 + $0x18] sm:$0xff]
        %v642 = vld [vmem:[%s2 + $0x20] sm:$0xff]
        %v643 = vld [vmem:[%s2 + $0x28] sm:$0xff]
        %v644 = vld [vmem:[%s2 + $0x30] sm:$0xff]
        %v645 = vld [vmem:[%s2 + $0x38] sm:$0xff]
        %v646 = vld [vmem:[%s2 + $0x40] sm:$0xff]
        %v647 = vld [vmem:[%s2 + $0x48] sm:$0xff]
        %v648 = vld [vmem:[%s2 + $0x50] sm:$0xff]
        %v649 = vld [vmem:[%s2 + $0x58] sm:$0xff]
        %v650 = vld [vmem:[%s2 + $0x60] sm:$0xff]
        %v651 = vld [vmem:[%s2 + $0x68] sm:$0xff]
        %v652 = vld [vmem:[%s2 + $0x70] sm:$0xff]
        %v653 = vld [vmem:[%s2 + $0x78] sm:$0xff]
        %v654 = vld [vmem:[%s2 + $0x80] sm:$0xff]
        %v655 = vld [vmem:[%s2 + $0x88] sm:$0xff]
        %v656 = vld [vmem:[%s2 + $0x90] sm:$0xff]
        %v657 = vld [vmem:[%s2 + $0x98] sm:$0xff]
        %v658 = vld [vmem:[%s2 + $0xa0] sm:$0xff]
        %v659 = vld [vmem:[%s2 + $0xa8] sm:$0xff]
        %v660 = vld [vmem:[%s2 + $0xb0] sm:$0xff]
        %v661 = vld [vmem:[%s2 + $0xb8] sm:$0xff]
        %s662 = scalar_lea.vmem %s2, 192
        %v663 = vld [vmem:[%s662] sm:$0xff]
        %v664 = vld [vmem:[%s662 + $0x8] sm:$0xff]
        %v665 = vld [vmem:[%s662 + $0x10] sm:$0xff]
        %v666 = vld [vmem:[%s662 + $0x18] sm:$0xff]
        %v667 = vld [vmem:[%s662 + $0x20] sm:$0xff]
        %v668 = vld [vmem:[%s662 + $0x28] sm:$0xff]
        %v669 = vld [vmem:[%s662 + $0x30] sm:$0xff]
        %v670 = vld [vmem:[%s662 + $0x38] sm:$0xff]
        %v671 = vld [vmem:[%s662 + $0x40] sm:$0xff]
        %v672 = vld [vmem:[%s662 + $0x48] sm:$0xff]
        %v673 = vld [vmem:[%s662 + $0x50] sm:$0xff]
        %v674 = vld [vmem:[%s662 + $0x58] sm:$0xff]
        %v675 = vld [vmem:[%s662 + $0x60] sm:$0xff]
        %v676 = vld [vmem:[%s662 + $0x68] sm:$0xff]
        %v677 = vld [vmem:[%s662 + $0x70] sm:$0xff]
        %v678 = vld [vmem:[%s662 + $0x78] sm:$0xff]
        %v679 = vld [vmem:[%s662 + $0x80] sm:$0xff]
        %v680 = vld [vmem:[%s662 + $0x88] sm:$0xff]
        %v681 = vld [vmem:[%s662 + $0x90] sm:$0xff]
        %v682 = vld [vmem:[%s662 + $0x98] sm:$0xff]
        %v683 = vld [vmem:[%s662 + $0xa0] sm:$0xff]
        %v684 = vld [vmem:[%s662 + $0xa8] sm:$0xff]
        %v685 = vld [vmem:[%s662 + $0xb0] sm:$0xff]
        %v686 = vld [vmem:[%s662 + $0xb8] sm:$0xff]
        %687 = vrot.lane.b32.xlu0 %v547, 127
        %v688 = vpop.permute.xlu0 %687
        %689 = vrot.lane.b32.xlu0 %v551, 127
        %v690 = vpop.permute.xlu0 %689
        %691 = vrot.lane.b32.xlu0 %v557, 127
        %v692 = vpop.permute.xlu0 %691
        %693 = vrot.lane.b32.xlu0 %v561, 127
        %v694 = vpop.permute.xlu0 %693
        %695 = vrot.lane.b32.xlu0 %v567, 127
        %v696 = vpop.permute.xlu0 %695
        %697 = vrot.lane.b32.xlu0 %v571, 127
        %v698 = vpop.permute.xlu0 %697
        %699 = vrot.lane.b32.xlu0 %v549, 127
        %v700 = vpop.permute.xlu0 %699
        %701 = vrot.lane.b32.xlu0 %v553, 127
        %v702 = vpop.permute.xlu0 %701
        %703 = vrot.lane.b32.xlu0 %v559, 127
        %v704 = vpop.permute.xlu0 %703
        %705 = vrot.lane.b32.xlu0 %v563, 127
        %v706 = vpop.permute.xlu0 %705
        %707 = vrot.lane.b32.xlu0 %v569, 127
        %v708 = vpop.permute.xlu0 %707
        %709 = vrot.lane.b32.xlu0 %v573, 127
        %v710 = vpop.permute.xlu0 %709
        %711 = vrot.lane.b32.xlu0 %v610, 127
        %v712 = vpop.permute.xlu0 %711
        %713 = vrot.lane.b32.xlu0 %v614, 127
        %v714 = vpop.permute.xlu0 %713
        %715 = vrot.lane.b32.xlu0 %v620, 127
        %v716 = vpop.permute.xlu0 %715
        %717 = vrot.lane.b32.xlu0 %v624, 127
        %v718 = vpop.permute.xlu0 %717
        %719 = vrot.lane.b32.xlu0 %v630, 127
        %v720 = vpop.permute.xlu0 %719
        %721 = vrot.lane.b32.xlu0 %v634, 127
        %v722 = vpop.permute.xlu0 %721
        %723 = vrot.lane.b32.xlu0 %v612, 127
        %v724 = vpop.permute.xlu0 %723
        %725 = vrot.lane.b32.xlu0 %v616, 127
        %v726 = vpop.permute.xlu0 %725
        %727 = vrot.lane.b32.xlu0 %v622, 127
        %v728 = vpop.permute.xlu0 %727
        %729 = vrot.lane.b32.xlu0 %v626, 127
        %v730 = vpop.permute.xlu0 %729
        %731 = vrot.lane.b32.xlu0 %v632, 127
        %v732 = vpop.permute.xlu0 %731
        %733 = vrot.lane.b32.xlu0 %v636, 127
        %v734 = vpop.permute.xlu0 %733
        %vm735 = vcmp.lt.s32.totalorder %v323, 127
        %v736 = vsel %vm735, %v712, %v724
        %v737 = vsel %vm735, %v714, %v726
        %v738 = vsel %vm735, %v716, %v728
        %v739 = vsel %vm735, %v718, %v730
        %v740 = vsel %vm735, %v720, %v732
        %v741 = vsel %vm735, %v722, %v734
        %v742 = vsel %vm735, %v700, %v712
        %v743 = vsel %vm735, %v702, %v714
        %v744 = vsel %vm735, %v704, %v716
        %v745 = vsel %vm735, %v706, %v718
        %v746 = vsel %vm735, %v708, %v720
        %v747 = vsel %vm735, %v710, %v722
        %v748 = vsel %vm735, %v688, %v700
        %v749 = vsel %vm735, %v690, %v702
        %v750 = vsel %vm735, %v692, %v704
        %v751 = vsel %vm735, %v694, %v706
        %v752 = vsel %vm735, %v696, %v708
        %v753 = vsel %vm735, %v698, %v710
        %v754 = vsel %vm735, %v724, %v688
        %v755 = vsel %vm735, %v726, %v690
        %v756 = vsel %vm735, %v728, %v692
        %v757 = vsel %vm735, %v730, %v694
        %v758 = vsel %vm735, %v732, %v696
        %v759 = vsel %vm735, %v734, %v698
        %760 = vrot.lane.b32.xlu0 %v547, 1
        %v761 = vpop.permute.xlu0 %760
        %762 = vrot.lane.b32.xlu0 %v551, 1
        %v763 = vpop.permute.xlu0 %762
        %764 = vrot.lane.b32.xlu0 %v557, 1
        %v765 = vpop.permute.xlu0 %764
        %766 = vrot.lane.b32.xlu0 %v561, 1
        %v767 = vpop.permute.xlu0 %766
        %768 = vrot.lane.b32.xlu0 %v567, 1
        %v769 = vpop.permute.xlu0 %768
        %770 = vrot.lane.b32.xlu0 %v571, 1
        %v771 = vpop.permute.xlu0 %770
        %772 = vrot.lane.b32.xlu0 %v549, 1
        %v773 = vpop.permute.xlu0 %772
        %774 = vrot.lane.b32.xlu0 %v553, 1
        %v775 = vpop.permute.xlu0 %774
        %776 = vrot.lane.b32.xlu0 %v559, 1
        %v777 = vpop.permute.xlu0 %776
        %778 = vrot.lane.b32.xlu0 %v563, 1
        %v779 = vpop.permute.xlu0 %778
        %780 = vrot.lane.b32.xlu0 %v569, 1
        %v781 = vpop.permute.xlu0 %780
        %782 = vrot.lane.b32.xlu0 %v573, 1
        %v783 = vpop.permute.xlu0 %782
        %784 = vrot.lane.b32.xlu0 %v610, 1
        %v785 = vpop.permute.xlu0 %784
        %786 = vrot.lane.b32.xlu0 %v614, 1
        %v787 = vpop.permute.xlu0 %786
        %788 = vrot.lane.b32.xlu0 %v620, 1
        %v789 = vpop.permute.xlu0 %788
        %790 = vrot.lane.b32.xlu0 %v624, 1
        %v791 = vpop.permute.xlu0 %790
        %792 = vrot.lane.b32.xlu0 %v630, 1
        %v793 = vpop.permute.xlu0 %792
        %794 = vrot.lane.b32.xlu0 %v634, 1
        %v795 = vpop.permute.xlu0 %794
        %796 = vrot.lane.b32.xlu0 %v612, 1
        %v797 = vpop.permute.xlu0 %796
        %798 = vrot.lane.b32.xlu0 %v616, 1
        %v799 = vpop.permute.xlu0 %798
        %800 = vrot.lane.b32.xlu0 %v622, 1
        %v801 = vpop.permute.xlu0 %800
        %802 = vrot.lane.b32.xlu0 %v626, 1
        %v803 = vpop.permute.xlu0 %802
        %804 = vrot.lane.b32.xlu0 %v632, 1
        %v805 = vpop.permute.xlu0 %804
        %806 = vrot.lane.b32.xlu0 %v636, 1
        %v807 = vpop.permute.xlu0 %806
        %vm808 = vcmp.lt.s32.totalorder %v323, 1
        %v809 = vsel %vm808, %v785, %v797
        %v810 = vsel %vm808, %v787, %v799
        %v811 = vsel %vm808, %v789, %v801
        %v812 = vsel %vm808, %v791, %v803
        %v813 = vsel %vm808, %v793, %v805
        %v814 = vsel %vm808, %v795, %v807
        %v815 = vsel %vm808, %v773, %v785
        %v816 = vsel %vm808, %v775, %v787
        %v817 = vsel %vm808, %v777, %v789
        %v818 = vsel %vm808, %v779, %v791
        %v819 = vsel %vm808, %v781, %v793
        %v820 = vsel %vm808, %v783, %v795
        %v821 = vsel %vm808, %v761, %v773
        %v822 = vsel %vm808, %v763, %v775
        %v823 = vsel %vm808, %v765, %v777
        %v824 = vsel %vm808, %v767, %v779
        %v825 = vsel %vm808, %v769, %v781
        %v826 = vsel %vm808, %v771, %v783
        %v827 = vsel %vm808, %v797, %v761
        %v828 = vsel %vm808, %v799, %v763
        %v829 = vsel %vm808, %v801, %v765
        %v830 = vsel %vm808, %v803, %v767
        %v831 = vsel %vm808, %v805, %v769
        %v832 = vsel %vm808, %v807, %v771
        %v833 = vsel %vm387, %v748, %v827
        %v834 = vsel %vm388, %v742, %v821
        %v835 = vsel %vm389, %v736, %v815
        %v836 = vsel %vm390, %v754, %v809
        %v837 = vsel %vm387, %v749, %v828
        %v838 = vsel %vm388, %v743, %v822
        %v839 = vsel %vm389, %v737, %v816
        %v840 = vsel %vm390, %v755, %v810
        %v841 = vsel %vm387, %v750, %v829
        %v842 = vsel %vm388, %v744, %v823
        %v843 = vsel %vm389, %v738, %v817
        %v844 = vsel %vm390, %v756, %v811
        %v845 = vsel %vm387, %v751, %v830
        %v846 = vsel %vm388, %v745, %v824
        %v847 = vsel %vm389, %v739, %v818
        %v848 = vsel %vm390, %v757, %v812
        %v849 = vsel %vm387, %v752, %v831
        %v850 = vsel %vm388, %v746, %v825
        %v851 = vsel %vm389, %v740, %v819
        %v852 = vsel %vm390, %v758, %v813
        %v853 = vsel %vm387, %v753, %v832
        %v854 = vsel %vm388, %v747, %v826
        %v855 = vsel %vm389, %v741, %v820
        %v856 = vsel %vm390, %v759, %v814
        %v857 = vmul.f32 %v547, %v638
        %v858 = vmul.f32 %v549, %v639
        %v859 = vmul.f32 %v610, %v640
        %v860 = vmul.f32 %v612, %v641
        %v861 = vmul.f32 %v551, %v642
        %v862 = vmul.f32 %v553, %v643
        %v863 = vmul.f32 %v614, %v644
        %v864 = vmul.f32 %v616, %v645
        %v865 = vmul.f32 %v557, %v646
        %v866 = vmul.f32 %v559, %v647
        %v867 = vmul.f32 %v620, %v648
        %v868 = vmul.f32 %v622, %v649
        %v869 = vmul.f32 %v561, %v650
        %v870 = vmul.f32 %v563, %v651
        %v871 = vmul.f32 %v624, %v652
        %v872 = vmul.f32 %v626, %v653
        %v873 = vmul.f32 %v567, %v654
        %v874 = vmul.f32 %v569, %v655
        %v875 = vmul.f32 %v630, %v656
        %v876 = vmul.f32 %v632, %v657
        %v877 = vmul.f32 %v571, %v658
        %v878 = vmul.f32 %v573, %v659
        %v879 = vmul.f32 %v634, %v660
        %v880 = vmul.f32 %v636, %v661
        %v881 = vmul.f32 %v833, %v663
        %v882 = vmul.f32 %v834, %v664
        %v883 = vmul.f32 %v835, %v665
        %v884 = vmul.f32 %v836, %v666
        %v885 = vmul.f32 %v837, %v667
        %v886 = vmul.f32 %v838, %v668
        %v887 = vmul.f32 %v839, %v669
        %v888 = vmul.f32 %v840, %v670
        %v889 = vmul.f32 %v841, %v671
        %v890 = vmul.f32 %v842, %v672
        %v891 = vmul.f32 %v843, %v673
        %v892 = vmul.f32 %v844, %v674
        %v893 = vmul.f32 %v845, %v675
        %v894 = vmul.f32 %v846, %v676
        %v895 = vmul.f32 %v847, %v677
        %v896 = vmul.f32 %v848, %v678
        %v897 = vmul.f32 %v849, %v679
        %v898 = vmul.f32 %v850, %v680
        %v899 = vmul.f32 %v851, %v681
        %v900 = vmul.f32 %v852, %v682
        %v901 = vmul.f32 %v853, %v683
        %v902 = vmul.f32 %v854, %v684
        %v903 = vmul.f32 %v855, %v685
        %v904 = vmul.f32 %v856, %v686
        %v905 = vadd.f32 %v857, %v881
        %v906 = vadd.f32 %v858, %v882
        %v907 = vadd.f32 %v859, %v883
        %v908 = vadd.f32 %v860, %v884
        %v909 = vadd.f32 %v861, %v885
        %v910 = vadd.f32 %v862, %v886
        %v911 = vadd.f32 %v863, %v887
        %v912 = vadd.f32 %v864, %v888
        %v913 = vadd.f32 %v865, %v889
        %v914 = vadd.f32 %v866, %v890
        %v915 = vadd.f32 %v867, %v891
        %v916 = vadd.f32 %v868, %v892
        %v917 = vadd.f32 %v869, %v893
        %v918 = vadd.f32 %v870, %v894
        %v919 = vadd.f32 %v871, %v895
        %v920 = vadd.f32 %v872, %v896
        %v921 = vadd.f32 %v873, %v897
        %v922 = vadd.f32 %v874, %v898
        %v923 = vadd.f32 %v875, %v899
        %v924 = vadd.f32 %v876, %v900
        %v925 = vadd.f32 %v877, %v901
        %v926 = vadd.f32 %v878, %v902
        %v927 = vadd.f32 %v879, %v903
        %v928 = vadd.f32 %v880, %v904
        %v929 = vld [vmem:[%s3 + $0x10] sm:$0xff]
        %v930 = vld [vmem:[%s3 + $0x18] sm:$0xff]
        %v931 = vld [vmem:[%s3 + $0x58] sm:$0xff]
        %v932 = vld [vmem:[%s3 + $0x60] sm:$0xff]
        %v933 = vld [vmem:[%s3 + $0xa0] sm:$0xff]
        %v934 = vld [vmem:[%s3 + $0xa8] sm:$0xff]
        %v935 = vld [vmem:[%s3 + $0xe8] sm:$0xff]
        %v936 = vld [vmem:[%s3 + $0xf0] sm:$0xff]
        %v945 = vunpack.c.l.b16 %v929
        %v946 = vunpack.c.h.b16 %v929
        %v947 = vunpack.c.l.b16 %v930
        %v948 = vunpack.c.h.b16 %v930
        %v949 = vunpack.c.l.b16 %v931
        %v950 = vunpack.c.h.b16 %v931
        %v951 = vunpack.c.l.b16 %v932
        %v952 = vunpack.c.h.b16 %v932
        %v953 = vunpack.c.l.b16 %v933
        %v954 = vunpack.c.h.b16 %v933
        %v955 = vunpack.c.l.b16 %v934
        %v956 = vunpack.c.h.b16 %v934
        %v957 = vunpack.c.l.b16 %v935
        %v958 = vunpack.c.h.b16 %v935
        %v959 = vunpack.c.l.b16 %v936
        %v960 = vunpack.c.h.b16 %v936
        %v961 = vpack.c.b16 %v949, %v945
        %v962 = vpack.c.b16 %v950, %v946
        %v963 = vpack.c.b16 %v951, %v947
        %v964 = vpack.c.b16 %v952, %v948
        %v965 = vpack.c.b16 %v957, %v953
        %v966 = vpack.c.b16 %v958, %v954
        %v967 = vpack.c.b16 %v959, %v955
        %v968 = vpack.c.b16 %v960, %v956
        %977 = vmatprep.subr.bf16.mxu0 %v962
        %978 = vmatpush1.bf16.msra.mxu0 %v961
        %979 = vmatprep.subr.bf16.mxu0 %v966
        %980 = vmatpush1.bf16.msra.mxu0 %v965
        %981 = vmatprep.subr.bf16.mxu0 0
        %982 = vmatpush1.bf16.msra.mxu0 0
        %983 = vmatprep.subr.bf16.mxu0 0
        %984 = vmatpush1.bf16.msra.mxu0 0
        %985 = vmatprep.subr.bf16.mxu0 0
        %986 = vmatpush1.bf16.msra.mxu0 0
        %987 = vmatprep.subr.bf16.mxu0 0
        %988 = vmatpush1.bf16.msra.mxu0 0
        %989 = vmatprep.subr.bf16.mxu0 0
        %990 = vmatpush1.bf16.msra.mxu0 0
        %991 = vmatprep.subr.bf16.mxu0 0
        %992 = vmatpush1.bf16.msra.mxu0 0
        %993 = vmatprep.subr.bf16.mxu0 0
        %994 = vmatpush1.bf16.msra.mxu0 0
        %995 = vmatprep.subr.bf16.mxu0 0
        %996 = vmatpush1.bf16.msra.mxu0 0
        %997 = vmatprep.subr.bf16.mxu0 0
        %998 = vmatpush1.bf16.msra.mxu0 0
        %999 = vmatprep.subr.bf16.mxu0 0
        %1000 = vmatpush1.bf16.msra.mxu0 0
        %1001 = vmatprep.subr.bf16.mxu0 0
        %1002 = vmatpush1.bf16.msra.mxu0 0
        %1003 = vmatprep.subr.bf16.mxu0 0
        %1004 = vmatpush1.bf16.msra.mxu0 0
        %1005 = vmatprep.subr.bf16.mxu0 0
        %1006 = vmatpush1.bf16.msra.mxu0 0
        %1007 = vmatprep.subr.bf16.mxu0 0
        %1008 = vmatpush1.bf16.msra.mxu0 0
        %1009 = vmatprep.mubr.bf16.mxu0 0
        %1010 = vmatmul.mubr.bf16.gmra.mrb[0].mxu0 %v504
        %v1011 = vpop.f32.mrb[0].mxu0
        %v1012 = vadd.f32 0.0, %v1011
        %v1013 = vpop.f32.mrb[0].mxu0
        %v1014 = vadd.f32 0.0, %v1013
        %v1015 = vpop.f32.mrb[0].mxu0
        %v1016 = vadd.f32 0.0, %v1015
        %v1017 = vpop.f32.mrb[0].mxu0
        %v1018 = vadd.f32 0.0, %v1017
        %1019 = vmatprep.mubr.bf16.mxu0 0
        %1020 = vmatmul.mubr.bf16.gmra.mrb[0].mxu0 %v507
        %v1021 = vpop.f32.mrb[0].mxu0
        %v1022 = vadd.f32 0.0, %v1021
        %v1023 = vpop.f32.mrb[0].mxu0
        %v1024 = vadd.f32 0.0, %v1023
        %v1025 = vpop.f32.mrb[0].mxu0
        %v1026 = vadd.f32 0.0, %v1025
        %v1027 = vpop.f32.mrb[0].mxu0
        %v1028 = vadd.f32 0.0, %v1027
        %1029 = vmatprep.mubr.bf16.mxu0 0
        %1030 = vmatmul.mubr.bf16.gmra.mrb[0].mxu0 %v510
        %v1031 = vpop.f32.mrb[0].mxu0
        %v1032 = vadd.f32 0.0, %v1031
        %v1033 = vpop.f32.mrb[0].mxu0
        %v1034 = vadd.f32 0.0, %v1033
        %v1035 = vpop.f32.mrb[0].mxu0
        %v1036 = vadd.f32 0.0, %v1035
        %v1037 = vpop.f32.mrb[0].mxu0
        %v1038 = vadd.f32 0.0, %v1037
        %1039 = vdwg.mxu0
        %1040 = vmatprep.subr.bf16.mxu0 %v964
        %1041 = vmatpush1.bf16.msra.mxu0 %v963
        %1042 = vmatprep.subr.bf16.mxu0 %v968
        %1043 = vmatpush1.bf16.msra.mxu0 %v967
        %1044 = vmatprep.subr.bf16.mxu0 0
        %1045 = vmatpush1.bf16.msra.mxu0 0
        %1046 = vmatprep.subr.bf16.mxu0 0
        %1047 = vmatpush1.bf16.msra.mxu0 0
        %1048 = vmatprep.subr.bf16.mxu0 0
        %1049 = vmatpush1.bf16.msra.mxu0 0
        %1050 = vmatprep.subr.bf16.mxu0 0
        %1051 = vmatpush1.bf16.msra.mxu0 0
        %1052 = vmatprep.subr.bf16.mxu0 0
        %1053 = vmatpush1.bf16.msra.mxu0 0
        %1054 = vmatprep.subr.bf16.mxu0 0
        %1055 = vmatpush1.bf16.msra.mxu0 0
        %1056 = vmatprep.subr.bf16.mxu0 0
        %1057 = vmatpush1.bf16.msra.mxu0 0
        %1058 = vmatprep.subr.bf16.mxu0 0
        %1059 = vmatpush1.bf16.msra.mxu0 0
        %1060 = vmatprep.subr.bf16.mxu0 0
        %1061 = vmatpush1.bf16.msra.mxu0 0
        %1062 = vmatprep.subr.bf16.mxu0 0
        %1063 = vmatpush1.bf16.msra.mxu0 0
        %1064 = vmatprep.subr.bf16.mxu0 0
        %1065 = vmatpush1.bf16.msra.mxu0 0
        %1066 = vmatprep.subr.bf16.mxu0 0
        %1067 = vmatpush1.bf16.msra.mxu0 0
        %1068 = vmatprep.subr.bf16.mxu0 0
        %1069 = vmatpush1.bf16.msra.mxu0 0
        %1070 = vmatprep.subr.bf16.mxu0 0
        %1071 = vmatpush1.bf16.msra.mxu0 0
        %1072 = vmatprep.mubr.bf16.mxu0 0
        %1073 = vmatmul.mubr.bf16.gmra.mrb[0].mxu0 %v504
        %v1074 = vpop.f32.mrb[0].mxu0
        %v1075 = vadd.f32 0.0, %v1074
        %v1076 = vpop.f32.mrb[0].mxu0
        %v1077 = vadd.f32 0.0, %v1076
        %v1078 = vpop.f32.mrb[0].mxu0
        %v1079 = vadd.f32 0.0, %v1078
        %v1080 = vpop.f32.mrb[0].mxu0
        %v1081 = vadd.f32 0.0, %v1080
        %1082 = vmatprep.mubr.bf16.mxu0 0
        %1083 = vmatmul.mubr.bf16.gmra.mrb[0].mxu0 %v507
        %v1084 = vpop.f32.mrb[0].mxu0
        %v1085 = vadd.f32 0.0, %v1084
        %v1086 = vpop.f32.mrb[0].mxu0
        %v1087 = vadd.f32 0.0, %v1086
        %v1088 = vpop.f32.mrb[0].mxu0
        %v1089 = vadd.f32 0.0, %v1088
        %v1090 = vpop.f32.mrb[0].mxu0
        %v1091 = vadd.f32 0.0, %v1090
        %1092 = vmatprep.mubr.bf16.mxu0 0
        %1093 = vmatmul.mubr.bf16.gmra.mrb[0].mxu0 %v510
        %v1094 = vpop.f32.mrb[0].mxu0
        %v1095 = vadd.f32 0.0, %v1094
        %v1096 = vpop.f32.mrb[0].mxu0
        %v1097 = vadd.f32 0.0, %v1096
        %v1098 = vpop.f32.mrb[0].mxu0
        %v1099 = vadd.f32 0.0, %v1098
        %v1100 = vpop.f32.mrb[0].mxu0
        %v1101 = vadd.f32 0.0, %v1100
        %1102 = vdwg.mxu0
        %1103 = vrot.lane.b32.xlu0 %v1012, 127
        %v1104 = vpop.permute.xlu0 %1103
        %1105 = vrot.lane.b32.xlu0 %v1016, 127
        %v1106 = vpop.permute.xlu0 %1105
        %1107 = vrot.lane.b32.xlu0 %v1022, 127
        %v1108 = vpop.permute.xlu0 %1107
        %1109 = vrot.lane.b32.xlu0 %v1026, 127
        %v1110 = vpop.permute.xlu0 %1109
        %1111 = vrot.lane.b32.xlu0 %v1032, 127
        %v1112 = vpop.permute.xlu0 %1111
        %1113 = vrot.lane.b32.xlu0 %v1036, 127
        %v1114 = vpop.permute.xlu0 %1113
        %1115 = vrot.lane.b32.xlu0 %v1014, 127
        %v1116 = vpop.permute.xlu0 %1115
        %1117 = vrot.lane.b32.xlu0 %v1018, 127
        %v1118 = vpop.permute.xlu0 %1117
        %1119 = vrot.lane.b32.xlu0 %v1024, 127
        %v1120 = vpop.permute.xlu0 %1119
        %1121 = vrot.lane.b32.xlu0 %v1028, 127
        %v1122 = vpop.permute.xlu0 %1121
        %1123 = vrot.lane.b32.xlu0 %v1034, 127
        %v1124 = vpop.permute.xlu0 %1123
        %1125 = vrot.lane.b32.xlu0 %v1038, 127
        %v1126 = vpop.permute.xlu0 %1125
        %1127 = vrot.lane.b32.xlu0 %v1075, 127
        %v1128 = vpop.permute.xlu0 %1127
        %1129 = vrot.lane.b32.xlu0 %v1079, 127
        %v1130 = vpop.permute.xlu0 %1129
        %1131 = vrot.lane.b32.xlu0 %v1085, 127
        %v1132 = vpop.permute.xlu0 %1131
        %1133 = vrot.lane.b32.xlu0 %v1089, 127
        %v1134 = vpop.permute.xlu0 %1133
        %1135 = vrot.lane.b32.xlu0 %v1095, 127
        %v1136 = vpop.permute.xlu0 %1135
        %1137 = vrot.lane.b32.xlu0 %v1099, 127
        %v1138 = vpop.permute.xlu0 %1137
        %1139 = vrot.lane.b32.xlu0 %v1077, 127
        %v1140 = vpop.permute.xlu0 %1139
        %1141 = vrot.lane.b32.xlu0 %v1081, 127
        %v1142 = vpop.permute.xlu0 %1141
        %1143 = vrot.lane.b32.xlu0 %v1087, 127
        %v1144 = vpop.permute.xlu0 %1143
        %1145 = vrot.lane.b32.xlu0 %v1091, 127
        %v1146 = vpop.permute.xlu0 %1145
        %1147 = vrot.lane.b32.xlu0 %v1097, 127
        %v1148 = vpop.permute.xlu0 %1147
        %1149 = vrot.lane.b32.xlu0 %v1101, 127
        %v1150 = vpop.permute.xlu0 %1149
        %v1151 = vsel %vm735, %v1128, %v1140
        %v1152 = vsel %vm735, %v1130, %v1142
        %v1153 = vsel %vm735, %v1132, %v1144
        %v1154 = vsel %vm735, %v1134, %v1146
        %v1155 = vsel %vm735, %v1136, %v1148
        %v1156 = vsel %vm735, %v1138, %v1150
        %v1157 = vsel %vm735, %v1116, %v1128
        %v1158 = vsel %vm735, %v1118, %v1130
        %v1159 = vsel %vm735, %v1120, %v1132
        %v1160 = vsel %vm735, %v1122, %v1134
        %v1161 = vsel %vm735, %v1124, %v1136
        %v1162 = vsel %vm735, %v1126, %v1138
        %v1163 = vsel %vm735, %v1104, %v1116
        %v1164 = vsel %vm735, %v1106, %v1118
        %v1165 = vsel %vm735, %v1108, %v1120
        %v1166 = vsel %vm735, %v1110, %v1122
        %v1167 = vsel %vm735, %v1112, %v1124
        %v1168 = vsel %vm735, %v1114, %v1126
        %v1169 = vsel %vm735, %v1140, %v1104
        %v1170 = vsel %vm735, %v1142, %v1106
        %v1171 = vsel %vm735, %v1144, %v1108
        %v1172 = vsel %vm735, %v1146, %v1110
        %v1173 = vsel %vm735, %v1148, %v1112
        %v1174 = vsel %vm735, %v1150, %v1114
        %1175 = vrot.lane.b32.xlu0 %v1012, 1
        %v1176 = vpop.permute.xlu0 %1175
        %1177 = vrot.lane.b32.xlu0 %v1016, 1
        %v1178 = vpop.permute.xlu0 %1177
        %1179 = vrot.lane.b32.xlu0 %v1022, 1
        %v1180 = vpop.permute.xlu0 %1179
        %1181 = vrot.lane.b32.xlu0 %v1026, 1
        %v1182 = vpop.permute.xlu0 %1181
        %1183 = vrot.lane.b32.xlu0 %v1032, 1
        %v1184 = vpop.permute.xlu0 %1183
        %1185 = vrot.lane.b32.xlu0 %v1036, 1
        %v1186 = vpop.permute.xlu0 %1185
        %1187 = vrot.lane.b32.xlu0 %v1014, 1
        %v1188 = vpop.permute.xlu0 %1187
        %1189 = vrot.lane.b32.xlu0 %v1018, 1
        %v1190 = vpop.permute.xlu0 %1189
        %1191 = vrot.lane.b32.xlu0 %v1024, 1
        %v1192 = vpop.permute.xlu0 %1191
        %1193 = vrot.lane.b32.xlu0 %v1028, 1
        %v1194 = vpop.permute.xlu0 %1193
        %1195 = vrot.lane.b32.xlu0 %v1034, 1
        %v1196 = vpop.permute.xlu0 %1195
        %1197 = vrot.lane.b32.xlu0 %v1038, 1
        %v1198 = vpop.permute.xlu0 %1197
        %1199 = vrot.lane.b32.xlu0 %v1075, 1
        %v1200 = vpop.permute.xlu0 %1199
        %1201 = vrot.lane.b32.xlu0 %v1079, 1
        %v1202 = vpop.permute.xlu0 %1201
        %1203 = vrot.lane.b32.xlu0 %v1085, 1
        %v1204 = vpop.permute.xlu0 %1203
        %1205 = vrot.lane.b32.xlu0 %v1089, 1
        %v1206 = vpop.permute.xlu0 %1205
        %1207 = vrot.lane.b32.xlu0 %v1095, 1
        %v1208 = vpop.permute.xlu0 %1207
        %1209 = vrot.lane.b32.xlu0 %v1099, 1
        %v1210 = vpop.permute.xlu0 %1209
        %1211 = vrot.lane.b32.xlu0 %v1077, 1
        %v1212 = vpop.permute.xlu0 %1211
        %1213 = vrot.lane.b32.xlu0 %v1081, 1
        %v1214 = vpop.permute.xlu0 %1213
        %1215 = vrot.lane.b32.xlu0 %v1087, 1
        %v1216 = vpop.permute.xlu0 %1215
        %1217 = vrot.lane.b32.xlu0 %v1091, 1
        %v1218 = vpop.permute.xlu0 %1217
        %1219 = vrot.lane.b32.xlu0 %v1097, 1
        %v1220 = vpop.permute.xlu0 %1219
        %1221 = vrot.lane.b32.xlu0 %v1101, 1
        %v1222 = vpop.permute.xlu0 %1221
        %v1223 = vsel %vm808, %v1200, %v1212
        %v1224 = vsel %vm808, %v1202, %v1214
        %v1225 = vsel %vm808, %v1204, %v1216
        %v1226 = vsel %vm808, %v1206, %v1218
        %v1227 = vsel %vm808, %v1208, %v1220
        %v1228 = vsel %vm808, %v1210, %v1222
        %v1229 = vsel %vm808, %v1188, %v1200
        %v1230 = vsel %vm808, %v1190, %v1202
        %v1231 = vsel %vm808, %v1192, %v1204
        %v1232 = vsel %vm808, %v1194, %v1206
        %v1233 = vsel %vm808, %v1196, %v1208
        %v1234 = vsel %vm808, %v1198, %v1210
        %v1235 = vsel %vm808, %v1176, %v1188
        %v1236 = vsel %vm808, %v1178, %v1190
        %v1237 = vsel %vm808, %v1180, %v1192
        %v1238 = vsel %vm808, %v1182, %v1194
        %v1239 = vsel %vm808, %v1184, %v1196
        %v1240 = vsel %vm808, %v1186, %v1198
        %v1241 = vsel %vm808, %v1212, %v1176
        %v1242 = vsel %vm808, %v1214, %v1178
        %v1243 = vsel %vm808, %v1216, %v1180
        %v1244 = vsel %vm808, %v1218, %v1182
        %v1245 = vsel %vm808, %v1220, %v1184
        %v1246 = vsel %vm808, %v1222, %v1186
        %v1247 = vsel %vm387, %v1163, %v1241
        %v1248 = vsel %vm388, %v1157, %v1235
        %v1249 = vsel %vm389, %v1151, %v1229
        %v1250 = vsel %vm390, %v1169, %v1223
        %v1251 = vsel %vm387, %v1164, %v1242
        %v1252 = vsel %vm388, %v1158, %v1236
        %v1253 = vsel %vm389, %v1152, %v1230
        %v1254 = vsel %vm390, %v1170, %v1224
        %v1255 = vsel %vm387, %v1165, %v1243
        %v1256 = vsel %vm388, %v1159, %v1237
        %v1257 = vsel %vm389, %v1153, %v1231
        %v1258 = vsel %vm390, %v1171, %v1225
        %v1259 = vsel %vm387, %v1166, %v1244
        %v1260 = vsel %vm388, %v1160, %v1238
        %v1261 = vsel %vm389, %v1154, %v1232
        %v1262 = vsel %vm390, %v1172, %v1226
        %v1263 = vsel %vm387, %v1167, %v1245
        %v1264 = vsel %vm388, %v1161, %v1239
        %v1265 = vsel %vm389, %v1155, %v1233
        %v1266 = vsel %vm390, %v1173, %v1227
        %v1267 = vsel %vm387, %v1168, %v1246
        %v1268 = vsel %vm388, %v1162, %v1240
        %v1269 = vsel %vm389, %v1156, %v1234
        %v1270 = vsel %vm390, %v1174, %v1228
        %v1271 = vmul.f32 %v1012, %v638
        %v1272 = vmul.f32 %v1014, %v639
        %v1273 = vmul.f32 %v1075, %v640
        %v1274 = vmul.f32 %v1077, %v641
        %v1275 = vmul.f32 %v1016, %v642
        %v1276 = vmul.f32 %v1018, %v643
        %v1277 = vmul.f32 %v1079, %v644
        %v1278 = vmul.f32 %v1081, %v645
        %v1279 = vmul.f32 %v1022, %v646
        %v1280 = vmul.f32 %v1024, %v647
        %v1281 = vmul.f32 %v1085, %v648
        %v1282 = vmul.f32 %v1087, %v649
        %v1283 = vmul.f32 %v1026, %v650
        %v1284 = vmul.f32 %v1028, %v651
        %v1285 = vmul.f32 %v1089, %v652
        %v1286 = vmul.f32 %v1091, %v653
        %v1287 = vmul.f32 %v1032, %v654
        %v1288 = vmul.f32 %v1034, %v655
        %v1289 = vmul.f32 %v1095, %v656
        %v1290 = vmul.f32 %v1097, %v657
        %v1291 = vmul.f32 %v1036, %v658
        %v1292 = vmul.f32 %v1038, %v659
        %v1293 = vmul.f32 %v1099, %v660
        %v1294 = vmul.f32 %v1101, %v661
        %v1295 = vmul.f32 %v1247, %v663
        %v1296 = vmul.f32 %v1248, %v664
        %v1297 = vmul.f32 %v1249, %v665
        %v1298 = vmul.f32 %v1250, %v666
        %v1299 = vmul.f32 %v1251, %v667
        %v1300 = vmul.f32 %v1252, %v668
        %v1301 = vmul.f32 %v1253, %v669
        %v1302 = vmul.f32 %v1254, %v670
        %v1303 = vmul.f32 %v1255, %v671
        %v1304 = vmul.f32 %v1256, %v672
        %v1305 = vmul.f32 %v1257, %v673
        %v1306 = vmul.f32 %v1258, %v674
        %v1307 = vmul.f32 %v1259, %v675
        %v1308 = vmul.f32 %v1260, %v676
        %v1309 = vmul.f32 %v1261, %v677
        %v1310 = vmul.f32 %v1262, %v678
        %v1311 = vmul.f32 %v1263, %v679
        %v1312 = vmul.f32 %v1264, %v680
        %v1313 = vmul.f32 %v1265, %v681
        %v1314 = vmul.f32 %v1266, %v682
        %v1315 = vmul.f32 %v1267, %v683
        %v1316 = vmul.f32 %v1268, %v684
        %v1317 = vmul.f32 %v1269, %v685
        %v1318 = vmul.f32 %v1270, %v686
        %v1319 = vadd.f32 %v1271, %v1295
        %v1320 = vadd.f32 %v1272, %v1296
        %v1321 = vadd.f32 %v1273, %v1297
        %v1322 = vadd.f32 %v1274, %v1298
        %v1323 = vadd.f32 %v1275, %v1299
        %v1324 = vadd.f32 %v1276, %v1300
        %v1325 = vadd.f32 %v1277, %v1301
        %v1326 = vadd.f32 %v1278, %v1302
        %v1327 = vadd.f32 %v1279, %v1303
        %v1328 = vadd.f32 %v1280, %v1304
        %v1329 = vadd.f32 %v1281, %v1305
        %v1330 = vadd.f32 %v1282, %v1306
        %v1331 = vadd.f32 %v1283, %v1307
        %v1332 = vadd.f32 %v1284, %v1308
        %v1333 = vadd.f32 %v1285, %v1309
        %v1334 = vadd.f32 %v1286, %v1310
        %v1335 = vadd.f32 %v1287, %v1311
        %v1336 = vadd.f32 %v1288, %v1312
        %v1337 = vadd.f32 %v1289, %v1313
        %v1338 = vadd.f32 %v1290, %v1314
        %v1339 = vadd.f32 %v1291, %v1315
        %v1340 = vadd.f32 %v1292, %v1316
        %v1341 = vadd.f32 %v1293, %v1317
        %v1342 = vadd.f32 %v1294, %v1318
        %v1343 = vld [vmem:[%s3 + $0x20] sm:$0xff]
        %v1344 = vld [vmem:[%s3 + $0x28] sm:$0xff]
        %v1345 = vld [vmem:[%s3 + $0x68] sm:$0xff]
        %v1346 = vld [vmem:[%s3 + $0x70] sm:$0xff]
        %v1347 = vld [vmem:[%s3 + $0xb0] sm:$0xff]
        %v1348 = vld [vmem:[%s3 + $0xb8] sm:$0xff]
        %v1349 = vld [vmem:[%s3 + $0xf8] sm:$0xff]
        %v1350 = vld [vmem:[%s3 + $0x100] sm:$0xff]
        %v1359 = vunpack.c.l.b16 %v1343
        %v1360 = vunpack.c.h.b16 %v1343
        %v1361 = vunpack.c.l.b16 %v1344
        %v1362 = vunpack.c.h.b16 %v1344
        %v1363 = vunpack.c.l.b16 %v1345
        %v1364 = vunpack.c.h.b16 %v1345
        %v1365 = vunpack.c.l.b16 %v1346
        %v1366 = vunpack.c.h.b16 %v1346
        %v1367 = vunpack.c.l.b16 %v1347
        %v1368 = vunpack.c.h.b16 %v1347
        %v1369 = vunpack.c.l.b16 %v1348
        %v1370 = vunpack.c.h.b16 %v1348
        %v1371 = vunpack.c.l.b16 %v1349
        %v1372 = vunpack.c.h.b16 %v1349
        %v1373 = vunpack.c.l.b16 %v1350
        %v1374 = vunpack.c.h.b16 %v1350
        %v1375 = vpack.c.b16 %v1363, %v1359
        %v1376 = vpack.c.b16 %v1364, %v1360
        %v1377 = vpack.c.b16 %v1365, %v1361
        %v1378 = vpack.c.b16 %v1366, %v1362
        %v1379 = vpack.c.b16 %v1371, %v1367
        %v1380 = vpack.c.b16 %v1372, %v1368
        %v1381 = vpack.c.b16 %v1373, %v1369
        %v1382 = vpack.c.b16 %v1374, %v1370
        %1391 = vmatprep.subr.bf16.mxu0 %v1376
        %1392 = vmatpush1.bf16.msra.mxu0 %v1375
        %1393 = vmatprep.subr.bf16.mxu0 %v1380
        %1394 = vmatpush1.bf16.msra.mxu0 %v1379
        %1395 = vmatprep.subr.bf16.mxu0 0
        %1396 = vmatpush1.bf16.msra.mxu0 0
        %1397 = vmatprep.subr.bf16.mxu0 0
        %1398 = vmatpush1.bf16.msra.mxu0 0
        %1399 = vmatprep.subr.bf16.mxu0 0
        %1400 = vmatpush1.bf16.msra.mxu0 0
        %1401 = vmatprep.subr.bf16.mxu0 0
        %1402 = vmatpush1.bf16.msra.mxu0 0
        %1403 = vmatprep.subr.bf16.mxu0 0
        %1404 = vmatpush1.bf16.msra.mxu0 0
        %1405 = vmatprep.subr.bf16.mxu0 0
        %1406 = vmatpush1.bf16.msra.mxu0 0
        %1407 = vmatprep.subr.bf16.mxu0 0
        %1408 = vmatpush1.bf16.msra.mxu0 0
        %1409 = vmatprep.subr.bf16.mxu0 0
        %1410 = vmatpush1.bf16.msra.mxu0 0
        %1411 = vmatprep.subr.bf16.mxu0 0
        %1412 = vmatpush1.bf16.msra.mxu0 0
        %1413 = vmatprep.subr.bf16.mxu0 0
        %1414 = vmatpush1.bf16.msra.mxu0 0
        %1415 = vmatprep.subr.bf16.mxu0 0
        %1416 = vmatpush1.bf16.msra.mxu0 0
        %1417 = vmatprep.subr.bf16.mxu0 0
        %1418 = vmatpush1.bf16.msra.mxu0 0
        %1419 = vmatprep.subr.bf16.mxu0 0
        %1420 = vmatpush1.bf16.msra.mxu0 0
        %1421 = vmatprep.subr.bf16.mxu0 0
        %1422 = vmatpush1.bf16.msra.mxu0 0
        %1423 = vmatprep.mubr.bf16.mxu0 0
        %1424 = vmatmul.mubr.bf16.gmra.mrb[0].mxu0 %v504
        %v1425 = vpop.f32.mrb[0].mxu0
        %v1426 = vadd.f32 0.0, %v1425
        %v1427 = vpop.f32.mrb[0].mxu0
        %v1428 = vadd.f32 0.0, %v1427
        %v1429 = vpop.f32.mrb[0].mxu0
        %v1430 = vadd.f32 0.0, %v1429
        %v1431 = vpop.f32.mrb[0].mxu0
        %v1432 = vadd.f32 0.0, %v1431
        %1433 = vmatprep.mubr.bf16.mxu0 0
        %1434 = vmatmul.mubr.bf16.gmra.mrb[0].mxu0 %v507
        %v1435 = vpop.f32.mrb[0].mxu0
        %v1436 = vadd.f32 0.0, %v1435
        %v1437 = vpop.f32.mrb[0].mxu0
        %v1438 = vadd.f32 0.0, %v1437
        %v1439 = vpop.f32.mrb[0].mxu0
        %v1440 = vadd.f32 0.0, %v1439
        %v1441 = vpop.f32.mrb[0].mxu0
        %v1442 = vadd.f32 0.0, %v1441
        %1443 = vmatprep.mubr.bf16.mxu0 0
        %1444 = vmatmul.mubr.bf16.gmra.mrb[0].mxu0 %v510
        %v1445 = vpop.f32.mrb[0].mxu0
        %v1446 = vadd.f32 0.0, %v1445
        %v1447 = vpop.f32.mrb[0].mxu0
        %v1448 = vadd.f32 0.0, %v1447
        %v1449 = vpop.f32.mrb[0].mxu0
        %v1450 = vadd.f32 0.0, %v1449
        %v1451 = vpop.f32.mrb[0].mxu0
        %v1452 = vadd.f32 0.0, %v1451
        %1453 = vdwg.mxu0
        %1454 = vmatprep.subr.bf16.mxu0 %v1378
        %1455 = vmatpush1.bf16.msra.mxu0 %v1377
        %1456 = vmatprep.subr.bf16.mxu0 %v1382
        %1457 = vmatpush1.bf16.msra.mxu0 %v1381
        %1458 = vmatprep.subr.bf16.mxu0 0
        %1459 = vmatpush1.bf16.msra.mxu0 0
        %1460 = vmatprep.subr.bf16.mxu0 0
        %1461 = vmatpush1.bf16.msra.mxu0 0
        %1462 = vmatprep.subr.bf16.mxu0 0
        %1463 = vmatpush1.bf16.msra.mxu0 0
        %1464 = vmatprep.subr.bf16.mxu0 0
        %1465 = vmatpush1.bf16.msra.mxu0 0
        %1466 = vmatprep.subr.bf16.mxu0 0
        %1467 = vmatpush1.bf16.msra.mxu0 0
        %1468 = vmatprep.subr.bf16.mxu0 0
        %1469 = vmatpush1.bf16.msra.mxu0 0
        %1470 = vmatprep.subr.bf16.mxu0 0
        %1471 = vmatpush1.bf16.msra.mxu0 0
        %1472 = vmatprep.subr.bf16.mxu0 0
        %1473 = vmatpush1.bf16.msra.mxu0 0
        %1474 = vmatprep.subr.bf16.mxu0 0
        %1475 = vmatpush1.bf16.msra.mxu0 0
        %1476 = vmatprep.subr.bf16.mxu0 0
        %1477 = vmatpush1.bf16.msra.mxu0 0
        %1478 = vmatprep.subr.bf16.mxu0 0
        %1479 = vmatpush1.bf16.msra.mxu0 0
        %1480 = vmatprep.subr.bf16.mxu0 0
        %1481 = vmatpush1.bf16.msra.mxu0 0
        %1482 = vmatprep.subr.bf16.mxu0 0
        %1483 = vmatpush1.bf16.msra.mxu0 0
        %1484 = vmatprep.subr.bf16.mxu0 0
        %1485 = vmatpush1.bf16.msra.mxu0 0
        %1486 = vmatprep.mubr.bf16.mxu0 0
        %1487 = vmatmul.mubr.bf16.gmra.mrb[0].mxu0 %v504
        %v1488 = vpop.f32.mrb[0].mxu0
        %v1489 = vadd.f32 0.0, %v1488
        %v1490 = vpop.f32.mrb[0].mxu0
        %v1491 = vadd.f32 0.0, %v1490
        %v1492 = vpop.f32.mrb[0].mxu0
        %v1493 = vadd.f32 0.0, %v1492
        %v1494 = vpop.f32.mrb[0].mxu0
        %v1495 = vadd.f32 0.0, %v1494
        %1496 = vmatprep.mubr.bf16.mxu0 0
        %1497 = vmatmul.mubr.bf16.gmra.mrb[0].mxu0 %v507
        %v1498 = vpop.f32.mrb[0].mxu0
        %v1499 = vadd.f32 0.0, %v1498
        %v1500 = vpop.f32.mrb[0].mxu0
        %v1501 = vadd.f32 0.0, %v1500
        %v1502 = vpop.f32.mrb[0].mxu0
        %v1503 = vadd.f32 0.0, %v1502
        %v1504 = vpop.f32.mrb[0].mxu0
        %v1505 = vadd.f32 0.0, %v1504
        %1506 = vmatprep.mubr.bf16.mxu0 0
        %1507 = vmatmul.mubr.bf16.gmra.mrb[0].mxu0 %v510
        %v1508 = vpop.f32.mrb[0].mxu0
        %v1509 = vadd.f32 0.0, %v1508
        %v1510 = vpop.f32.mrb[0].mxu0
        %v1511 = vadd.f32 0.0, %v1510
        %v1512 = vpop.f32.mrb[0].mxu0
        %v1513 = vadd.f32 0.0, %v1512
        %v1514 = vpop.f32.mrb[0].mxu0
        %v1515 = vadd.f32 0.0, %v1514
        %1516 = vdwg.mxu0
        %v1517 = vld [vmem:[%s3 + $0x30] sm:$0xff]
        %v1518 = vld [vmem:[%s3 + $0x38] sm:$0xff]
        %v1519 = vld [vmem:[%s3 + $0x78] sm:$0xff]
        %v1520 = vld [vmem:[%s3 + $0x80] sm:$0xff]
        %v1521 = vld [vmem:[%s3 + $0xc0] sm:$0xff]
        %v1522 = vld [vmem:[%s3 + $0xc8] sm:$0xff]
        %v1523 = vld [vmem:[%s3 + $0x108] sm:$0xff]
        %v1524 = vld [vmem:[%s3 + $0x110] sm:$0xff]
        %v1533 = vunpack.c.l.b16 %v1517
        %v1534 = vunpack.c.h.b16 %v1517
        %v1535 = vunpack.c.l.b16 %v1518
        %v1536 = vunpack.c.h.b16 %v1518
        %v1537 = vunpack.c.l.b16 %v1519
        %v1538 = vunpack.c.h.b16 %v1519
        %v1539 = vunpack.c.l.b16 %v1520
        %v1540 = vunpack.c.h.b16 %v1520
        %v1541 = vunpack.c.l.b16 %v1521
        %v1542 = vunpack.c.h.b16 %v1521
        %v1543 = vunpack.c.l.b16 %v1522
        %v1544 = vunpack.c.h.b16 %v1522
        %v1545 = vunpack.c.l.b16 %v1523
        %v1546 = vunpack.c.h.b16 %v1523
        %v1547 = vunpack.c.l.b16 %v1524
        %v1548 = vunpack.c.h.b16 %v1524
        %v1549 = vpack.c.b16 %v1537, %v1533
        %v1550 = vpack.c.b16 %v1538, %v1534
        %v1551 = vpack.c.b16 %v1539, %v1535
        %v1552 = vpack.c.b16 %v1540, %v1536
        %v1553 = vpack.c.b16 %v1545, %v1541
        %v1554 = vpack.c.b16 %v1546, %v1542
        %v1555 = vpack.c.b16 %v1547, %v1543
        %v1556 = vpack.c.b16 %v1548, %v1544
        %1565 = vmatprep.subr.bf16.mxu0 %v1550
        %1566 = vmatpush1.bf16.msra.mxu0 %v1549
        %1567 = vmatprep.subr.bf16.mxu0 %v1554
        %1568 = vmatpush1.bf16.msra.mxu0 %v1553
        %1569 = vmatprep.subr.bf16.mxu0 0
        %1570 = vmatpush1.bf16.msra.mxu0 0
        %1571 = vmatprep.subr.bf16.mxu0 0
        %1572 = vmatpush1.bf16.msra.mxu0 0
        %1573 = vmatprep.subr.bf16.mxu0 0
        %1574 = vmatpush1.bf16.msra.mxu0 0
        %1575 = vmatprep.subr.bf16.mxu0 0
        %1576 = vmatpush1.bf16.msra.mxu0 0
        %1577 = vmatprep.subr.bf16.mxu0 0
        %1578 = vmatpush1.bf16.msra.mxu0 0
        %1579 = vmatprep.subr.bf16.mxu0 0
        %1580 = vmatpush1.bf16.msra.mxu0 0
        %1581 = vmatprep.subr.bf16.mxu0 0
        %1582 = vmatpush1.bf16.msra.mxu0 0
        %1583 = vmatprep.subr.bf16.mxu0 0
        %1584 = vmatpush1.bf16.msra.mxu0 0
        %1585 = vmatprep.subr.bf16.mxu0 0
        %1586 = vmatpush1.bf16.msra.mxu0 0
        %1587 = vmatprep.subr.bf16.mxu0 0
        %1588 = vmatpush1.bf16.msra.mxu0 0
        %1589 = vmatprep.subr.bf16.mxu0 0
        %1590 = vmatpush1.bf16.msra.mxu0 0
        %1591 = vmatprep.subr.bf16.mxu0 0
        %1592 = vmatpush1.bf16.msra.mxu0 0
        %1593 = vmatprep.subr.bf16.mxu0 0
        %1594 = vmatpush1.bf16.msra.mxu0 0
        %1595 = vmatprep.subr.bf16.mxu0 0
        %1596 = vmatpush1.bf16.msra.mxu0 0
        %1597 = vmatprep.mubr.bf16.mxu0 0
        %1598 = vmatmul.mubr.bf16.gmra.mrb[0].mxu0 %v504
        %v1599 = vpop.f32.mrb[0].mxu0
        %v1600 = vadd.f32 0.0, %v1599
        %v1601 = vpop.f32.mrb[0].mxu0
        %v1602 = vadd.f32 0.0, %v1601
        %v1603 = vpop.f32.mrb[0].mxu0
        %v1604 = vadd.f32 0.0, %v1603
        %v1605 = vpop.f32.mrb[0].mxu0
        %v1606 = vadd.f32 0.0, %v1605
        %1607 = vmatprep.mubr.bf16.mxu0 0
        %1608 = vmatmul.mubr.bf16.gmra.mrb[0].mxu0 %v507
        %v1609 = vpop.f32.mrb[0].mxu0
        %v1610 = vadd.f32 0.0, %v1609
        %v1611 = vpop.f32.mrb[0].mxu0
        %v1612 = vadd.f32 0.0, %v1611
        %v1613 = vpop.f32.mrb[0].mxu0
        %v1614 = vadd.f32 0.0, %v1613
        %v1615 = vpop.f32.mrb[0].mxu0
        %v1616 = vadd.f32 0.0, %v1615
        %1617 = vmatprep.mubr.bf16.mxu0 0
        %1618 = vmatmul.mubr.bf16.gmra.mrb[0].mxu0 %v510
        %v1619 = vpop.f32.mrb[0].mxu0
        %v1620 = vadd.f32 0.0, %v1619
        %v1621 = vpop.f32.mrb[0].mxu0
        %v1622 = vadd.f32 0.0, %v1621
        %v1623 = vpop.f32.mrb[0].mxu0
        %v1624 = vadd.f32 0.0, %v1623
        %v1625 = vpop.f32.mrb[0].mxu0
        %v1626 = vadd.f32 0.0, %v1625
        %1627 = vdwg.mxu0
        %1628 = vmatprep.subr.bf16.mxu0 %v1552
        %1629 = vmatpush1.bf16.msra.mxu0 %v1551
        %1630 = vmatprep.subr.bf16.mxu0 %v1556
        %1631 = vmatpush1.bf16.msra.mxu0 %v1555
        %1632 = vmatprep.subr.bf16.mxu0 0
        %1633 = vmatpush1.bf16.msra.mxu0 0
        %1634 = vmatprep.subr.bf16.mxu0 0
        %1635 = vmatpush1.bf16.msra.mxu0 0
        %1636 = vmatprep.subr.bf16.mxu0 0
        %1637 = vmatpush1.bf16.msra.mxu0 0
        %1638 = vmatprep.subr.bf16.mxu0 0
        %1639 = vmatpush1.bf16.msra.mxu0 0
        %1640 = vmatprep.subr.bf16.mxu0 0
        %1641 = vmatpush1.bf16.msra.mxu0 0
        %1642 = vmatprep.subr.bf16.mxu0 0
        %1643 = vmatpush1.bf16.msra.mxu0 0
        %1644 = vmatprep.subr.bf16.mxu0 0
        %1645 = vmatpush1.bf16.msra.mxu0 0
        %1646 = vmatprep.subr.bf16.mxu0 0
        %1647 = vmatpush1.bf16.msra.mxu0 0
        %1648 = vmatprep.subr.bf16.mxu0 0
        %1649 = vmatpush1.bf16.msra.mxu0 0
        %1650 = vmatprep.subr.bf16.mxu0 0
        %1651 = vmatpush1.bf16.msra.mxu0 0
        %1652 = vmatprep.subr.bf16.mxu0 0
        %1653 = vmatpush1.bf16.msra.mxu0 0
        %1654 = vmatprep.subr.bf16.mxu0 0
        %1655 = vmatpush1.bf16.msra.mxu0 0
        %1656 = vmatprep.subr.bf16.mxu0 0
        %1657 = vmatpush1.bf16.msra.mxu0 0
        %1658 = vmatprep.subr.bf16.mxu0 0
        %1659 = vmatpush1.bf16.msra.mxu0 0
        %1660 = vmatprep.mubr.bf16.mxu0 0
        %1661 = vmatmul.mubr.bf16.gmra.mrb[0].mxu0 %v504
        %v1662 = vpop.f32.mrb[0].mxu0
        %v1663 = vadd.f32 0.0, %v1662
        %v1664 = vpop.f32.mrb[0].mxu0
        %v1665 = vadd.f32 0.0, %v1664
        %v1666 = vpop.f32.mrb[0].mxu0
        %v1667 = vadd.f32 0.0, %v1666
        %v1668 = vpop.f32.mrb[0].mxu0
        %v1669 = vadd.f32 0.0, %v1668
        %1670 = vmatprep.mubr.bf16.mxu0 0
        %1671 = vmatmul.mubr.bf16.gmra.mrb[0].mxu0 %v507
        %v1672 = vpop.f32.mrb[0].mxu0
        %v1673 = vadd.f32 0.0, %v1672
        %v1674 = vpop.f32.mrb[0].mxu0
        %v1675 = vadd.f32 0.0, %v1674
        %v1676 = vpop.f32.mrb[0].mxu0
        %v1677 = vadd.f32 0.0, %v1676
        %v1678 = vpop.f32.mrb[0].mxu0
        %v1679 = vadd.f32 0.0, %v1678
        %1680 = vmatprep.mubr.bf16.mxu0 0
        %1681 = vmatmul.mubr.bf16.gmra.mrb[0].mxu0 %v510
        %v1682 = vpop.f32.mrb[0].mxu0
        %v1683 = vadd.f32 0.0, %v1682
        %v1684 = vpop.f32.mrb[0].mxu0
        %v1685 = vadd.f32 0.0, %v1684
        %v1686 = vpop.f32.mrb[0].mxu0
        %v1687 = vadd.f32 0.0, %v1686
        %v1688 = vpop.f32.mrb[0].mxu0
        %v1689 = vadd.f32 0.0, %v1688
        %1690 = vdwg.mxu0
        %v1691 = vtanh.pop %v1600
        %v1692 = vtanh.pop %v1602
        %v1693 = vtanh.pop %v1663
        %v1694 = vtanh.pop %v1665
        %v1695 = vtanh.pop %v1604
        %v1696 = vtanh.pop %v1606
        %v1697 = vtanh.pop %v1667
        %v1698 = vtanh.pop %v1669
        %v1699 = vtanh.pop %v1610
        %v1700 = vtanh.pop %v1612
        %v1701 = vtanh.pop %v1673
        %v1702 = vtanh.pop %v1675
        %v1703 = vtanh.pop %v1614
        %v1704 = vtanh.pop %v1616
        %v1705 = vtanh.pop %v1677
        %v1706 = vtanh.pop %v1679
        %v1707 = vtanh.pop %v1620
        %v1708 = vtanh.pop %v1622
        %v1709 = vtanh.pop %v1683
        %v1710 = vtanh.pop %v1685
        %v1711 = vtanh.pop %v1624
        %v1712 = vtanh.pop %v1626
        %v1713 = vtanh.pop %v1687
        %v1714 = vtanh.pop %v1689
        %v1715 = vmul.f32 %v1426, %v1691
        %v1716 = vmul.f32 %v1428, %v1692
        %v1717 = vmul.f32 %v1489, %v1693
        %v1718 = vmul.f32 %v1491, %v1694
        %v1719 = vmul.f32 %v1430, %v1695
        %v1720 = vmul.f32 %v1432, %v1696
        %v1721 = vmul.f32 %v1493, %v1697
        %v1722 = vmul.f32 %v1495, %v1698
        %v1723 = vmul.f32 %v1436, %v1699
        %v1724 = vmul.f32 %v1438, %v1700
        %v1725 = vmul.f32 %v1499, %v1701
        %v1726 = vmul.f32 %v1501, %v1702
        %v1727 = vmul.f32 %v1440, %v1703
        %v1728 = vmul.f32 %v1442, %v1704
        %v1729 = vmul.f32 %v1503, %v1705
        %v1730 = vmul.f32 %v1505, %v1706
        %v1731 = vmul.f32 %v1446, %v1707
        %v1732 = vmul.f32 %v1448, %v1708
        %v1733 = vmul.f32 %v1509, %v1709
        %v1734 = vmul.f32 %v1511, %v1710
        %v1735 = vmul.f32 %v1450, %v1711
        %v1736 = vmul.f32 %v1452, %v1712
        %v1737 = vmul.f32 %v1513, %v1713
        %v1738 = vmul.f32 %v1515, %v1714
        %v1739 = vsel %vm309, 1, 0
        %v1740 = vsel %vm310, 1, 0
        %v1741 = vsel %vm311, 1, 0
        %v1742 = vsel %vm312, 1, 0
        %v1743 = vsel %vm313, 1, 0
        %v1744 = vsel %vm314, 1, 0
        %1745 = vset.pattern.permute.xlu0 1
        %1746 = vperm.xlu0 %1745, %v1739
        %v1747 = vpop.permute.xlu0 %1746
        %1748 = vset.pattern.permute.xlu0 1
        %1749 = vperm.xlu0 %1748, %v1740
        %v1750 = vpop.permute.xlu0 %1749
        %1751 = vset.pattern.permute.xlu0 1
        %1752 = vperm.xlu0 %1751, %v1741
        %v1753 = vpop.permute.xlu0 %1752
        %1754 = vset.pattern.permute.xlu0 1
        %1755 = vperm.xlu0 %1754, %v1742
        %v1756 = vpop.permute.xlu0 %1755
        %1757 = vset.pattern.permute.xlu0 1
        %1758 = vperm.xlu0 %1757, %v1743
        %v1759 = vpop.permute.xlu0 %1758
        %1760 = vset.pattern.permute.xlu0 1
        %1761 = vperm.xlu0 %1760, %v1744
        %v1762 = vpop.permute.xlu0 %1761
        %vm1763 = vcmp.eq.s32.totalorder %v1747, 1
        %vm1764 = vcmp.eq.s32.totalorder %v1750, 1
        %vm1765 = vcmp.eq.s32.totalorder %v1753, 1
        %vm1766 = vcmp.eq.s32.totalorder %v1756, 1
        %vm1767 = vcmp.eq.s32.totalorder %v1759, 1
        %vm1768 = vcmp.eq.s32.totalorder %v1762, 1
        %v1769 = vsel %vm1763, %v1715, %v1426
        %v1770 = vsel %vm1763, %v1716, %v1428
        %v1771 = vsel %vm1763, %v1717, %v1489
        %v1772 = vsel %vm1763, %v1718, %v1491
        %v1773 = vsel %vm1764, %v1719, %v1430
        %v1774 = vsel %vm1764, %v1720, %v1432
        %v1775 = vsel %vm1764, %v1721, %v1493
        %v1776 = vsel %vm1764, %v1722, %v1495
        %v1777 = vsel %vm1765, %v1723, %v1436
        %v1778 = vsel %vm1765, %v1724, %v1438
        %v1779 = vsel %vm1765, %v1725, %v1499
        %v1780 = vsel %vm1765, %v1726, %v1501
        %v1781 = vsel %vm1766, %v1727, %v1440
        %v1782 = vsel %vm1766, %v1728, %v1442
        %v1783 = vsel %vm1766, %v1729, %v1503
        %v1784 = vsel %vm1766, %v1730, %v1505
        %v1785 = vsel %vm1767, %v1731, %v1446
        %v1786 = vsel %vm1767, %v1732, %v1448
        %v1787 = vsel %vm1767, %v1733, %v1509
        %v1788 = vsel %vm1767, %v1734, %v1511
        %v1789 = vsel %vm1768, %v1735, %v1450
        %v1790 = vsel %vm1768, %v1736, %v1452
        %v1791 = vsel %vm1768, %v1737, %v1513
        %v1792 = vsel %vm1768, %v1738, %v1515
        %v1793 = vpack.c.bf16 %v909, %v905
        %v1794 = vpack.c.bf16 %v910, %v906
        %v1795 = vpack.c.bf16 %v911, %v907
        %v1796 = vpack.c.bf16 %v912, %v908
        %v1797 = vpack.c.bf16 %v917, %v913
        %v1798 = vpack.c.bf16 %v918, %v914
        %v1799 = vpack.c.bf16 %v919, %v915
        %v1800 = vpack.c.bf16 %v920, %v916
        %v1801 = vpack.c.bf16 %v925, %v921
        %v1802 = vpack.c.bf16 %v926, %v922
        %v1803 = vpack.c.bf16 %v927, %v923
        %v1804 = vpack.c.bf16 %v928, %v924
        %v1805 = vpack.c.bf16 %v1323, %v1319
        %v1806 = vpack.c.bf16 %v1324, %v1320
        %v1807 = vpack.c.bf16 %v1325, %v1321
        %v1808 = vpack.c.bf16 %v1326, %v1322
        %v1809 = vpack.c.bf16 %v1331, %v1327
        %v1810 = vpack.c.bf16 %v1332, %v1328
        %v1811 = vpack.c.bf16 %v1333, %v1329
        %v1812 = vpack.c.bf16 %v1334, %v1330
        %v1813 = vpack.c.bf16 %v1339, %v1335
        %v1814 = vpack.c.bf16 %v1340, %v1336
        %v1815 = vpack.c.bf16 %v1341, %v1337
        %v1816 = vpack.c.bf16 %v1342, %v1338
        %v1817 = vpack.c.bf16 %v1773, %v1769
        %v1818 = vpack.c.bf16 %v1774, %v1770
        %v1819 = vpack.c.bf16 %v1775, %v1771
        %v1820 = vpack.c.bf16 %v1776, %v1772
        %v1821 = vpack.c.bf16 %v1781, %v1777
        %v1822 = vpack.c.bf16 %v1782, %v1778
        %v1823 = vpack.c.bf16 %v1783, %v1779
        %v1824 = vpack.c.bf16 %v1784, %v1780
        %v1825 = vpack.c.bf16 %v1789, %v1785
        %v1826 = vpack.c.bf16 %v1790, %v1786
        %v1827 = vpack.c.bf16 %v1791, %v1787
        %v1828 = vpack.c.bf16 %v1792, %v1788
        %1829 = vmatprep.subr.bf16.mxu0 0
        %1830 = vmatpush1.bf16.xpose.msra.mxu0 %v1805
        %1831 = vmatprep.subr.bf16.mxu0 0
        %1832 = vmatpush1.bf16.xpose.msra.mxu0 %v1809
        %1833 = vmatprep.subr.bf16.mxu0 0
        %1834 = vmatpush1.bf16.xpose.msra.mxu0 %v1813
        %1835 = vmatprep.subr.bf16.mxu0 0
        %1836 = vmatpush1.bf16.xpose.msra.mxu0 0
        %1837 = vmatprep.subr.bf16.mxu0 0
        %1838 = vmatpush1.bf16.xpose.msra.mxu0 0
        %1839 = vmatprep.subr.bf16.mxu0 0
        %1840 = vmatpush1.bf16.xpose.msra.mxu0 0
        %1841 = vmatprep.subr.bf16.mxu0 0
        %1842 = vmatpush1.bf16.xpose.msra.mxu0 0
        %1843 = vmatprep.subr.bf16.mxu0 0
        %1844 = vmatpush1.bf16.xpose.msra.mxu0 0
        %1845 = vmatprep.subr.bf16.mxu0 0
        %1846 = vmatpush1.bf16.xpose.msra.mxu0 0
        %1847 = vmatprep.subr.bf16.mxu0 0
        %1848 = vmatpush1.bf16.xpose.msra.mxu0 0
        %1849 = vmatprep.subr.bf16.mxu0 0
        %1850 = vmatpush1.bf16.xpose.msra.mxu0 0
        %1851 = vmatprep.subr.bf16.mxu0 0
        %1852 = vmatpush1.bf16.xpose.msra.mxu0 0
        %1853 = vmatprep.subr.bf16.mxu0 0
        %1854 = vmatpush1.bf16.xpose.msra.mxu0 0
        %1855 = vmatprep.subr.bf16.mxu0 0
        %1856 = vmatpush1.bf16.xpose.msra.mxu0 0
        %1857 = vmatprep.subr.bf16.mxu0 0
        %1858 = vmatpush1.bf16.xpose.msra.mxu0 0
        %1859 = vmatprep.subr.bf16.mxu0 0
        %1860 = vmatpush1.bf16.xpose.msra.mxu0 0
        %1861 = vmatprep.mubr.bf16.mxu0 0
        %1862 = vmatmul.mubr.bf16.gmra.mrb[0].mxu0 %v1793
        %v1863 = vpop.f32.mrb[0].mxu0
        %v1864 = vadd.f32 %v330, %v1863
        %v1865 = vpop.f32.mrb[0].mxu0
        %v1866 = vpop.f32.mrb[0].mxu0
        %v1867 = vadd.f32 %v331, %v1866
        %v1868 = vpop.f32.mrb[0].mxu0
        %1869 = vmatprep.mubr.bf16.mxu0 0
        %1870 = vmatmul.mubr.bf16.gmra.mrb[0].mxu0 %v1797
        %v1871 = vpop.f32.mrb[0].mxu0
        %v1872 = vadd.f32 %v332, %v1871
        %v1873 = vpop.f32.mrb[0].mxu0
        %v1874 = vpop.f32.mrb[0].mxu0
        %v1875 = vadd.f32 %v333, %v1874
        %v1876 = vpop.f32.mrb[0].mxu0
        %1877 = vmatprep.mubr.bf16.mxu0 0
        %1878 = vmatmul.mubr.bf16.gmra.mrb[0].mxu0 %v1801
        %v1879 = vpop.f32.mrb[0].mxu0
        %v1880 = vadd.f32 %v334, %v1879
        %v1881 = vpop.f32.mrb[0].mxu0
        %v1882 = vpop.f32.mrb[0].mxu0
        %v1883 = vadd.f32 %v335, %v1882
        %v1884 = vpop.f32.mrb[0].mxu0
        %1885 = vdwg.mxu0
        %vm1886 = vcmask 392192
        %v1887 = vsel %vm1886, %v1864, -inf
        %1888 = vmax.xlane.f32.xlu0 %v1887
        %v1889 = vpop.xlane.xlu0 %1888
        %v1890 = vsel %vm1886, %v1867, -inf
        %1891 = vmax.xlane.f32.xlu0 %v1890
        %v1892 = vpop.xlane.xlu0 %1891
        %v1893 = vsel %vm1886, %v1872, -inf
        %1894 = vmax.xlane.f32.xlu0 %v1893
        %v1895 = vpop.xlane.xlu0 %1894
        %v1896 = vsel %vm1886, %v1875, -inf
        %1897 = vmax.xlane.f32.xlu0 %v1896
        %v1898 = vpop.xlane.xlu0 %1897
        %v1899 = vsel %vm1886, %v1880, -inf
        %1900 = vmax.xlane.f32.xlu0 %v1899
        %v1901 = vpop.xlane.xlu0 %1900
        %v1902 = vsel %vm1886, %v1883, -inf
        %1903 = vmax.xlane.f32.xlu0 %v1902
        %v1904 = vpop.xlane.xlu0 %1903
        %v1905 = vsub.f32 %v1864, %v1889
        %v1906 = vsub.f32 %v1867, %v1892
        %v1907 = vsub.f32 %v1872, %v1895
        %v1908 = vsub.f32 %v1875, %v1898
        %v1909 = vsub.f32 %v1880, %v1901
        %v1910 = vsub.f32 %v1883, %v1904
        %v1911 = vmul.f32 %v1905, 1.442695
        %v1912 = vpow.pop %v1911
        %v1913 = vmul.f32 %v1906, 1.442695
        %v1914 = vpow.pop %v1913
        %v1915 = vmul.f32 %v1907, 1.442695
        %v1916 = vpow.pop %v1915
        %v1917 = vmul.f32 %v1908, 1.442695
        %v1918 = vpow.pop %v1917
        %v1919 = vmul.f32 %v1909, 1.442695
        %v1920 = vpow.pop %v1919
        %v1921 = vmul.f32 %v1910, 1.442695
        %v1922 = vpow.pop %v1921
        %v1923 = vsel %vm1886, %v1912, 0.0
        %1924 = vadd.xlane.f32.xlu0 %v1923
        %v1925 = vpop.xlane.xlu0 %1924
        %v1926 = vsel %vm1886, %v1914, 0.0
        %1927 = vadd.xlane.f32.xlu0 %v1926
        %v1928 = vpop.xlane.xlu0 %1927
        %v1929 = vsel %vm1886, %v1916, 0.0
        %1930 = vadd.xlane.f32.xlu0 %v1929
        %v1931 = vpop.xlane.xlu0 %1930
        %v1932 = vsel %vm1886, %v1918, 0.0
        %1933 = vadd.xlane.f32.xlu0 %v1932
        %v1934 = vpop.xlane.xlu0 %1933
        %v1935 = vsel %vm1886, %v1920, 0.0
        %1936 = vadd.xlane.f32.xlu0 %v1935
        %v1937 = vpop.xlane.xlu0 %1936
        %v1938 = vsel %vm1886, %v1922, 0.0
        %1939 = vadd.xlane.f32.xlu0 %v1938
        %v1940 = vpop.xlane.xlu0 %1939
        %v1941 = vrcp.pop %v1925
        %v1942 = vmul.f32 %v1912, %v1941
        %v1943 = vrcp.pop %v1928
        %v1944 = vmul.f32 %v1914, %v1943
        %v1945 = vrcp.pop %v1931
        %v1946 = vmul.f32 %v1916, %v1945
        %v1947 = vrcp.pop %v1934
        %v1948 = vmul.f32 %v1918, %v1947
        %v1949 = vrcp.pop %v1937
        %v1950 = vmul.f32 %v1920, %v1949
        %v1951 = vrcp.pop %v1940
        %v1952 = vmul.f32 %v1922, %v1951
        %v1953 = vpack.c.bf16 %v1944, %v1942
        %v1954 = vpack.c.bf16 %v1948, %v1946
        %v1955 = vpack.c.bf16 %v1952, %v1950
        %v1957 = vsel %vm1886, %v1953, 0
        %v1960 = vsel %vm1886, %v1954, 0
        %v1963 = vsel %vm1886, %v1955, 0
        %1965 = vmatprep.subr.bf16.mxu0 0
        %1966 = vmatpush1.bf16.msra.mxu0 %v1817
        %1967 = vmatprep.subr.bf16.mxu0 0
        %1968 = vmatpush1.bf16.msra.mxu0 %v1821
        %1969 = vmatprep.subr.bf16.mxu0 0
        %1970 = vmatpush1.bf16.msra.mxu0 %v1825
        %1971 = vmatprep.subr.bf16.mxu0 0
        %1972 = vmatpush1.bf16.msra.mxu0 0
        %1973 = vmatprep.subr.bf16.mxu0 0
        %1974 = vmatpush1.bf16.msra.mxu0 0
        %1975 = vmatprep.subr.bf16.mxu0 0
        %1976 = vmatpush1.bf16.msra.mxu0 0
        %1977 = vmatprep.subr.bf16.mxu0 0
        %1978 = vmatpush1.bf16.msra.mxu0 0
        %1979 = vmatprep.subr.bf16.mxu0 0
        %1980 = vmatpush1.bf16.msra.mxu0 0
        %1981 = vmatprep.subr.bf16.mxu0 0
        %1982 = vmatpush1.bf16.msra.mxu0 0
        %1983 = vmatprep.subr.bf16.mxu0 0
        %1984 = vmatpush1.bf16.msra.mxu0 0
        %1985 = vmatprep.subr.bf16.mxu0 0
        %1986 = vmatpush1.bf16.msra.mxu0 0
        %1987 = vmatprep.subr.bf16.mxu0 0
        %1988 = vmatpush1.bf16.msra.mxu0 0
        %1989 = vmatprep.subr.bf16.mxu0 0
        %1990 = vmatpush1.bf16.msra.mxu0 0
        %1991 = vmatprep.subr.bf16.mxu0 0
        %1992 = vmatpush1.bf16.msra.mxu0 0
        %1993 = vmatprep.subr.bf16.mxu0 0
        %1994 = vmatpush1.bf16.msra.mxu0 0
        %1995 = vmatprep.subr.bf16.mxu0 0
        %1996 = vmatpush1.bf16.msra.mxu0 0
        %1997 = vmatprep.mubr.bf16.mxu0 0
        %1998 = vmatmul.mubr.bf16.gmra.mrb[0].mxu0 %v1957
        %v1999 = vpop.f32.mrb[0].mxu0
        %v2000 = vadd.f32 0.0, %v1999
        %v2001 = vpop.f32.mrb[0].mxu0
        %v2002 = vpop.f32.mrb[0].mxu0
        %v2003 = vadd.f32 0.0, %v2002
        %v2004 = vpop.f32.mrb[0].mxu0
        %2005 = vmatprep.mubr.bf16.mxu0 0
        %2006 = vmatmul.mubr.bf16.gmra.mrb[0].mxu0 %v1960
        %v2007 = vpop.f32.mrb[0].mxu0
        %v2008 = vadd.f32 0.0, %v2007
        %v2009 = vpop.f32.mrb[0].mxu0
        %v2010 = vpop.f32.mrb[0].mxu0
        %v2011 = vadd.f32 0.0, %v2010
        %v2012 = vpop.f32.mrb[0].mxu0
        %2013 = vmatprep.mubr.bf16.mxu0 0
        %2014 = vmatmul.mubr.bf16.gmra.mrb[0].mxu0 %v1963
        %v2015 = vpop.f32.mrb[0].mxu0
        %v2016 = vadd.f32 0.0, %v2015
        %v2017 = vpop.f32.mrb[0].mxu0
        %v2018 = vpop.f32.mrb[0].mxu0
        %v2019 = vadd.f32 0.0, %v2018
        %v2020 = vpop.f32.mrb[0].mxu0
        %2021 = vdwg.mxu0
        %v2022 = vpack.c.bf16 %v2003, %v2000
        %v2023 = vpack.c.bf16 %v2011, %v2008
        %v2024 = vpack.c.bf16 %v2019, %v2016
        %2025 = vmatprep.subr.bf16.mxu0 0
        %2026 = vmatpush1.bf16.xpose.msra.mxu0 %v1806
        %2027 = vmatprep.subr.bf16.mxu0 0
        %2028 = vmatpush1.bf16.xpose.msra.mxu0 %v1810
        %2029 = vmatprep.subr.bf16.mxu0 0
        %2030 = vmatpush1.bf16.xpose.msra.mxu0 %v1814
        %2031 = vmatprep.subr.bf16.mxu0 0
        %2032 = vmatpush1.bf16.xpose.msra.mxu0 0
        %2033 = vmatprep.subr.bf16.mxu0 0
        %2034 = vmatpush1.bf16.xpose.msra.mxu0 0
        %2035 = vmatprep.subr.bf16.mxu0 0
        %2036 = vmatpush1.bf16.xpose.msra.mxu0 0
        %2037 = vmatprep.subr.bf16.mxu0 0
        %2038 = vmatpush1.bf16.xpose.msra.mxu0 0
        %2039 = vmatprep.subr.bf16.mxu0 0
        %2040 = vmatpush1.bf16.xpose.msra.mxu0 0
        %2041 = vmatprep.subr.bf16.mxu0 0
        %2042 = vmatpush1.bf16.xpose.msra.mxu0 0
        %2043 = vmatprep.subr.bf16.mxu0 0
        %2044 = vmatpush1.bf16.xpose.msra.mxu0 0
        %2045 = vmatprep.subr.bf16.mxu0 0
        %2046 = vmatpush1.bf16.xpose.msra.mxu0 0
        %2047 = vmatprep.subr.bf16.mxu0 0
        %2048 = vmatpush1.bf16.xpose.msra.mxu0 0
        %2049 = vmatprep.subr.bf16.mxu0 0
        %2050 = vmatpush1.bf16.xpose.msra.mxu0 0
        %2051 = vmatprep.subr.bf16.mxu0 0
        %2052 = vmatpush1.bf16.xpose.msra.mxu0 0
        %2053 = vmatprep.subr.bf16.mxu0 0
        %2054 = vmatpush1.bf16.xpose.msra.mxu0 0
        %2055 = vmatprep.subr.bf16.mxu0 0
        %2056 = vmatpush1.bf16.xpose.msra.mxu0 0
        %2057 = vmatprep.mubr.bf16.mxu0 0
        %2058 = vmatmul.mubr.bf16.gmra.mrb[0].mxu0 %v1794
        %v2059 = vpop.f32.mrb[0].mxu0
        %v2060 = vadd.f32 %v330, %v2059
        %v2061 = vpop.f32.mrb[0].mxu0
        %v2062 = vpop.f32.mrb[0].mxu0
        %v2063 = vadd.f32 %v331, %v2062
        %v2064 = vpop.f32.mrb[0].mxu0
        %2065 = vmatprep.mubr.bf16.mxu0 0
        %2066 = vmatmul.mubr.bf16.gmra.mrb[0].mxu0 %v1798
        %v2067 = vpop.f32.mrb[0].mxu0
        %v2068 = vadd.f32 %v332, %v2067
        %v2069 = vpop.f32.mrb[0].mxu0
        %v2070 = vpop.f32.mrb[0].mxu0
        %v2071 = vadd.f32 %v333, %v2070
        %v2072 = vpop.f32.mrb[0].mxu0
        %2073 = vmatprep.mubr.bf16.mxu0 0
        %2074 = vmatmul.mubr.bf16.gmra.mrb[0].mxu0 %v1802
        %v2075 = vpop.f32.mrb[0].mxu0
        %v2076 = vadd.f32 %v334, %v2075
        %v2077 = vpop.f32.mrb[0].mxu0
        %v2078 = vpop.f32.mrb[0].mxu0
        %v2079 = vadd.f32 %v335, %v2078
        %v2080 = vpop.f32.mrb[0].mxu0
        %2081 = vdwg.mxu0
        %v2082 = vsel %vm1886, %v2060, -inf
        %2083 = vmax.xlane.f32.xlu0 %v2082
        %v2084 = vpop.xlane.xlu0 %2083
        %v2085 = vsel %vm1886, %v2063, -inf
        %2086 = vmax.xlane.f32.xlu0 %v2085
        %v2087 = vpop.xlane.xlu0 %2086
        %v2088 = vsel %vm1886, %v2068, -inf
        %2089 = vmax.xlane.f32.xlu0 %v2088
        %v2090 = vpop.xlane.xlu0 %2089
        %v2091 = vsel %vm1886, %v2071, -inf
        %2092 = vmax.xlane.f32.xlu0 %v2091
        %v2093 = vpop.xlane.xlu0 %2092
        %v2094 = vsel %vm1886, %v2076, -inf
        %2095 = vmax.xlane.f32.xlu0 %v2094
        %v2096 = vpop.xlane.xlu0 %2095
        %v2097 = vsel %vm1886, %v2079, -inf
        %2098 = vmax.xlane.f32.xlu0 %v2097
        %v2099 = vpop.xlane.xlu0 %2098
        %v2100 = vsub.f32 %v2060, %v2084
        %v2101 = vsub.f32 %v2063, %v2087
        %v2102 = vsub.f32 %v2068, %v2090
        %v2103 = vsub.f32 %v2071, %v2093
        %v2104 = vsub.f32 %v2076, %v2096
        %v2105 = vsub.f32 %v2079, %v2099
        %v2106 = vmul.f32 %v2100, 1.442695
        %v2107 = vpow.pop %v2106
        %v2108 = vmul.f32 %v2101, 1.442695
        %v2109 = vpow.pop %v2108
        %v2110 = vmul.f32 %v2102, 1.442695
        %v2111 = vpow.pop %v2110
        %v2112 = vmul.f32 %v2103, 1.442695
        %v2113 = vpow.pop %v2112
        %v2114 = vmul.f32 %v2104, 1.442695
        %v2115 = vpow.pop %v2114
        %v2116 = vmul.f32 %v2105, 1.442695
        %v2117 = vpow.pop %v2116
        %v2118 = vsel %vm1886, %v2107, 0.0
        %2119 = vadd.xlane.f32.xlu0 %v2118
        %v2120 = vpop.xlane.xlu0 %2119
        %v2121 = vsel %vm1886, %v2109, 0.0
        %2122 = vadd.xlane.f32.xlu0 %v2121
        %v2123 = vpop.xlane.xlu0 %2122
        %v2124 = vsel %vm1886, %v2111, 0.0
        %2125 = vadd.xlane.f32.xlu0 %v2124
        %v2126 = vpop.xlane.xlu0 %2125
        %v2127 = vsel %vm1886, %v2113, 0.0
        %2128 = vadd.xlane.f32.xlu0 %v2127
        %v2129 = vpop.xlane.xlu0 %2128
        %v2130 = vsel %vm1886, %v2115, 0.0
        %2131 = vadd.xlane.f32.xlu0 %v2130
        %v2132 = vpop.xlane.xlu0 %2131
        %v2133 = vsel %vm1886, %v2117, 0.0
        %2134 = vadd.xlane.f32.xlu0 %v2133
        %v2135 = vpop.xlane.xlu0 %2134
        %v2136 = vrcp.pop %v2120
        %v2137 = vmul.f32 %v2107, %v2136
        %v2138 = vrcp.pop %v2123
        %v2139 = vmul.f32 %v2109, %v2138
        %v2140 = vrcp.pop %v2126
        %v2141 = vmul.f32 %v2111, %v2140
        %v2142 = vrcp.pop %v2129
        %v2143 = vmul.f32 %v2113, %v2142
        %v2144 = vrcp.pop %v2132
        %v2145 = vmul.f32 %v2115, %v2144
        %v2146 = vrcp.pop %v2135
        %v2147 = vmul.f32 %v2117, %v2146
        %v2148 = vpack.c.bf16 %v2139, %v2137
        %v2149 = vpack.c.bf16 %v2143, %v2141
        %v2150 = vpack.c.bf16 %v2147, %v2145
        %v2152 = vsel %vm1886, %v2148, 0
        %v2155 = vsel %vm1886, %v2149, 0
        %v2158 = vsel %vm1886, %v2150, 0
        %2160 = vmatprep.subr.bf16.mxu0 0
        %2161 = vmatpush1.bf16.msra.mxu0 %v1818
        %2162 = vmatprep.subr.bf16.mxu0 0
        %2163 = vmatpush1.bf16.msra.mxu0 %v1822
        %2164 = vmatprep.subr.bf16.mxu0 0
        %2165 = vmatpush1.bf16.msra.mxu0 %v1826
        %2166 = vmatprep.subr.bf16.mxu0 0
        %2167 = vmatpush1.bf16.msra.mxu0 0
        %2168 = vmatprep.subr.bf16.mxu0 0
        %2169 = vmatpush1.bf16.msra.mxu0 0
        %2170 = vmatprep.subr.bf16.mxu0 0
        %2171 = vmatpush1.bf16.msra.mxu0 0
        %2172 = vmatprep.subr.bf16.mxu0 0
        %2173 = vmatpush1.bf16.msra.mxu0 0
        %2174 = vmatprep.subr.bf16.mxu0 0
        %2175 = vmatpush1.bf16.msra.mxu0 0
        %2176 = vmatprep.subr.bf16.mxu0 0
        %2177 = vmatpush1.bf16.msra.mxu0 0
        %2178 = vmatprep.subr.bf16.mxu0 0
        %2179 = vmatpush1.bf16.msra.mxu0 0
        %2180 = vmatprep.subr.bf16.mxu0 0
        %2181 = vmatpush1.bf16.msra.mxu0 0
        %2182 = vmatprep.subr.bf16.mxu0 0
        %2183 = vmatpush1.bf16.msra.mxu0 0
        %2184 = vmatprep.subr.bf16.mxu0 0
        %2185 = vmatpush1.bf16.msra.mxu0 0
        %2186 = vmatprep.subr.bf16.mxu0 0
        %2187 = vmatpush1.bf16.msra.mxu0 0
        %2188 = vmatprep.subr.bf16.mxu0 0
        %2189 = vmatpush1.bf16.msra.mxu0 0
        %2190 = vmatprep.subr.bf16.mxu0 0
        %2191 = vmatpush1.bf16.msra.mxu0 0
        %2192 = vmatprep.mubr.bf16.mxu0 0
        %2193 = vmatmul.mubr.bf16.gmra.mrb[0].mxu0 %v2152
        %v2194 = vpop.f32.mrb[0].mxu0
        %v2195 = vadd.f32 0.0, %v2194
        %v2196 = vpop.f32.mrb[0].mxu0
        %v2197 = vpop.f32.mrb[0].mxu0
        %v2198 = vadd.f32 0.0, %v2197
        %v2199 = vpop.f32.mrb[0].mxu0
        %2200 = vmatprep.mubr.bf16.mxu0 0
        %2201 = vmatmul.mubr.bf16.gmra.mrb[0].mxu0 %v2155
        %v2202 = vpop.f32.mrb[0].mxu0
        %v2203 = vadd.f32 0.0, %v2202
        %v2204 = vpop.f32.mrb[0].mxu0
        %v2205 = vpop.f32.mrb[0].mxu0
        %v2206 = vadd.f32 0.0, %v2205
        %v2207 = vpop.f32.mrb[0].mxu0
        %2208 = vmatprep.mubr.bf16.mxu0 0
        %2209 = vmatmul.mubr.bf16.gmra.mrb[0].mxu0 %v2158
        %v2210 = vpop.f32.mrb[0].mxu0
        %v2211 = vadd.f32 0.0, %v2210
        %v2212 = vpop.f32.mrb[0].mxu0
        %v2213 = vpop.f32.mrb[0].mxu0
        %v2214 = vadd.f32 0.0, %v2213
        %v2215 = vpop.f32.mrb[0].mxu0
        %2216 = vdwg.mxu0
        %v2217 = vpack.c.bf16 %v2198, %v2195
        %v2218 = vpack.c.bf16 %v2206, %v2203
        %v2219 = vpack.c.bf16 %v2214, %v2211
        %2220 = vmatprep.subr.bf16.mxu0 0
        %2221 = vmatpush1.bf16.xpose.msra.mxu0 %v1807
        %2222 = vmatprep.subr.bf16.mxu0 0
        %2223 = vmatpush1.bf16.xpose.msra.mxu0 %v1811
        %2224 = vmatprep.subr.bf16.mxu0 0
        %2225 = vmatpush1.bf16.xpose.msra.mxu0 %v1815
        %2226 = vmatprep.subr.bf16.mxu0 0
        %2227 = vmatpush1.bf16.xpose.msra.mxu0 0
        %2228 = vmatprep.subr.bf16.mxu0 0
        %2229 = vmatpush1.bf16.xpose.msra.mxu0 0
        %2230 = vmatprep.subr.bf16.mxu0 0
        %2231 = vmatpush1.bf16.xpose.msra.mxu0 0
        %2232 = vmatprep.subr.bf16.mxu0 0
        %2233 = vmatpush1.bf16.xpose.msra.mxu0 0
        %2234 = vmatprep.subr.bf16.mxu0 0
        %2235 = vmatpush1.bf16.xpose.msra.mxu0 0
        %2236 = vmatprep.subr.bf16.mxu0 0
        %2237 = vmatpush1.bf16.xpose.msra.mxu0 0
        %2238 = vmatprep.subr.bf16.mxu0 0
        %2239 = vmatpush1.bf16.xpose.msra.mxu0 0
        %2240 = vmatprep.subr.bf16.mxu0 0
        %2241 = vmatpush1.bf16.xpose.msra.mxu0 0
        %2242 = vmatprep.subr.bf16.mxu0 0
        %2243 = vmatpush1.bf16.xpose.msra.mxu0 0
        %2244 = vmatprep.subr.bf16.mxu0 0
        %2245 = vmatpush1.bf16.xpose.msra.mxu0 0
        %2246 = vmatprep.subr.bf16.mxu0 0
        %2247 = vmatpush1.bf16.xpose.msra.mxu0 0
        %2248 = vmatprep.subr.bf16.mxu0 0
        %2249 = vmatpush1.bf16.xpose.msra.mxu0 0
        %2250 = vmatprep.subr.bf16.mxu0 0
        %2251 = vmatpush1.bf16.xpose.msra.mxu0 0
        %2252 = vmatprep.mubr.bf16.mxu0 0
        %2253 = vmatmul.mubr.bf16.gmra.mrb[0].mxu0 %v1795
        %v2254 = vpop.f32.mrb[0].mxu0
        %v2255 = vadd.f32 %v330, %v2254
        %v2256 = vpop.f32.mrb[0].mxu0
        %v2257 = vpop.f32.mrb[0].mxu0
        %v2258 = vadd.f32 %v331, %v2257
        %v2259 = vpop.f32.mrb[0].mxu0
        %2260 = vmatprep.mubr.bf16.mxu0 0
        %2261 = vmatmul.mubr.bf16.gmra.mrb[0].mxu0 %v1799
        %v2262 = vpop.f32.mrb[0].mxu0
        %v2263 = vadd.f32 %v332, %v2262
        %v2264 = vpop.f32.mrb[0].mxu0
        %v2265 = vpop.f32.mrb[0].mxu0
        %v2266 = vadd.f32 %v333, %v2265
        %v2267 = vpop.f32.mrb[0].mxu0
        %2268 = vmatprep.mubr.bf16.mxu0 0
        %2269 = vmatmul.mubr.bf16.gmra.mrb[0].mxu0 %v1803
        %v2270 = vpop.f32.mrb[0].mxu0
        %v2271 = vadd.f32 %v334, %v2270
        %v2272 = vpop.f32.mrb[0].mxu0
        %v2273 = vpop.f32.mrb[0].mxu0
        %v2274 = vadd.f32 %v335, %v2273
        %v2275 = vpop.f32.mrb[0].mxu0
        %2276 = vdwg.mxu0
        %v2277 = vsel %vm1886, %v2255, -inf
        %2278 = vmax.xlane.f32.xlu0 %v2277
        %v2279 = vpop.xlane.xlu0 %2278
        %v2280 = vsel %vm1886, %v2258, -inf
        %2281 = vmax.xlane.f32.xlu0 %v2280
        %v2282 = vpop.xlane.xlu0 %2281
        %v2283 = vsel %vm1886, %v2263, -inf
        %2284 = vmax.xlane.f32.xlu0 %v2283
        %v2285 = vpop.xlane.xlu0 %2284
        %v2286 = vsel %vm1886, %v2266, -inf
        %2287 = vmax.xlane.f32.xlu0 %v2286
        %v2288 = vpop.xlane.xlu0 %2287
        %v2289 = vsel %vm1886, %v2271, -inf
        %2290 = vmax.xlane.f32.xlu0 %v2289
        %v2291 = vpop.xlane.xlu0 %2290
        %v2292 = vsel %vm1886, %v2274, -inf
        %2293 = vmax.xlane.f32.xlu0 %v2292
        %v2294 = vpop.xlane.xlu0 %2293
        %v2295 = vsub.f32 %v2255, %v2279
        %v2296 = vsub.f32 %v2258, %v2282
        %v2297 = vsub.f32 %v2263, %v2285
        %v2298 = vsub.f32 %v2266, %v2288
        %v2299 = vsub.f32 %v2271, %v2291
        %v2300 = vsub.f32 %v2274, %v2294
        %v2301 = vmul.f32 %v2295, 1.442695
        %v2302 = vpow.pop %v2301
        %v2303 = vmul.f32 %v2296, 1.442695
        %v2304 = vpow.pop %v2303
        %v2305 = vmul.f32 %v2297, 1.442695
        %v2306 = vpow.pop %v2305
        %v2307 = vmul.f32 %v2298, 1.442695
        %v2308 = vpow.pop %v2307
        %v2309 = vmul.f32 %v2299, 1.442695
        %v2310 = vpow.pop %v2309
        %v2311 = vmul.f32 %v2300, 1.442695
        %v2312 = vpow.pop %v2311
        %v2313 = vsel %vm1886, %v2302, 0.0
        %2314 = vadd.xlane.f32.xlu0 %v2313
        %v2315 = vpop.xlane.xlu0 %2314
        %v2316 = vsel %vm1886, %v2304, 0.0
        %2317 = vadd.xlane.f32.xlu0 %v2316
        %v2318 = vpop.xlane.xlu0 %2317
        %v2319 = vsel %vm1886, %v2306, 0.0
        %2320 = vadd.xlane.f32.xlu0 %v2319
        %v2321 = vpop.xlane.xlu0 %2320
        %v2322 = vsel %vm1886, %v2308, 0.0
        %2323 = vadd.xlane.f32.xlu0 %v2322
        %v2324 = vpop.xlane.xlu0 %2323
        %v2325 = vsel %vm1886, %v2310, 0.0
        %2326 = vadd.xlane.f32.xlu0 %v2325
        %v2327 = vpop.xlane.xlu0 %2326
        %v2328 = vsel %vm1886, %v2312, 0.0
        %2329 = vadd.xlane.f32.xlu0 %v2328
        %v2330 = vpop.xlane.xlu0 %2329
        %v2331 = vrcp.pop %v2315
        %v2332 = vmul.f32 %v2302, %v2331
        %v2333 = vrcp.pop %v2318
        %v2334 = vmul.f32 %v2304, %v2333
        %v2335 = vrcp.pop %v2321
        %v2336 = vmul.f32 %v2306, %v2335
        %v2337 = vrcp.pop %v2324
        %v2338 = vmul.f32 %v2308, %v2337
        %v2339 = vrcp.pop %v2327
        %v2340 = vmul.f32 %v2310, %v2339
        %v2341 = vrcp.pop %v2330
        %v2342 = vmul.f32 %v2312, %v2341
        %v2343 = vpack.c.bf16 %v2334, %v2332
        %v2344 = vpack.c.bf16 %v2338, %v2336
        %v2345 = vpack.c.bf16 %v2342, %v2340
        %v2347 = vsel %vm1886, %v2343, 0
        %v2350 = vsel %vm1886, %v2344, 0
        %v2353 = vsel %vm1886, %v2345, 0
        %2355 = vmatprep.subr.bf16.mxu0 0
        %2356 = vmatpush1.bf16.msra.mxu0 %v1819
        %2357 = vmatprep.subr.bf16.mxu0 0
        %2358 = vmatpush1.bf16.msra.mxu0 %v1823
        %2359 = vmatprep.subr.bf16.mxu0 0
        %2360 = vmatpush1.bf16.msra.mxu0 %v1827
        %2361 = vmatprep.subr.bf16.mxu0 0
        %2362 = vmatpush1.bf16.msra.mxu0 0
        %2363 = vmatprep.subr.bf16.mxu0 0
        %2364 = vmatpush1.bf16.msra.mxu0 0
        %2365 = vmatprep.subr.bf16.mxu0 0
        %2366 = vmatpush1.bf16.msra.mxu0 0
        %2367 = vmatprep.subr.bf16.mxu0 0
        %2368 = vmatpush1.bf16.msra.mxu0 0
        %2369 = vmatprep.subr.bf16.mxu0 0
        %2370 = vmatpush1.bf16.msra.mxu0 0
        %2371 = vmatprep.subr.bf16.mxu0 0
        %2372 = vmatpush1.bf16.msra.mxu0 0
        %2373 = vmatprep.subr.bf16.mxu0 0
        %2374 = vmatpush1.bf16.msra.mxu0 0
        %2375 = vmatprep.subr.bf16.mxu0 0
        %2376 = vmatpush1.bf16.msra.mxu0 0
        %2377 = vmatprep.subr.bf16.mxu0 0
        %2378 = vmatpush1.bf16.msra.mxu0 0
        %2379 = vmatprep.subr.bf16.mxu0 0
        %2380 = vmatpush1.bf16.msra.mxu0 0
        %2381 = vmatprep.subr.bf16.mxu0 0
        %2382 = vmatpush1.bf16.msra.mxu0 0
        %2383 = vmatprep.subr.bf16.mxu0 0
        %2384 = vmatpush1.bf16.msra.mxu0 0
        %2385 = vmatprep.subr.bf16.mxu0 0
        %2386 = vmatpush1.bf16.msra.mxu0 0
        %2387 = vmatprep.mubr.bf16.mxu0 0
        %2388 = vmatmul.mubr.bf16.gmra.mrb[0].mxu0 %v2347
        %v2389 = vpop.f32.mrb[0].mxu0
        %v2390 = vadd.f32 0.0, %v2389
        %v2391 = vpop.f32.mrb[0].mxu0
        %v2392 = vpop.f32.mrb[0].mxu0
        %v2393 = vadd.f32 0.0, %v2392
        %v2394 = vpop.f32.mrb[0].mxu0
        %2395 = vmatprep.mubr.bf16.mxu0 0
        %2396 = vmatmul.mubr.bf16.gmra.mrb[0].mxu0 %v2350
        %v2397 = vpop.f32.mrb[0].mxu0
        %v2398 = vadd.f32 0.0, %v2397
        %v2399 = vpop.f32.mrb[0].mxu0
        %v2400 = vpop.f32.mrb[0].mxu0
        %v2401 = vadd.f32 0.0, %v2400
        %v2402 = vpop.f32.mrb[0].mxu0
        %2403 = vmatprep.mubr.bf16.mxu0 0
        %2404 = vmatmul.mubr.bf16.gmra.mrb[0].mxu0 %v2353
        %v2405 = vpop.f32.mrb[0].mxu0
        %v2406 = vadd.f32 0.0, %v2405
        %v2407 = vpop.f32.mrb[0].mxu0
        %v2408 = vpop.f32.mrb[0].mxu0
        %v2409 = vadd.f32 0.0, %v2408
        %v2410 = vpop.f32.mrb[0].mxu0
        %2411 = vdwg.mxu0
        %v2412 = vpack.c.bf16 %v2393, %v2390
        %v2413 = vpack.c.bf16 %v2401, %v2398
        %v2414 = vpack.c.bf16 %v2409, %v2406
        %2415 = vmatprep.subr.bf16.mxu0 0
        %2416 = vmatpush1.bf16.xpose.msra.mxu0 %v1808
        %2417 = vmatprep.subr.bf16.mxu0 0
        %2418 = vmatpush1.bf16.xpose.msra.mxu0 %v1812
        %2419 = vmatprep.subr.bf16.mxu0 0
        %2420 = vmatpush1.bf16.xpose.msra.mxu0 %v1816
        %2421 = vmatprep.subr.bf16.mxu0 0
        %2422 = vmatpush1.bf16.xpose.msra.mxu0 0
        %2423 = vmatprep.subr.bf16.mxu0 0
        %2424 = vmatpush1.bf16.xpose.msra.mxu0 0
        %2425 = vmatprep.subr.bf16.mxu0 0
        %2426 = vmatpush1.bf16.xpose.msra.mxu0 0
        %2427 = vmatprep.subr.bf16.mxu0 0
        %2428 = vmatpush1.bf16.xpose.msra.mxu0 0
        %2429 = vmatprep.subr.bf16.mxu0 0
        %2430 = vmatpush1.bf16.xpose.msra.mxu0 0
        %2431 = vmatprep.subr.bf16.mxu0 0
        %2432 = vmatpush1.bf16.xpose.msra.mxu0 0
        %2433 = vmatprep.subr.bf16.mxu0 0
        %2434 = vmatpush1.bf16.xpose.msra.mxu0 0
        %2435 = vmatprep.subr.bf16.mxu0 0
        %2436 = vmatpush1.bf16.xpose.msra.mxu0 0
        %2437 = vmatprep.subr.bf16.mxu0 0
        %2438 = vmatpush1.bf16.xpose.msra.mxu0 0
        %2439 = vmatprep.subr.bf16.mxu0 0
        %2440 = vmatpush1.bf16.xpose.msra.mxu0 0
        %2441 = vmatprep.subr.bf16.mxu0 0
        %2442 = vmatpush1.bf16.xpose.msra.mxu0 0
        %2443 = vmatprep.subr.bf16.mxu0 0
        %2444 = vmatpush1.bf16.xpose.msra.mxu0 0
        %2445 = vmatprep.subr.bf16.mxu0 0
        %2446 = vmatpush1.bf16.xpose.msra.mxu0 0
        %2447 = vmatprep.mubr.bf16.mxu0 0
        %2448 = vmatmul.mubr.bf16.gmra.mrb[0].mxu0 %v1796
        %v2449 = vpop.f32.mrb[0].mxu0
        %v2450 = vadd.f32 %v330, %v2449
        %v2451 = vpop.f32.mrb[0].mxu0
        %v2452 = vpop.f32.mrb[0].mxu0
        %v2453 = vadd.f32 %v331, %v2452
        %v2454 = vpop.f32.mrb[0].mxu0
        %2455 = vmatprep.mubr.bf16.mxu0 0
        %2456 = vmatmul.mubr.bf16.gmra.mrb[0].mxu0 %v1800
        %v2457 = vpop.f32.mrb[0].mxu0
        %v2458 = vadd.f32 %v332, %v2457
        %v2459 = vpop.f32.mrb[0].mxu0
        %v2460 = vpop.f32.mrb[0].mxu0
        %v2461 = vadd.f32 %v333, %v2460
        %v2462 = vpop.f32.mrb[0].mxu0
        %2463 = vmatprep.mubr.bf16.mxu0 0
        %2464 = vmatmul.mubr.bf16.gmra.mrb[0].mxu0 %v1804
        %v2465 = vpop.f32.mrb[0].mxu0
        %v2466 = vadd.f32 %v334, %v2465
        %v2467 = vpop.f32.mrb[0].mxu0
        %v2468 = vpop.f32.mrb[0].mxu0
        %v2469 = vadd.f32 %v335, %v2468
        %v2470 = vpop.f32.mrb[0].mxu0
        %2471 = vdwg.mxu0
        %v2472 = vsel %vm1886, %v2450, -inf
        %2473 = vmax.xlane.f32.xlu0 %v2472
        %v2474 = vpop.xlane.xlu0 %2473
        %v2475 = vsel %vm1886, %v2453, -inf
        %2476 = vmax.xlane.f32.xlu0 %v2475
        %v2477 = vpop.xlane.xlu0 %2476
        %v2478 = vsel %vm1886, %v2458, -inf
        %2479 = vmax.xlane.f32.xlu0 %v2478
        %v2480 = vpop.xlane.xlu0 %2479
        %v2481 = vsel %vm1886, %v2461, -inf
        %2482 = vmax.xlane.f32.xlu0 %v2481
        %v2483 = vpop.xlane.xlu0 %2482
        %v2484 = vsel %vm1886, %v2466, -inf
        %2485 = vmax.xlane.f32.xlu0 %v2484
        %v2486 = vpop.xlane.xlu0 %2485
        %v2487 = vsel %vm1886, %v2469, -inf
        %2488 = vmax.xlane.f32.xlu0 %v2487
        %v2489 = vpop.xlane.xlu0 %2488
        %v2490 = vsub.f32 %v2450, %v2474
        %v2491 = vsub.f32 %v2453, %v2477
        %v2492 = vsub.f32 %v2458, %v2480
        %v2493 = vsub.f32 %v2461, %v2483
        %v2494 = vsub.f32 %v2466, %v2486
        %v2495 = vsub.f32 %v2469, %v2489
        %v2496 = vmul.f32 %v2490, 1.442695
        %v2497 = vpow.pop %v2496
        %v2498 = vmul.f32 %v2491, 1.442695
        %v2499 = vpow.pop %v2498
        %v2500 = vmul.f32 %v2492, 1.442695
        %v2501 = vpow.pop %v2500
        %v2502 = vmul.f32 %v2493, 1.442695
        %v2503 = vpow.pop %v2502
        %v2504 = vmul.f32 %v2494, 1.442695
        %v2505 = vpow.pop %v2504
        %v2506 = vmul.f32 %v2495, 1.442695
        %v2507 = vpow.pop %v2506
        %v2508 = vsel %vm1886, %v2497, 0.0
        %2509 = vadd.xlane.f32.xlu0 %v2508
        %v2510 = vpop.xlane.xlu0 %2509
        %v2511 = vsel %vm1886, %v2499, 0.0
        %2512 = vadd.xlane.f32.xlu0 %v2511
        %v2513 = vpop.xlane.xlu0 %2512
        %v2514 = vsel %vm1886, %v2501, 0.0
        %2515 = vadd.xlane.f32.xlu0 %v2514
        %v2516 = vpop.xlane.xlu0 %2515
        %v2517 = vsel %vm1886, %v2503, 0.0
        %2518 = vadd.xlane.f32.xlu0 %v2517
        %v2519 = vpop.xlane.xlu0 %2518
        %v2520 = vsel %vm1886, %v2505, 0.0
        %2521 = vadd.xlane.f32.xlu0 %v2520
        %v2522 = vpop.xlane.xlu0 %2521
        %v2523 = vsel %vm1886, %v2507, 0.0
        %2524 = vadd.xlane.f32.xlu0 %v2523
        %v2525 = vpop.xlane.xlu0 %2524
        %v2526 = vrcp.pop %v2510
        %v2527 = vmul.f32 %v2497, %v2526
        %v2528 = vrcp.pop %v2513
        %v2529 = vmul.f32 %v2499, %v2528
        %v2530 = vrcp.pop %v2516
        %v2531 = vmul.f32 %v2501, %v2530
        %v2532 = vrcp.pop %v2519
        %v2533 = vmul.f32 %v2503, %v2532
        %v2534 = vrcp.pop %v2522
        %v2535 = vmul.f32 %v2505, %v2534
        %v2536 = vrcp.pop %v2525
        %v2537 = vmul.f32 %v2507, %v2536
        %v2538 = vpack.c.bf16 %v2529, %v2527
        %v2539 = vpack.c.bf16 %v2533, %v2531
        %v2540 = vpack.c.bf16 %v2537, %v2535
        %v2542 = vsel %vm1886, %v2538, 0
        %v2545 = vsel %vm1886, %v2539, 0
        %v2548 = vsel %vm1886, %v2540, 0
        %2550 = vmatprep.subr.bf16.mxu0 0
        %2551 = vmatpush1.bf16.msra.mxu0 %v1820
        %2552 = vmatprep.subr.bf16.mxu0 0
        %2553 = vmatpush1.bf16.msra.mxu0 %v1824
        %2554 = vmatprep.subr.bf16.mxu0 0
        %2555 = vmatpush1.bf16.msra.mxu0 %v1828
        %2556 = vmatprep.subr.bf16.mxu0 0
        %2557 = vmatpush1.bf16.msra.mxu0 0
        %2558 = vmatprep.subr.bf16.mxu0 0
        %2559 = vmatpush1.bf16.msra.mxu0 0
        %2560 = vmatprep.subr.bf16.mxu0 0
        %2561 = vmatpush1.bf16.msra.mxu0 0
        %2562 = vmatprep.subr.bf16.mxu0 0
        %2563 = vmatpush1.bf16.msra.mxu0 0
        %2564 = vmatprep.subr.bf16.mxu0 0
        %2565 = vmatpush1.bf16.msra.mxu0 0
        %2566 = vmatprep.subr.bf16.mxu0 0
        %2567 = vmatpush1.bf16.msra.mxu0 0
        %2568 = vmatprep.subr.bf16.mxu0 0
        %2569 = vmatpush1.bf16.msra.mxu0 0
        %2570 = vmatprep.subr.bf16.mxu0 0
        %2571 = vmatpush1.bf16.msra.mxu0 0
        %2572 = vmatprep.subr.bf16.mxu0 0
        %2573 = vmatpush1.bf16.msra.mxu0 0
        %2574 = vmatprep.subr.bf16.mxu0 0
        %2575 = vmatpush1.bf16.msra.mxu0 0
        %2576 = vmatprep.subr.bf16.mxu0 0
        %2577 = vmatpush1.bf16.msra.mxu0 0
        %2578 = vmatprep.subr.bf16.mxu0 0
        %2579 = vmatpush1.bf16.msra.mxu0 0
        %2580 = vmatprep.subr.bf16.mxu0 0
        %2581 = vmatpush1.bf16.msra.mxu0 0
        %2582 = vmatprep.mubr.bf16.mxu0 0
        %2583 = vmatmul.mubr.bf16.gmra.mrb[0].mxu0 %v2542
        %v2584 = vpop.f32.mrb[0].mxu0
        %v2585 = vadd.f32 0.0, %v2584
        %v2586 = vpop.f32.mrb[0].mxu0
        %v2587 = vpop.f32.mrb[0].mxu0
        %v2588 = vadd.f32 0.0, %v2587
        %v2589 = vpop.f32.mrb[0].mxu0
        %2590 = vmatprep.mubr.bf16.mxu0 0
        %2591 = vmatmul.mubr.bf16.gmra.mrb[0].mxu0 %v2545
        %v2592 = vpop.f32.mrb[0].mxu0
        %v2593 = vadd.f32 0.0, %v2592
        %v2594 = vpop.f32.mrb[0].mxu0
        %v2595 = vpop.f32.mrb[0].mxu0
        %v2596 = vadd.f32 0.0, %v2595
        %v2597 = vpop.f32.mrb[0].mxu0
        %2598 = vmatprep.mubr.bf16.mxu0 0
        %2599 = vmatmul.mubr.bf16.gmra.mrb[0].mxu0 %v2548
        %v2600 = vpop.f32.mrb[0].mxu0
        %v2601 = vadd.f32 0.0, %v2600
        %v2602 = vpop.f32.mrb[0].mxu0
        %v2603 = vpop.f32.mrb[0].mxu0
        %v2604 = vadd.f32 0.0, %v2603
        %v2605 = vpop.f32.mrb[0].mxu0
        %2606 = vdwg.mxu0
        %v2607 = vpack.c.bf16 %v2588, %v2585
        %v2608 = vpack.c.bf16 %v2596, %v2593
        %v2609 = vpack.c.bf16 %v2604, %v2601
        %v2610 = vld [vmem:[%s4] sm:$0xf]
        %v2611 = vld [vmem:[%s4 + $0x4] sm:$0xf]
        %v2612 = vld [vmem:[%s4 + $0x8] sm:$0xf]
        %v2613 = vld [vmem:[%s4 + $0xc] sm:$0xf]
        %v2614 = vld [vmem:[%s4 + $0x10] sm:$0xf]
        %v2615 = vld [vmem:[%s4 + $0x14] sm:$0xf]
        %v2616 = vld [vmem:[%s4 + $0x18] sm:$0xf]
        %v2617 = vld [vmem:[%s4 + $0x1c] sm:$0xf]
        %v2618 = vld [vmem:[%s4 + $0x20] sm:$0xf]
        %v2619 = vld [vmem:[%s4 + $0x24] sm:$0xf]
        %v2620 = vld [vmem:[%s4 + $0x28] sm:$0xf]
        %v2621 = vld [vmem:[%s4 + $0x2c] sm:$0xf]
        %v2622 = vld [vmem:[%s4 + $0x30] sm:$0xf]
        %v2623 = vld [vmem:[%s4 + $0x34] sm:$0xf]
        %v2624 = vld [vmem:[%s4 + $0x38] sm:$0xf]
        %v2625 = vld [vmem:[%s4 + $0x3c] sm:$0xf]
        %v2626 = vld [vmem:[%s4 + $0x40] sm:$0xf]
        %v2627 = vld [vmem:[%s4 + $0x44] sm:$0xf]
        %v2628 = vld [vmem:[%s4 + $0x48] sm:$0xf]
        %v2629 = vld [vmem:[%s4 + $0x4c] sm:$0xf]
        %v2630 = vld [vmem:[%s4 + $0x50] sm:$0xf]
        %v2631 = vld [vmem:[%s4 + $0x54] sm:$0xf]
        %v2632 = vld [vmem:[%s4 + $0x58] sm:$0xf]
        %v2633 = vld [vmem:[%s4 + $0x5c] sm:$0xf]
        %v2634 = vld [vmem:[%s4 + $0x60] sm:$0xf]
        %v2635 = vld [vmem:[%s4 + $0x64] sm:$0xf]
        %v2636 = vld [vmem:[%s4 + $0x68] sm:$0xf]
        %v2637 = vld [vmem:[%s4 + $0x6c] sm:$0xf]
        %v2638 = vld [vmem:[%s4 + $0x70] sm:$0xf]
        %v2639 = vld [vmem:[%s4 + $0x74] sm:$0xf]
        %v2640 = vld [vmem:[%s4 + $0x78] sm:$0xf]
        %v2641 = vld [vmem:[%s4 + $0x7c] sm:$0xf]
        %v2642 = vld [vmem:[%s4 + $0x80] sm:$0xf]
        %v2643 = vld [vmem:[%s4 + $0x84] sm:$0xf]
        %v2644 = vld [vmem:[%s4 + $0x88] sm:$0xf]
        %v2645 = vld [vmem:[%s4 + $0x8c] sm:$0xf]
        %v2646 = vld [vmem:[%s4 + $0x90] sm:$0xf]
        %v2647 = vld [vmem:[%s4 + $0x94] sm:$0xf]
        %v2648 = vld [vmem:[%s4 + $0x98] sm:$0xf]
        %v2649 = vld [vmem:[%s4 + $0x9c] sm:$0xf]
        %v2650 = vld [vmem:[%s4 + $0xa0] sm:$0xf]
        %v2651 = vld [vmem:[%s4 + $0xa4] sm:$0xf]
        %v2652 = vld [vmem:[%s4 + $0xa8] sm:$0xf]
        %v2653 = vld [vmem:[%s4 + $0xac] sm:$0xf]
        %v2654 = vld [vmem:[%s4 + $0xb0] sm:$0xf]
        %v2655 = vld [vmem:[%s4 + $0xb4] sm:$0xf]
        %v2656 = vld [vmem:[%s4 + $0xb8] sm:$0xf]
        %v2657 = vld [vmem:[%s4 + $0xbc] sm:$0xf]
        %v2658 = vld [vmem:[%s4 + $0xc0] sm:$0xf]
        %v2659 = vld [vmem:[%s4 + $0xc4] sm:$0xf]
        %v2660 = vld [vmem:[%s4 + $0xc8] sm:$0xf]
        %v2661 = vld [vmem:[%s4 + $0xcc] sm:$0xf]
        %v2662 = vld [vmem:[%s4 + $0xd0] sm:$0xf]
        %v2663 = vld [vmem:[%s4 + $0xd4] sm:$0xf]
        %v2664 = vld [vmem:[%s4 + $0xd8] sm:$0xf]
        %v2665 = vld [vmem:[%s4 + $0xdc] sm:$0xf]
        %v2666 = vld [vmem:[%s4 + $0xe0] sm:$0xf]
        %v2667 = vld [vmem:[%s4 + $0xe4] sm:$0xf]
        %v2668 = vld [vmem:[%s4 + $0xe8] sm:$0xf]
        %v2669 = vld [vmem:[%s4 + $0xec] sm:$0xf]
        %v2670 = vld [vmem:[%s4 + $0xf0] sm:$0xf]
        %v2671 = vld [vmem:[%s4 + $0xf4] sm:$0xf]
        %v2672 = vld [vmem:[%s4 + $0xf8] sm:$0xf]
        %v2673 = vld [vmem:[%s4 + $0xfc] sm:$0xf]
        %v2738 = vunpack.c.l.b16 %v2610
        %v2739 = vunpack.c.l.b16 %v2611
        %v2740 = vunpack.c.l.b16 %v2612
        %v2741 = vunpack.c.l.b16 %v2613
        %v2742 = vunpack.c.l.b16 %v2614
        %v2743 = vunpack.c.l.b16 %v2615
        %v2744 = vunpack.c.l.b16 %v2616
        %v2745 = vunpack.c.l.b16 %v2617
        %v2746 = vunpack.c.l.b16 %v2618
        %v2747 = vunpack.c.l.b16 %v2619
        %v2748 = vunpack.c.l.b16 %v2620
        %v2749 = vunpack.c.l.b16 %v2621
        %v2750 = vunpack.c.l.b16 %v2622
        %v2751 = vunpack.c.l.b16 %v2623
        %v2752 = vunpack.c.l.b16 %v2624
        %v2753 = vunpack.c.l.b16 %v2625
        %v2754 = vunpack.c.l.b16 %v2626
        %v2755 = vunpack.c.l.b16 %v2627
        %v2756 = vunpack.c.l.b16 %v2628
        %v2757 = vunpack.c.l.b16 %v2629
        %v2758 = vunpack.c.l.b16 %v2630
        %v2759 = vunpack.c.l.b16 %v2631
        %v2760 = vunpack.c.l.b16 %v2632
        %v2761 = vunpack.c.l.b16 %v2633
        %v2762 = vunpack.c.l.b16 %v2634
        %v2763 = vunpack.c.l.b16 %v2635
        %v2764 = vunpack.c.l.b16 %v2636
        %v2765 = vunpack.c.l.b16 %v2637
        %v2766 = vunpack.c.l.b16 %v2638
        %v2767 = vunpack.c.l.b16 %v2639
        %v2768 = vunpack.c.l.b16 %v2640
        %v2769 = vunpack.c.l.b16 %v2641
        %v2770 = vunpack.c.l.b16 %v2642
        %v2771 = vunpack.c.l.b16 %v2643
        %v2772 = vunpack.c.l.b16 %v2644
        %v2773 = vunpack.c.l.b16 %v2645
        %v2774 = vunpack.c.l.b16 %v2646
        %v2775 = vunpack.c.l.b16 %v2647
        %v2776 = vunpack.c.l.b16 %v2648
        %v2777 = vunpack.c.l.b16 %v2649
        %v2778 = vunpack.c.l.b16 %v2650
        %v2779 = vunpack.c.l.b16 %v2651
        %v2780 = vunpack.c.l.b16 %v2652
        %v2781 = vunpack.c.l.b16 %v2653
        %v2782 = vunpack.c.l.b16 %v2654
        %v2783 = vunpack.c.l.b16 %v2655
        %v2784 = vunpack.c.l.b16 %v2656
        %v2785 = vunpack.c.l.b16 %v2657
        %v2786 = vunpack.c.l.b16 %v2658
        %v2787 = vunpack.c.l.b16 %v2659
        %v2788 = vunpack.c.l.b16 %v2660
        %v2789 = vunpack.c.l.b16 %v2661
        %v2790 = vunpack.c.l.b16 %v2662
        %v2791 = vunpack.c.l.b16 %v2663
        %v2792 = vunpack.c.l.b16 %v2664
        %v2793 = vunpack.c.l.b16 %v2665
        %v2794 = vunpack.c.l.b16 %v2666
        %v2795 = vunpack.c.l.b16 %v2667
        %v2796 = vunpack.c.l.b16 %v2668
        %v2797 = vunpack.c.l.b16 %v2669
        %v2798 = vunpack.c.l.b16 %v2670
        %v2799 = vunpack.c.l.b16 %v2671
        %v2800 = vunpack.c.l.b16 %v2672
        %v2801 = vunpack.c.l.b16 %v2673
        %v2802 = vpack.c.b16 %v2739, %v2738
        %v2803 = vpack.c.b16 %v2741, %v2740
        %v2804 = vpack.c.b16 %v2743, %v2742
        %v2805 = vpack.c.b16 %v2745, %v2744
        %v2806 = vpack.c.b16 %v2747, %v2746
        %v2807 = vpack.c.b16 %v2749, %v2748
        %v2808 = vpack.c.b16 %v2751, %v2750
        %v2809 = vpack.c.b16 %v2753, %v2752
        %v2810 = vpack.c.b16 %v2755, %v2754
        %v2811 = vpack.c.b16 %v2757, %v2756
        %v2812 = vpack.c.b16 %v2759, %v2758
        %v2813 = vpack.c.b16 %v2761, %v2760
        %v2814 = vpack.c.b16 %v2763, %v2762
        %v2815 = vpack.c.b16 %v2765, %v2764
        %v2816 = vpack.c.b16 %v2767, %v2766
        %v2817 = vpack.c.b16 %v2769, %v2768
        %v2818 = vpack.c.b16 %v2771, %v2770
        %v2819 = vpack.c.b16 %v2773, %v2772
        %v2820 = vpack.c.b16 %v2775, %v2774
        %v2821 = vpack.c.b16 %v2777, %v2776
        %v2822 = vpack.c.b16 %v2779, %v2778
        %v2823 = vpack.c.b16 %v2781, %v2780
        %v2824 = vpack.c.b16 %v2783, %v2782
        %v2825 = vpack.c.b16 %v2785, %v2784
        %v2826 = vpack.c.b16 %v2787, %v2786
        %v2827 = vpack.c.b16 %v2789, %v2788
        %v2828 = vpack.c.b16 %v2791, %v2790
        %v2829 = vpack.c.b16 %v2793, %v2792
        %v2830 = vpack.c.b16 %v2795, %v2794
        %v2831 = vpack.c.b16 %v2797, %v2796
        %v2832 = vpack.c.b16 %v2799, %v2798
        %v2833 = vpack.c.b16 %v2801, %v2800
        %2866 = vmatprep.subr.bf16.mxu0 0
        %2867 = vmatpush1.bf16.msra.mxu0 %v2802
        %2868 = vmatprep.subr.bf16.mxu0 0
        %2869 = vmatpush1.bf16.msra.mxu0 %v2803
        %2870 = vmatprep.subr.bf16.mxu0 0
        %2871 = vmatpush1.bf16.msra.mxu0 %v2804
        %2872 = vmatprep.subr.bf16.mxu0 0
        %2873 = vmatpush1.bf16.msra.mxu0 %v2805
        %2874 = vmatprep.subr.bf16.mxu0 0
        %2875 = vmatpush1.bf16.msra.mxu0 %v2806
        %2876 = vmatprep.subr.bf16.mxu0 0
        %2877 = vmatpush1.bf16.msra.mxu0 %v2807
        %2878 = vmatprep.subr.bf16.mxu0 0
        %2879 = vmatpush1.bf16.msra.mxu0 %v2808
        %2880 = vmatprep.subr.bf16.mxu0 0
        %2881 = vmatpush1.bf16.msra.mxu0 %v2809
        %2882 = vmatprep.subr.bf16.mxu0 0
        %2883 = vmatpush1.bf16.msra.mxu0 %v2810
        %2884 = vmatprep.subr.bf16.mxu0 0
        %2885 = vmatpush1.bf16.msra.mxu0 %v2811
        %2886 = vmatprep.subr.bf16.mxu0 0
        %2887 = vmatpush1.bf16.msra.mxu0 %v2812
        %2888 = vmatprep.subr.bf16.mxu0 0
        %2889 = vmatpush1.bf16.msra.mxu0 %v2813
        %2890 = vmatprep.subr.bf16.mxu0 0
        %2891 = vmatpush1.bf16.msra.mxu0 %v2814
        %2892 = vmatprep.subr.bf16.mxu0 0
        %2893 = vmatpush1.bf16.msra.mxu0 %v2815
        %2894 = vmatprep.subr.bf16.mxu0 0
        %2895 = vmatpush1.bf16.msra.mxu0 %v2816
        %2896 = vmatprep.subr.bf16.mxu0 0
        %2897 = vmatpush1.bf16.msra.mxu0 %v2817
        %2898 = vmatprep.mubr.bf16.mxu0 %v2217
        %2899 = vmatmul.mubr.bf16.gmra.mrb[0].mxu0 %v2022
        %v2900 = vpop.f32.mrb[0].mxu0
        %v2901 = vadd.f32 0.0, %v2900
        %v2902 = vpop.f32.mrb[0].mxu0
        %v2903 = vpop.f32.mrb[0].mxu0
        %v2904 = vadd.f32 0.0, %v2903
        %v2905 = vpop.f32.mrb[0].mxu0
        %2906 = vmatprep.mubr.bf16.mxu0 %v2218
        %2907 = vmatmul.mubr.bf16.gmra.mrb[0].mxu0 %v2023
        %v2908 = vpop.f32.mrb[0].mxu0
        %v2909 = vadd.f32 0.0, %v2908
        %v2910 = vpop.f32.mrb[0].mxu0
        %v2911 = vpop.f32.mrb[0].mxu0
        %v2912 = vadd.f32 0.0, %v2911
        %v2913 = vpop.f32.mrb[0].mxu0
        %2914 = vmatprep.mubr.bf16.mxu0 %v2219
        %2915 = vmatmul.mubr.bf16.gmra.mrb[0].mxu0 %v2024
        %v2916 = vpop.f32.mrb[0].mxu0
        %v2917 = vadd.f32 0.0, %v2916
        %v2918 = vpop.f32.mrb[0].mxu0
        %v2919 = vpop.f32.mrb[0].mxu0
        %v2920 = vadd.f32 0.0, %v2919
        %v2921 = vpop.f32.mrb[0].mxu0
        %2922 = vdwg.mxu0
        %2923 = vmatprep.subr.bf16.mxu0 0
        %2924 = vmatpush1.bf16.msra.mxu0 %v2818
        %2925 = vmatprep.subr.bf16.mxu0 0
        %2926 = vmatpush1.bf16.msra.mxu0 %v2819
        %2927 = vmatprep.subr.bf16.mxu0 0
        %2928 = vmatpush1.bf16.msra.mxu0 %v2820
        %2929 = vmatprep.subr.bf16.mxu0 0
        %2930 = vmatpush1.bf16.msra.mxu0 %v2821
        %2931 = vmatprep.subr.bf16.mxu0 0
        %2932 = vmatpush1.bf16.msra.mxu0 %v2822
        %2933 = vmatprep.subr.bf16.mxu0 0
        %2934 = vmatpush1.bf16.msra.mxu0 %v2823
        %2935 = vmatprep.subr.bf16.mxu0 0
        %2936 = vmatpush1.bf16.msra.mxu0 %v2824
        %2937 = vmatprep.subr.bf16.mxu0 0
        %2938 = vmatpush1.bf16.msra.mxu0 %v2825
        %2939 = vmatprep.subr.bf16.mxu0 0
        %2940 = vmatpush1.bf16.msra.mxu0 %v2826
        %2941 = vmatprep.subr.bf16.mxu0 0
        %2942 = vmatpush1.bf16.msra.mxu0 %v2827
        %2943 = vmatprep.subr.bf16.mxu0 0
        %2944 = vmatpush1.bf16.msra.mxu0 %v2828
        %2945 = vmatprep.subr.bf16.mxu0 0
        %2946 = vmatpush1.bf16.msra.mxu0 %v2829
        %2947 = vmatprep.subr.bf16.mxu0 0
        %2948 = vmatpush1.bf16.msra.mxu0 %v2830
        %2949 = vmatprep.subr.bf16.mxu0 0
        %2950 = vmatpush1.bf16.msra.mxu0 %v2831
        %2951 = vmatprep.subr.bf16.mxu0 0
        %2952 = vmatpush1.bf16.msra.mxu0 %v2832
        %2953 = vmatprep.subr.bf16.mxu0 0
        %2954 = vmatpush1.bf16.msra.mxu0 %v2833
        %2955 = vmatprep.mubr.bf16.mxu0 %v2607
        %2956 = vmatmul.mubr.bf16.gmra.mrb[0].mxu0 %v2412
        %v2957 = vpop.f32.mrb[0].mxu0
        %v2958 = vadd.f32 %v2901, %v2957
        %v2959 = vpop.f32.mrb[0].mxu0
        %v2960 = vpop.f32.mrb[0].mxu0
        %v2961 = vadd.f32 %v2904, %v2960
        %v2962 = vpop.f32.mrb[0].mxu0
        %2963 = vmatprep.mubr.bf16.mxu0 %v2608
        %2964 = vmatmul.mubr.bf16.gmra.mrb[0].mxu0 %v2413
        %v2965 = vpop.f32.mrb[0].mxu0
        %v2966 = vadd.f32 %v2909, %v2965
        %v2967 = vpop.f32.mrb[0].mxu0
        %v2968 = vpop.f32.mrb[0].mxu0
        %v2969 = vadd.f32 %v2912, %v2968
        %v2970 = vpop.f32.mrb[0].mxu0
        %2971 = vmatprep.mubr.bf16.mxu0 %v2609
        %2972 = vmatmul.mubr.bf16.gmra.mrb[0].mxu0 %v2414
        %v2973 = vpop.f32.mrb[0].mxu0
        %v2974 = vadd.f32 %v2917, %v2973
        %v2975 = vpop.f32.mrb[0].mxu0
        %v2976 = vpop.f32.mrb[0].mxu0
        %v2977 = vadd.f32 %v2920, %v2976
        %v2978 = vpop.f32.mrb[0].mxu0
        %2979 = vdwg.mxu0
        %v2980 = vadd.f32 %v297, %v2958
        %v2981 = vadd.f32 %v298, %v2961
        %v2982 = vadd.f32 %v299, %v2966
        %v2983 = vadd.f32 %v300, %v2969
        %v2984 = vadd.f32 %v301, %v2974
        %v2985 = vadd.f32 %v302, %v2977
        %v2986 = vld [vmem:[%s5 + $0x1] sm:$0x1]
        %v2987 = vmul.f32 %v2980, %v2980
        %v2988 = vmul.f32 %v2981, %v2981
        %v2989 = vmul.f32 %v2982, %v2982
        %v2990 = vmul.f32 %v2983, %v2983
        %v2991 = vmul.f32 %v2984, %v2984
        %v2992 = vmul.f32 %v2985, %v2985
        %v2993 = vsel %vm398, %v2987, 0.0
        %2994 = vadd.xlane.f32.xlu0 %v2993
        %v2995 = vpop.xlane.xlu0 %2994
        %v2996 = vsel %vm398, %v2988, 0.0
        %2997 = vadd.xlane.f32.xlu0 %v2996
        %v2998 = vpop.xlane.xlu0 %2997
        %v2999 = vsel %vm398, %v2989, 0.0
        %3000 = vadd.xlane.f32.xlu0 %v2999
        %v3001 = vpop.xlane.xlu0 %3000
        %v3002 = vsel %vm398, %v2990, 0.0
        %3003 = vadd.xlane.f32.xlu0 %v3002
        %v3004 = vpop.xlane.xlu0 %3003
        %v3005 = vsel %vm398, %v2991, 0.0
        %3006 = vadd.xlane.f32.xlu0 %v3005
        %v3007 = vpop.xlane.xlu0 %3006
        %v3008 = vsel %vm398, %v2992, 0.0
        %3009 = vadd.xlane.f32.xlu0 %v3008
        %v3010 = vpop.xlane.xlu0 %3009
        %v3011 = vmul.f32 %v2995, %v417
        %v3012 = vmul.f32 %v2998, %v417
        %v3013 = vmul.f32 %v3001, %v417
        %v3014 = vmul.f32 %v3004, %v417
        %v3015 = vmul.f32 %v3007, %v417
        %v3016 = vmul.f32 %v3010, %v417
        %v3017 = vadd.f32 %v3011, 1e-05
        %v3018 = vadd.f32 %v3012, 1e-05
        %v3019 = vadd.f32 %v3013, 1e-05
        %v3020 = vadd.f32 %v3014, 1e-05
        %v3021 = vadd.f32 %v3015, 1e-05
        %v3022 = vadd.f32 %v3016, 1e-05
        %v3023 = vrsqrt.pop %v3017
        %v3024 = vrsqrt.pop %v3018
        %v3025 = vrsqrt.pop %v3019
        %v3026 = vrsqrt.pop %v3020
        %v3027 = vrsqrt.pop %v3021
        %v3028 = vrsqrt.pop %v3022
        %v3029 = vmul.f32 %v2980, %v3023
        %v3030 = vmul.f32 %v2981, %v3024
        %v3031 = vmul.f32 %v2982, %v3025
        %v3032 = vmul.f32 %v2983, %v3026
        %v3033 = vmul.f32 %v2984, %v3027
        %v3034 = vmul.f32 %v2985, %v3028
        %v3035 = vlaneseq
        %v3036 = vshrl.u32 %v3035, 7
        %v3037 = vsub.s32 0, %v3036
        %v3038 = vrot.slane %v2986, %v3037
        %v3039 = vmul.f32 %v3029, %v3038
        %v3040 = vmul.f32 %v3030, %v3038
        %v3041 = vmul.f32 %v3031, %v3038
        %v3042 = vmul.f32 %v3032, %v3038
        %v3043 = vmul.f32 %v3033, %v3038
        %v3044 = vmul.f32 %v3034, %v3038
        %v3045 = vpack.c.bf16 %v3040, %v3039
        %v3046 = vpack.c.bf16 %v3042, %v3041
        %v3047 = vpack.c.bf16 %v3044, %v3043
        %v3048 = vld [vmem:[%s3 + $0x40] sm:$0xff]
        %v3049 = vld [vmem:[%s3 + $0x88] sm:$0xff]
        %v3050 = vld [vmem:[%s3 + $0xd0] sm:$0xff]
        %v3051 = vld [vmem:[%s3 + $0x118] sm:$0xff]
        %v3056 = vunpack.c.l.b16 %v3048
        %v3057 = vunpack.c.h.b16 %v3048
        %v3058 = vunpack.c.l.b16 %v3049
        %v3059 = vunpack.c.h.b16 %v3049
        %v3060 = vunpack.c.l.b16 %v3050
        %v3061 = vunpack.c.h.b16 %v3050
        %v3062 = vunpack.c.l.b16 %v3051
        %v3063 = vunpack.c.h.b16 %v3051
        %v3064 = vpack.c.b16 %v3058, %v3056
        %v3065 = vpack.c.b16 %v3059, %v3057
        %v3066 = vpack.c.b16 %v3062, %v3060
        %v3067 = vpack.c.b16 %v3063, %v3061
        %v3073 = vsel %vm398, %v3045, 0
        %v3076 = vsel %vm398, %v3046, 0
        %v3079 = vsel %vm398, %v3047, 0
        %3081 = vmatprep.subr.bf16.mxu0 %v3065
        %3082 = vmatpush1.bf16.msra.mxu0 %v3064
        %3083 = vmatprep.subr.bf16.mxu0 %v3067
        %3084 = vmatpush1.bf16.msra.mxu0 %v3066
        %3085 = vmatprep.subr.bf16.mxu0 0
        %3086 = vmatpush1.bf16.msra.mxu0 0
        %3087 = vmatprep.subr.bf16.mxu0 0
        %3088 = vmatpush1.bf16.msra.mxu0 0
        %3089 = vmatprep.subr.bf16.mxu0 0
        %3090 = vmatpush1.bf16.msra.mxu0 0
        %3091 = vmatprep.subr.bf16.mxu0 0
        %3092 = vmatpush1.bf16.msra.mxu0 0
        %3093 = vmatprep.subr.bf16.mxu0 0
        %3094 = vmatpush1.bf16.msra.mxu0 0
        %3095 = vmatprep.subr.bf16.mxu0 0
        %3096 = vmatpush1.bf16.msra.mxu0 0
        %3097 = vmatprep.subr.bf16.mxu0 0
        %3098 = vmatpush1.bf16.msra.mxu0 0
        %3099 = vmatprep.subr.bf16.mxu0 0
        %3100 = vmatpush1.bf16.msra.mxu0 0
        %3101 = vmatprep.subr.bf16.mxu0 0
        %3102 = vmatpush1.bf16.msra.mxu0 0
        %3103 = vmatprep.subr.bf16.mxu0 0
        %3104 = vmatpush1.bf16.msra.mxu0 0
        %3105 = vmatprep.subr.bf16.mxu0 0
        %3106 = vmatpush1.bf16.msra.mxu0 0
        %3107 = vmatprep.subr.bf16.mxu0 0
        %3108 = vmatpush1.bf16.msra.mxu0 0
        %3109 = vmatprep.subr.bf16.mxu0 0
        %3110 = vmatpush1.bf16.msra.mxu0 0
        %3111 = vmatprep.subr.bf16.mxu0 0
        %3112 = vmatpush1.bf16.msra.mxu0 0
        %3113 = vmatprep.mubr.bf16.mxu0 0
        %3114 = vmatmul.mubr.bf16.gmra.mrb[0].mxu0 %v3073
        %v3115 = vpop.f32.mrb[0].mxu0
        %v3116 = vadd.f32 0.0, %v3115
        %v3117 = vpop.f32.mrb[0].mxu0
        %v3118 = vadd.f32 0.0, %v3117
        %v3119 = vpop.f32.mrb[0].mxu0
        %v3120 = vadd.f32 0.0, %v3119
        %v3121 = vpop.f32.mrb[0].mxu0
        %v3122 = vadd.f32 0.0, %v3121
        %3123 = vmatprep.mubr.bf16.mxu0 0
        %3124 = vmatmul.mubr.bf16.gmra.mrb[0].mxu0 %v3076
        %v3125 = vpop.f32.mrb[0].mxu0
        %v3126 = vadd.f32 0.0, %v3125
        %v3127 = vpop.f32.mrb[0].mxu0
        %v3128 = vadd.f32 0.0, %v3127
        %v3129 = vpop.f32.mrb[0].mxu0
        %v3130 = vadd.f32 0.0, %v3129
        %v3131 = vpop.f32.mrb[0].mxu0
        %v3132 = vadd.f32 0.0, %v3131
        %3133 = vmatprep.mubr.bf16.mxu0 0
        %3134 = vmatmul.mubr.bf16.gmra.mrb[0].mxu0 %v3079
        %v3135 = vpop.f32.mrb[0].mxu0
        %v3136 = vadd.f32 0.0, %v3135
        %v3137 = vpop.f32.mrb[0].mxu0
        %v3138 = vadd.f32 0.0, %v3137
        %v3139 = vpop.f32.mrb[0].mxu0
        %v3140 = vadd.f32 0.0, %v3139
        %v3141 = vpop.f32.mrb[0].mxu0
        %v3142 = vadd.f32 0.0, %v3141
        %3143 = vdwg.mxu0
        %v3144 = vsub.f32 0.0, %v3116
        %v3145 = vsub.f32 0.0, %v3120
        %v3146 = vsub.f32 0.0, %v3126
        %v3147 = vsub.f32 0.0, %v3130
        %v3148 = vsub.f32 0.0, %v3136
        %v3149 = vsub.f32 0.0, %v3140
        %v3150 = vmul.f32 %v3144, 1.442695
        %v3151 = vpow.pop %v3150
        %v3152 = vmul.f32 %v3145, 1.442695
        %v3153 = vpow.pop %v3152
        %v3154 = vmul.f32 %v3146, 1.442695
        %v3155 = vpow.pop %v3154
        %v3156 = vmul.f32 %v3147, 1.442695
        %v3157 = vpow.pop %v3156
        %v3158 = vmul.f32 %v3148, 1.442695
        %v3159 = vpow.pop %v3158
        %v3160 = vmul.f32 %v3149, 1.442695
        %v3161 = vpow.pop %v3160
        %v3162 = vadd.f32 %v3151, 1.0
        %v3163 = vadd.f32 %v3153, 1.0
        %v3164 = vadd.f32 %v3155, 1.0
        %v3165 = vadd.f32 %v3157, 1.0
        %v3166 = vadd.f32 %v3159, 1.0
        %v3167 = vadd.f32 %v3161, 1.0
        %v3168 = vrcp.pop %v3162
        %v3169 = vmul.f32 1.0, %v3168
        %v3170 = vrcp.pop %v3163
        %v3171 = vmul.f32 1.0, %v3170
        %v3172 = vrcp.pop %v3164
        %v3173 = vmul.f32 1.0, %v3172
        %v3174 = vrcp.pop %v3165
        %v3175 = vmul.f32 1.0, %v3174
        %v3176 = vrcp.pop %v3166
        %v3177 = vmul.f32 1.0, %v3176
        %v3178 = vrcp.pop %v3167
        %v3179 = vmul.f32 1.0, %v3178
        %v3180 = vmul.f32 %v3116, %v3169
        %v3181 = vmul.f32 %v3120, %v3171
        %v3182 = vmul.f32 %v3126, %v3173
        %v3183 = vmul.f32 %v3130, %v3175
        %v3184 = vmul.f32 %v3136, %v3177
        %v3185 = vmul.f32 %v3140, %v3179
        %v3186 = vmul.f32 %v3180, %v3118
        %v3187 = vmul.f32 %v3181, %v3122
        %v3188 = vmul.f32 %v3182, %v3128
        %v3189 = vmul.f32 %v3183, %v3132
        %v3190 = vmul.f32 %v3184, %v3138
        %v3191 = vmul.f32 %v3185, %v3142
        %v3192 = vpack.c.bf16 %v3187, %v3186
        %v3193 = vpack.c.bf16 %v3189, %v3188
        %v3194 = vpack.c.bf16 %v3191, %v3190
        %v3195 = vld [vmem:[%s4 + $0x100] sm:$0xf]
        %v3196 = vld [vmem:[%s4 + $0x104] sm:$0xf]
        %v3197 = vld [vmem:[%s4 + $0x108] sm:$0xf]
        %v3198 = vld [vmem:[%s4 + $0x10c] sm:$0xf]
        %v3199 = vld [vmem:[%s4 + $0x110] sm:$0xf]
        %v3200 = vld [vmem:[%s4 + $0x114] sm:$0xf]
        %v3201 = vld [vmem:[%s4 + $0x118] sm:$0xf]
        %v3202 = vld [vmem:[%s4 + $0x11c] sm:$0xf]
        %v3203 = vld [vmem:[%s4 + $0x120] sm:$0xf]
        %v3204 = vld [vmem:[%s4 + $0x124] sm:$0xf]
        %v3205 = vld [vmem:[%s4 + $0x128] sm:$0xf]
        %v3206 = vld [vmem:[%s4 + $0x12c] sm:$0xf]
        %v3207 = vld [vmem:[%s4 + $0x130] sm:$0xf]
        %v3208 = vld [vmem:[%s4 + $0x134] sm:$0xf]
        %v3209 = vld [vmem:[%s4 + $0x138] sm:$0xf]
        %v3210 = vld [vmem:[%s4 + $0x13c] sm:$0xf]
        %v3227 = vunpack.c.l.b16 %v3195
        %v3228 = vunpack.c.l.b16 %v3196
        %v3229 = vunpack.c.l.b16 %v3197
        %v3230 = vunpack.c.l.b16 %v3198
        %v3231 = vunpack.c.l.b16 %v3199
        %v3232 = vunpack.c.l.b16 %v3200
        %v3233 = vunpack.c.l.b16 %v3201
        %v3234 = vunpack.c.l.b16 %v3202
        %v3235 = vunpack.c.l.b16 %v3203
        %v3236 = vunpack.c.l.b16 %v3204
        %v3237 = vunpack.c.l.b16 %v3205
        %v3238 = vunpack.c.l.b16 %v3206
        %v3239 = vunpack.c.l.b16 %v3207
        %v3240 = vunpack.c.l.b16 %v3208
        %v3241 = vunpack.c.l.b16 %v3209
        %v3242 = vunpack.c.l.b16 %v3210
        %v3243 = vpack.c.b16 %v3228, %v3227
        %v3244 = vpack.c.b16 %v3230, %v3229
        %v3245 = vpack.c.b16 %v3232, %v3231
        %v3246 = vpack.c.b16 %v3234, %v3233
        %v3247 = vpack.c.b16 %v3236, %v3235
        %v3248 = vpack.c.b16 %v3238, %v3237
        %v3249 = vpack.c.b16 %v3240, %v3239
        %v3250 = vpack.c.b16 %v3242, %v3241
        %3259 = vmatprep.subr.bf16.mxu0 0
        %3260 = vmatpush1.bf16.msra.mxu0 %v3243
        %3261 = vmatprep.subr.bf16.mxu0 0
        %3262 = vmatpush1.bf16.msra.mxu0 %v3244
        %3263 = vmatprep.subr.bf16.mxu0 0
        %3264 = vmatpush1.bf16.msra.mxu0 %v3245
        %3265 = vmatprep.subr.bf16.mxu0 0
        %3266 = vmatpush1.bf16.msra.mxu0 %v3246
        %3267 = vmatprep.subr.bf16.mxu0 0
        %3268 = vmatpush1.bf16.msra.mxu0 %v3247
        %3269 = vmatprep.subr.bf16.mxu0 0
        %3270 = vmatpush1.bf16.msra.mxu0 %v3248
        %3271 = vmatprep.subr.bf16.mxu0 0
        %3272 = vmatpush1.bf16.msra.mxu0 %v3249
        %3273 = vmatprep.subr.bf16.mxu0 0
        %3274 = vmatpush1.bf16.msra.mxu0 %v3250
        %3275 = vmatprep.subr.bf16.mxu0 0
        %3276 = vmatpush1.bf16.msra.mxu0 0
        %3277 = vmatprep.subr.bf16.mxu0 0
        %3278 = vmatpush1.bf16.msra.mxu0 0
        %3279 = vmatprep.subr.bf16.mxu0 0
        %3280 = vmatpush1.bf16.msra.mxu0 0
        %3281 = vmatprep.subr.bf16.mxu0 0
        %3282 = vmatpush1.bf16.msra.mxu0 0
        %3283 = vmatprep.subr.bf16.mxu0 0
        %3284 = vmatpush1.bf16.msra.mxu0 0
        %3285 = vmatprep.subr.bf16.mxu0 0
        %3286 = vmatpush1.bf16.msra.mxu0 0
        %3287 = vmatprep.subr.bf16.mxu0 0
        %3288 = vmatpush1.bf16.msra.mxu0 0
        %3289 = vmatprep.subr.bf16.mxu0 0
        %3290 = vmatpush1.bf16.msra.mxu0 0
        %3291 = vmatprep.mubr.bf16.mxu0 0
        %3292 = vmatmul.mubr.bf16.gmra.mrb[0].mxu0 %v3192
        %v3293 = vpop.f32.mrb[0].mxu0
        %v3294 = vadd.f32 0.0, %v3293
        %v3295 = vpop.f32.mrb[0].mxu0
        %v3296 = vpop.f32.mrb[0].mxu0
        %v3297 = vadd.f32 0.0, %v3296
        %v3298 = vpop.f32.mrb[0].mxu0
        %3299 = vmatprep.mubr.bf16.mxu0 0
        %3300 = vmatmul.mubr.bf16.gmra.mrb[0].mxu0 %v3193
        %v3301 = vpop.f32.mrb[0].mxu0
        %v3302 = vadd.f32 0.0, %v3301
        %v3303 = vpop.f32.mrb[0].mxu0
        %v3304 = vpop.f32.mrb[0].mxu0
        %v3305 = vadd.f32 0.0, %v3304
        %v3306 = vpop.f32.mrb[0].mxu0
        %3307 = vmatprep.mubr.bf16.mxu0 0
        %3308 = vmatmul.mubr.bf16.gmra.mrb[0].mxu0 %v3194
        %v3309 = vpop.f32.mrb[0].mxu0
        %v3310 = vadd.f32 0.0, %v3309
        %v3311 = vpop.f32.mrb[0].mxu0
        %v3312 = vpop.f32.mrb[0].mxu0
        %v3313 = vadd.f32 0.0, %v3312
        %v3314 = vpop.f32.mrb[0].mxu0
        %3315 = vdwg.mxu0
        %v3316 = vadd.f32 %v2980, %v3294
        %v3317 = vadd.f32 %v2981, %v3297
        %v3318 = vadd.f32 %v2982, %v3302
        %v3319 = vadd.f32 %v2983, %v3305
        %v3320 = vadd.f32 %v2984, %v3310
        %v3321 = vadd.f32 %v2985, %v3313
        %v3322 = vld [vmem:[%s5 + $0x2] sm:$0x1]
        %v3323 = vmul.f32 %v3316, %v3316
        %v3324 = vmul.f32 %v3317, %v3317
        %v3325 = vmul.f32 %v3318, %v3318
        %v3326 = vmul.f32 %v3319, %v3319
        %v3327 = vmul.f32 %v3320, %v3320
        %v3328 = vmul.f32 %v3321, %v3321
        %v3329 = vsel %vm398, %v3323, 0.0
        %3330 = vadd.xlane.f32.xlu0 %v3329
        %v3331 = vpop.xlane.xlu0 %3330
        %v3332 = vsel %vm398, %v3324, 0.0
        %3333 = vadd.xlane.f32.xlu0 %v3332
        %v3334 = vpop.xlane.xlu0 %3333
        %v3335 = vsel %vm398, %v3325, 0.0
        %3336 = vadd.xlane.f32.xlu0 %v3335
        %v3337 = vpop.xlane.xlu0 %3336
        %v3338 = vsel %vm398, %v3326, 0.0
        %3339 = vadd.xlane.f32.xlu0 %v3338
        %v3340 = vpop.xlane.xlu0 %3339
        %v3341 = vsel %vm398, %v3327, 0.0
        %3342 = vadd.xlane.f32.xlu0 %v3341
        %v3343 = vpop.xlane.xlu0 %3342
        %v3344 = vsel %vm398, %v3328, 0.0
        %3345 = vadd.xlane.f32.xlu0 %v3344
        %v3346 = vpop.xlane.xlu0 %3345
        %v3347 = vmul.f32 %v3331, %v417
        %v3348 = vmul.f32 %v3334, %v417
        %v3349 = vmul.f32 %v3337, %v417
        %v3350 = vmul.f32 %v3340, %v417
        %v3351 = vmul.f32 %v3343, %v417
        %v3352 = vmul.f32 %v3346, %v417
        %v3353 = vadd.f32 %v3347, 1e-05
        %v3354 = vadd.f32 %v3348, 1e-05
        %v3355 = vadd.f32 %v3349, 1e-05
        %v3356 = vadd.f32 %v3350, 1e-05
        %v3357 = vadd.f32 %v3351, 1e-05
        %v3358 = vadd.f32 %v3352, 1e-05
        %v3359 = vrsqrt.pop %v3353
        %v3360 = vrsqrt.pop %v3354
        %v3361 = vrsqrt.pop %v3355
        %v3362 = vrsqrt.pop %v3356
        %v3363 = vrsqrt.pop %v3357
        %v3364 = vrsqrt.pop %v3358
        %v3365 = vmul.f32 %v3316, %v3359
        %v3366 = vmul.f32 %v3317, %v3360
        %v3367 = vmul.f32 %v3318, %v3361
        %v3368 = vmul.f32 %v3319, %v3362
        %v3369 = vmul.f32 %v3320, %v3363
        %v3370 = vmul.f32 %v3321, %v3364
        %v3371 = vlaneseq
        %v3372 = vshrl.u32 %v3371, 7
        %v3373 = vsub.s32 0, %v3372
        %v3374 = vrot.slane %v3322, %v3373
        %v3375 = vmul.f32 %v3365, %v3374
        %v3376 = vmul.f32 %v3366, %v3374
        %v3377 = vmul.f32 %v3367, %v3374
        %v3378 = vmul.f32 %v3368, %v3374
        %v3379 = vmul.f32 %v3369, %v3374
        %v3380 = vmul.f32 %v3370, %v3374
        %v3381 = vpack.c.bf16 %v3376, %v3375
        %v3382 = vpack.c.bf16 %v3378, %v3377
        %v3383 = vpack.c.bf16 %v3380, %v3379
        %s3384 = scalar_lea.vmem %s3, 288
        %v3385 = vld [vmem:[%s3384] sm:$0xff]
        %v3386 = vld [vmem:[%s3384 + $0x8] sm:$0xff]
        %v3387 = vld [vmem:[%s3384 + $0x48] sm:$0xff]
        %v3388 = vld [vmem:[%s3384 + $0x50] sm:$0xff]
        %v3389 = vld [vmem:[%s3384 + $0x90] sm:$0xff]
        %v3390 = vld [vmem:[%s3384 + $0x98] sm:$0xff]
        %v3391 = vld [vmem:[%s3384 + $0xd8] sm:$0xff]
        %v3392 = vld [vmem:[%s3384 + $0xe0] sm:$0xff]
        %v3401 = vunpack.c.l.b16 %v3385
        %v3402 = vunpack.c.h.b16 %v3385
        %v3403 = vunpack.c.l.b16 %v3386
        %v3404 = vunpack.c.h.b16 %v3386
        %v3405 = vunpack.c.l.b16 %v3387
        %v3406 = vunpack.c.h.b16 %v3387
        %v3407 = vunpack.c.l.b16 %v3388
        %v3408 = vunpack.c.h.b16 %v3388
        %v3409 = vunpack.c.l.b16 %v3389
        %v3410 = vunpack.c.h.b16 %v3389
        %v3411 = vunpack.c.l.b16 %v3390
        %v3412 = vunpack.c.h.b16 %v3390
        %v3413 = vunpack.c.l.b16 %v3391
        %v3414 = vunpack.c.h.b16 %v3391
        %v3415 = vunpack.c.l.b16 %v3392
        %v3416 = vunpack.c.h.b16 %v3392
        %v3417 = vpack.c.b16 %v3405, %v3401
        %v3418 = vpack.c.b16 %v3406, %v3402
        %v3419 = vpack.c.b16 %v3407, %v3403
        %v3420 = vpack.c.b16 %v3408, %v3404
        %v3421 = vpack.c.b16 %v3413, %v3409
        %v3422 = vpack.c.b16 %v3414, %v3410
        %v3423 = vpack.c.b16 %v3415, %v3411
        %v3424 = vpack.c.b16 %v3416, %v3412
        %v3434 = vsel %vm398, %v3381, 0
        %v3437 = vsel %vm398, %v3382, 0
        %v3440 = vsel %vm398, %v3383, 0
        %3442 = vmatprep.subr.bf16.mxu0 %v3418
        %3443 = vmatpush1.bf16.msra.mxu0 %v3417
        %3444 = vmatprep.subr.bf16.mxu0 %v3422
        %3445 = vmatpush1.bf16.msra.mxu0 %v3421
        %3446 = vmatprep.subr.bf16.mxu0 0
        %3447 = vmatpush1.bf16.msra.mxu0 0
        %3448 = vmatprep.subr.bf16.mxu0 0
        %3449 = vmatpush1.bf16.msra.mxu0 0
        %3450 = vmatprep.subr.bf16.mxu0 0
        %3451 = vmatpush1.bf16.msra.mxu0 0
        %3452 = vmatprep.subr.bf16.mxu0 0
        %3453 = vmatpush1.bf16.msra.mxu0 0
        %3454 = vmatprep.subr.bf16.mxu0 0
        %3455 = vmatpush1.bf16.msra.mxu0 0
        %3456 = vmatprep.subr.bf16.mxu0 0
        %3457 = vmatpush1.bf16.msra.mxu0 0
        %3458 = vmatprep.subr.bf16.mxu0 0
        %3459 = vmatpush1.bf16.msra.mxu0 0
        %3460 = vmatprep.subr.bf16.mxu0 0
        %3461 = vmatpush1.bf16.msra.mxu0 0
        %3462 = vmatprep.subr.bf16.mxu0 0
        %3463 = vmatpush1.bf16.msra.mxu0 0
        %3464 = vmatprep.subr.bf16.mxu0 0
        %3465 = vmatpush1.bf16.msra.mxu0 0
        %3466 = vmatprep.subr.bf16.mxu0 0
        %3467 = vmatpush1.bf16.msra.mxu0 0
        %3468 = vmatprep.subr.bf16.mxu0 0
        %3469 = vmatpush1.bf16.msra.mxu0 0
        %3470 = vmatprep.subr.bf16.mxu0 0
        %3471 = vmatpush1.bf16.msra.mxu0 0
        %3472 = vmatprep.subr.bf16.mxu0 0
        %3473 = vmatpush1.bf16.msra.mxu0 0
        %3474 = vmatprep.mubr.bf16.mxu0 0
        %3475 = vmatmul.mubr.bf16.gmra.mrb[0].mxu0 %v3434
        %v3476 = vpop.f32.mrb[0].mxu0
        %v3477 = vadd.f32 0.0, %v3476
        %v3478 = vpop.f32.mrb[0].mxu0
        %v3479 = vadd.f32 0.0, %v3478
        %v3480 = vpop.f32.mrb[0].mxu0
        %v3481 = vadd.f32 0.0, %v3480
        %v3482 = vpop.f32.mrb[0].mxu0
        %v3483 = vadd.f32 0.0, %v3482
        %3484 = vmatprep.mubr.bf16.mxu0 0
        %3485 = vmatmul.mubr.bf16.gmra.mrb[0].mxu0 %v3437
        %v3486 = vpop.f32.mrb[0].mxu0
        %v3487 = vadd.f32 0.0, %v3486
        %v3488 = vpop.f32.mrb[0].mxu0
        %v3489 = vadd.f32 0.0, %v3488
        %v3490 = vpop.f32.mrb[0].mxu0
        %v3491 = vadd.f32 0.0, %v3490
        %v3492 = vpop.f32.mrb[0].mxu0
        %v3493 = vadd.f32 0.0, %v3492
        %3494 = vmatprep.mubr.bf16.mxu0 0
        %3495 = vmatmul.mubr.bf16.gmra.mrb[0].mxu0 %v3440
        %v3496 = vpop.f32.mrb[0].mxu0
        %v3497 = vadd.f32 0.0, %v3496
        %v3498 = vpop.f32.mrb[0].mxu0
        %v3499 = vadd.f32 0.0, %v3498
        %v3500 = vpop.f32.mrb[0].mxu0
        %v3501 = vadd.f32 0.0, %v3500
        %v3502 = vpop.f32.mrb[0].mxu0
        %v3503 = vadd.f32 0.0, %v3502
        %3504 = vdwg.mxu0
        %3505 = vmatprep.subr.bf16.mxu0 %v3420
        %3506 = vmatpush1.bf16.msra.mxu0 %v3419
        %3507 = vmatprep.subr.bf16.mxu0 %v3424
        %3508 = vmatpush1.bf16.msra.mxu0 %v3423
        %3509 = vmatprep.subr.bf16.mxu0 0
        %3510 = vmatpush1.bf16.msra.mxu0 0
        %3511 = vmatprep.subr.bf16.mxu0 0
        %3512 = vmatpush1.bf16.msra.mxu0 0
        %3513 = vmatprep.subr.bf16.mxu0 0
        %3514 = vmatpush1.bf16.msra.mxu0 0
        %3515 = vmatprep.subr.bf16.mxu0 0
        %3516 = vmatpush1.bf16.msra.mxu0 0
        %3517 = vmatprep.subr.bf16.mxu0 0
        %3518 = vmatpush1.bf16.msra.mxu0 0
        %3519 = vmatprep.subr.bf16.mxu0 0
        %3520 = vmatpush1.bf16.msra.mxu0 0
        %3521 = vmatprep.subr.bf16.mxu0 0
        %3522 = vmatpush1.bf16.msra.mxu0 0
        %3523 = vmatprep.subr.bf16.mxu0 0
        %3524 = vmatpush1.bf16.msra.mxu0 0
        %3525 = vmatprep.subr.bf16.mxu0 0
        %3526 = vmatpush1.bf16.msra.mxu0 0
        %3527 = vmatprep.subr.bf16.mxu0 0
        %3528 = vmatpush1.bf16.msra.mxu0 0
        %3529 = vmatprep.subr.bf16.mxu0 0
        %3530 = vmatpush1.bf16.msra.mxu0 0
        %3531 = vmatprep.subr.bf16.mxu0 0
        %3532 = vmatpush1.bf16.msra.mxu0 0
        %3533 = vmatprep.subr.bf16.mxu0 0
        %3534 = vmatpush1.bf16.msra.mxu0 0
        %3535 = vmatprep.subr.bf16.mxu0 0
        %3536 = vmatpush1.bf16.msra.mxu0 0
        %3537 = vmatprep.mubr.bf16.mxu0 0
        %3538 = vmatmul.mubr.bf16.gmra.mrb[0].mxu0 %v3434
        %v3539 = vpop.f32.mrb[0].mxu0
        %v3540 = vadd.f32 0.0, %v3539
        %v3541 = vpop.f32.mrb[0].mxu0
        %v3542 = vadd.f32 0.0, %v3541
        %v3543 = vpop.f32.mrb[0].mxu0
        %v3544 = vadd.f32 0.0, %v3543
        %v3545 = vpop.f32.mrb[0].mxu0
        %v3546 = vadd.f32 0.0, %v3545
        %3547 = vmatprep.mubr.bf16.mxu0 0
        %3548 = vmatmul.mubr.bf16.gmra.mrb[0].mxu0 %v3437
        %v3549 = vpop.f32.mrb[0].mxu0
        %v3550 = vadd.f32 0.0, %v3549
        %v3551 = vpop.f32.mrb[0].mxu0
        %v3552 = vadd.f32 0.0, %v3551
        %v3553 = vpop.f32.mrb[0].mxu0
        %v3554 = vadd.f32 0.0, %v3553
        %v3555 = vpop.f32.mrb[0].mxu0
        %v3556 = vadd.f32 0.0, %v3555
        %3557 = vmatprep.mubr.bf16.mxu0 0
        %3558 = vmatmul.mubr.bf16.gmra.mrb[0].mxu0 %v3440
        %v3559 = vpop.f32.mrb[0].mxu0
        %v3560 = vadd.f32 0.0, %v3559
        %v3561 = vpop.f32.mrb[0].mxu0
        %v3562 = vadd.f32 0.0, %v3561
        %v3563 = vpop.f32.mrb[0].mxu0
        %v3564 = vadd.f32 0.0, %v3563
        %v3565 = vpop.f32.mrb[0].mxu0
        %v3566 = vadd.f32 0.0, %v3565
        %3567 = vdwg.mxu0
        %3568 = vrot.lane.b32.xlu0 %v3477, 127
        %v3569 = vpop.permute.xlu0 %3568
        %3570 = vrot.lane.b32.xlu0 %v3481, 127
        %v3571 = vpop.permute.xlu0 %3570
        %3572 = vrot.lane.b32.xlu0 %v3487, 127
        %v3573 = vpop.permute.xlu0 %3572
        %3574 = vrot.lane.b32.xlu0 %v3491, 127
        %v3575 = vpop.permute.xlu0 %3574
        %3576 = vrot.lane.b32.xlu0 %v3497, 127
        %v3577 = vpop.permute.xlu0 %3576
        %3578 = vrot.lane.b32.xlu0 %v3501, 127
        %v3579 = vpop.permute.xlu0 %3578
        %3580 = vrot.lane.b32.xlu0 %v3479, 127
        %v3581 = vpop.permute.xlu0 %3580
        %3582 = vrot.lane.b32.xlu0 %v3483, 127
        %v3583 = vpop.permute.xlu0 %3582
        %3584 = vrot.lane.b32.xlu0 %v3489, 127
        %v3585 = vpop.permute.xlu0 %3584
        %3586 = vrot.lane.b32.xlu0 %v3493, 127
        %v3587 = vpop.permute.xlu0 %3586
        %3588 = vrot.lane.b32.xlu0 %v3499, 127
        %v3589 = vpop.permute.xlu0 %3588
        %3590 = vrot.lane.b32.xlu0 %v3503, 127
        %v3591 = vpop.permute.xlu0 %3590
        %3592 = vrot.lane.b32.xlu0 %v3540, 127
        %v3593 = vpop.permute.xlu0 %3592
        %3594 = vrot.lane.b32.xlu0 %v3544, 127
        %v3595 = vpop.permute.xlu0 %3594
        %3596 = vrot.lane.b32.xlu0 %v3550, 127
        %v3597 = vpop.permute.xlu0 %3596
        %3598 = vrot.lane.b32.xlu0 %v3554, 127
        %v3599 = vpop.permute.xlu0 %3598
        %3600 = vrot.lane.b32.xlu0 %v3560, 127
        %v3601 = vpop.permute.xlu0 %3600
        %3602 = vrot.lane.b32.xlu0 %v3564, 127
        %v3603 = vpop.permute.xlu0 %3602
        %3604 = vrot.lane.b32.xlu0 %v3542, 127
        %v3605 = vpop.permute.xlu0 %3604
        %3606 = vrot.lane.b32.xlu0 %v3546, 127
        %v3607 = vpop.permute.xlu0 %3606
        %3608 = vrot.lane.b32.xlu0 %v3552, 127
        %v3609 = vpop.permute.xlu0 %3608
        %3610 = vrot.lane.b32.xlu0 %v3556, 127
        %v3611 = vpop.permute.xlu0 %3610
        %3612 = vrot.lane.b32.xlu0 %v3562, 127
        %v3613 = vpop.permute.xlu0 %3612
        %3614 = vrot.lane.b32.xlu0 %v3566, 127
        %v3615 = vpop.permute.xlu0 %3614
        %v3616 = vsel %vm735, %v3593, %v3605
        %v3617 = vsel %vm735, %v3595, %v3607
        %v3618 = vsel %vm735, %v3597, %v3609
        %v3619 = vsel %vm735, %v3599, %v3611
        %v3620 = vsel %vm735, %v3601, %v3613
        %v3621 = vsel %vm735, %v3603, %v3615
        %v3622 = vsel %vm735, %v3581, %v3593
        %v3623 = vsel %vm735, %v3583, %v3595
        %v3624 = vsel %vm735, %v3585, %v3597
        %v3625 = vsel %vm735, %v3587, %v3599
        %v3626 = vsel %vm735, %v3589, %v3601
        %v3627 = vsel %vm735, %v3591, %v3603
        %v3628 = vsel %vm735, %v3569, %v3581
        %v3629 = vsel %vm735, %v3571, %v3583
        %v3630 = vsel %vm735, %v3573, %v3585
        %v3631 = vsel %vm735, %v3575, %v3587
        %v3632 = vsel %vm735, %v3577, %v3589
        %v3633 = vsel %vm735, %v3579, %v3591
        %v3634 = vsel %vm735, %v3605, %v3569
        %v3635 = vsel %vm735, %v3607, %v3571
        %v3636 = vsel %vm735, %v3609, %v3573
        %v3637 = vsel %vm735, %v3611, %v3575
        %v3638 = vsel %vm735, %v3613, %v3577
        %v3639 = vsel %vm735, %v3615, %v3579
        %3640 = vrot.lane.b32.xlu0 %v3477, 1
        %v3641 = vpop.permute.xlu0 %3640
        %3642 = vrot.lane.b32.xlu0 %v3481, 1
        %v3643 = vpop.permute.xlu0 %3642
        %3644 = vrot.lane.b32.xlu0 %v3487, 1
        %v3645 = vpop.permute.xlu0 %3644
        %3646 = vrot.lane.b32.xlu0 %v3491, 1
        %v3647 = vpop.permute.xlu0 %3646
        %3648 = vrot.lane.b32.xlu0 %v3497, 1
        %v3649 = vpop.permute.xlu0 %3648
        %3650 = vrot.lane.b32.xlu0 %v3501, 1
        %v3651 = vpop.permute.xlu0 %3650
        %3652 = vrot.lane.b32.xlu0 %v3479, 1
        %v3653 = vpop.permute.xlu0 %3652
        %3654 = vrot.lane.b32.xlu0 %v3483, 1
        %v3655 = vpop.permute.xlu0 %3654
        %3656 = vrot.lane.b32.xlu0 %v3489, 1
        %v3657 = vpop.permute.xlu0 %3656
        %3658 = vrot.lane.b32.xlu0 %v3493, 1
        %v3659 = vpop.permute.xlu0 %3658
        %3660 = vrot.lane.b32.xlu0 %v3499, 1
        %v3661 = vpop.permute.xlu0 %3660
        %3662 = vrot.lane.b32.xlu0 %v3503, 1
        %v3663 = vpop.permute.xlu0 %3662
        %3664 = vrot.lane.b32.xlu0 %v3540, 1
        %v3665 = vpop.permute.xlu0 %3664
        %3666 = vrot.lane.b32.xlu0 %v3544, 1
        %v3667 = vpop.permute.xlu0 %3666
        %3668 = vrot.lane.b32.xlu0 %v3550, 1
        %v3669 = vpop.permute.xlu0 %3668
        %3670 = vrot.lane.b32.xlu0 %v3554, 1
        %v3671 = vpop.permute.xlu0 %3670
        %3672 = vrot.lane.b32.xlu0 %v3560, 1
        %v3673 = vpop.permute.xlu0 %3672
        %3674 = vrot.lane.b32.xlu0 %v3564, 1
        %v3675 = vpop.permute.xlu0 %3674
        %3676 = vrot.lane.b32.xlu0 %v3542, 1
        %v3677 = vpop.permute.xlu0 %3676
        %3678 = vrot.lane.b32.xlu0 %v3546, 1
        %v3679 = vpop.permute.xlu0 %3678
        %3680 = vrot.lane.b32.xlu0 %v3552, 1
        %v3681 = vpop.permute.xlu0 %3680
        %3682 = vrot.lane.b32.xlu0 %v3556, 1
        %v3683 = vpop.permute.xlu0 %3682
        %3684 = vrot.lane.b32.xlu0 %v3562, 1
        %v3685 = vpop.permute.xlu0 %3684
        %3686 = vrot.lane.b32.xlu0 %v3566, 1
        %v3687 = vpop.permute.xlu0 %3686
        %v3688 = vsel %vm808, %v3665, %v3677
        %v3689 = vsel %vm808, %v3667, %v3679
        %v3690 = vsel %vm808, %v3669, %v3681
        %v3691 = vsel %vm808, %v3671, %v3683
        %v3692 = vsel %vm808, %v3673, %v3685
        %v3693 = vsel %vm808, %v3675, %v3687
        %v3694 = vsel %vm808, %v3653, %v3665
        %v3695 = vsel %vm808, %v3655, %v3667
        %v3696 = vsel %vm808, %v3657, %v3669
        %v3697 = vsel %vm808, %v3659, %v3671
        %v3698 = vsel %vm808, %v3661, %v3673
        %v3699 = vsel %vm808, %v3663, %v3675
        %v3700 = vsel %vm808, %v3641, %v3653
        %v3701 = vsel %vm808, %v3643, %v3655
        %v3702 = vsel %vm808, %v3645, %v3657
        %v3703 = vsel %vm808, %v3647, %v3659
        %v3704 = vsel %vm808, %v3649, %v3661
        %v3705 = vsel %vm808, %v3651, %v3663
        %v3706 = vsel %vm808, %v3677, %v3641
        %v3707 = vsel %vm808, %v3679, %v3643
        %v3708 = vsel %vm808, %v3681, %v3645
        %v3709 = vsel %vm808, %v3683, %v3647
        %v3710 = vsel %vm808, %v3685, %v3649
        %v3711 = vsel %vm808, %v3687, %v3651
        %v3712 = vsel %vm387, %v3628, %v3706
        %v3713 = vsel %vm388, %v3622, %v3700
        %v3714 = vsel %vm389, %v3616, %v3694
        %v3715 = vsel %vm390, %v3634, %v3688
        %v3716 = vsel %vm387, %v3629, %v3707
        %v3717 = vsel %vm388, %v3623, %v3701
        %v3718 = vsel %vm389, %v3617, %v3695
        %v3719 = vsel %vm390, %v3635, %v3689
        %v3720 = vsel %vm387, %v3630, %v3708
        %v3721 = vsel %vm388, %v3624, %v3702
        %v3722 = vsel %vm389, %v3618, %v3696
        %v3723 = vsel %vm390, %v3636, %v3690
        %v3724 = vsel %vm387, %v3631, %v3709
        %v3725 = vsel %vm388, %v3625, %v3703
        %v3726 = vsel %vm389, %v3619, %v3697
        %v3727 = vsel %vm390, %v3637, %v3691
        %v3728 = vsel %vm387, %v3632, %v3710
        %v3729 = vsel %vm388, %v3626, %v3704
        %v3730 = vsel %vm389, %v3620, %v3698
        %v3731 = vsel %vm390, %v3638, %v3692
        %v3732 = vsel %vm387, %v3633, %v3711
        %v3733 = vsel %vm388, %v3627, %v3705
        %v3734 = vsel %vm389, %v3621, %v3699
        %v3735 = vsel %vm390, %v3639, %v3693
        %v3736 = vmul.f32 %v3477, %v638
        %v3737 = vmul.f32 %v3479, %v639
        %v3738 = vmul.f32 %v3540, %v640
        %v3739 = vmul.f32 %v3542, %v641
        %v3740 = vmul.f32 %v3481, %v642
        %v3741 = vmul.f32 %v3483, %v643
        %v3742 = vmul.f32 %v3544, %v644
        %v3743 = vmul.f32 %v3546, %v645
        %v3744 = vmul.f32 %v3487, %v646
        %v3745 = vmul.f32 %v3489, %v647
        %v3746 = vmul.f32 %v3550, %v648
        %v3747 = vmul.f32 %v3552, %v649
        %v3748 = vmul.f32 %v3491, %v650
        %v3749 = vmul.f32 %v3493, %v651
        %v3750 = vmul.f32 %v3554, %v652
        %v3751 = vmul.f32 %v3556, %v653
        %v3752 = vmul.f32 %v3497, %v654
        %v3753 = vmul.f32 %v3499, %v655
        %v3754 = vmul.f32 %v3560, %v656
        %v3755 = vmul.f32 %v3562, %v657
        %v3756 = vmul.f32 %v3501, %v658
        %v3757 = vmul.f32 %v3503, %v659
        %v3758 = vmul.f32 %v3564, %v660
        %v3759 = vmul.f32 %v3566, %v661
        %v3760 = vmul.f32 %v3712, %v663
        %v3761 = vmul.f32 %v3713, %v664
        %v3762 = vmul.f32 %v3714, %v665
        %v3763 = vmul.f32 %v3715, %v666
        %v3764 = vmul.f32 %v3716, %v667
        %v3765 = vmul.f32 %v3717, %v668
        %v3766 = vmul.f32 %v3718, %v669
        %v3767 = vmul.f32 %v3719, %v670
        %v3768 = vmul.f32 %v3720, %v671
        %v3769 = vmul.f32 %v3721, %v672
        %v3770 = vmul.f32 %v3722, %v673
        %v3771 = vmul.f32 %v3723, %v674
        %v3772 = vmul.f32 %v3724, %v675
        %v3773 = vmul.f32 %v3725, %v676
        %v3774 = vmul.f32 %v3726, %v677
        %v3775 = vmul.f32 %v3727, %v678
        %v3776 = vmul.f32 %v3728, %v679
        %v3777 = vmul.f32 %v3729, %v680
        %v3778 = vmul.f32 %v3730, %v681
        %v3779 = vmul.f32 %v3731, %v682
        %v3780 = vmul.f32 %v3732, %v683
        %v3781 = vmul.f32 %v3733, %v684
        %v3782 = vmul.f32 %v3734, %v685
        %v3783 = vmul.f32 %v3735, %v686
        %v3784 = vadd.f32 %v3736, %v3760
        %v3785 = vadd.f32 %v3737, %v3761
        %v3786 = vadd.f32 %v3738, %v3762
        %v3787 = vadd.f32 %v3739, %v3763
        %v3788 = vadd.f32 %v3740, %v3764
        %v3789 = vadd.f32 %v3741, %v3765
        %v3790 = vadd.f32 %v3742, %v3766
        %v3791 = vadd.f32 %v3743, %v3767
        %v3792 = vadd.f32 %v3744, %v3768
        %v3793 = vadd.f32 %v3745, %v3769
        %v3794 = vadd.f32 %v3746, %v3770
        %v3795 = vadd.f32 %v3747, %v3771
        %v3796 = vadd.f32 %v3748, %v3772
        %v3797 = vadd.f32 %v3749, %v3773
        %v3798 = vadd.f32 %v3750, %v3774
        %v3799 = vadd.f32 %v3751, %v3775
        %v3800 = vadd.f32 %v3752, %v3776
        %v3801 = vadd.f32 %v3753, %v3777
        %v3802 = vadd.f32 %v3754, %v3778
        %v3803 = vadd.f32 %v3755, %v3779
        %v3804 = vadd.f32 %v3756, %v3780
        %v3805 = vadd.f32 %v3757, %v3781
        %v3806 = vadd.f32 %v3758, %v3782
        %v3807 = vadd.f32 %v3759, %v3783
        %v3808 = vld [vmem:[%s3384 + $0x10] sm:$0xff]
        %v3809 = vld [vmem:[%s3384 + $0x18] sm:$0xff]
        %v3810 = vld [vmem:[%s3384 + $0x58] sm:$0xff]
        %v3811 = vld [vmem:[%s3384 + $0x60] sm:$0xff]
        %v3812 = vld [vmem:[%s3384 + $0xa0] sm:$0xff]
        %v3813 = vld [vmem:[%s3384 + $0xa8] sm:$0xff]
        %v3814 = vld [vmem:[%s3384 + $0xe8] sm:$0xff]
        %v3815 = vld [vmem:[%s3384 + $0xf0] sm:$0xff]
        %v3824 = vunpack.c.l.b16 %v3808
        %v3825 = vunpack.c.h.b16 %v3808
        %v3826 = vunpack.c.l.b16 %v3809
        %v3827 = vunpack.c.h.b16 %v3809
        %v3828 = vunpack.c.l.b16 %v3810
        %v3829 = vunpack.c.h.b16 %v3810
        %v3830 = vunpack.c.l.b16 %v3811
        %v3831 = vunpack.c.h.b16 %v3811
        %v3832 = vunpack.c.l.b16 %v3812
        %v3833 = vunpack.c.h.b16 %v3812
        %v3834 = vunpack.c.l.b16 %v3813
        %v3835 = vunpack.c.h.b16 %v3813
        %v3836 = vunpack.c.l.b16 %v3814
        %v3837 = vunpack.c.h.b16 %v3814
        %v3838 = vunpack.c.l.b16 %v3815
        %v3839 = vunpack.c.h.b16 %v3815
        %v3840 = vpack.c.b16 %v3828, %v3824
        %v3841 = vpack.c.b16 %v3829, %v3825
        %v3842 = vpack.c.b16 %v3830, %v3826
        %v3843 = vpack.c.b16 %v3831, %v3827
        %v3844 = vpack.c.b16 %v3836, %v3832
        %v3845 = vpack.c.b16 %v3837, %v3833
        %v3846 = vpack.c.b16 %v3838, %v3834
        %v3847 = vpack.c.b16 %v3839, %v3835
        %3856 = vmatprep.subr.bf16.mxu0 %v3841
        %3857 = vmatpush1.bf16.msra.mxu0 %v3840
        %3858 = vmatprep.subr.bf16.mxu0 %v3845
        %3859 = vmatpush1.bf16.msra.mxu0 %v3844
        %3860 = vmatprep.subr.bf16.mxu0 0
        %3861 = vmatpush1.bf16.msra.mxu0 0
        %3862 = vmatprep.subr.bf16.mxu0 0
        %3863 = vmatpush1.bf16.msra.mxu0 0
        %3864 = vmatprep.subr.bf16.mxu0 0
        %3865 = vmatpush1.bf16.msra.mxu0 0
        %3866 = vmatprep.subr.bf16.mxu0 0
        %3867 = vmatpush1.bf16.msra.mxu0 0
        %3868 = vmatprep.subr.bf16.mxu0 0
        %3869 = vmatpush1.bf16.msra.mxu0 0
        %3870 = vmatprep.subr.bf16.mxu0 0
        %3871 = vmatpush1.bf16.msra.mxu0 0
        %3872 = vmatprep.subr.bf16.mxu0 0
        %3873 = vmatpush1.bf16.msra.mxu0 0
        %3874 = vmatprep.subr.bf16.mxu0 0
        %3875 = vmatpush1.bf16.msra.mxu0 0
        %3876 = vmatprep.subr.bf16.mxu0 0
        %3877 = vmatpush1.bf16.msra.mxu0 0
        %3878 = vmatprep.subr.bf16.mxu0 0
        %3879 = vmatpush1.bf16.msra.mxu0 0
        %3880 = vmatprep.subr.bf16.mxu0 0
        %3881 = vmatpush1.bf16.msra.mxu0 0
        %3882 = vmatprep.subr.bf16.mxu0 0
        %3883 = vmatpush1.bf16.msra.mxu0 0
        %3884 = vmatprep.subr.bf16.mxu0 0
        %3885 = vmatpush1.bf16.msra.mxu0 0
        %3886 = vmatprep.subr.bf16.mxu0 0
        %3887 = vmatpush1.bf16.msra.mxu0 0
        %3888 = vmatprep.mubr.bf16.mxu0 0
        %3889 = vmatmul.mubr.bf16.gmra.mrb[0].mxu0 %v3434
        %v3890 = vpop.f32.mrb[0].mxu0
        %v3891 = vadd.f32 0.0, %v3890
        %v3892 = vpop.f32.mrb[0].mxu0
        %v3893 = vadd.f32 0.0, %v3892
        %v3894 = vpop.f32.mrb[0].mxu0
        %v3895 = vadd.f32 0.0, %v3894
        %v3896 = vpop.f32.mrb[0].mxu0
        %v3897 = vadd.f32 0.0, %v3896
        %3898 = vmatprep.mubr.bf16.mxu0 0
        %3899 = vmatmul.mubr.bf16.gmra.mrb[0].mxu0 %v3437
        %v3900 = vpop.f32.mrb[0].mxu0
        %v3901 = vadd.f32 0.0, %v3900
        %v3902 = vpop.f32.mrb[0].mxu0
        %v3903 = vadd.f32 0.0, %v3902
        %v3904 = vpop.f32.mrb[0].mxu0
        %v3905 = vadd.f32 0.0, %v3904
        %v3906 = vpop.f32.mrb[0].mxu0
        %v3907 = vadd.f32 0.0, %v3906
        %3908 = vmatprep.mubr.bf16.mxu0 0
        %3909 = vmatmul.mubr.bf16.gmra.mrb[0].mxu0 %v3440
        %v3910 = vpop.f32.mrb[0].mxu0
        %v3911 = vadd.f32 0.0, %v3910
        %v3912 = vpop.f32.mrb[0].mxu0
        %v3913 = vadd.f32 0.0, %v3912
        %v3914 = vpop.f32.mrb[0].mxu0
        %v3915 = vadd.f32 0.0, %v3914
        %v3916 = vpop.f32.mrb[0].mxu0
        %v3917 = vadd.f32 0.0, %v3916
        %3918 = vdwg.mxu0
        %3919 = vmatprep.subr.bf16.mxu0 %v3843
        %3920 = vmatpush1.bf16.msra.mxu0 %v3842
        %3921 = vmatprep.subr.bf16.mxu0 %v3847
        %3922 = vmatpush1.bf16.msra.mxu0 %v3846
        %3923 = vmatprep.subr.bf16.mxu0 0
        %3924 = vmatpush1.bf16.msra.mxu0 0
        %3925 = vmatprep.subr.bf16.mxu0 0
        %3926 = vmatpush1.bf16.msra.mxu0 0
        %3927 = vmatprep.subr.bf16.mxu0 0
        %3928 = vmatpush1.bf16.msra.mxu0 0
        %3929 = vmatprep.subr.bf16.mxu0 0
        %3930 = vmatpush1.bf16.msra.mxu0 0
        %3931 = vmatprep.subr.bf16.mxu0 0
        %3932 = vmatpush1.bf16.msra.mxu0 0
        %3933 = vmatprep.subr.bf16.mxu0 0
        %3934 = vmatpush1.bf16.msra.mxu0 0
        %3935 = vmatprep.subr.bf16.mxu0 0
        %3936 = vmatpush1.bf16.msra.mxu0 0
        %3937 = vmatprep.subr.bf16.mxu0 0
        %3938 = vmatpush1.bf16.msra.mxu0 0
        %3939 = vmatprep.subr.bf16.mxu0 0
        %3940 = vmatpush1.bf16.msra.mxu0 0
        %3941 = vmatprep.subr.bf16.mxu0 0
        %3942 = vmatpush1.bf16.msra.mxu0 0
        %3943 = vmatprep.subr.bf16.mxu0 0
        %3944 = vmatpush1.bf16.msra.mxu0 0
        %3945 = vmatprep.subr.bf16.mxu0 0
        %3946 = vmatpush1.bf16.msra.mxu0 0
        %3947 = vmatprep.subr.bf16.mxu0 0
        %3948 = vmatpush1.bf16.msra.mxu0 0
        %3949 = vmatprep.subr.bf16.mxu0 0
        %3950 = vmatpush1.bf16.msra.mxu0 0
        %3951 = vmatprep.mubr.bf16.mxu0 0
        %3952 = vmatmul.mubr.bf16.gmra.mrb[0].mxu0 %v3434
        %v3953 = vpop.f32.mrb[0].mxu0
        %v3954 = vadd.f32 0.0, %v3953
        %v3955 = vpop.f32.mrb[0].mxu0
        %v3956 = vadd.f32 0.0, %v3955
        %v3957 = vpop.f32.mrb[0].mxu0
        %v3958 = vadd.f32 0.0, %v3957
        %v3959 = vpop.f32.mrb[0].mxu0
        %v3960 = vadd.f32 0.0, %v3959
        %3961 = vmatprep.mubr.bf16.mxu0 0
        %3962 = vmatmul.mubr.bf16.gmra.mrb[0].mxu0 %v3437
        %v3963 = vpop.f32.mrb[0].mxu0
        %v3964 = vadd.f32 0.0, %v3963
        %v3965 = vpop.f32.mrb[0].mxu0
        %v3966 = vadd.f32 0.0, %v3965
        %v3967 = vpop.f32.mrb[0].mxu0
        %v3968 = vadd.f32 0.0, %v3967
        %v3969 = vpop.f32.mrb[0].mxu0
        %v3970 = vadd.f32 0.0, %v3969
        %3971 = vmatprep.mubr.bf16.mxu0 0
        %3972 = vmatmul.mubr.bf16.gmra.mrb[0].mxu0 %v3440
        %v3973 = vpop.f32.mrb[0].mxu0
        %v3974 = vadd.f32 0.0, %v3973
        %v3975 = vpop.f32.mrb[0].mxu0
        %v3976 = vadd.f32 0.0, %v3975
        %v3977 = vpop.f32.mrb[0].mxu0
        %v3978 = vadd.f32 0.0, %v3977
        %v3979 = vpop.f32.mrb[0].mxu0
        %v3980 = vadd.f32 0.0, %v3979
        %3981 = vdwg.mxu0
        %3982 = vrot.lane.b32.xlu0 %v3891, 127
        %v3983 = vpop.permute.xlu0 %3982
        %3984 = vrot.lane.b32.xlu0 %v3895, 127
        %v3985 = vpop.permute.xlu0 %3984
        %3986 = vrot.lane.b32.xlu0 %v3901, 127
        %v3987 = vpop.permute.xlu0 %3986
        %3988 = vrot.lane.b32.xlu0 %v3905, 127
        %v3989 = vpop.permute.xlu0 %3988
        %3990 = vrot.lane.b32.xlu0 %v3911, 127
        %v3991 = vpop.permute.xlu0 %3990
        %3992 = vrot.lane.b32.xlu0 %v3915, 127
        %v3993 = vpop.permute.xlu0 %3992
        %3994 = vrot.lane.b32.xlu0 %v3893, 127
        %v3995 = vpop.permute.xlu0 %3994
        %3996 = vrot.lane.b32.xlu0 %v3897, 127
        %v3997 = vpop.permute.xlu0 %3996
        %3998 = vrot.lane.b32.xlu0 %v3903, 127
        %v3999 = vpop.permute.xlu0 %3998
        %4000 = vrot.lane.b32.xlu0 %v3907, 127
        %v4001 = vpop.permute.xlu0 %4000
        %4002 = vrot.lane.b32.xlu0 %v3913, 127
        %v4003 = vpop.permute.xlu0 %4002
        %4004 = vrot.lane.b32.xlu0 %v3917, 127
        %v4005 = vpop.permute.xlu0 %4004
        %4006 = vrot.lane.b32.xlu0 %v3954, 127
        %v4007 = vpop.permute.xlu0 %4006
        %4008 = vrot.lane.b32.xlu0 %v3958, 127
        %v4009 = vpop.permute.xlu0 %4008
        %4010 = vrot.lane.b32.xlu0 %v3964, 127
        %v4011 = vpop.permute.xlu0 %4010
        %4012 = vrot.lane.b32.xlu0 %v3968, 127
        %v4013 = vpop.permute.xlu0 %4012
        %4014 = vrot.lane.b32.xlu0 %v3974, 127
        %v4015 = vpop.permute.xlu0 %4014
        %4016 = vrot.lane.b32.xlu0 %v3978, 127
        %v4017 = vpop.permute.xlu0 %4016
        %4018 = vrot.lane.b32.xlu0 %v3956, 127
        %v4019 = vpop.permute.xlu0 %4018
        %4020 = vrot.lane.b32.xlu0 %v3960, 127
        %v4021 = vpop.permute.xlu0 %4020
        %4022 = vrot.lane.b32.xlu0 %v3966, 127
        %v4023 = vpop.permute.xlu0 %4022
        %4024 = vrot.lane.b32.xlu0 %v3970, 127
        %v4025 = vpop.permute.xlu0 %4024
        %4026 = vrot.lane.b32.xlu0 %v3976, 127
        %v4027 = vpop.permute.xlu0 %4026
        %4028 = vrot.lane.b32.xlu0 %v3980, 127
        %v4029 = vpop.permute.xlu0 %4028
        %v4030 = vsel %vm735, %v4007, %v4019
        %v4031 = vsel %vm735, %v4009, %v4021
        %v4032 = vsel %vm735, %v4011, %v4023
        %v4033 = vsel %vm735, %v4013, %v4025
        %v4034 = vsel %vm735, %v4015, %v4027
        %v4035 = vsel %vm735, %v4017, %v4029
        %v4036 = vsel %vm735, %v3995, %v4007
        %v4037 = vsel %vm735, %v3997, %v4009
        %v4038 = vsel %vm735, %v3999, %v4011
        %v4039 = vsel %vm735, %v4001, %v4013
        %v4040 = vsel %vm735, %v4003, %v4015
        %v4041 = vsel %vm735, %v4005, %v4017
        %v4042 = vsel %vm735, %v3983, %v3995
        %v4043 = vsel %vm735, %v3985, %v3997
        %v4044 = vsel %vm735, %v3987, %v3999
        %v4045 = vsel %vm735, %v3989, %v4001
        %v4046 = vsel %vm735, %v3991, %v4003
        %v4047 = vsel %vm735, %v3993, %v4005
        %v4048 = vsel %vm735, %v4019, %v3983
        %v4049 = vsel %vm735, %v4021, %v3985
        %v4050 = vsel %vm735, %v4023, %v3987
        %v4051 = vsel %vm735, %v4025, %v3989
        %v4052 = vsel %vm735, %v4027, %v3991
        %v4053 = vsel %vm735, %v4029, %v3993
        %4054 = vrot.lane.b32.xlu0 %v3891, 1
        %v4055 = vpop.permute.xlu0 %4054
        %4056 = vrot.lane.b32.xlu0 %v3895, 1
        %v4057 = vpop.permute.xlu0 %4056
        %4058 = vrot.lane.b32.xlu0 %v3901, 1
        %v4059 = vpop.permute.xlu0 %4058
        %4060 = vrot.lane.b32.xlu0 %v3905, 1
        %v4061 = vpop.permute.xlu0 %4060
        %4062 = vrot.lane.b32.xlu0 %v3911, 1
        %v4063 = vpop.permute.xlu0 %4062
        %4064 = vrot.lane.b32.xlu0 %v3915, 1
        %v4065 = vpop.permute.xlu0 %4064
        %4066 = vrot.lane.b32.xlu0 %v3893, 1
        %v4067 = vpop.permute.xlu0 %4066
        %4068 = vrot.lane.b32.xlu0 %v3897, 1
        %v4069 = vpop.permute.xlu0 %4068
        %4070 = vrot.lane.b32.xlu0 %v3903, 1
        %v4071 = vpop.permute.xlu0 %4070
        %4072 = vrot.lane.b32.xlu0 %v3907, 1
        %v4073 = vpop.permute.xlu0 %4072
        %4074 = vrot.lane.b32.xlu0 %v3913, 1
        %v4075 = vpop.permute.xlu0 %4074
        %4076 = vrot.lane.b32.xlu0 %v3917, 1
        %v4077 = vpop.permute.xlu0 %4076
        %4078 = vrot.lane.b32.xlu0 %v3954, 1
        %v4079 = vpop.permute.xlu0 %4078
        %4080 = vrot.lane.b32.xlu0 %v3958, 1
        %v4081 = vpop.permute.xlu0 %4080
        %4082 = vrot.lane.b32.xlu0 %v3964, 1
        %v4083 = vpop.permute.xlu0 %4082
        %4084 = vrot.lane.b32.xlu0 %v3968, 1
        %v4085 = vpop.permute.xlu0 %4084
        %4086 = vrot.lane.b32.xlu0 %v3974, 1
        %v4087 = vpop.permute.xlu0 %4086
        %4088 = vrot.lane.b32.xlu0 %v3978, 1
        %v4089 = vpop.permute.xlu0 %4088
        %4090 = vrot.lane.b32.xlu0 %v3956, 1
        %v4091 = vpop.permute.xlu0 %4090
        %4092 = vrot.lane.b32.xlu0 %v3960, 1
        %v4093 = vpop.permute.xlu0 %4092
        %4094 = vrot.lane.b32.xlu0 %v3966, 1
        %v4095 = vpop.permute.xlu0 %4094
        %4096 = vrot.lane.b32.xlu0 %v3970, 1
        %v4097 = vpop.permute.xlu0 %4096
        %4098 = vrot.lane.b32.xlu0 %v3976, 1
        %v4099 = vpop.permute.xlu0 %4098
        %4100 = vrot.lane.b32.xlu0 %v3980, 1
        %v4101 = vpop.permute.xlu0 %4100
        %v4102 = vsel %vm808, %v4079, %v4091
        %v4103 = vsel %vm808, %v4081, %v4093
        %v4104 = vsel %vm808, %v4083, %v4095
        %v4105 = vsel %vm808, %v4085, %v4097
        %v4106 = vsel %vm808, %v4087, %v4099
        %v4107 = vsel %vm808, %v4089, %v4101
        %v4108 = vsel %vm808, %v4067, %v4079
        %v4109 = vsel %vm808, %v4069, %v4081
        %v4110 = vsel %vm808, %v4071, %v4083
        %v4111 = vsel %vm808, %v4073, %v4085
        %v4112 = vsel %vm808, %v4075, %v4087
        %v4113 = vsel %vm808, %v4077, %v4089
        %v4114 = vsel %vm808, %v4055, %v4067
        %v4115 = vsel %vm808, %v4057, %v4069
        %v4116 = vsel %vm808, %v4059, %v4071
        %v4117 = vsel %vm808, %v4061, %v4073
        %v4118 = vsel %vm808, %v4063, %v4075
        %v4119 = vsel %vm808, %v4065, %v4077
        %v4120 = vsel %vm808, %v4091, %v4055
        %v4121 = vsel %vm808, %v4093, %v4057
        %v4122 = vsel %vm808, %v4095, %v4059
        %v4123 = vsel %vm808, %v4097, %v4061
        %v4124 = vsel %vm808, %v4099, %v4063
        %v4125 = vsel %vm808, %v4101, %v4065
        %v4126 = vsel %vm387, %v4042, %v4120
        %v4127 = vsel %vm388, %v4036, %v4114
        %v4128 = vsel %vm389, %v4030, %v4108
        %v4129 = vsel %vm390, %v4048, %v4102
        %v4130 = vsel %vm387, %v4043, %v4121
        %v4131 = vsel %vm388, %v4037, %v4115
        %v4132 = vsel %vm389, %v4031, %v4109
        %v4133 = vsel %vm390, %v4049, %v4103
        %v4134 = vsel %vm387, %v4044, %v4122
        %v4135 = vsel %vm388, %v4038, %v4116
        %v4136 = vsel %vm389, %v4032, %v4110
        %v4137 = vsel %vm390, %v4050, %v4104
        %v4138 = vsel %vm387, %v4045, %v4123
        %v4139 = vsel %vm388, %v4039, %v4117
        %v4140 = vsel %vm389, %v4033, %v4111
        %v4141 = vsel %vm390, %v4051, %v4105
        %v4142 = vsel %vm387, %v4046, %v4124
        %v4143 = vsel %vm388, %v4040, %v4118
        %v4144 = vsel %vm389, %v4034, %v4112
        %v4145 = vsel %vm390, %v4052, %v4106
        %v4146 = vsel %vm387, %v4047, %v4125
        %v4147 = vsel %vm388, %v4041, %v4119
        %v4148 = vsel %vm389, %v4035, %v4113
        %v4149 = vsel %vm390, %v4053, %v4107
        %v4150 = vmul.f32 %v3891, %v638
        %v4151 = vmul.f32 %v3893, %v639
        %v4152 = vmul.f32 %v3954, %v640
        %v4153 = vmul.f32 %v3956, %v641
        %v4154 = vmul.f32 %v3895, %v642
        %v4155 = vmul.f32 %v3897, %v643
        %v4156 = vmul.f32 %v3958, %v644
        %v4157 = vmul.f32 %v3960, %v645
        %v4158 = vmul.f32 %v3901, %v646
        %v4159 = vmul.f32 %v3903, %v647
        %v4160 = vmul.f32 %v3964, %v648
        %v4161 = vmul.f32 %v3966, %v649
        %v4162 = vmul.f32 %v3905, %v650
        %v4163 = vmul.f32 %v3907, %v651
        %v4164 = vmul.f32 %v3968, %v652
        %v4165 = vmul.f32 %v3970, %v653
        %v4166 = vmul.f32 %v3911, %v654
        %v4167 = vmul.f32 %v3913, %v655
        %v4168 = vmul.f32 %v3974, %v656
        %v4169 = vmul.f32 %v3976, %v657
        %v4170 = vmul.f32 %v3915, %v658
        %v4171 = vmul.f32 %v3917, %v659
        %v4172 = vmul.f32 %v3978, %v660
        %v4173 = vmul.f32 %v3980, %v661
        %v4174 = vmul.f32 %v4126, %v663
        %v4175 = vmul.f32 %v4127, %v664
        %v4176 = vmul.f32 %v4128, %v665
        %v4177 = vmul.f32 %v4129, %v666
        %v4178 = vmul.f32 %v4130, %v667
        %v4179 = vmul.f32 %v4131, %v668
        %v4180 = vmul.f32 %v4132, %v669
        %v4181 = vmul.f32 %v4133, %v670
        %v4182 = vmul.f32 %v4134, %v671
        %v4183 = vmul.f32 %v4135, %v672
        %v4184 = vmul.f32 %v4136, %v673
        %v4185 = vmul.f32 %v4137, %v674
        %v4186 = vmul.f32 %v4138, %v675
        %v4187 = vmul.f32 %v4139, %v676
        %v4188 = vmul.f32 %v4140, %v677
        %v4189 = vmul.f32 %v4141, %v678
        %v4190 = vmul.f32 %v4142, %v679
        %v4191 = vmul.f32 %v4143, %v680
        %v4192 = vmul.f32 %v4144, %v681
        %v4193 = vmul.f32 %v4145, %v682
        %v4194 = vmul.f32 %v4146, %v683
        %v4195 = vmul.f32 %v4147, %v684
        %v4196 = vmul.f32 %v4148, %v685
        %v4197 = vmul.f32 %v4149, %v686
        %v4198 = vadd.f32 %v4150, %v4174
        %v4199 = vadd.f32 %v4151, %v4175
        %v4200 = vadd.f32 %v4152, %v4176
        %v4201 = vadd.f32 %v4153, %v4177
        %v4202 = vadd.f32 %v4154, %v4178
        %v4203 = vadd.f32 %v4155, %v4179
        %v4204 = vadd.f32 %v4156, %v4180
        %v4205 = vadd.f32 %v4157, %v4181
        %v4206 = vadd.f32 %v4158, %v4182
        %v4207 = vadd.f32 %v4159, %v4183
        %v4208 = vadd.f32 %v4160, %v4184
        %v4209 = vadd.f32 %v4161, %v4185
        %v4210 = vadd.f32 %v4162, %v4186
        %v4211 = vadd.f32 %v4163, %v4187
        %v4212 = vadd.f32 %v4164, %v4188
        %v4213 = vadd.f32 %v4165, %v4189
        %v4214 = vadd.f32 %v4166, %v4190
        %v4215 = vadd.f32 %v4167, %v4191
        %v4216 = vadd.f32 %v4168, %v4192
        %v4217 = vadd.f32 %v4169, %v4193
        %v4218 = vadd.f32 %v4170, %v4194
        %v4219 = vadd.f32 %v4171, %v4195
        %v4220 = vadd.f32 %v4172, %v4196
        %v4221 = vadd.f32 %v4173, %v4197
        %v4222 = vld [vmem:[%s3384 + $0x20] sm:$0xff]
        %v4223 = vld [vmem:[%s3384 + $0x28] sm:$0xff]
        %v4224 = vld [vmem:[%s3384 + $0x68] sm:$0xff]
        %v4225 = vld [vmem:[%s3384 + $0x70] sm:$0xff]
        %v4226 = vld [vmem:[%s3384 + $0xb0] sm:$0xff]
        %v4227 = vld [vmem:[%s3384 + $0xb8] sm:$0xff]
        %v4228 = vld [vmem:[%s3384 + $0xf8] sm:$0xff]
        %v4229 = vld [vmem:[%s3384 + $0x100] sm:$0xff]
        %v4238 = vunpack.c.l.b16 %v4222
        %v4239 = vunpack.c.h.b16 %v4222
        %v4240 = vunpack.c.l.b16 %v4223
        %v4241 = vunpack.c.h.b16 %v4223
        %v4242 = vunpack.c.l.b16 %v4224
        %v4243 = vunpack.c.h.b16 %v4224
        %v4244 = vunpack.c.l.b16 %v4225
        %v4245 = vunpack.c.h.b16 %v4225
        %v4246 = vunpack.c.l.b16 %v4226
        %v4247 = vunpack.c.h.b16 %v4226
        %v4248 = vunpack.c.l.b16 %v4227
        %v4249 = vunpack.c.h.b16 %v4227
        %v4250 = vunpack.c.l.b16 %v4228
        %v4251 = vunpack.c.h.b16 %v4228
        %v4252 = vunpack.c.l.b16 %v4229
        %v4253 = vunpack.c.h.b16 %v4229
        %v4254 = vpack.c.b16 %v4242, %v4238
        %v4255 = vpack.c.b16 %v4243, %v4239
        %v4256 = vpack.c.b16 %v4244, %v4240
        %v4257 = vpack.c.b16 %v4245, %v4241
        %v4258 = vpack.c.b16 %v4250, %v4246
        %v4259 = vpack.c.b16 %v4251, %v4247
        %v4260 = vpack.c.b16 %v4252, %v4248
        %v4261 = vpack.c.b16 %v4253, %v4249
        %4270 = vmatprep.subr.bf16.mxu0 %v4255
        %4271 = vmatpush1.bf16.msra.mxu0 %v4254
        %4272 = vmatprep.subr.bf16.mxu0 %v4259
        %4273 = vmatpush1.bf16.msra.mxu0 %v4258
        %4274 = vmatprep.subr.bf16.mxu0 0
        %4275 = vmatpush1.bf16.msra.mxu0 0
        %4276 = vmatprep.subr.bf16.mxu0 0
        %4277 = vmatpush1.bf16.msra.mxu0 0
        %4278 = vmatprep.subr.bf16.mxu0 0
        %4279 = vmatpush1.bf16.msra.mxu0 0
        %4280 = vmatprep.subr.bf16.mxu0 0
        %4281 = vmatpush1.bf16.msra.mxu0 0
        %4282 = vmatprep.subr.bf16.mxu0 0
        %4283 = vmatpush1.bf16.msra.mxu0 0
        %4284 = vmatprep.subr.bf16.mxu0 0
        %4285 = vmatpush1.bf16.msra.mxu0 0
        %4286 = vmatprep.subr.bf16.mxu0 0
        %4287 = vmatpush1.bf16.msra.mxu0 0
        %4288 = vmatprep.subr.bf16.mxu0 0
        %4289 = vmatpush1.bf16.msra.mxu0 0
        %4290 = vmatprep.subr.bf16.mxu0 0
        %4291 = vmatpush1.bf16.msra.mxu0 0
        %4292 = vmatprep.subr.bf16.mxu0 0
        %4293 = vmatpush1.bf16.msra.mxu0 0
        %4294 = vmatprep.subr.bf16.mxu0 0
        %4295 = vmatpush1.bf16.msra.mxu0 0
        %4296 = vmatprep.subr.bf16.mxu0 0
        %4297 = vmatpush1.bf16.msra.mxu0 0
        %4298 = vmatprep.subr.bf16.mxu0 0
        %4299 = vmatpush1.bf16.msra.mxu0 0
        %4300 = vmatprep.subr.bf16.mxu0 0
        %4301 = vmatpush1.bf16.msra.mxu0 0
        %4302 = vmatprep.mubr.bf16.mxu0 0
        %4303 = vmatmul.mubr.bf16.gmra.mrb[0].mxu0 %v3434
        %v4304 = vpop.f32.mrb[0].mxu0
        %v4305 = vadd.f32 0.0, %v4304
        %v4306 = vpop.f32.mrb[0].mxu0
        %v4307 = vadd.f32 0.0, %v4306
        %v4308 = vpop.f32.mrb[0].mxu0
        %v4309 = vadd.f32 0.0, %v4308
        %v4310 = vpop.f32.mrb[0].mxu0
        %v4311 = vadd.f32 0.0, %v4310
        %4312 = vmatprep.mubr.bf16.mxu0 0
        %4313 = vmatmul.mubr.bf16.gmra.mrb[0].mxu0 %v3437
        %v4314 = vpop.f32.mrb[0].mxu0
        %v4315 = vadd.f32 0.0, %v4314
        %v4316 = vpop.f32.mrb[0].mxu0
        %v4317 = vadd.f32 0.0, %v4316
        %v4318 = vpop.f32.mrb[0].mxu0
        %v4319 = vadd.f32 0.0, %v4318
        %v4320 = vpop.f32.mrb[0].mxu0
        %v4321 = vadd.f32 0.0, %v4320
        %4322 = vmatprep.mubr.bf16.mxu0 0
        %4323 = vmatmul.mubr.bf16.gmra.mrb[0].mxu0 %v3440
        %v4324 = vpop.f32.mrb[0].mxu0
        %v4325 = vadd.f32 0.0, %v4324
        %v4326 = vpop.f32.mrb[0].mxu0
        %v4327 = vadd.f32 0.0, %v4326
        %v4328 = vpop.f32.mrb[0].mxu0
        %v4329 = vadd.f32 0.0, %v4328
        %v4330 = vpop.f32.mrb[0].mxu0
        %v4331 = vadd.f32 0.0, %v4330
        %4332 = vdwg.mxu0
        %4333 = vmatprep.subr.bf16.mxu0 %v4257
        %4334 = vmatpush1.bf16.msra.mxu0 %v4256
        %4335 = vmatprep.subr.bf16.mxu0 %v4261
        %4336 = vmatpush1.bf16.msra.mxu0 %v4260
        %4337 = vmatprep.subr.bf16.mxu0 0
        %4338 = vmatpush1.bf16.msra.mxu0 0
        %4339 = vmatprep.subr.bf16.mxu0 0
        %4340 = vmatpush1.bf16.msra.mxu0 0
        %4341 = vmatprep.subr.bf16.mxu0 0
        %4342 = vmatpush1.bf16.msra.mxu0 0
        %4343 = vmatprep.subr.bf16.mxu0 0
        %4344 = vmatpush1.bf16.msra.mxu0 0
        %4345 = vmatprep.subr.bf16.mxu0 0
        %4346 = vmatpush1.bf16.msra.mxu0 0
        %4347 = vmatprep.subr.bf16.mxu0 0
        %4348 = vmatpush1.bf16.msra.mxu0 0
        %4349 = vmatprep.subr.bf16.mxu0 0
        %4350 = vmatpush1.bf16.msra.mxu0 0
        %4351 = vmatprep.subr.bf16.mxu0 0
        %4352 = vmatpush1.bf16.msra.mxu0 0
        %4353 = vmatprep.subr.bf16.mxu0 0
        %4354 = vmatpush1.bf16.msra.mxu0 0
        %4355 = vmatprep.subr.bf16.mxu0 0
        %4356 = vmatpush1.bf16.msra.mxu0 0
        %4357 = vmatprep.subr.bf16.mxu0 0
        %4358 = vmatpush1.bf16.msra.mxu0 0
        %4359 = vmatprep.subr.bf16.mxu0 0
        %4360 = vmatpush1.bf16.msra.mxu0 0
        %4361 = vmatprep.subr.bf16.mxu0 0
        %4362 = vmatpush1.bf16.msra.mxu0 0
        %4363 = vmatprep.subr.bf16.mxu0 0
        %4364 = vmatpush1.bf16.msra.mxu0 0
        %4365 = vmatprep.mubr.bf16.mxu0 0
        %4366 = vmatmul.mubr.bf16.gmra.mrb[0].mxu0 %v3434
        %v4367 = vpop.f32.mrb[0].mxu0
        %v4368 = vadd.f32 0.0, %v4367
        %v4369 = vpop.f32.mrb[0].mxu0
        %v4370 = vadd.f32 0.0, %v4369
        %v4371 = vpop.f32.mrb[0].mxu0
        %v4372 = vadd.f32 0.0, %v4371
        %v4373 = vpop.f32.mrb[0].mxu0
        %v4374 = vadd.f32 0.0, %v4373
        %4375 = vmatprep.mubr.bf16.mxu0 0
        %4376 = vmatmul.mubr.bf16.gmra.mrb[0].mxu0 %v3437
        %v4377 = vpop.f32.mrb[0].mxu0
        %v4378 = vadd.f32 0.0, %v4377
        %v4379 = vpop.f32.mrb[0].mxu0
        %v4380 = vadd.f32 0.0, %v4379
        %v4381 = vpop.f32.mrb[0].mxu0
        %v4382 = vadd.f32 0.0, %v4381
        %v4383 = vpop.f32.mrb[0].mxu0
        %v4384 = vadd.f32 0.0, %v4383
        %4385 = vmatprep.mubr.bf16.mxu0 0
        %4386 = vmatmul.mubr.bf16.gmra.mrb[0].mxu0 %v3440
        %v4387 = vpop.f32.mrb[0].mxu0
        %v4388 = vadd.f32 0.0, %v4387
        %v4389 = vpop.f32.mrb[0].mxu0
        %v4390 = vadd.f32 0.0, %v4389
        %v4391 = vpop.f32.mrb[0].mxu0
        %v4392 = vadd.f32 0.0, %v4391
        %v4393 = vpop.f32.mrb[0].mxu0
        %v4394 = vadd.f32 0.0, %v4393
        %4395 = vdwg.mxu0
        %v4396 = vld [vmem:[%s3384 + $0x30] sm:$0xff]
        %v4397 = vld [vmem:[%s3384 + $0x38] sm:$0xff]
        %v4398 = vld [vmem:[%s3384 + $0x78] sm:$0xff]
        %v4399 = vld [vmem:[%s3384 + $0x80] sm:$0xff]
        %v4400 = vld [vmem:[%s3384 + $0xc0] sm:$0xff]
        %v4401 = vld [vmem:[%s3384 + $0xc8] sm:$0xff]
        %v4402 = vld [vmem:[%s3384 + $0x108] sm:$0xff]
        %v4403 = vld [vmem:[%s3384 + $0x110] sm:$0xff]
        %v4412 = vunpack.c.l.b16 %v4396
        %v4413 = vunpack.c.h.b16 %v4396
        %v4414 = vunpack.c.l.b16 %v4397
        %v4415 = vunpack.c.h.b16 %v4397
        %v4416 = vunpack.c.l.b16 %v4398
        %v4417 = vunpack.c.h.b16 %v4398
        %v4418 = vunpack.c.l.b16 %v4399
        %v4419 = vunpack.c.h.b16 %v4399
        %v4420 = vunpack.c.l.b16 %v4400
        %v4421 = vunpack.c.h.b16 %v4400
        %v4422 = vunpack.c.l.b16 %v4401
        %v4423 = vunpack.c.h.b16 %v4401
        %v4424 = vunpack.c.l.b16 %v4402
        %v4425 = vunpack.c.h.b16 %v4402
        %v4426 = vunpack.c.l.b16 %v4403
        %v4427 = vunpack.c.h.b16 %v4403
        %v4428 = vpack.c.b16 %v4416, %v4412
        %v4429 = vpack.c.b16 %v4417, %v4413
        %v4430 = vpack.c.b16 %v4418, %v4414
        %v4431 = vpack.c.b16 %v4419, %v4415
        %v4432 = vpack.c.b16 %v4424, %v4420
        %v4433 = vpack.c.b16 %v4425, %v4421
        %v4434 = vpack.c.b16 %v4426, %v4422
        %v4435 = vpack.c.b16 %v4427, %v4423
        %4444 = vmatprep.subr.bf16.mxu0 %v4429
        %4445 = vmatpush1.bf16.msra.mxu0 %v4428
        %4446 = vmatprep.subr.bf16.mxu0 %v4433
        %4447 = vmatpush1.bf16.msra.mxu0 %v4432
        %4448 = vmatprep.subr.bf16.mxu0 0
        %4449 = vmatpush1.bf16.msra.mxu0 0
        %4450 = vmatprep.subr.bf16.mxu0 0
        %4451 = vmatpush1.bf16.msra.mxu0 0
        %4452 = vmatprep.subr.bf16.mxu0 0
        %4453 = vmatpush1.bf16.msra.mxu0 0
        %4454 = vmatprep.subr.bf16.mxu0 0
        %4455 = vmatpush1.bf16.msra.mxu0 0
        %4456 = vmatprep.subr.bf16.mxu0 0
        %4457 = vmatpush1.bf16.msra.mxu0 0
        %4458 = vmatprep.subr.bf16.mxu0 0
        %4459 = vmatpush1.bf16.msra.mxu0 0
        %4460 = vmatprep.subr.bf16.mxu0 0
        %4461 = vmatpush1.bf16.msra.mxu0 0
        %4462 = vmatprep.subr.bf16.mxu0 0
        %4463 = vmatpush1.bf16.msra.mxu0 0
        %4464 = vmatprep.subr.bf16.mxu0 0
        %4465 = vmatpush1.bf16.msra.mxu0 0
        %4466 = vmatprep.subr.bf16.mxu0 0
        %4467 = vmatpush1.bf16.msra.mxu0 0
        %4468 = vmatprep.subr.bf16.mxu0 0
        %4469 = vmatpush1.bf16.msra.mxu0 0
        %4470 = vmatprep.subr.bf16.mxu0 0
        %4471 = vmatpush1.bf16.msra.mxu0 0
        %4472 = vmatprep.subr.bf16.mxu0 0
        %4473 = vmatpush1.bf16.msra.mxu0 0
        %4474 = vmatprep.subr.bf16.mxu0 0
        %4475 = vmatpush1.bf16.msra.mxu0 0
        %4476 = vmatprep.mubr.bf16.mxu0 0
        %4477 = vmatmul.mubr.bf16.gmra.mrb[0].mxu0 %v3434
        %v4478 = vpop.f32.mrb[0].mxu0
        %v4479 = vadd.f32 0.0, %v4478
        %v4480 = vpop.f32.mrb[0].mxu0
        %v4481 = vadd.f32 0.0, %v4480
        %v4482 = vpop.f32.mrb[0].mxu0
        %v4483 = vadd.f32 0.0, %v4482
        %v4484 = vpop.f32.mrb[0].mxu0
        %v4485 = vadd.f32 0.0, %v4484
        %4486 = vmatprep.mubr.bf16.mxu0 0
        %4487 = vmatmul.mubr.bf16.gmra.mrb[0].mxu0 %v3437
        %v4488 = vpop.f32.mrb[0].mxu0
        %v4489 = vadd.f32 0.0, %v4488
        %v4490 = vpop.f32.mrb[0].mxu0
        %v4491 = vadd.f32 0.0, %v4490
        %v4492 = vpop.f32.mrb[0].mxu0
        %v4493 = vadd.f32 0.0, %v4492
        %v4494 = vpop.f32.mrb[0].mxu0
        %v4495 = vadd.f32 0.0, %v4494
        %4496 = vmatprep.mubr.bf16.mxu0 0
        %4497 = vmatmul.mubr.bf16.gmra.mrb[0].mxu0 %v3440
        %v4498 = vpop.f32.mrb[0].mxu0
        %v4499 = vadd.f32 0.0, %v4498
        %v4500 = vpop.f32.mrb[0].mxu0
        %v4501 = vadd.f32 0.0, %v4500
        %v4502 = vpop.f32.mrb[0].mxu0
        %v4503 = vadd.f32 0.0, %v4502
        %v4504 = vpop.f32.mrb[0].mxu0
        %v4505 = vadd.f32 0.0, %v4504
        %4506 = vdwg.mxu0
        %4507 = vmatprep.subr.bf16.mxu0 %v4431
        %4508 = vmatpush1.bf16.msra.mxu0 %v4430
        %4509 = vmatprep.subr.bf16.mxu0 %v4435
        %4510 = vmatpush1.bf16.msra.mxu0 %v4434
        %4511 = vmatprep.subr.bf16.mxu0 0
        %4512 = vmatpush1.bf16.msra.mxu0 0
        %4513 = vmatprep.subr.bf16.mxu0 0
        %4514 = vmatpush1.bf16.msra.mxu0 0
        %4515 = vmatprep.subr.bf16.mxu0 0
        %4516 = vmatpush1.bf16.msra.mxu0 0
        %4517 = vmatprep.subr.bf16.mxu0 0
        %4518 = vmatpush1.bf16.msra.mxu0 0
        %4519 = vmatprep.subr.bf16.mxu0 0
        %4520 = vmatpush1.bf16.msra.mxu0 0
        %4521 = vmatprep.subr.bf16.mxu0 0
        %4522 = vmatpush1.bf16.msra.mxu0 0
        %4523 = vmatprep.subr.bf16.mxu0 0
        %4524 = vmatpush1.bf16.msra.mxu0 0
        %4525 = vmatprep.subr.bf16.mxu0 0
        %4526 = vmatpush1.bf16.msra.mxu0 0
        %4527 = vmatprep.subr.bf16.mxu0 0
        %4528 = vmatpush1.bf16.msra.mxu0 0
        %4529 = vmatprep.subr.bf16.mxu0 0
        %4530 = vmatpush1.bf16.msra.mxu0 0
        %4531 = vmatprep.subr.bf16.mxu0 0
        %4532 = vmatpush1.bf16.msra.mxu0 0
        %4533 = vmatprep.subr.bf16.mxu0 0
        %4534 = vmatpush1.bf16.msra.mxu0 0
        %4535 = vmatprep.subr.bf16.mxu0 0
        %4536 = vmatpush1.bf16.msra.mxu0 0
        %4537 = vmatprep.subr.bf16.mxu0 0
        %4538 = vmatpush1.bf16.msra.mxu0 0
        %4539 = vmatprep.mubr.bf16.mxu0 0
        %4540 = vmatmul.mubr.bf16.gmra.mrb[0].mxu0 %v3434
        %v4541 = vpop.f32.mrb[0].mxu0
        %v4542 = vadd.f32 0.0, %v4541
        %v4543 = vpop.f32.mrb[0].mxu0
        %v4544 = vadd.f32 0.0, %v4543
        %v4545 = vpop.f32.mrb[0].mxu0
        %v4546 = vadd.f32 0.0, %v4545
        %v4547 = vpop.f32.mrb[0].mxu0
        %v4548 = vadd.f32 0.0, %v4547
        %4549 = vmatprep.mubr.bf16.mxu0 0
        %4550 = vmatmul.mubr.bf16.gmra.mrb[0].mxu0 %v3437
        %v4551 = vpop.f32.mrb[0].mxu0
        %v4552 = vadd.f32 0.0, %v4551
        %v4553 = vpop.f32.mrb[0].mxu0
        %v4554 = vadd.f32 0.0, %v4553
        %v4555 = vpop.f32.mrb[0].mxu0
        %v4556 = vadd.f32 0.0, %v4555
        %v4557 = vpop.f32.mrb[0].mxu0
        %v4558 = vadd.f32 0.0, %v4557
        %4559 = vmatprep.mubr.bf16.mxu0 0
        %4560 = vmatmul.mubr.bf16.gmra.mrb[0].mxu0 %v3440
        %v4561 = vpop.f32.mrb[0].mxu0
        %v4562 = vadd.f32 0.0, %v4561
        %v4563 = vpop.f32.mrb[0].mxu0
        %v4564 = vadd.f32 0.0, %v4563
        %v4565 = vpop.f32.mrb[0].mxu0
        %v4566 = vadd.f32 0.0, %v4565
        %v4567 = vpop.f32.mrb[0].mxu0
        %v4568 = vadd.f32 0.0, %v4567
        %4569 = vdwg.mxu0
        %v4570 = vtanh.pop %v4479
        %v4571 = vtanh.pop %v4481
        %v4572 = vtanh.pop %v4542
        %v4573 = vtanh.pop %v4544
        %v4574 = vtanh.pop %v4483
        %v4575 = vtanh.pop %v4485
        %v4576 = vtanh.pop %v4546
        %v4577 = vtanh.pop %v4548
        %v4578 = vtanh.pop %v4489
        %v4579 = vtanh.pop %v4491
        %v4580 = vtanh.pop %v4552
        %v4581 = vtanh.pop %v4554
        %v4582 = vtanh.pop %v4493
        %v4583 = vtanh.pop %v4495
        %v4584 = vtanh.pop %v4556
        %v4585 = vtanh.pop %v4558
        %v4586 = vtanh.pop %v4499
        %v4587 = vtanh.pop %v4501
        %v4588 = vtanh.pop %v4562
        %v4589 = vtanh.pop %v4564
        %v4590 = vtanh.pop %v4503
        %v4591 = vtanh.pop %v4505
        %v4592 = vtanh.pop %v4566
        %v4593 = vtanh.pop %v4568
        %v4594 = vmul.f32 %v4305, %v4570
        %v4595 = vmul.f32 %v4307, %v4571
        %v4596 = vmul.f32 %v4368, %v4572
        %v4597 = vmul.f32 %v4370, %v4573
        %v4598 = vmul.f32 %v4309, %v4574
        %v4599 = vmul.f32 %v4311, %v4575
        %v4600 = vmul.f32 %v4372, %v4576
        %v4601 = vmul.f32 %v4374, %v4577
        %v4602 = vmul.f32 %v4315, %v4578
        %v4603 = vmul.f32 %v4317, %v4579
        %v4604 = vmul.f32 %v4378, %v4580
        %v4605 = vmul.f32 %v4380, %v4581
        %v4606 = vmul.f32 %v4319, %v4582
        %v4607 = vmul.f32 %v4321, %v4583
        %v4608 = vmul.f32 %v4382, %v4584
        %v4609 = vmul.f32 %v4384, %v4585
        %v4610 = vmul.f32 %v4325, %v4586
        %v4611 = vmul.f32 %v4327, %v4587
        %v4612 = vmul.f32 %v4388, %v4588
        %v4613 = vmul.f32 %v4390, %v4589
        %v4614 = vmul.f32 %v4329, %v4590
        %v4615 = vmul.f32 %v4331, %v4591
        %v4616 = vmul.f32 %v4392, %v4592
        %v4617 = vmul.f32 %v4394, %v4593
        %v4618 = vsel %vm1763, %v4594, %v4305
        %v4619 = vsel %vm1763, %v4595, %v4307
        %v4620 = vsel %vm1763, %v4596, %v4368
        %v4621 = vsel %vm1763, %v4597, %v4370
        %v4622 = vsel %vm1764, %v4598, %v4309
        %v4623 = vsel %vm1764, %v4599, %v4311
        %v4624 = vsel %vm1764, %v4600, %v4372
        %v4625 = vsel %vm1764, %v4601, %v4374
        %v4626 = vsel %vm1765, %v4602, %v4315
        %v4627 = vsel %vm1765, %v4603, %v4317
        %v4628 = vsel %vm1765, %v4604, %v4378
        %v4629 = vsel %vm1765, %v4605, %v4380
        %v4630 = vsel %vm1766, %v4606, %v4319
        %v4631 = vsel %vm1766, %v4607, %v4321
        %v4632 = vsel %vm1766, %v4608, %v4382
        %v4633 = vsel %vm1766, %v4609, %v4384
        %v4634 = vsel %vm1767, %v4610, %v4325
        %v4635 = vsel %vm1767, %v4611, %v4327
        %v4636 = vsel %vm1767, %v4612, %v4388
        %v4637 = vsel %vm1767, %v4613, %v4390
        %v4638 = vsel %vm1768, %v4614, %v4329
        %v4639 = vsel %vm1768, %v4615, %v4331
        %v4640 = vsel %vm1768, %v4616, %v4392
        %v4641 = vsel %vm1768, %v4617, %v4394
        %v4642 = vpack.c.bf16 %v3788, %v3784
        %v4643 = vpack.c.bf16 %v3789, %v3785
        %v4644 = vpack.c.bf16 %v3790, %v3786
        %v4645 = vpack.c.bf16 %v3791, %v3787
        %v4646 = vpack.c.bf16 %v3796, %v3792
        %v4647 = vpack.c.bf16 %v3797, %v3793
        %v4648 = vpack.c.bf16 %v3798, %v3794
        %v4649 = vpack.c.bf16 %v3799, %v3795
        %v4650 = vpack.c.bf16 %v3804, %v3800
        %v4651 = vpack.c.bf16 %v3805, %v3801
        %v4652 = vpack.c.bf16 %v3806, %v3802
        %v4653 = vpack.c.bf16 %v3807, %v3803
        %v4654 = vpack.c.bf16 %v4202, %v4198
        %v4655 = vpack.c.bf16 %v4203, %v4199
        %v4656 = vpack.c.bf16 %v4204, %v4200
        %v4657 = vpack.c.bf16 %v4205, %v4201
        %v4658 = vpack.c.bf16 %v4210, %v4206
        %v4659 = vpack.c.bf16 %v4211, %v4207
        %v4660 = vpack.c.bf16 %v4212, %v4208
        %v4661 = vpack.c.bf16 %v4213, %v4209
        %v4662 = vpack.c.bf16 %v4218, %v4214
        %v4663 = vpack.c.bf16 %v4219, %v4215
        %v4664 = vpack.c.bf16 %v4220, %v4216
        %v4665 = vpack.c.bf16 %v4221, %v4217
        %v4666 = vpack.c.bf16 %v4622, %v4618
        %v4667 = vpack.c.bf16 %v4623, %v4619
        %v4668 = vpack.c.bf16 %v4624, %v4620
        %v4669 = vpack.c.bf16 %v4625, %v4621
        %v4670 = vpack.c.bf16 %v4630, %v4626
        %v4671 = vpack.c.bf16 %v4631, %v4627
        %v4672 = vpack.c.bf16 %v4632, %v4628
        %v4673 = vpack.c.bf16 %v4633, %v4629
        %v4674 = vpack.c.bf16 %v4638, %v4634
        %v4675 = vpack.c.bf16 %v4639, %v4635
        %v4676 = vpack.c.bf16 %v4640, %v4636
        %v4677 = vpack.c.bf16 %v4641, %v4637
        %4678 = vmatprep.subr.bf16.mxu0 0
        %4679 = vmatpush1.bf16.xpose.msra.mxu0 %v4654
        %4680 = vmatprep.subr.bf16.mxu0 0
        %4681 = vmatpush1.bf16.xpose.msra.mxu0 %v4658
        %4682 = vmatprep.subr.bf16.mxu0 0
        %4683 = vmatpush1.bf16.xpose.msra.mxu0 %v4662
        %4684 = vmatprep.subr.bf16.mxu0 0
        %4685 = vmatpush1.bf16.xpose.msra.mxu0 0
        %4686 = vmatprep.subr.bf16.mxu0 0
        %4687 = vmatpush1.bf16.xpose.msra.mxu0 0
        %4688 = vmatprep.subr.bf16.mxu0 0
        %4689 = vmatpush1.bf16.xpose.msra.mxu0 0
        %4690 = vmatprep.subr.bf16.mxu0 0
        %4691 = vmatpush1.bf16.xpose.msra.mxu0 0
        %4692 = vmatprep.subr.bf16.mxu0 0
        %4693 = vmatpush1.bf16.xpose.msra.mxu0 0
        %4694 = vmatprep.subr.bf16.mxu0 0
        %4695 = vmatpush1.bf16.xpose.msra.mxu0 0
        %4696 = vmatprep.subr.bf16.mxu0 0
        %4697 = vmatpush1.bf16.xpose.msra.mxu0 0
        %4698 = vmatprep.subr.bf16.mxu0 0
        %4699 = vmatpush1.bf16.xpose.msra.mxu0 0
        %4700 = vmatprep.subr.bf16.mxu0 0
        %4701 = vmatpush1.bf16.xpose.msra.mxu0 0
        %4702 = vmatprep.subr.bf16.mxu0 0
        %4703 = vmatpush1.bf16.xpose.msra.mxu0 0
        %4704 = vmatprep.subr.bf16.mxu0 0
        %4705 = vmatpush1.bf16.xpose.msra.mxu0 0
        %4706 = vmatprep.subr.bf16.mxu0 0
        %4707 = vmatpush1.bf16.xpose.msra.mxu0 0
        %4708 = vmatprep.subr.bf16.mxu0 0
        %4709 = vmatpush1.bf16.xpose.msra.mxu0 0
        %4710 = vmatprep.mubr.bf16.mxu0 0
        %4711 = vmatmul.mubr.bf16.gmra.mrb[0].mxu0 %v4642
        %v4712 = vpop.f32.mrb[0].mxu0
        %v4713 = vadd.f32 %v330, %v4712
        %v4714 = vpop.f32.mrb[0].mxu0
        %v4715 = vpop.f32.mrb[0].mxu0
        %v4716 = vadd.f32 %v331, %v4715
        %v4717 = vpop.f32.mrb[0].mxu0
        %4718 = vmatprep.mubr.bf16.mxu0 0
        %4719 = vmatmul.mubr.bf16.gmra.mrb[0].mxu0 %v4646
        %v4720 = vpop.f32.mrb[0].mxu0
        %v4721 = vadd.f32 %v332, %v4720
        %v4722 = vpop.f32.mrb[0].mxu0
        %v4723 = vpop.f32.mrb[0].mxu0
        %v4724 = vadd.f32 %v333, %v4723
        %v4725 = vpop.f32.mrb[0].mxu0
        %4726 = vmatprep.mubr.bf16.mxu0 0
        %4727 = vmatmul.mubr.bf16.gmra.mrb[0].mxu0 %v4650
        %v4728 = vpop.f32.mrb[0].mxu0
        %v4729 = vadd.f32 %v334, %v4728
        %v4730 = vpop.f32.mrb[0].mxu0
        %v4731 = vpop.f32.mrb[0].mxu0
        %v4732 = vadd.f32 %v335, %v4731
        %v4733 = vpop.f32.mrb[0].mxu0
        %4734 = vdwg.mxu0
        %v4735 = vsel %vm1886, %v4713, -inf
        %4736 = vmax.xlane.f32.xlu0 %v4735
        %v4737 = vpop.xlane.xlu0 %4736
        %v4738 = vsel %vm1886, %v4716, -inf
        %4739 = vmax.xlane.f32.xlu0 %v4738
        %v4740 = vpop.xlane.xlu0 %4739
        %v4741 = vsel %vm1886, %v4721, -inf
        %4742 = vmax.xlane.f32.xlu0 %v4741
        %v4743 = vpop.xlane.xlu0 %4742
        %v4744 = vsel %vm1886, %v4724, -inf
        %4745 = vmax.xlane.f32.xlu0 %v4744
        %v4746 = vpop.xlane.xlu0 %4745
        %v4747 = vsel %vm1886, %v4729, -inf
        %4748 = vmax.xlane.f32.xlu0 %v4747
        %v4749 = vpop.xlane.xlu0 %4748
        %v4750 = vsel %vm1886, %v4732, -inf
        %4751 = vmax.xlane.f32.xlu0 %v4750
        %v4752 = vpop.xlane.xlu0 %4751
        %v4753 = vsub.f32 %v4713, %v4737
        %v4754 = vsub.f32 %v4716, %v4740
        %v4755 = vsub.f32 %v4721, %v4743
        %v4756 = vsub.f32 %v4724, %v4746
        %v4757 = vsub.f32 %v4729, %v4749
        %v4758 = vsub.f32 %v4732, %v4752
        %v4759 = vmul.f32 %v4753, 1.442695
        %v4760 = vpow.pop %v4759
        %v4761 = vmul.f32 %v4754, 1.442695
        %v4762 = vpow.pop %v4761
        %v4763 = vmul.f32 %v4755, 1.442695
        %v4764 = vpow.pop %v4763
        %v4765 = vmul.f32 %v4756, 1.442695
        %v4766 = vpow.pop %v4765
        %v4767 = vmul.f32 %v4757, 1.442695
        %v4768 = vpow.pop %v4767
        %v4769 = vmul.f32 %v4758, 1.442695
        %v4770 = vpow.pop %v4769
        %v4771 = vsel %vm1886, %v4760, 0.0
        %4772 = vadd.xlane.f32.xlu0 %v4771
        %v4773 = vpop.xlane.xlu0 %4772
        %v4774 = vsel %vm1886, %v4762, 0.0
        %4775 = vadd.xlane.f32.xlu0 %v4774
        %v4776 = vpop.xlane.xlu0 %4775
        %v4777 = vsel %vm1886, %v4764, 0.0
        %4778 = vadd.xlane.f32.xlu0 %v4777
        %v4779 = vpop.xlane.xlu0 %4778
        %v4780 = vsel %vm1886, %v4766, 0.0
        %4781 = vadd.xlane.f32.xlu0 %v4780
        %v4782 = vpop.xlane.xlu0 %4781
        %v4783 = vsel %vm1886, %v4768, 0.0
        %4784 = vadd.xlane.f32.xlu0 %v4783
        %v4785 = vpop.xlane.xlu0 %4784
        %v4786 = vsel %vm1886, %v4770, 0.0
        %4787 = vadd.xlane.f32.xlu0 %v4786
        %v4788 = vpop.xlane.xlu0 %4787
        %v4789 = vrcp.pop %v4773
        %v4790 = vmul.f32 %v4760, %v4789
        %v4791 = vrcp.pop %v4776
        %v4792 = vmul.f32 %v4762, %v4791
        %v4793 = vrcp.pop %v4779
        %v4794 = vmul.f32 %v4764, %v4793
        %v4795 = vrcp.pop %v4782
        %v4796 = vmul.f32 %v4766, %v4795
        %v4797 = vrcp.pop %v4785
        %v4798 = vmul.f32 %v4768, %v4797
        %v4799 = vrcp.pop %v4788
        %v4800 = vmul.f32 %v4770, %v4799
        %v4801 = vpack.c.bf16 %v4792, %v4790
        %v4802 = vpack.c.bf16 %v4796, %v4794
        %v4803 = vpack.c.bf16 %v4800, %v4798
        %v4805 = vsel %vm1886, %v4801, 0
        %v4808 = vsel %vm1886, %v4802, 0
        %v4811 = vsel %vm1886, %v4803, 0
        %4813 = vmatprep.subr.bf16.mxu0 0
        %4814 = vmatpush1.bf16.msra.mxu0 %v4666
        %4815 = vmatprep.subr.bf16.mxu0 0
        %4816 = vmatpush1.bf16.msra.mxu0 %v4670
        %4817 = vmatprep.subr.bf16.mxu0 0
        %4818 = vmatpush1.bf16.msra.mxu0 %v4674
        %4819 = vmatprep.subr.bf16.mxu0 0
        %4820 = vmatpush1.bf16.msra.mxu0 0
        %4821 = vmatprep.subr.bf16.mxu0 0
        %4822 = vmatpush1.bf16.msra.mxu0 0
        %4823 = vmatprep.subr.bf16.mxu0 0
        %4824 = vmatpush1.bf16.msra.mxu0 0
        %4825 = vmatprep.subr.bf16.mxu0 0
        %4826 = vmatpush1.bf16.msra.mxu0 0
        %4827 = vmatprep.subr.bf16.mxu0 0
        %4828 = vmatpush1.bf16.msra.mxu0 0
        %4829 = vmatprep.subr.bf16.mxu0 0
        %4830 = vmatpush1.bf16.msra.mxu0 0
        %4831 = vmatprep.subr.bf16.mxu0 0
        %4832 = vmatpush1.bf16.msra.mxu0 0
        %4833 = vmatprep.subr.bf16.mxu0 0
        %4834 = vmatpush1.bf16.msra.mxu0 0
        %4835 = vmatprep.subr.bf16.mxu0 0
        %4836 = vmatpush1.bf16.msra.mxu0 0
        %4837 = vmatprep.subr.bf16.mxu0 0
        %4838 = vmatpush1.bf16.msra.mxu0 0
        %4839 = vmatprep.subr.bf16.mxu0 0
        %4840 = vmatpush1.bf16.msra.mxu0 0
        %4841 = vmatprep.subr.bf16.mxu0 0
        %4842 = vmatpush1.bf16.msra.mxu0 0
        %4843 = vmatprep.subr.bf16.mxu0 0
        %4844 = vmatpush1.bf16.msra.mxu0 0
        %4845 = vmatprep.mubr.bf16.mxu0 0
        %4846 = vmatmul.mubr.bf16.gmra.mrb[0].mxu0 %v4805
        %v4847 = vpop.f32.mrb[0].mxu0
        %v4848 = vadd.f32 0.0, %v4847
        %v4849 = vpop.f32.mrb[0].mxu0
        %v4850 = vpop.f32.mrb[0].mxu0
        %v4851 = vadd.f32 0.0, %v4850
        %v4852 = vpop.f32.mrb[0].mxu0
        %4853 = vmatprep.mubr.bf16.mxu0 0
        %4854 = vmatmul.mubr.bf16.gmra.mrb[0].mxu0 %v4808
        %v4855 = vpop.f32.mrb[0].mxu0
        %v4856 = vadd.f32 0.0, %v4855
        %v4857 = vpop.f32.mrb[0].mxu0
        %v4858 = vpop.f32.mrb[0].mxu0
        %v4859 = vadd.f32 0.0, %v4858
        %v4860 = vpop.f32.mrb[0].mxu0
        %4861 = vmatprep.mubr.bf16.mxu0 0
        %4862 = vmatmul.mubr.bf16.gmra.mrb[0].mxu0 %v4811
        %v4863 = vpop.f32.mrb[0].mxu0
        %v4864 = vadd.f32 0.0, %v4863
        %v4865 = vpop.f32.mrb[0].mxu0
        %v4866 = vpop.f32.mrb[0].mxu0
        %v4867 = vadd.f32 0.0, %v4866
        %v4868 = vpop.f32.mrb[0].mxu0
        %4869 = vdwg.mxu0
        %v4870 = vpack.c.bf16 %v4851, %v4848
        %v4871 = vpack.c.bf16 %v4859, %v4856
        %v4872 = vpack.c.bf16 %v4867, %v4864
        %4873 = vmatprep.subr.bf16.mxu0 0
        %4874 = vmatpush1.bf16.xpose.msra.mxu0 %v4655
        %4875 = vmatprep.subr.bf16.mxu0 0
        %4876 = vmatpush1.bf16.xpose.msra.mxu0 %v4659
        %4877 = vmatprep.subr.bf16.mxu0 0
        %4878 = vmatpush1.bf16.xpose.msra.mxu0 %v4663
        %4879 = vmatprep.subr.bf16.mxu0 0
        %4880 = vmatpush1.bf16.xpose.msra.mxu0 0
        %4881 = vmatprep.subr.bf16.mxu0 0
        %4882 = vmatpush1.bf16.xpose.msra.mxu0 0
        %4883 = vmatprep.subr.bf16.mxu0 0
        %4884 = vmatpush1.bf16.xpose.msra.mxu0 0
        %4885 = vmatprep.subr.bf16.mxu0 0
        %4886 = vmatpush1.bf16.xpose.msra.mxu0 0
        %4887 = vmatprep.subr.bf16.mxu0 0
        %4888 = vmatpush1.bf16.xpose.msra.mxu0 0
        %4889 = vmatprep.subr.bf16.mxu0 0
        %4890 = vmatpush1.bf16.xpose.msra.mxu0 0
        %4891 = vmatprep.subr.bf16.mxu0 0
        %4892 = vmatpush1.bf16.xpose.msra.mxu0 0
        %4893 = vmatprep.subr.bf16.mxu0 0
        %4894 = vmatpush1.bf16.xpose.msra.mxu0 0
        %4895 = vmatprep.subr.bf16.mxu0 0
        %4896 = vmatpush1.bf16.xpose.msra.mxu0 0
        %4897 = vmatprep.subr.bf16.mxu0 0
        %4898 = vmatpush1.bf16.xpose.msra.mxu0 0
        %4899 = vmatprep.subr.bf16.mxu0 0
        %4900 = vmatpush1.bf16.xpose.msra.mxu0 0
        %4901 = vmatprep.subr.bf16.mxu0 0
        %4902 = vmatpush1.bf16.xpose.msra.mxu0 0
        %4903 = vmatprep.subr.bf16.mxu0 0
        %4904 = vmatpush1.bf16.xpose.msra.mxu0 0
        %4905 = vmatprep.mubr.bf16.mxu0 0
        %4906 = vmatmul.mubr.bf16.gmra.mrb[0].mxu0 %v4643
        %v4907 = vpop.f32.mrb[0].mxu0
        %v4908 = vadd.f32 %v330, %v4907
        %v4909 = vpop.f32.mrb[0].mxu0
        %v4910 = vpop.f32.mrb[0].mxu0
        %v4911 = vadd.f32 %v331, %v4910
        %v4912 = vpop.f32.mrb[0].mxu0
        %4913 = vmatprep.mubr.bf16.mxu0 0
        %4914 = vmatmul.mubr.bf16.gmra.mrb[0].mxu0 %v4647
        %v4915 = vpop.f32.mrb[0].mxu0
        %v4916 = vadd.f32 %v332, %v4915
        %v4917 = vpop.f32.mrb[0].mxu0
        %v4918 = vpop.f32.mrb[0].mxu0
        %v4919 = vadd.f32 %v333, %v4918
        %v4920 = vpop.f32.mrb[0].mxu0
        %4921 = vmatprep.mubr.bf16.mxu0 0
        %4922 = vmatmul.mubr.bf16.gmra.mrb[0].mxu0 %v4651
        %v4923 = vpop.f32.mrb[0].mxu0
        %v4924 = vadd.f32 %v334, %v4923
        %v4925 = vpop.f32.mrb[0].mxu0
        %v4926 = vpop.f32.mrb[0].mxu0
        %v4927 = vadd.f32 %v335, %v4926
        %v4928 = vpop.f32.mrb[0].mxu0
        %4929 = vdwg.mxu0
        %v4930 = vsel %vm1886, %v4908, -inf
        %4931 = vmax.xlane.f32.xlu0 %v4930
        %v4932 = vpop.xlane.xlu0 %4931
        %v4933 = vsel %vm1886, %v4911, -inf
        %4934 = vmax.xlane.f32.xlu0 %v4933
        %v4935 = vpop.xlane.xlu0 %4934
        %v4936 = vsel %vm1886, %v4916, -inf
        %4937 = vmax.xlane.f32.xlu0 %v4936
        %v4938 = vpop.xlane.xlu0 %4937
        %v4939 = vsel %vm1886, %v4919, -inf
        %4940 = vmax.xlane.f32.xlu0 %v4939
        %v4941 = vpop.xlane.xlu0 %4940
        %v4942 = vsel %vm1886, %v4924, -inf
        %4943 = vmax.xlane.f32.xlu0 %v4942
        %v4944 = vpop.xlane.xlu0 %4943
        %v4945 = vsel %vm1886, %v4927, -inf
        %4946 = vmax.xlane.f32.xlu0 %v4945
        %v4947 = vpop.xlane.xlu0 %4946
        %v4948 = vsub.f32 %v4908, %v4932
        %v4949 = vsub.f32 %v4911, %v4935
        %v4950 = vsub.f32 %v4916, %v4938
        %v4951 = vsub.f32 %v4919, %v4941
        %v4952 = vsub.f32 %v4924, %v4944
        %v4953 = vsub.f32 %v4927, %v4947
        %v4954 = vmul.f32 %v4948, 1.442695
        %v4955 = vpow.pop %v4954
        %v4956 = vmul.f32 %v4949, 1.442695
        %v4957 = vpow.pop %v4956
        %v4958 = vmul.f32 %v4950, 1.442695
        %v4959 = vpow.pop %v4958
        %v4960 = vmul.f32 %v4951, 1.442695
        %v4961 = vpow.pop %v4960
        %v4962 = vmul.f32 %v4952, 1.442695
        %v4963 = vpow.pop %v4962
        %v4964 = vmul.f32 %v4953, 1.442695
        %v4965 = vpow.pop %v4964
        %v4966 = vsel %vm1886, %v4955, 0.0
        %4967 = vadd.xlane.f32.xlu0 %v4966
        %v4968 = vpop.xlane.xlu0 %4967
        %v4969 = vsel %vm1886, %v4957, 0.0
        %4970 = vadd.xlane.f32.xlu0 %v4969
        %v4971 = vpop.xlane.xlu0 %4970
        %v4972 = vsel %vm1886, %v4959, 0.0
        %4973 = vadd.xlane.f32.xlu0 %v4972
        %v4974 = vpop.xlane.xlu0 %4973
        %v4975 = vsel %vm1886, %v4961, 0.0
        %4976 = vadd.xlane.f32.xlu0 %v4975
        %v4977 = vpop.xlane.xlu0 %4976
        %v4978 = vsel %vm1886, %v4963, 0.0
        %4979 = vadd.xlane.f32.xlu0 %v4978
        %v4980 = vpop.xlane.xlu0 %4979
        %v4981 = vsel %vm1886, %v4965, 0.0
        %4982 = vadd.xlane.f32.xlu0 %v4981
        %v4983 = vpop.xlane.xlu0 %4982
        %v4984 = vrcp.pop %v4968
        %v4985 = vmul.f32 %v4955, %v4984
        %v4986 = vrcp.pop %v4971
        %v4987 = vmul.f32 %v4957, %v4986
        %v4988 = vrcp.pop %v4974
        %v4989 = vmul.f32 %v4959, %v4988
        %v4990 = vrcp.pop %v4977
        %v4991 = vmul.f32 %v4961, %v4990
        %v4992 = vrcp.pop %v4980
        %v4993 = vmul.f32 %v4963, %v4992
        %v4994 = vrcp.pop %v4983
        %v4995 = vmul.f32 %v4965, %v4994
        %v4996 = vpack.c.bf16 %v4987, %v4985
        %v4997 = vpack.c.bf16 %v4991, %v4989
        %v4998 = vpack.c.bf16 %v4995, %v4993
        %v5000 = vsel %vm1886, %v4996, 0
        %v5003 = vsel %vm1886, %v4997, 0
        %v5006 = vsel %vm1886, %v4998, 0
        %5008 = vmatprep.subr.bf16.mxu0 0
        %5009 = vmatpush1.bf16.msra.mxu0 %v4667
        %5010 = vmatprep.subr.bf16.mxu0 0
        %5011 = vmatpush1.bf16.msra.mxu0 %v4671
        %5012 = vmatprep.subr.bf16.mxu0 0
        %5013 = vmatpush1.bf16.msra.mxu0 %v4675
        %5014 = vmatprep.subr.bf16.mxu0 0
        %5015 = vmatpush1.bf16.msra.mxu0 0
        %5016 = vmatprep.subr.bf16.mxu0 0
        %5017 = vmatpush1.bf16.msra.mxu0 0
        %5018 = vmatprep.subr.bf16.mxu0 0
        %5019 = vmatpush1.bf16.msra.mxu0 0
        %5020 = vmatprep.subr.bf16.mxu0 0
        %5021 = vmatpush1.bf16.msra.mxu0 0
        %5022 = vmatprep.subr.bf16.mxu0 0
        %5023 = vmatpush1.bf16.msra.mxu0 0
        %5024 = vmatprep.subr.bf16.mxu0 0
        %5025 = vmatpush1.bf16.msra.mxu0 0
        %5026 = vmatprep.subr.bf16.mxu0 0
        %5027 = vmatpush1.bf16.msra.mxu0 0
        %5028 = vmatprep.subr.bf16.mxu0 0
        %5029 = vmatpush1.bf16.msra.mxu0 0
        %5030 = vmatprep.subr.bf16.mxu0 0
        %5031 = vmatpush1.bf16.msra.mxu0 0
        %5032 = vmatprep.subr.bf16.mxu0 0
        %5033 = vmatpush1.bf16.msra.mxu0 0
        %5034 = vmatprep.subr.bf16.mxu0 0
        %5035 = vmatpush1.bf16.msra.mxu0 0
        %5036 = vmatprep.subr.bf16.mxu0 0
        %5037 = vmatpush1.bf16.msra.mxu0 0
        %5038 = vmatprep.subr.bf16.mxu0 0
        %5039 = vmatpush1.bf16.msra.mxu0 0
        %5040 = vmatprep.mubr.bf16.mxu0 0
        %5041 = vmatmul.mubr.bf16.gmra.mrb[0].mxu0 %v5000
        %v5042 = vpop.f32.mrb[0].mxu0
        %v5043 = vadd.f32 0.0, %v5042
        %v5044 = vpop.f32.mrb[0].mxu0
        %v5045 = vpop.f32.mrb[0].mxu0
        %v5046 = vadd.f32 0.0, %v5045
        %v5047 = vpop.f32.mrb[0].mxu0
        %5048 = vmatprep.mubr.bf16.mxu0 0
        %5049 = vmatmul.mubr.bf16.gmra.mrb[0].mxu0 %v5003
        %v5050 = vpop.f32.mrb[0].mxu0
        %v5051 = vadd.f32 0.0, %v5050
        %v5052 = vpop.f32.mrb[0].mxu0
        %v5053 = vpop.f32.mrb[0].mxu0
        %v5054 = vadd.f32 0.0, %v5053
        %v5055 = vpop.f32.mrb[0].mxu0
        %5056 = vmatprep.mubr.bf16.mxu0 0
        %5057 = vmatmul.mubr.bf16.gmra.mrb[0].mxu0 %v5006
        %v5058 = vpop.f32.mrb[0].mxu0
        %v5059 = vadd.f32 0.0, %v5058
        %v5060 = vpop.f32.mrb[0].mxu0
        %v5061 = vpop.f32.mrb[0].mxu0
        %v5062 = vadd.f32 0.0, %v5061
        %v5063 = vpop.f32.mrb[0].mxu0
        %5064 = vdwg.mxu0
        %v5065 = vpack.c.bf16 %v5046, %v5043
        %v5066 = vpack.c.bf16 %v5054, %v5051
        %v5067 = vpack.c.bf16 %v5062, %v5059
        %5068 = vmatprep.subr.bf16.mxu0 0
        %5069 = vmatpush1.bf16.xpose.msra.mxu0 %v4656
        %5070 = vmatprep.subr.bf16.mxu0 0
        %5071 = vmatpush1.bf16.xpose.msra.mxu0 %v4660
        %5072 = vmatprep.subr.bf16.mxu0 0
        %5073 = vmatpush1.bf16.xpose.msra.mxu0 %v4664
        %5074 = vmatprep.subr.bf16.mxu0 0
        %5075 = vmatpush1.bf16.xpose.msra.mxu0 0
        %5076 = vmatprep.subr.bf16.mxu0 0
        %5077 = vmatpush1.bf16.xpose.msra.mxu0 0
        %5078 = vmatprep.subr.bf16.mxu0 0
        %5079 = vmatpush1.bf16.xpose.msra.mxu0 0
        %5080 = vmatprep.subr.bf16.mxu0 0
        %5081 = vmatpush1.bf16.xpose.msra.mxu0 0
        %5082 = vmatprep.subr.bf16.mxu0 0
        %5083 = vmatpush1.bf16.xpose.msra.mxu0 0
        %5084 = vmatprep.subr.bf16.mxu0 0
        %5085 = vmatpush1.bf16.xpose.msra.mxu0 0
        %5086 = vmatprep.subr.bf16.mxu0 0
        %5087 = vmatpush1.bf16.xpose.msra.mxu0 0
        %5088 = vmatprep.subr.bf16.mxu0 0
        %5089 = vmatpush1.bf16.xpose.msra.mxu0 0
        %5090 = vmatprep.subr.bf16.mxu0 0
        %5091 = vmatpush1.bf16.xpose.msra.mxu0 0
        %5092 = vmatprep.subr.bf16.mxu0 0
        %5093 = vmatpush1.bf16.xpose.msra.mxu0 0
        %5094 = vmatprep.subr.bf16.mxu0 0
        %5095 = vmatpush1.bf16.xpose.msra.mxu0 0
        %5096 = vmatprep.subr.bf16.mxu0 0
        %5097 = vmatpush1.bf16.xpose.msra.mxu0 0
        %5098 = vmatprep.subr.bf16.mxu0 0
        %5099 = vmatpush1.bf16.xpose.msra.mxu0 0
        %5100 = vmatprep.mubr.bf16.mxu0 0
        %5101 = vmatmul.mubr.bf16.gmra.mrb[0].mxu0 %v4644
        %v5102 = vpop.f32.mrb[0].mxu0
        %v5103 = vadd.f32 %v330, %v5102
        %v5104 = vpop.f32.mrb[0].mxu0
        %v5105 = vpop.f32.mrb[0].mxu0
        %v5106 = vadd.f32 %v331, %v5105
        %v5107 = vpop.f32.mrb[0].mxu0
        %5108 = vmatprep.mubr.bf16.mxu0 0
        %5109 = vmatmul.mubr.bf16.gmra.mrb[0].mxu0 %v4648
        %v5110 = vpop.f32.mrb[0].mxu0
        %v5111 = vadd.f32 %v332, %v5110
        %v5112 = vpop.f32.mrb[0].mxu0
        %v5113 = vpop.f32.mrb[0].mxu0
        %v5114 = vadd.f32 %v333, %v5113
        %v5115 = vpop.f32.mrb[0].mxu0
        %5116 = vmatprep.mubr.bf16.mxu0 0
        %5117 = vmatmul.mubr.bf16.gmra.mrb[0].mxu0 %v4652
        %v5118 = vpop.f32.mrb[0].mxu0
        %v5119 = vadd.f32 %v334, %v5118
        %v5120 = vpop.f32.mrb[0].mxu0
        %v5121 = vpop.f32.mrb[0].mxu0
        %v5122 = vadd.f32 %v335, %v5121
        %v5123 = vpop.f32.mrb[0].mxu0
        %5124 = vdwg.mxu0
        %v5125 = vsel %vm1886, %v5103, -inf
        %5126 = vmax.xlane.f32.xlu0 %v5125
        %v5127 = vpop.xlane.xlu0 %5126
        %v5128 = vsel %vm1886, %v5106, -inf
        %5129 = vmax.xlane.f32.xlu0 %v5128
        %v5130 = vpop.xlane.xlu0 %5129
        %v5131 = vsel %vm1886, %v5111, -inf
        %5132 = vmax.xlane.f32.xlu0 %v5131
        %v5133 = vpop.xlane.xlu0 %5132
        %v5134 = vsel %vm1886, %v5114, -inf
        %5135 = vmax.xlane.f32.xlu0 %v5134
        %v5136 = vpop.xlane.xlu0 %5135
        %v5137 = vsel %vm1886, %v5119, -inf
        %5138 = vmax.xlane.f32.xlu0 %v5137
        %v5139 = vpop.xlane.xlu0 %5138
        %v5140 = vsel %vm1886, %v5122, -inf
        %5141 = vmax.xlane.f32.xlu0 %v5140
        %v5142 = vpop.xlane.xlu0 %5141
        %v5143 = vsub.f32 %v5103, %v5127
        %v5144 = vsub.f32 %v5106, %v5130
        %v5145 = vsub.f32 %v5111, %v5133
        %v5146 = vsub.f32 %v5114, %v5136
        %v5147 = vsub.f32 %v5119, %v5139
        %v5148 = vsub.f32 %v5122, %v5142
        %v5149 = vmul.f32 %v5143, 1.442695
        %v5150 = vpow.pop %v5149
        %v5151 = vmul.f32 %v5144, 1.442695
        %v5152 = vpow.pop %v5151
        %v5153 = vmul.f32 %v5145, 1.442695
        %v5154 = vpow.pop %v5153
        %v5155 = vmul.f32 %v5146, 1.442695
        %v5156 = vpow.pop %v5155
        %v5157 = vmul.f32 %v5147, 1.442695
        %v5158 = vpow.pop %v5157
        %v5159 = vmul.f32 %v5148, 1.442695
        %v5160 = vpow.pop %v5159
        %v5161 = vsel %vm1886, %v5150, 0.0
        %5162 = vadd.xlane.f32.xlu0 %v5161
        %v5163 = vpop.xlane.xlu0 %5162
        %v5164 = vsel %vm1886, %v5152, 0.0
        %5165 = vadd.xlane.f32.xlu0 %v5164
        %v5166 = vpop.xlane.xlu0 %5165
        %v5167 = vsel %vm1886, %v5154, 0.0
        %5168 = vadd.xlane.f32.xlu0 %v5167
        %v5169 = vpop.xlane.xlu0 %5168
        %v5170 = vsel %vm1886, %v5156, 0.0
        %5171 = vadd.xlane.f32.xlu0 %v5170
        %v5172 = vpop.xlane.xlu0 %5171
        %v5173 = vsel %vm1886, %v5158, 0.0
        %5174 = vadd.xlane.f32.xlu0 %v5173
        %v5175 = vpop.xlane.xlu0 %5174
        %v5176 = vsel %vm1886, %v5160, 0.0
        %5177 = vadd.xlane.f32.xlu0 %v5176
        %v5178 = vpop.xlane.xlu0 %5177
        %v5179 = vrcp.pop %v5163
        %v5180 = vmul.f32 %v5150, %v5179
        %v5181 = vrcp.pop %v5166
        %v5182 = vmul.f32 %v5152, %v5181
        %v5183 = vrcp.pop %v5169
        %v5184 = vmul.f32 %v5154, %v5183
        %v5185 = vrcp.pop %v5172
        %v5186 = vmul.f32 %v5156, %v5185
        %v5187 = vrcp.pop %v5175
        %v5188 = vmul.f32 %v5158, %v5187
        %v5189 = vrcp.pop %v5178
        %v5190 = vmul.f32 %v5160, %v5189
        %v5191 = vpack.c.bf16 %v5182, %v5180
        %v5192 = vpack.c.bf16 %v5186, %v5184
        %v5193 = vpack.c.bf16 %v5190, %v5188
        %v5195 = vsel %vm1886, %v5191, 0
        %v5198 = vsel %vm1886, %v5192, 0
        %v5201 = vsel %vm1886, %v5193, 0
        %5203 = vmatprep.subr.bf16.mxu0 0
        %5204 = vmatpush1.bf16.msra.mxu0 %v4668
        %5205 = vmatprep.subr.bf16.mxu0 0
        %5206 = vmatpush1.bf16.msra.mxu0 %v4672
        %5207 = vmatprep.subr.bf16.mxu0 0
        %5208 = vmatpush1.bf16.msra.mxu0 %v4676
        %5209 = vmatprep.subr.bf16.mxu0 0
        %5210 = vmatpush1.bf16.msra.mxu0 0
        %5211 = vmatprep.subr.bf16.mxu0 0
        %5212 = vmatpush1.bf16.msra.mxu0 0
        %5213 = vmatprep.subr.bf16.mxu0 0
        %5214 = vmatpush1.bf16.msra.mxu0 0
        %5215 = vmatprep.subr.bf16.mxu0 0
        %5216 = vmatpush1.bf16.msra.mxu0 0
        %5217 = vmatprep.subr.bf16.mxu0 0
        %5218 = vmatpush1.bf16.msra.mxu0 0
        %5219 = vmatprep.subr.bf16.mxu0 0
        %5220 = vmatpush1.bf16.msra.mxu0 0
        %5221 = vmatprep.subr.bf16.mxu0 0
        %5222 = vmatpush1.bf16.msra.mxu0 0
        %5223 = vmatprep.subr.bf16.mxu0 0
        %5224 = vmatpush1.bf16.msra.mxu0 0
        %5225 = vmatprep.subr.bf16.mxu0 0
        %5226 = vmatpush1.bf16.msra.mxu0 0
        %5227 = vmatprep.subr.bf16.mxu0 0
        %5228 = vmatpush1.bf16.msra.mxu0 0
        %5229 = vmatprep.subr.bf16.mxu0 0
        %5230 = vmatpush1.bf16.msra.mxu0 0
        %5231 = vmatprep.subr.bf16.mxu0 0
        %5232 = vmatpush1.bf16.msra.mxu0 0
        %5233 = vmatprep.subr.bf16.mxu0 0
        %5234 = vmatpush1.bf16.msra.mxu0 0
        %5235 = vmatprep.mubr.bf16.mxu0 0
        %5236 = vmatmul.mubr.bf16.gmra.mrb[0].mxu0 %v5195
        %v5237 = vpop.f32.mrb[0].mxu0
        %v5238 = vadd.f32 0.0, %v5237
        %v5239 = vpop.f32.mrb[0].mxu0
        %v5240 = vpop.f32.mrb[0].mxu0
        %v5241 = vadd.f32 0.0, %v5240
        %v5242 = vpop.f32.mrb[0].mxu0
        %5243 = vmatprep.mubr.bf16.mxu0 0
        %5244 = vmatmul.mubr.bf16.gmra.mrb[0].mxu0 %v5198
        %v5245 = vpop.f32.mrb[0].mxu0
        %v5246 = vadd.f32 0.0, %v5245
        %v5247 = vpop.f32.mrb[0].mxu0
        %v5248 = vpop.f32.mrb[0].mxu0
        %v5249 = vadd.f32 0.0, %v5248
        %v5250 = vpop.f32.mrb[0].mxu0
        %5251 = vmatprep.mubr.bf16.mxu0 0
        %5252 = vmatmul.mubr.bf16.gmra.mrb[0].mxu0 %v5201
        %v5253 = vpop.f32.mrb[0].mxu0
        %v5254 = vadd.f32 0.0, %v5253
        %v5255 = vpop.f32.mrb[0].mxu0
        %v5256 = vpop.f32.mrb[0].mxu0
        %v5257 = vadd.f32 0.0, %v5256
        %v5258 = vpop.f32.mrb[0].mxu0
        %5259 = vdwg.mxu0
        %v5260 = vpack.c.bf16 %v5241, %v5238
        %v5261 = vpack.c.bf16 %v5249, %v5246
        %v5262 = vpack.c.bf16 %v5257, %v5254
        %5263 = vmatprep.subr.bf16.mxu0 0
        %5264 = vmatpush1.bf16.xpose.msra.mxu0 %v4657
        %5265 = vmatprep.subr.bf16.mxu0 0
        %5266 = vmatpush1.bf16.xpose.msra.mxu0 %v4661
        %5267 = vmatprep.subr.bf16.mxu0 0
        %5268 = vmatpush1.bf16.xpose.msra.mxu0 %v4665
        %5269 = vmatprep.subr.bf16.mxu0 0
        %5270 = vmatpush1.bf16.xpose.msra.mxu0 0
        %5271 = vmatprep.subr.bf16.mxu0 0
        %5272 = vmatpush1.bf16.xpose.msra.mxu0 0
        %5273 = vmatprep.subr.bf16.mxu0 0
        %5274 = vmatpush1.bf16.xpose.msra.mxu0 0
        %5275 = vmatprep.subr.bf16.mxu0 0
        %5276 = vmatpush1.bf16.xpose.msra.mxu0 0
        %5277 = vmatprep.subr.bf16.mxu0 0
        %5278 = vmatpush1.bf16.xpose.msra.mxu0 0
        %5279 = vmatprep.subr.bf16.mxu0 0
        %5280 = vmatpush1.bf16.xpose.msra.mxu0 0
        %5281 = vmatprep.subr.bf16.mxu0 0
        %5282 = vmatpush1.bf16.xpose.msra.mxu0 0
        %5283 = vmatprep.subr.bf16.mxu0 0
        %5284 = vmatpush1.bf16.xpose.msra.mxu0 0
        %5285 = vmatprep.subr.bf16.mxu0 0
        %5286 = vmatpush1.bf16.xpose.msra.mxu0 0
        %5287 = vmatprep.subr.bf16.mxu0 0
        %5288 = vmatpush1.bf16.xpose.msra.mxu0 0
        %5289 = vmatprep.subr.bf16.mxu0 0
        %5290 = vmatpush1.bf16.xpose.msra.mxu0 0
        %5291 = vmatprep.subr.bf16.mxu0 0
        %5292 = vmatpush1.bf16.xpose.msra.mxu0 0
        %5293 = vmatprep.subr.bf16.mxu0 0
        %5294 = vmatpush1.bf16.xpose.msra.mxu0 0
        %5295 = vmatprep.mubr.bf16.mxu0 0
        %5296 = vmatmul.mubr.bf16.gmra.mrb[0].mxu0 %v4645
        %v5297 = vpop.f32.mrb[0].mxu0
        %v5298 = vadd.f32 %v330, %v5297
        %v5299 = vpop.f32.mrb[0].mxu0
        %v5300 = vpop.f32.mrb[0].mxu0
        %v5301 = vadd.f32 %v331, %v5300
        %v5302 = vpop.f32.mrb[0].mxu0
        %5303 = vmatprep.mubr.bf16.mxu0 0
        %5304 = vmatmul.mubr.bf16.gmra.mrb[0].mxu0 %v4649
        %v5305 = vpop.f32.mrb[0].mxu0
        %v5306 = vadd.f32 %v332, %v5305
        %v5307 = vpop.f32.mrb[0].mxu0
        %v5308 = vpop.f32.mrb[0].mxu0
        %v5309 = vadd.f32 %v333, %v5308
        %v5310 = vpop.f32.mrb[0].mxu0
        %5311 = vmatprep.mubr.bf16.mxu0 0
        %5312 = vmatmul.mubr.bf16.gmra.mrb[0].mxu0 %v4653
        %v5313 = vpop.f32.mrb[0].mxu0
        %v5314 = vadd.f32 %v334, %v5313
        %v5315 = vpop.f32.mrb[0].mxu0
        %v5316 = vpop.f32.mrb[0].mxu0
        %v5317 = vadd.f32 %v335, %v5316
        %v5318 = vpop.f32.mrb[0].mxu0
        %5319 = vdwg.mxu0
        %v5320 = vsel %vm1886, %v5298, -inf
        %5321 = vmax.xlane.f32.xlu0 %v5320
        %v5322 = vpop.xlane.xlu0 %5321
        %v5323 = vsel %vm1886, %v5301, -inf
        %5324 = vmax.xlane.f32.xlu0 %v5323
        %v5325 = vpop.xlane.xlu0 %5324
        %v5326 = vsel %vm1886, %v5306, -inf
        %5327 = vmax.xlane.f32.xlu0 %v5326
        %v5328 = vpop.xlane.xlu0 %5327
        %v5329 = vsel %vm1886, %v5309, -inf
        %5330 = vmax.xlane.f32.xlu0 %v5329
        %v5331 = vpop.xlane.xlu0 %5330
        %v5332 = vsel %vm1886, %v5314, -inf
        %5333 = vmax.xlane.f32.xlu0 %v5332
        %v5334 = vpop.xlane.xlu0 %5333
        %v5335 = vsel %vm1886, %v5317, -inf
        %5336 = vmax.xlane.f32.xlu0 %v5335
        %v5337 = vpop.xlane.xlu0 %5336
        %v5338 = vsub.f32 %v5298, %v5322
        %v5339 = vsub.f32 %v5301, %v5325
        %v5340 = vsub.f32 %v5306, %v5328
        %v5341 = vsub.f32 %v5309, %v5331
        %v5342 = vsub.f32 %v5314, %v5334
        %v5343 = vsub.f32 %v5317, %v5337
        %v5344 = vmul.f32 %v5338, 1.442695
        %v5345 = vpow.pop %v5344
        %v5346 = vmul.f32 %v5339, 1.442695
        %v5347 = vpow.pop %v5346
        %v5348 = vmul.f32 %v5340, 1.442695
        %v5349 = vpow.pop %v5348
        %v5350 = vmul.f32 %v5341, 1.442695
        %v5351 = vpow.pop %v5350
        %v5352 = vmul.f32 %v5342, 1.442695
        %v5353 = vpow.pop %v5352
        %v5354 = vmul.f32 %v5343, 1.442695
        %v5355 = vpow.pop %v5354
        %v5356 = vsel %vm1886, %v5345, 0.0
        %5357 = vadd.xlane.f32.xlu0 %v5356
        %v5358 = vpop.xlane.xlu0 %5357
        %v5359 = vsel %vm1886, %v5347, 0.0
        %5360 = vadd.xlane.f32.xlu0 %v5359
        %v5361 = vpop.xlane.xlu0 %5360
        %v5362 = vsel %vm1886, %v5349, 0.0
        %5363 = vadd.xlane.f32.xlu0 %v5362
        %v5364 = vpop.xlane.xlu0 %5363
        %v5365 = vsel %vm1886, %v5351, 0.0
        %5366 = vadd.xlane.f32.xlu0 %v5365
        %v5367 = vpop.xlane.xlu0 %5366
        %v5368 = vsel %vm1886, %v5353, 0.0
        %5369 = vadd.xlane.f32.xlu0 %v5368
        %v5370 = vpop.xlane.xlu0 %5369
        %v5371 = vsel %vm1886, %v5355, 0.0
        %5372 = vadd.xlane.f32.xlu0 %v5371
        %v5373 = vpop.xlane.xlu0 %5372
        %v5374 = vrcp.pop %v5358
        %v5375 = vmul.f32 %v5345, %v5374
        %v5376 = vrcp.pop %v5361
        %v5377 = vmul.f32 %v5347, %v5376
        %v5378 = vrcp.pop %v5364
        %v5379 = vmul.f32 %v5349, %v5378
        %v5380 = vrcp.pop %v5367
        %v5381 = vmul.f32 %v5351, %v5380
        %v5382 = vrcp.pop %v5370
        %v5383 = vmul.f32 %v5353, %v5382
        %v5384 = vrcp.pop %v5373
        %v5385 = vmul.f32 %v5355, %v5384
        %v5386 = vpack.c.bf16 %v5377, %v5375
        %v5387 = vpack.c.bf16 %v5381, %v5379
        %v5388 = vpack.c.bf16 %v5385, %v5383
        %v5390 = vsel %vm1886, %v5386, 0
        %v5393 = vsel %vm1886, %v5387, 0
        %v5396 = vsel %vm1886, %v5388, 0
        %5398 = vmatprep.subr.bf16.mxu0 0
        %5399 = vmatpush1.bf16.msra.mxu0 %v4669
        %5400 = vmatprep.subr.bf16.mxu0 0
        %5401 = vmatpush1.bf16.msra.mxu0 %v4673
        %5402 = vmatprep.subr.bf16.mxu0 0
        %5403 = vmatpush1.bf16.msra.mxu0 %v4677
        %5404 = vmatprep.subr.bf16.mxu0 0
        %5405 = vmatpush1.bf16.msra.mxu0 0
        %5406 = vmatprep.subr.bf16.mxu0 0
        %5407 = vmatpush1.bf16.msra.mxu0 0
        %5408 = vmatprep.subr.bf16.mxu0 0
        %5409 = vmatpush1.bf16.msra.mxu0 0
        %5410 = vmatprep.subr.bf16.mxu0 0
        %5411 = vmatpush1.bf16.msra.mxu0 0
        %5412 = vmatprep.subr.bf16.mxu0 0
        %5413 = vmatpush1.bf16.msra.mxu0 0
        %5414 = vmatprep.subr.bf16.mxu0 0
        %5415 = vmatpush1.bf16.msra.mxu0 0
        %5416 = vmatprep.subr.bf16.mxu0 0
        %5417 = vmatpush1.bf16.msra.mxu0 0
        %5418 = vmatprep.subr.bf16.mxu0 0
        %5419 = vmatpush1.bf16.msra.mxu0 0
        %5420 = vmatprep.subr.bf16.mxu0 0
        %5421 = vmatpush1.bf16.msra.mxu0 0
        %5422 = vmatprep.subr.bf16.mxu0 0
        %5423 = vmatpush1.bf16.msra.mxu0 0
        %5424 = vmatprep.subr.bf16.mxu0 0
        %5425 = vmatpush1.bf16.msra.mxu0 0
        %5426 = vmatprep.subr.bf16.mxu0 0
        %5427 = vmatpush1.bf16.msra.mxu0 0
        %5428 = vmatprep.subr.bf16.mxu0 0
        %5429 = vmatpush1.bf16.msra.mxu0 0
        %5430 = vmatprep.mubr.bf16.mxu0 0
        %5431 = vmatmul.mubr.bf16.gmra.mrb[0].mxu0 %v5390
        %v5432 = vpop.f32.mrb[0].mxu0
        %v5433 = vadd.f32 0.0, %v5432
        %v5434 = vpop.f32.mrb[0].mxu0
        %v5435 = vpop.f32.mrb[0].mxu0
        %v5436 = vadd.f32 0.0, %v5435
        %v5437 = vpop.f32.mrb[0].mxu0
        %5438 = vmatprep.mubr.bf16.mxu0 0
        %5439 = vmatmul.mubr.bf16.gmra.mrb[0].mxu0 %v5393
        %v5440 = vpop.f32.mrb[0].mxu0
        %v5441 = vadd.f32 0.0, %v5440
        %v5442 = vpop.f32.mrb[0].mxu0
        %v5443 = vpop.f32.mrb[0].mxu0
        %v5444 = vadd.f32 0.0, %v5443
        %v5445 = vpop.f32.mrb[0].mxu0
        %5446 = vmatprep.mubr.bf16.mxu0 0
        %5447 = vmatmul.mubr.bf16.gmra.mrb[0].mxu0 %v5396
        %v5448 = vpop.f32.mrb[0].mxu0
        %v5449 = vadd.f32 0.0, %v5448
        %v5450 = vpop.f32.mrb[0].mxu0
        %v5451 = vpop.f32.mrb[0].mxu0
        %v5452 = vadd.f32 0.0, %v5451
        %v5453 = vpop.f32.mrb[0].mxu0
        %5454 = vdwg.mxu0
        %v5455 = vpack.c.bf16 %v5436, %v5433
        %v5456 = vpack.c.bf16 %v5444, %v5441
        %v5457 = vpack.c.bf16 %v5452, %v5449
        %s5458 = scalar_lea.vmem %s4, 320
        %v5459 = vld [vmem:[%s5458] sm:$0xf]
        %v5460 = vld [vmem:[%s5458 + $0x4] sm:$0xf]
        %v5461 = vld [vmem:[%s5458 + $0x8] sm:$0xf]
        %v5462 = vld [vmem:[%s5458 + $0xc] sm:$0xf]
        %v5463 = vld [vmem:[%s5458 + $0x10] sm:$0xf]
        %v5464 = vld [vmem:[%s5458 + $0x14] sm:$0xf]
        %v5465 = vld [vmem:[%s5458 + $0x18] sm:$0xf]
        %v5466 = vld [vmem:[%s5458 + $0x1c] sm:$0xf]
        %v5467 = vld [vmem:[%s5458 + $0x20] sm:$0xf]
        %v5468 = vld [vmem:[%s5458 + $0x24] sm:$0xf]
        %v5469 = vld [vmem:[%s5458 + $0x28] sm:$0xf]
        %v5470 = vld [vmem:[%s5458 + $0x2c] sm:$0xf]
        %v5471 = vld [vmem:[%s5458 + $0x30] sm:$0xf]
        %v5472 = vld [vmem:[%s5458 + $0x34] sm:$0xf]
        %v5473 = vld [vmem:[%s5458 + $0x38] sm:$0xf]
        %v5474 = vld [vmem:[%s5458 + $0x3c] sm:$0xf]
        %v5475 = vld [vmem:[%s5458 + $0x40] sm:$0xf]
        %v5476 = vld [vmem:[%s5458 + $0x44] sm:$0xf]
        %v5477 = vld [vmem:[%s5458 + $0x48] sm:$0xf]
        %v5478 = vld [vmem:[%s5458 + $0x4c] sm:$0xf]
        %v5479 = vld [vmem:[%s5458 + $0x50] sm:$0xf]
        %v5480 = vld [vmem:[%s5458 + $0x54] sm:$0xf]
        %v5481 = vld [vmem:[%s5458 + $0x58] sm:$0xf]
        %v5482 = vld [vmem:[%s5458 + $0x5c] sm:$0xf]
        %v5483 = vld [vmem:[%s5458 + $0x60] sm:$0xf]
        %v5484 = vld [vmem:[%s5458 + $0x64] sm:$0xf]
        %v5485 = vld [vmem:[%s5458 + $0x68] sm:$0xf]
        %v5486 = vld [vmem:[%s5458 + $0x6c] sm:$0xf]
        %v5487 = vld [vmem:[%s5458 + $0x70] sm:$0xf]
        %v5488 = vld [vmem:[%s5458 + $0x74] sm:$0xf]
        %v5489 = vld [vmem:[%s5458 + $0x78] sm:$0xf]
        %v5490 = vld [vmem:[%s5458 + $0x7c] sm:$0xf]
        %v5491 = vld [vmem:[%s5458 + $0x80] sm:$0xf]
        %v5492 = vld [vmem:[%s5458 + $0x84] sm:$0xf]
        %v5493 = vld [vmem:[%s5458 + $0x88] sm:$0xf]
        %v5494 = vld [vmem:[%s5458 + $0x8c] sm:$0xf]
        %v5495 = vld [vmem:[%s5458 + $0x90] sm:$0xf]
        %v5496 = vld [vmem:[%s5458 + $0x94] sm:$0xf]
        %v5497 = vld [vmem:[%s5458 + $0x98] sm:$0xf]
        %v5498 = vld [vmem:[%s5458 + $0x9c] sm:$0xf]
        %v5499 = vld [vmem:[%s5458 + $0xa0] sm:$0xf]
        %v5500 = vld [vmem:[%s5458 + $0xa4] sm:$0xf]
        %v5501 = vld [vmem:[%s5458 + $0xa8] sm:$0xf]
        %v5502 = vld [vmem:[%s5458 + $0xac] sm:$0xf]
        %v5503 = vld [vmem:[%s5458 + $0xb0] sm:$0xf]
        %v5504 = vld [vmem:[%s5458 + $0xb4] sm:$0xf]
        %v5505 = vld [vmem:[%s5458 + $0xb8] sm:$0xf]
        %v5506 = vld [vmem:[%s5458 + $0xbc] sm:$0xf]
        %v5507 = vld [vmem:[%s5458 + $0xc0] sm:$0xf]
        %v5508 = vld [vmem:[%s5458 + $0xc4] sm:$0xf]
        %v5509 = vld [vmem:[%s5458 + $0xc8] sm:$0xf]
        %v5510 = vld [vmem:[%s5458 + $0xcc] sm:$0xf]
        %v5511 = vld [vmem:[%s5458 + $0xd0] sm:$0xf]
        %v5512 = vld [vmem:[%s5458 + $0xd4] sm:$0xf]
        %v5513 = vld [vmem:[%s5458 + $0xd8] sm:$0xf]
        %v5514 = vld [vmem:[%s5458 + $0xdc] sm:$0xf]
        %v5515 = vld [vmem:[%s5458 + $0xe0] sm:$0xf]
        %v5516 = vld [vmem:[%s5458 + $0xe4] sm:$0xf]
        %v5517 = vld [vmem:[%s5458 + $0xe8] sm:$0xf]
        %v5518 = vld [vmem:[%s5458 + $0xec] sm:$0xf]
        %v5519 = vld [vmem:[%s5458 + $0xf0] sm:$0xf]
        %v5520 = vld [vmem:[%s5458 + $0xf4] sm:$0xf]
        %v5521 = vld [vmem:[%s5458 + $0xf8] sm:$0xf]
        %v5522 = vld [vmem:[%s5458 + $0xfc] sm:$0xf]
        %v5587 = vunpack.c.l.b16 %v5459
        %v5588 = vunpack.c.l.b16 %v5460
        %v5589 = vunpack.c.l.b16 %v5461
        %v5590 = vunpack.c.l.b16 %v5462
        %v5591 = vunpack.c.l.b16 %v5463
        %v5592 = vunpack.c.l.b16 %v5464
        %v5593 = vunpack.c.l.b16 %v5465
        %v5594 = vunpack.c.l.b16 %v5466
        %v5595 = vunpack.c.l.b16 %v5467
        %v5596 = vunpack.c.l.b16 %v5468
        %v5597 = vunpack.c.l.b16 %v5469
        %v5598 = vunpack.c.l.b16 %v5470
        %v5599 = vunpack.c.l.b16 %v5471
        %v5600 = vunpack.c.l.b16 %v5472
        %v5601 = vunpack.c.l.b16 %v5473
        %v5602 = vunpack.c.l.b16 %v5474
        %v5603 = vunpack.c.l.b16 %v5475
        %v5604 = vunpack.c.l.b16 %v5476
        %v5605 = vunpack.c.l.b16 %v5477
        %v5606 = vunpack.c.l.b16 %v5478
        %v5607 = vunpack.c.l.b16 %v5479
        %v5608 = vunpack.c.l.b16 %v5480
        %v5609 = vunpack.c.l.b16 %v5481
        %v5610 = vunpack.c.l.b16 %v5482
        %v5611 = vunpack.c.l.b16 %v5483
        %v5612 = vunpack.c.l.b16 %v5484
        %v5613 = vunpack.c.l.b16 %v5485
        %v5614 = vunpack.c.l.b16 %v5486
        %v5615 = vunpack.c.l.b16 %v5487
        %v5616 = vunpack.c.l.b16 %v5488
        %v5617 = vunpack.c.l.b16 %v5489
        %v5618 = vunpack.c.l.b16 %v5490
        %v5619 = vunpack.c.l.b16 %v5491
        %v5620 = vunpack.c.l.b16 %v5492
        %v5621 = vunpack.c.l.b16 %v5493
        %v5622 = vunpack.c.l.b16 %v5494
        %v5623 = vunpack.c.l.b16 %v5495
        %v5624 = vunpack.c.l.b16 %v5496
        %v5625 = vunpack.c.l.b16 %v5497
        %v5626 = vunpack.c.l.b16 %v5498
        %v5627 = vunpack.c.l.b16 %v5499
        %v5628 = vunpack.c.l.b16 %v5500
        %v5629 = vunpack.c.l.b16 %v5501
        %v5630 = vunpack.c.l.b16 %v5502
        %v5631 = vunpack.c.l.b16 %v5503
        %v5632 = vunpack.c.l.b16 %v5504
        %v5633 = vunpack.c.l.b16 %v5505
        %v5634 = vunpack.c.l.b16 %v5506
        %v5635 = vunpack.c.l.b16 %v5507
        %v5636 = vunpack.c.l.b16 %v5508
        %v5637 = vunpack.c.l.b16 %v5509
        %v5638 = vunpack.c.l.b16 %v5510
        %v5639 = vunpack.c.l.b16 %v5511
        %v5640 = vunpack.c.l.b16 %v5512
        %v5641 = vunpack.c.l.b16 %v5513
        %v5642 = vunpack.c.l.b16 %v5514
        %v5643 = vunpack.c.l.b16 %v5515
        %v5644 = vunpack.c.l.b16 %v5516
        %v5645 = vunpack.c.l.b16 %v5517
        %v5646 = vunpack.c.l.b16 %v5518
        %v5647 = vunpack.c.l.b16 %v5519
        %v5648 = vunpack.c.l.b16 %v5520
        %v5649 = vunpack.c.l.b16 %v5521
        %v5650 = vunpack.c.l.b16 %v5522
        %v5651 = vpack.c.b16 %v5588, %v5587
        %v5652 = vpack.c.b16 %v5590, %v5589
        %v5653 = vpack.c.b16 %v5592, %v5591
        %v5654 = vpack.c.b16 %v5594, %v5593
        %v5655 = vpack.c.b16 %v5596, %v5595
        %v5656 = vpack.c.b16 %v5598, %v5597
        %v5657 = vpack.c.b16 %v5600, %v5599
        %v5658 = vpack.c.b16 %v5602, %v5601
        %v5659 = vpack.c.b16 %v5604, %v5603
        %v5660 = vpack.c.b16 %v5606, %v5605
        %v5661 = vpack.c.b16 %v5608, %v5607
        %v5662 = vpack.c.b16 %v5610, %v5609
        %v5663 = vpack.c.b16 %v5612, %v5611
        %v5664 = vpack.c.b16 %v5614, %v5613
        %v5665 = vpack.c.b16 %v5616, %v5615
        %v5666 = vpack.c.b16 %v5618, %v5617
        %v5667 = vpack.c.b16 %v5620, %v5619
        %v5668 = vpack.c.b16 %v5622, %v5621
        %v5669 = vpack.c.b16 %v5624, %v5623
        %v5670 = vpack.c.b16 %v5626, %v5625
        %v5671 = vpack.c.b16 %v5628, %v5627
        %v5672 = vpack.c.b16 %v5630, %v5629
        %v5673 = vpack.c.b16 %v5632, %v5631
        %v5674 = vpack.c.b16 %v5634, %v5633
        %v5675 = vpack.c.b16 %v5636, %v5635
        %v5676 = vpack.c.b16 %v5638, %v5637
        %v5677 = vpack.c.b16 %v5640, %v5639
        %v5678 = vpack.c.b16 %v5642, %v5641
        %v5679 = vpack.c.b16 %v5644, %v5643
        %v5680 = vpack.c.b16 %v5646, %v5645
        %v5681 = vpack.c.b16 %v5648, %v5647
        %v5682 = vpack.c.b16 %v5650, %v5649
        %5715 = vmatprep.subr.bf16.mxu0 0
        %5716 = vmatpush1.bf16.msra.mxu0 %v5651
        %5717 = vmatprep.subr.bf16.mxu0 0
        %5718 = vmatpush1.bf16.msra.mxu0 %v5652
        %5719 = vmatprep.subr.bf16.mxu0 0
        %5720 = vmatpush1.bf16.msra.mxu0 %v5653
        %5721 = vmatprep.subr.bf16.mxu0 0
        %5722 = vmatpush1.bf16.msra.mxu0 %v5654
        %5723 = vmatprep.subr.bf16.mxu0 0
        %5724 = vmatpush1.bf16.msra.mxu0 %v5655
        %5725 = vmatprep.subr.bf16.mxu0 0
        %5726 = vmatpush1.bf16.msra.mxu0 %v5656
        %5727 = vmatprep.subr.bf16.mxu0 0
        %5728 = vmatpush1.bf16.msra.mxu0 %v5657
        %5729 = vmatprep.subr.bf16.mxu0 0
        %5730 = vmatpush1.bf16.msra.mxu0 %v5658
        %5731 = vmatprep.subr.bf16.mxu0 0
        %5732 = vmatpush1.bf16.msra.mxu0 %v5659
        %5733 = vmatprep.subr.bf16.mxu0 0
        %5734 = vmatpush1.bf16.msra.mxu0 %v5660
        %5735 = vmatprep.subr.bf16.mxu0 0
        %5736 = vmatpush1.bf16.msra.mxu0 %v5661
        %5737 = vmatprep.subr.bf16.mxu0 0
        %5738 = vmatpush1.bf16.msra.mxu0 %v5662
        %5739 = vmatprep.subr.bf16.mxu0 0
        %5740 = vmatpush1.bf16.msra.mxu0 %v5663
        %5741 = vmatprep.subr.bf16.mxu0 0
        %5742 = vmatpush1.bf16.msra.mxu0 %v5664
        %5743 = vmatprep.subr.bf16.mxu0 0
        %5744 = vmatpush1.bf16.msra.mxu0 %v5665
        %5745 = vmatprep.subr.bf16.mxu0 0
        %5746 = vmatpush1.bf16.msra.mxu0 %v5666
        %5747 = vmatprep.mubr.bf16.mxu0 %v5065
        %5748 = vmatmul.mubr.bf16.gmra.mrb[0].mxu0 %v4870
        %v5749 = vpop.f32.mrb[0].mxu0
        %v5750 = vadd.f32 0.0, %v5749
        %v5751 = vpop.f32.mrb[0].mxu0
        %v5752 = vpop.f32.mrb[0].mxu0
        %v5753 = vadd.f32 0.0, %v5752
        %v5754 = vpop.f32.mrb[0].mxu0
        %5755 = vmatprep.mubr.bf16.mxu0 %v5066
        %5756 = vmatmul.mubr.bf16.gmra.mrb[0].mxu0 %v4871
        %v5757 = vpop.f32.mrb[0].mxu0
        %v5758 = vadd.f32 0.0, %v5757
        %v5759 = vpop.f32.mrb[0].mxu0
        %v5760 = vpop.f32.mrb[0].mxu0
        %v5761 = vadd.f32 0.0, %v5760
        %v5762 = vpop.f32.mrb[0].mxu0
        %5763 = vmatprep.mubr.bf16.mxu0 %v5067
        %5764 = vmatmul.mubr.bf16.gmra.mrb[0].mxu0 %v4872
        %v5765 = vpop.f32.mrb[0].mxu0
        %v5766 = vadd.f32 0.0, %v5765
        %v5767 = vpop.f32.mrb[0].mxu0
        %v5768 = vpop.f32.mrb[0].mxu0
        %v5769 = vadd.f32 0.0, %v5768
        %v5770 = vpop.f32.mrb[0].mxu0
        %5771 = vdwg.mxu0
        %5772 = vmatprep.subr.bf16.mxu0 0
        %5773 = vmatpush1.bf16.msra.mxu0 %v5667
        %5774 = vmatprep.subr.bf16.mxu0 0
        %5775 = vmatpush1.bf16.msra.mxu0 %v5668
        %5776 = vmatprep.subr.bf16.mxu0 0
        %5777 = vmatpush1.bf16.msra.mxu0 %v5669
        %5778 = vmatprep.subr.bf16.mxu0 0
        %5779 = vmatpush1.bf16.msra.mxu0 %v5670
        %5780 = vmatprep.subr.bf16.mxu0 0
        %5781 = vmatpush1.bf16.msra.mxu0 %v5671
        %5782 = vmatprep.subr.bf16.mxu0 0
        %5783 = vmatpush1.bf16.msra.mxu0 %v5672
        %5784 = vmatprep.subr.bf16.mxu0 0
        %5785 = vmatpush1.bf16.msra.mxu0 %v5673
        %5786 = vmatprep.subr.bf16.mxu0 0
        %5787 = vmatpush1.bf16.msra.mxu0 %v5674
        %5788 = vmatprep.subr.bf16.mxu0 0
        %5789 = vmatpush1.bf16.msra.mxu0 %v5675
        %5790 = vmatprep.subr.bf16.mxu0 0
        %5791 = vmatpush1.bf16.msra.mxu0 %v5676
        %5792 = vmatprep.subr.bf16.mxu0 0
        %5793 = vmatpush1.bf16.msra.mxu0 %v5677
        %5794 = vmatprep.subr.bf16.mxu0 0
        %5795 = vmatpush1.bf16.msra.mxu0 %v5678
        %5796 = vmatprep.subr.bf16.mxu0 0
        %5797 = vmatpush1.bf16.msra.mxu0 %v5679
        %5798 = vmatprep.subr.bf16.mxu0 0
        %5799 = vmatpush1.bf16.msra.mxu0 %v5680
        %5800 = vmatprep.subr.bf16.mxu0 0
        %5801 = vmatpush1.bf16.msra.mxu0 %v5681
        %5802 = vmatprep.subr.bf16.mxu0 0
        %5803 = vmatpush1.bf16.msra.mxu0 %v5682
        %5804 = vmatprep.mubr.bf16.mxu0 %v5455
        %5805 = vmatmul.mubr.bf16.gmra.mrb[0].mxu0 %v5260
        %v5806 = vpop.f32.mrb[0].mxu0
        %v5807 = vadd.f32 %v5750, %v5806
        %v5808 = vpop.f32.mrb[0].mxu0
        %v5809 = vpop.f32.mrb[0].mxu0
        %v5810 = vadd.f32 %v5753, %v5809
        %v5811 = vpop.f32.mrb[0].mxu0
        %5812 = vmatprep.mubr.bf16.mxu0 %v5456
        %5813 = vmatmul.mubr.bf16.gmra.mrb[0].mxu0 %v5261
        %v5814 = vpop.f32.mrb[0].mxu0
        %v5815 = vadd.f32 %v5758, %v5814
        %v5816 = vpop.f32.mrb[0].mxu0
        %v5817 = vpop.f32.mrb[0].mxu0
        %v5818 = vadd.f32 %v5761, %v5817
        %v5819 = vpop.f32.mrb[0].mxu0
        %5820 = vmatprep.mubr.bf16.mxu0 %v5457
        %5821 = vmatmul.mubr.bf16.gmra.mrb[0].mxu0 %v5262
        %v5822 = vpop.f32.mrb[0].mxu0
        %v5823 = vadd.f32 %v5766, %v5822
        %v5824 = vpop.f32.mrb[0].mxu0
        %v5825 = vpop.f32.mrb[0].mxu0
        %v5826 = vadd.f32 %v5769, %v5825
        %v5827 = vpop.f32.mrb[0].mxu0
        %5828 = vdwg.mxu0
        %v5829 = vadd.f32 %v3316, %v5807
        %v5830 = vadd.f32 %v3317, %v5810
        %v5831 = vadd.f32 %v3318, %v5815
        %v5832 = vadd.f32 %v3319, %v5818
        %v5833 = vadd.f32 %v3320, %v5823
        %v5834 = vadd.f32 %v3321, %v5826
        %v5835 = vld [vmem:[%s5 + $0x3] sm:$0x1]
        %v5836 = vmul.f32 %v5829, %v5829
        %v5837 = vmul.f32 %v5830, %v5830
        %v5838 = vmul.f32 %v5831, %v5831
        %v5839 = vmul.f32 %v5832, %v5832
        %v5840 = vmul.f32 %v5833, %v5833
        %v5841 = vmul.f32 %v5834, %v5834
        %v5842 = vsel %vm398, %v5836, 0.0
        %5843 = vadd.xlane.f32.xlu0 %v5842
        %v5844 = vpop.xlane.xlu0 %5843
        %v5845 = vsel %vm398, %v5837, 0.0
        %5846 = vadd.xlane.f32.xlu0 %v5845
        %v5847 = vpop.xlane.xlu0 %5846
        %v5848 = vsel %vm398, %v5838, 0.0
        %5849 = vadd.xlane.f32.xlu0 %v5848
        %v5850 = vpop.xlane.xlu0 %5849
        %v5851 = vsel %vm398, %v5839, 0.0
        %5852 = vadd.xlane.f32.xlu0 %v5851
        %v5853 = vpop.xlane.xlu0 %5852
        %v5854 = vsel %vm398, %v5840, 0.0
        %5855 = vadd.xlane.f32.xlu0 %v5854
        %v5856 = vpop.xlane.xlu0 %5855
        %v5857 = vsel %vm398, %v5841, 0.0
        %5858 = vadd.xlane.f32.xlu0 %v5857
        %v5859 = vpop.xlane.xlu0 %5858
        %v5860 = vmul.f32 %v5844, %v417
        %v5861 = vmul.f32 %v5847, %v417
        %v5862 = vmul.f32 %v5850, %v417
        %v5863 = vmul.f32 %v5853, %v417
        %v5864 = vmul.f32 %v5856, %v417
        %v5865 = vmul.f32 %v5859, %v417
        %v5866 = vadd.f32 %v5860, 1e-05
        %v5867 = vadd.f32 %v5861, 1e-05
        %v5868 = vadd.f32 %v5862, 1e-05
        %v5869 = vadd.f32 %v5863, 1e-05
        %v5870 = vadd.f32 %v5864, 1e-05
        %v5871 = vadd.f32 %v5865, 1e-05
        %v5872 = vrsqrt.pop %v5866
        %v5873 = vrsqrt.pop %v5867
        %v5874 = vrsqrt.pop %v5868
        %v5875 = vrsqrt.pop %v5869
        %v5876 = vrsqrt.pop %v5870
        %v5877 = vrsqrt.pop %v5871
        %v5878 = vmul.f32 %v5829, %v5872
        %v5879 = vmul.f32 %v5830, %v5873
        %v5880 = vmul.f32 %v5831, %v5874
        %v5881 = vmul.f32 %v5832, %v5875
        %v5882 = vmul.f32 %v5833, %v5876
        %v5883 = vmul.f32 %v5834, %v5877
        %v5884 = vlaneseq
        %v5885 = vshrl.u32 %v5884, 7
        %v5886 = vsub.s32 0, %v5885
        %v5887 = vrot.slane %v5835, %v5886
        %v5888 = vmul.f32 %v5878, %v5887
        %v5889 = vmul.f32 %v5879, %v5887
        %v5890 = vmul.f32 %v5880, %v5887
        %v5891 = vmul.f32 %v5881, %v5887
        %v5892 = vmul.f32 %v5882, %v5887
        %v5893 = vmul.f32 %v5883, %v5887
        %v5894 = vpack.c.bf16 %v5889, %v5888
        %v5895 = vpack.c.bf16 %v5891, %v5890
        %v5896 = vpack.c.bf16 %v5893, %v5892
        %v5897 = vld [vmem:[%s3384 + $0x40] sm:$0xff]
        %v5898 = vld [vmem:[%s3384 + $0x88] sm:$0xff]
        %v5899 = vld [vmem:[%s3384 + $0xd0] sm:$0xff]
        %v5900 = vld [vmem:[%s3384 + $0x118] sm:$0xff]
        %v5905 = vunpack.c.l.b16 %v5897
        %v5906 = vunpack.c.h.b16 %v5897
        %v5907 = vunpack.c.l.b16 %v5898
        %v5908 = vunpack.c.h.b16 %v5898
        %v5909 = vunpack.c.l.b16 %v5899
        %v5910 = vunpack.c.h.b16 %v5899
        %v5911 = vunpack.c.l.b16 %v5900
        %v5912 = vunpack.c.h.b16 %v5900
        %v5913 = vpack.c.b16 %v5907, %v5905
        %v5914 = vpack.c.b16 %v5908, %v5906
        %v5915 = vpack.c.b16 %v5911, %v5909
        %v5916 = vpack.c.b16 %v5912, %v5910
        %v5922 = vsel %vm398, %v5894, 0
        %v5925 = vsel %vm398, %v5895, 0
        %v5928 = vsel %vm398, %v5896, 0
        %5930 = vmatprep.subr.bf16.mxu0 %v5914
        %5931 = vmatpush1.bf16.msra.mxu0 %v5913
        %5932 = vmatprep.subr.bf16.mxu0 %v5916
        %5933 = vmatpush1.bf16.msra.mxu0 %v5915
        %5934 = vmatprep.subr.bf16.mxu0 0
        %5935 = vmatpush1.bf16.msra.mxu0 0
        %5936 = vmatprep.subr.bf16.mxu0 0
        %5937 = vmatpush1.bf16.msra.mxu0 0
        %5938 = vmatprep.subr.bf16.mxu0 0
        %5939 = vmatpush1.bf16.msra.mxu0 0
        %5940 = vmatprep.subr.bf16.mxu0 0
        %5941 = vmatpush1.bf16.msra.mxu0 0
        %5942 = vmatprep.subr.bf16.mxu0 0
        %5943 = vmatpush1.bf16.msra.mxu0 0
        %5944 = vmatprep.subr.bf16.mxu0 0
        %5945 = vmatpush1.bf16.msra.mxu0 0
        %5946 = vmatprep.subr.bf16.mxu0 0
        %5947 = vmatpush1.bf16.msra.mxu0 0
        %5948 = vmatprep.subr.bf16.mxu0 0
        %5949 = vmatpush1.bf16.msra.mxu0 0
        %5950 = vmatprep.subr.bf16.mxu0 0
        %5951 = vmatpush1.bf16.msra.mxu0 0
        %5952 = vmatprep.subr.bf16.mxu0 0
        %5953 = vmatpush1.bf16.msra.mxu0 0
        %5954 = vmatprep.subr.bf16.mxu0 0
        %5955 = vmatpush1.bf16.msra.mxu0 0
        %5956 = vmatprep.subr.bf16.mxu0 0
        %5957 = vmatpush1.bf16.msra.mxu0 0
        %5958 = vmatprep.subr.bf16.mxu0 0
        %5959 = vmatpush1.bf16.msra.mxu0 0
        %5960 = vmatprep.subr.bf16.mxu0 0
        %5961 = vmatpush1.bf16.msra.mxu0 0
        %5962 = vmatprep.mubr.bf16.mxu0 0
        %5963 = vmatmul.mubr.bf16.gmra.mrb[0].mxu0 %v5922
        %v5964 = vpop.f32.mrb[0].mxu0
        %v5965 = vadd.f32 0.0, %v5964
        %v5966 = vpop.f32.mrb[0].mxu0
        %v5967 = vadd.f32 0.0, %v5966
        %v5968 = vpop.f32.mrb[0].mxu0
        %v5969 = vadd.f32 0.0, %v5968
        %v5970 = vpop.f32.mrb[0].mxu0
        %v5971 = vadd.f32 0.0, %v5970
        %5972 = vmatprep.mubr.bf16.mxu0 0
        %5973 = vmatmul.mubr.bf16.gmra.mrb[0].mxu0 %v5925
        %v5974 = vpop.f32.mrb[0].mxu0
        %v5975 = vadd.f32 0.0, %v5974
        %v5976 = vpop.f32.mrb[0].mxu0
        %v5977 = vadd.f32 0.0, %v5976
        %v5978 = vpop.f32.mrb[0].mxu0
        %v5979 = vadd.f32 0.0, %v5978
        %v5980 = vpop.f32.mrb[0].mxu0
        %v5981 = vadd.f32 0.0, %v5980
        %5982 = vmatprep.mubr.bf16.mxu0 0
        %5983 = vmatmul.mubr.bf16.gmra.mrb[0].mxu0 %v5928
        %v5984 = vpop.f32.mrb[0].mxu0
        %v5985 = vadd.f32 0.0, %v5984
        %v5986 = vpop.f32.mrb[0].mxu0
        %v5987 = vadd.f32 0.0, %v5986
        %v5988 = vpop.f32.mrb[0].mxu0
        %v5989 = vadd.f32 0.0, %v5988
        %v5990 = vpop.f32.mrb[0].mxu0
        %v5991 = vadd.f32 0.0, %v5990
        %5992 = vdwg.mxu0
        %v5993 = vsub.f32 0.0, %v5965
        %v5994 = vsub.f32 0.0, %v5969
        %v5995 = vsub.f32 0.0, %v5975
        %v5996 = vsub.f32 0.0, %v5979
        %v5997 = vsub.f32 0.0, %v5985
        %v5998 = vsub.f32 0.0, %v5989
        %v5999 = vmul.f32 %v5993, 1.442695
        %v6000 = vpow.pop %v5999
        %v6001 = vmul.f32 %v5994, 1.442695
        %v6002 = vpow.pop %v6001
        %v6003 = vmul.f32 %v5995, 1.442695
        %v6004 = vpow.pop %v6003
        %v6005 = vmul.f32 %v5996, 1.442695
        %v6006 = vpow.pop %v6005
        %v6007 = vmul.f32 %v5997, 1.442695
        %v6008 = vpow.pop %v6007
        %v6009 = vmul.f32 %v5998, 1.442695
        %v6010 = vpow.pop %v6009
        %v6011 = vadd.f32 %v6000, 1.0
        %v6012 = vadd.f32 %v6002, 1.0
        %v6013 = vadd.f32 %v6004, 1.0
        %v6014 = vadd.f32 %v6006, 1.0
        %v6015 = vadd.f32 %v6008, 1.0
        %v6016 = vadd.f32 %v6010, 1.0
        %v6017 = vrcp.pop %v6011
        %v6018 = vmul.f32 1.0, %v6017
        %v6019 = vrcp.pop %v6012
        %v6020 = vmul.f32 1.0, %v6019
        %v6021 = vrcp.pop %v6013
        %v6022 = vmul.f32 1.0, %v6021
        %v6023 = vrcp.pop %v6014
        %v6024 = vmul.f32 1.0, %v6023
        %v6025 = vrcp.pop %v6015
        %v6026 = vmul.f32 1.0, %v6025
        %v6027 = vrcp.pop %v6016
        %v6028 = vmul.f32 1.0, %v6027
        %v6029 = vmul.f32 %v5965, %v6018
        %v6030 = vmul.f32 %v5969, %v6020
        %v6031 = vmul.f32 %v5975, %v6022
        %v6032 = vmul.f32 %v5979, %v6024
        %v6033 = vmul.f32 %v5985, %v6026
        %v6034 = vmul.f32 %v5989, %v6028
        %v6035 = vmul.f32 %v6029, %v5967
        %v6036 = vmul.f32 %v6030, %v5971
        %v6037 = vmul.f32 %v6031, %v5977
        %v6038 = vmul.f32 %v6032, %v5981
        %v6039 = vmul.f32 %v6033, %v5987
        %v6040 = vmul.f32 %v6034, %v5991
        %v6041 = vpack.c.bf16 %v6036, %v6035
        %v6042 = vpack.c.bf16 %v6038, %v6037
        %v6043 = vpack.c.bf16 %v6040, %v6039
        %v6044 = vld [vmem:[%s5458 + $0x100] sm:$0xf]
        %v6045 = vld [vmem:[%s5458 + $0x104] sm:$0xf]
        %v6046 = vld [vmem:[%s5458 + $0x108] sm:$0xf]
        %v6047 = vld [vmem:[%s5458 + $0x10c] sm:$0xf]
        %v6048 = vld [vmem:[%s5458 + $0x110] sm:$0xf]
        %v6049 = vld [vmem:[%s5458 + $0x114] sm:$0xf]
        %v6050 = vld [vmem:[%s5458 + $0x118] sm:$0xf]
        %v6051 = vld [vmem:[%s5458 + $0x11c] sm:$0xf]
        %v6052 = vld [vmem:[%s5458 + $0x120] sm:$0xf]
        %v6053 = vld [vmem:[%s5458 + $0x124] sm:$0xf]
        %v6054 = vld [vmem:[%s5458 + $0x128] sm:$0xf]
        %v6055 = vld [vmem:[%s5458 + $0x12c] sm:$0xf]
        %v6056 = vld [vmem:[%s5458 + $0x130] sm:$0xf]
        %v6057 = vld [vmem:[%s5458 + $0x134] sm:$0xf]
        %v6058 = vld [vmem:[%s5458 + $0x138] sm:$0xf]
        %v6059 = vld [vmem:[%s5458 + $0x13c] sm:$0xf]
        %v6076 = vunpack.c.l.b16 %v6044
        %v6077 = vunpack.c.l.b16 %v6045
        %v6078 = vunpack.c.l.b16 %v6046
        %v6079 = vunpack.c.l.b16 %v6047
        %v6080 = vunpack.c.l.b16 %v6048
        %v6081 = vunpack.c.l.b16 %v6049
        %v6082 = vunpack.c.l.b16 %v6050
        %v6083 = vunpack.c.l.b16 %v6051
        %v6084 = vunpack.c.l.b16 %v6052
        %v6085 = vunpack.c.l.b16 %v6053
        %v6086 = vunpack.c.l.b16 %v6054
        %v6087 = vunpack.c.l.b16 %v6055
        %v6088 = vunpack.c.l.b16 %v6056
        %v6089 = vunpack.c.l.b16 %v6057
        %v6090 = vunpack.c.l.b16 %v6058
        %v6091 = vunpack.c.l.b16 %v6059
        %v6092 = vpack.c.b16 %v6077, %v6076
        %v6093 = vpack.c.b16 %v6079, %v6078
        %v6094 = vpack.c.b16 %v6081, %v6080
        %v6095 = vpack.c.b16 %v6083, %v6082
        %v6096 = vpack.c.b16 %v6085, %v6084
        %v6097 = vpack.c.b16 %v6087, %v6086
        %v6098 = vpack.c.b16 %v6089, %v6088
        %v6099 = vpack.c.b16 %v6091, %v6090
        %6108 = vmatprep.subr.bf16.mxu0 0
        %6109 = vmatpush1.bf16.msra.mxu0 %v6092
        %6110 = vmatprep.subr.bf16.mxu0 0
        %6111 = vmatpush1.bf16.msra.mxu0 %v6093
        %6112 = vmatprep.subr.bf16.mxu0 0
        %6113 = vmatpush1.bf16.msra.mxu0 %v6094
        %6114 = vmatprep.subr.bf16.mxu0 0
        %6115 = vmatpush1.bf16.msra.mxu0 %v6095
        %6116 = vmatprep.subr.bf16.mxu0 0
        %6117 = vmatpush1.bf16.msra.mxu0 %v6096
        %6118 = vmatprep.subr.bf16.mxu0 0
        %6119 = vmatpush1.bf16.msra.mxu0 %v6097
        %6120 = vmatprep.subr.bf16.mxu0 0
        %6121 = vmatpush1.bf16.msra.mxu0 %v6098
        %6122 = vmatprep.subr.bf16.mxu0 0
        %6123 = vmatpush1.bf16.msra.mxu0 %v6099
        %6124 = vmatprep.subr.bf16.mxu0 0
        %6125 = vmatpush1.bf16.msra.mxu0 0
        %6126 = vmatprep.subr.bf16.mxu0 0
        %6127 = vmatpush1.bf16.msra.mxu0 0
        %6128 = vmatprep.subr.bf16.mxu0 0
        %6129 = vmatpush1.bf16.msra.mxu0 0
        %6130 = vmatprep.subr.bf16.mxu0 0
        %6131 = vmatpush1.bf16.msra.mxu0 0
        %6132 = vmatprep.subr.bf16.mxu0 0
        %6133 = vmatpush1.bf16.msra.mxu0 0
        %6134 = vmatprep.subr.bf16.mxu0 0
        %6135 = vmatpush1.bf16.msra.mxu0 0
        %6136 = vmatprep.subr.bf16.mxu0 0
        %6137 = vmatpush1.bf16.msra.mxu0 0
        %6138 = vmatprep.subr.bf16.mxu0 0
        %6139 = vmatpush1.bf16.msra.mxu0 0
        %6140 = vmatprep.mubr.bf16.mxu0 0
        %6141 = vmatmul.mubr.bf16.gmra.mrb[0].mxu0 %v6041
        %v6142 = vpop.f32.mrb[0].mxu0
        %v6143 = vadd.f32 0.0, %v6142
        %v6144 = vpop.f32.mrb[0].mxu0
        %v6145 = vpop.f32.mrb[0].mxu0
        %v6146 = vadd.f32 0.0, %v6145
        %v6147 = vpop.f32.mrb[0].mxu0
        %6148 = vmatprep.mubr.bf16.mxu0 0
        %6149 = vmatmul.mubr.bf16.gmra.mrb[0].mxu0 %v6042
        %v6150 = vpop.f32.mrb[0].mxu0
        %v6151 = vadd.f32 0.0, %v6150
        %v6152 = vpop.f32.mrb[0].mxu0
        %v6153 = vpop.f32.mrb[0].mxu0
        %v6154 = vadd.f32 0.0, %v6153
        %v6155 = vpop.f32.mrb[0].mxu0
        %6156 = vmatprep.mubr.bf16.mxu0 0
        %6157 = vmatmul.mubr.bf16.gmra.mrb[0].mxu0 %v6043
        %v6158 = vpop.f32.mrb[0].mxu0
        %v6159 = vadd.f32 0.0, %v6158
        %v6160 = vpop.f32.mrb[0].mxu0
        %v6161 = vpop.f32.mrb[0].mxu0
        %v6162 = vadd.f32 0.0, %v6161
        %v6163 = vpop.f32.mrb[0].mxu0
        %6164 = vdwg.mxu0
        %v6165 = vadd.f32 %v5829, %v6143
        %v6166 = vadd.f32 %v5830, %v6146
        %v6167 = vadd.f32 %v5831, %v6151
        %v6168 = vadd.f32 %v5832, %v6154
        %v6169 = vadd.f32 %v5833, %v6159
        %v6170 = vadd.f32 %v5834, %v6162
        %v6171 = vld [vmem:[%s5 + $0x4] sm:$0x1]
        %v6172 = vmul.f32 %v6165, %v6165
        %v6173 = vmul.f32 %v6166, %v6166
        %v6174 = vmul.f32 %v6167, %v6167
        %v6175 = vmul.f32 %v6168, %v6168
        %v6176 = vmul.f32 %v6169, %v6169
        %v6177 = vmul.f32 %v6170, %v6170
        %v6178 = vsel %vm398, %v6172, 0.0
        %6179 = vadd.xlane.f32.xlu0 %v6178
        %v6180 = vpop.xlane.xlu0 %6179
        %v6181 = vsel %vm398, %v6173, 0.0
        %6182 = vadd.xlane.f32.xlu0 %v6181
        %v6183 = vpop.xlane.xlu0 %6182
        %v6184 = vsel %vm398, %v6174, 0.0
        %6185 = vadd.xlane.f32.xlu0 %v6184
        %v6186 = vpop.xlane.xlu0 %6185
        %v6187 = vsel %vm398, %v6175, 0.0
        %6188 = vadd.xlane.f32.xlu0 %v6187
        %v6189 = vpop.xlane.xlu0 %6188
        %v6190 = vsel %vm398, %v6176, 0.0
        %6191 = vadd.xlane.f32.xlu0 %v6190
        %v6192 = vpop.xlane.xlu0 %6191
        %v6193 = vsel %vm398, %v6177, 0.0
        %6194 = vadd.xlane.f32.xlu0 %v6193
        %v6195 = vpop.xlane.xlu0 %6194
        %v6196 = vmul.f32 %v6180, %v417
        %v6197 = vmul.f32 %v6183, %v417
        %v6198 = vmul.f32 %v6186, %v417
        %v6199 = vmul.f32 %v6189, %v417
        %v6200 = vmul.f32 %v6192, %v417
        %v6201 = vmul.f32 %v6195, %v417
        %v6202 = vadd.f32 %v6196, 1e-05
        %v6203 = vadd.f32 %v6197, 1e-05
        %v6204 = vadd.f32 %v6198, 1e-05
        %v6205 = vadd.f32 %v6199, 1e-05
        %v6206 = vadd.f32 %v6200, 1e-05
        %v6207 = vadd.f32 %v6201, 1e-05
        %v6208 = vrsqrt.pop %v6202
        %v6209 = vrsqrt.pop %v6203
        %v6210 = vrsqrt.pop %v6204
        %v6211 = vrsqrt.pop %v6205
        %v6212 = vrsqrt.pop %v6206
        %v6213 = vrsqrt.pop %v6207
        %v6214 = vmul.f32 %v6165, %v6208
        %v6215 = vmul.f32 %v6166, %v6209
        %v6216 = vmul.f32 %v6167, %v6210
        %v6217 = vmul.f32 %v6168, %v6211
        %v6218 = vmul.f32 %v6169, %v6212
        %v6219 = vmul.f32 %v6170, %v6213
        %v6220 = vlaneseq
        %v6221 = vshrl.u32 %v6220, 7
        %v6222 = vsub.s32 0, %v6221
        %v6223 = vrot.slane %v6171, %v6222
        %v6224 = vmul.f32 %v6214, %v6223
        %v6225 = vmul.f32 %v6215, %v6223
        %v6226 = vmul.f32 %v6216, %v6223
        %v6227 = vmul.f32 %v6217, %v6223
        %v6228 = vmul.f32 %v6218, %v6223
        %v6229 = vmul.f32 %v6219, %v6223
        %v6230 = vpack.c.bf16 %v6225, %v6224
        %v6231 = vpack.c.bf16 %v6227, %v6226
        %v6232 = vpack.c.bf16 %v6229, %v6228
        %v6233 = vld [vmem:[%s6] sm:$0xf]
        %v6234 = vld [vmem:[%s6 + $0x4] sm:$0xf]
        %v6235 = vld [vmem:[%s6 + $0x8] sm:$0xf]
        %v6236 = vld [vmem:[%s6 + $0xc] sm:$0xf]
        %v6241 = vunpack.c.l.b16 %v6233
        %v6242 = vunpack.c.l.b16 %v6234
        %v6243 = vunpack.c.l.b16 %v6235
        %v6244 = vunpack.c.l.b16 %v6236
        %v6245 = vpack.c.b16 %v6242, %v6241
        %v6246 = vpack.c.b16 %v6244, %v6243
        %v6250 = vsel %vm398, %v6230, 0
        %v6253 = vsel %vm398, %v6231, 0
        %v6256 = vsel %vm398, %v6232, 0
        %6258 = vmatprep.subr.bf16.mxu0 0
        %6259 = vmatpush1.bf16.msra.mxu0 %v6245
        %6260 = vmatprep.subr.bf16.mxu0 0
        %6261 = vmatpush1.bf16.msra.mxu0 %v6246
        %6262 = vmatprep.subr.bf16.mxu0 0
        %6263 = vmatpush1.bf16.msra.mxu0 0
        %6264 = vmatprep.subr.bf16.mxu0 0
        %6265 = vmatpush1.bf16.msra.mxu0 0
        %6266 = vmatprep.subr.bf16.mxu0 0
        %6267 = vmatpush1.bf16.msra.mxu0 0
        %6268 = vmatprep.subr.bf16.mxu0 0
        %6269 = vmatpush1.bf16.msra.mxu0 0
        %6270 = vmatprep.subr.bf16.mxu0 0
        %6271 = vmatpush1.bf16.msra.mxu0 0
        %6272 = vmatprep.subr.bf16.mxu0 0
        %6273 = vmatpush1.bf16.msra.mxu0 0
        %6274 = vmatprep.subr.bf16.mxu0 0
        %6275 = vmatpush1.bf16.msra.mxu0 0
        %6276 = vmatprep.subr.bf16.mxu0 0
        %6277 = vmatpush1.bf16.msra.mxu0 0
        %6278 = vmatprep.subr.bf16.mxu0 0
        %6279 = vmatpush1.bf16.msra.mxu0 0
        %6280 = vmatprep.subr.bf16.mxu0 0
        %6281 = vmatpush1.bf16.msra.mxu0 0
        %6282 = vmatprep.subr.bf16.mxu0 0
        %6283 = vmatpush1.bf16.msra.mxu0 0
        %6284 = vmatprep.subr.bf16.mxu0 0
        %6285 = vmatpush1.bf16.msra.mxu0 0
        %6286 = vmatprep.subr.bf16.mxu0 0
        %6287 = vmatpush1.bf16.msra.mxu0 0
        %6288 = vmatprep.subr.bf16.mxu0 0
        %6289 = vmatpush1.bf16.msra.mxu0 0
        %6290 = vmatprep.mubr.bf16.mxu0 0
        %6291 = vmatmul.mubr.bf16.gmra.mrb[0].mxu0 %v6250
        %v6292 = vpop.f32.mrb[0].mxu0
        %v6293 = vadd.f32 0.0, %v6292
        %v6294 = vpop.f32.mrb[0].mxu0
        %v6295 = vpop.f32.mrb[0].mxu0
        %v6296 = vadd.f32 0.0, %v6295
        %v6297 = vpop.f32.mrb[0].mxu0
        %6298 = vmatprep.mubr.bf16.mxu0 0
        %6299 = vmatmul.mubr.bf16.gmra.mrb[0].mxu0 %v6253
        %v6300 = vpop.f32.mrb[0].mxu0
        %v6301 = vadd.f32 0.0, %v6300
        %v6302 = vpop.f32.mrb[0].mxu0
        %v6303 = vpop.f32.mrb[0].mxu0
        %v6304 = vadd.f32 0.0, %v6303
        %v6305 = vpop.f32.mrb[0].mxu0
        %6306 = vmatprep.mubr.bf16.mxu0 0
        %6307 = vmatmul.mubr.bf16.gmra.mrb[0].mxu0 %v6256
        %v6308 = vpop.f32.mrb[0].mxu0
        %v6309 = vadd.f32 0.0, %v6308
        %v6310 = vpop.f32.mrb[0].mxu0
        %v6311 = vpop.f32.mrb[0].mxu0
        %v6312 = vadd.f32 0.0, %v6311
        %v6313 = vpop.f32.mrb[0].mxu0
        %6314 = vdwg.mxu0
        %vm6315 = vcmask 523264
        %v6316 = vsel %vm6315, %v6293, -inf
        %6317 = vmax.xlane.f32.xlu0 %v6316
        %v6318 = vpop.xlane.xlu0 %6317
        %v6319 = vsel %vm6315, %v6296, -inf
        %6320 = vmax.xlane.f32.xlu0 %v6319
        %v6321 = vpop.xlane.xlu0 %6320
        %v6322 = vsel %vm6315, %v6301, -inf
        %6323 = vmax.xlane.f32.xlu0 %v6322
        %v6324 = vpop.xlane.xlu0 %6323
        %v6325 = vsel %vm6315, %v6304, -inf
        %6326 = vmax.xlane.f32.xlu0 %v6325
        %v6327 = vpop.xlane.xlu0 %6326
        %v6328 = vsel %vm6315, %v6309, -inf
        %6329 = vmax.xlane.f32.xlu0 %v6328
        %v6330 = vpop.xlane.xlu0 %6329
        %v6331 = vsel %vm6315, %v6312, -inf
        %6332 = vmax.xlane.f32.xlu0 %v6331
        %v6333 = vpop.xlane.xlu0 %6332
        %v6334 = vsub.f32 %v6293, %v6318
        %v6335 = vsub.f32 %v6296, %v6321
        %v6336 = vsub.f32 %v6301, %v6324
        %v6337 = vsub.f32 %v6304, %v6327
        %v6338 = vsub.f32 %v6309, %v6330
        %v6339 = vsub.f32 %v6312, %v6333
        %v6340 = vmul.f32 %v6334, 1.442695
        %v6341 = vpow.pop %v6340
        %v6342 = vmul.f32 %v6335, 1.442695
        %v6343 = vpow.pop %v6342
        %v6344 = vmul.f32 %v6336, 1.442695
        %v6345 = vpow.pop %v6344
        %v6346 = vmul.f32 %v6337, 1.442695
        %v6347 = vpow.pop %v6346
        %v6348 = vmul.f32 %v6338, 1.442695
        %v6349 = vpow.pop %v6348
        %v6350 = vmul.f32 %v6339, 1.442695
        %v6351 = vpow.pop %v6350
        %v6352 = vsel %vm6315, %v6341, 0.0
        %6353 = vadd.xlane.f32.xlu0 %v6352
        %v6354 = vpop.xlane.xlu0 %6353
        %v6355 = vsel %vm6315, %v6343, 0.0
        %6356 = vadd.xlane.f32.xlu0 %v6355
        %v6357 = vpop.xlane.xlu0 %6356
        %v6358 = vsel %vm6315, %v6345, 0.0
        %6359 = vadd.xlane.f32.xlu0 %v6358
        %v6360 = vpop.xlane.xlu0 %6359
        %v6361 = vsel %vm6315, %v6347, 0.0
        %6362 = vadd.xlane.f32.xlu0 %v6361
        %v6363 = vpop.xlane.xlu0 %6362
        %v6364 = vsel %vm6315, %v6349, 0.0
        %6365 = vadd.xlane.f32.xlu0 %v6364
        %v6366 = vpop.xlane.xlu0 %6365
        %v6367 = vsel %vm6315, %v6351, 0.0
        %6368 = vadd.xlane.f32.xlu0 %v6367
        %v6369 = vpop.xlane.xlu0 %6368
        %v6370 = vlog2.pop %v6354
        %v6371 = vmul.f32 %v6370, 0.6931472
        %v6372 = vlog2.pop %v6357
        %v6373 = vmul.f32 %v6372, 0.6931472
        %v6374 = vlog2.pop %v6360
        %v6375 = vmul.f32 %v6374, 0.6931472
        %v6376 = vlog2.pop %v6363
        %v6377 = vmul.f32 %v6376, 0.6931472
        %v6378 = vlog2.pop %v6366
        %v6379 = vmul.f32 %v6378, 0.6931472
        %v6380 = vlog2.pop %v6369
        %v6381 = vmul.f32 %v6380, 0.6931472
        %v6382 = vadd.f32 %v6318, %v6371
        %v6383 = vadd.f32 %v6321, %v6373
        %v6384 = vadd.f32 %v6324, %v6375
        %v6385 = vadd.f32 %v6327, %v6377
        %v6386 = vadd.f32 %v6330, %v6379
        %v6387 = vadd.f32 %v6333, %v6381
        %6388 = vset.pattern.permute.xlu0 0
        %6389 = vperm.xlu0 %6388, %v303
        %v6390 = vpop.permute.xlu0 %6389
        %6391 = vset.pattern.permute.xlu0 0
        %6392 = vperm.xlu0 %6391, %v304
        %v6393 = vpop.permute.xlu0 %6392
        %6394 = vset.pattern.permute.xlu0 0
        %6395 = vperm.xlu0 %6394, %v305
        %v6396 = vpop.permute.xlu0 %6395
        %6397 = vset.pattern.permute.xlu0 0
        %6398 = vperm.xlu0 %6397, %v306
        %v6399 = vpop.permute.xlu0 %6398
        %6400 = vset.pattern.permute.xlu0 0
        %6401 = vperm.xlu0 %6400, %v307
        %v6402 = vpop.permute.xlu0 %6401
        %6403 = vset.pattern.permute.xlu0 0
        %6404 = vperm.xlu0 %6403, %v308
        %v6405 = vpop.permute.xlu0 %6404
        %vm6406 = vcmp.eq.s32.totalorder %v323, %v6390
        %vm6407 = vcmp.eq.s32.totalorder %v323, %v6393
        %vm6408 = vcmp.eq.s32.totalorder %v323, %v6396
        %vm6409 = vcmp.eq.s32.totalorder %v323, %v6399
        %vm6410 = vcmp.eq.s32.totalorder %v323, %v6402
        %vm6411 = vcmp.eq.s32.totalorder %v323, %v6405
        %v6412 = vsel %vm6406, 1, 0
        %v6413 = vsel %vm6407, 1, 0
        %v6414 = vsel %vm6408, 1, 0
        %v6415 = vsel %vm6409, 1, 0
        %v6416 = vsel %vm6410, 1, 0
        %v6417 = vsel %vm6411, 1, 0
        %v6418 = vcvt.s32.f32 %v6412
        %v6419 = vcvt.s32.f32 %v6413
        %v6420 = vcvt.s32.f32 %v6414
        %v6421 = vcvt.s32.f32 %v6415
        %v6422 = vcvt.s32.f32 %v6416
        %v6423 = vcvt.s32.f32 %v6417
        %v6424 = vmul.f32 %v6293, %v6418
        %v6425 = vmul.f32 %v6296, %v6419
        %v6426 = vmul.f32 %v6301, %v6420
        %v6427 = vmul.f32 %v6304, %v6421
        %v6428 = vmul.f32 %v6309, %v6422
        %v6429 = vmul.f32 %v6312, %v6423
        %v6430 = vsel %vm6315, %v6424, 0.0
        %6431 = vadd.xlane.f32.xlu0 %v6430
        %v6432 = vpop.xlane.xlu0 %6431
        %v6433 = vsel %vm6315, %v6425, 0.0
        %6434 = vadd.xlane.f32.xlu0 %v6433
        %v6435 = vpop.xlane.xlu0 %6434
        %v6436 = vsel %vm6315, %v6426, 0.0
        %6437 = vadd.xlane.f32.xlu0 %v6436
        %v6438 = vpop.xlane.xlu0 %6437
        %v6439 = vsel %vm6315, %v6427, 0.0
        %6440 = vadd.xlane.f32.xlu0 %v6439
        %v6441 = vpop.xlane.xlu0 %6440
        %v6442 = vsel %vm6315, %v6428, 0.0
        %6443 = vadd.xlane.f32.xlu0 %v6442
        %v6444 = vpop.xlane.xlu0 %6443
        %v6445 = vsel %vm6315, %v6429, 0.0
        %6446 = vadd.xlane.f32.xlu0 %v6445
        %v6447 = vpop.xlane.xlu0 %6446
        %vm6448 = vcmp.ne.s32.totalorder %v303, 0
        %vm6449 = vcmp.ne.s32.totalorder %v304, 0
        %vm6450 = vcmp.ne.s32.totalorder %v305, 0
        %vm6451 = vcmp.ne.s32.totalorder %v306, 0
        %vm6452 = vcmp.ne.s32.totalorder %v307, 0
        %vm6453 = vcmp.ne.s32.totalorder %v308, 0
        %v6454 = vsel %vm6448, 1, 0
        %v6455 = vsel %vm6449, 1, 0
        %v6456 = vsel %vm6450, 1, 0
        %v6457 = vsel %vm6451, 1, 0
        %v6458 = vsel %vm6452, 1, 0
        %v6459 = vsel %vm6453, 1, 0
        %v6460 = vcvt.s32.f32 %v6454
        %v6461 = vcvt.s32.f32 %v6455
        %v6462 = vcvt.s32.f32 %v6456
        %v6463 = vcvt.s32.f32 %v6457
        %v6464 = vcvt.s32.f32 %v6458
        %v6465 = vcvt.s32.f32 %v6459
        %v6466 = vsub.f32 %v6382, %v6432
        %v6467 = vsub.f32 %v6383, %v6435
        %v6468 = vsub.f32 %v6384, %v6438
        %v6469 = vsub.f32 %v6385, %v6441
        %v6470 = vsub.f32 %v6386, %v6444
        %v6471 = vsub.f32 %v6387, %v6447
        %v6472 = vmul.f32 %v6466, %v6460
        %v6473 = vmul.f32 %v6467, %v6461
        %v6474 = vmul.f32 %v6468, %v6462
        %v6475 = vmul.f32 %v6469, %v6463
        %v6476 = vmul.f32 %v6470, %v6464
        %v6477 = vmul.f32 %v6471, %v6465
        %vm6478 = vcmask 7168
        %v6479 = vsel %vm6478, %v6472, 0.0
        %v6480 = vsel %vm6478, %v6473, 0.0
        %v6481 = vadd.f32 %v6479, %v6480
        %v6482 = vsel %vm6478, %v6474, 0.0
        %v6483 = vadd.f32 %v6481, %v6482
        %v6484 = vsel %vm6478, %v6475, 0.0
        %v6485 = vadd.f32 %v6483, %v6484
        %v6486 = vsel %vm6478, %v6476, 0.0
        %v6487 = vadd.f32 %v6485, %v6486
        %v6488 = vsel %vm6478, %v6477, 0.0
        %v6489 = vadd.f32 %v6487, %v6488
        %6490 = vadd.xlane.f32.xlu0 %v6489
        %v6491 = vpop.xlane.xlu0 %6490
        %v6492 = vrot.slane %v6491, 4
        %v6493 = vadd.f32 %v6491, %v6492
        %v6494 = vrot.slane %v6493, 2
        %v6495 = vadd.f32 %v6493, %v6494
        %v6496 = vrot.slane %v6495, 1
        %v6497 = vadd.f32 %v6495, %v6496
        %s6498 = vtos %v6497
        %v6499 = vsel %vm6478, %v6460, 0.0
        %v6500 = vsel %vm6478, %v6461, 0.0
        %v6501 = vadd.f32 %v6499, %v6500
        %v6502 = vsel %vm6478, %v6462, 0.0
        %v6503 = vadd.f32 %v6501, %v6502
        %v6504 = vsel %vm6478, %v6463, 0.0
        %v6505 = vadd.f32 %v6503, %v6504
        %v6506 = vsel %vm6478, %v6464, 0.0
        %v6507 = vadd.f32 %v6505, %v6506
        %v6508 = vsel %vm6478, %v6465, 0.0
        %v6509 = vadd.f32 %v6507, %v6508
        %6510 = vadd.xlane.f32.xlu0 %v6509
        %v6511 = vpop.xlane.xlu0 %6510
        %v6512 = vrot.slane %v6511, 4
        %v6513 = vadd.f32 %v6511, %v6512
        %v6514 = vrot.slane %v6513, 2
        %v6515 = vadd.f32 %v6513, %v6514
        %v6516 = vrot.slane %v6515, 1
        %v6517 = vadd.f32 %v6515, %v6516
        %s6518 = vtos %v6517
        %vm6519 = vcmp.eq.s32.totalorder %v323, 0
        %v6520 = vstv %s6498
        %v6521 = vsel %vm6519, %v6520, 0.0
        %vm6522 = vcmp.eq.s32.totalorder %v323, 1
        %v6523 = vstv %s6518
        %v6524 = vsel %vm6522, %v6523, 0.0
        %v6525 = vadd.f32 %v6521, %v6524
        %6526 = vst [vmem:[%s285] sm:$0x1] %v6525
        %s6527 = sand.u32 %s186, 1
        %s6528 = scalar_lea.sflag [#allocation3], %s6527
        %s6529 = sand.u32 %s186, 1
        %s6530 = scalar_lea.vmem [#allocation2], %s6529
        // Predicated region
        $region49: #{tpu_custom_call.1} parent=47 // pred_check
          %p6531 = pneg %p196
        $region50: #{tpu_custom_call.1} parent=47 // pred_check_branch
          %6533 = sbr.rel (%p6531) target = $region52
        $region51: #{tpu_custom_call.1} parent=47 // pred_region
          %s6535 = ssub.s32 16, 16
          %6536 = vsyncadd %s6528, %s6535
          %s6537 = smul.addr %s21, 16
          %s6538 = scalar_lea.hbm %s7, %s6537
          %s6540 = sshll.u32 %s6530, 4
          %s6541 = int_to_ptr.vmem [resolvable:$true] %s6540
          %6543 = dma.vmem_to_hbm [thread:$0]  %s6541, 16, %s6538, %s6528
        $region52: #{tpu_custom_call.1} parent=47 // pred_fallthru
          _
      $region48: #{tpu_custom_call.1} parent=5 // pred_fallthru
        _
      %p6544 = scmp.le.s32.totalorder 2, %s16
      // Predicated region
      $region53: #{tpu_custom_call.1} parent=5 // pred_check
        %p6545 = pneg %p6544
      $region54: #{tpu_custom_call.1} parent=5 // pred_check_branch
        %6547 = sbr.rel (%p6545) target = $region56
      $region55: #{tpu_custom_call.1} parent=5 // pred_region
        %s6548 = ssub.s32 %s16, 2
        // Predicated region
        $region57: #{tpu_custom_call.1} parent=55 // pred_check
          %p6549 = pneg %p202
        $region58: #{tpu_custom_call.1} parent=55 // pred_check_branch
          %6551 = sbr.rel (%p6549) target = $region60
        $region59: #{tpu_custom_call.1} parent=55 // pred_region
          %s6552 = sand.u32 %s187, 1
          %s6553 = scalar_lea.sflag [#allocation3], %s6552
          %s6554 = sand.u32 %s187, 1
          %s6555 = scalar_lea.vmem [#allocation2], %s6554
          %6556 = dma.done %s6553, 16
        $region60: #{tpu_custom_call.1} parent=55 // pred_fallthru
          _
      $region56: #{tpu_custom_call.1} parent=5 // pred_fallthru
        _
    $region6: #{tpu_custom_call.1} parent=1 // loop_footer
      %s20 = sadd.s32 1, %s16
    $region7: #{tpu_custom_call.1} parent=1 // loop_footer_branch
      %15 = sbr.rel target = $region3
    $region8: #{tpu_custom_call.1} parent=1 // loop_exit
      _
    %6557 = vsyncpa [#allocation3], 1
    %s6558 = scalar_lea.sflag [#allocation3], 1
    %6559 = vsyncpa %s6558, 1

</llo_original>
